<compile_context>
chip_gen: v5e
topology: v5e:2x2
jax: 0.10.0
libtpu: 0.0.40
codegen_flags: <defaults>
</compile_context>

<pallas_src>
import functools

import jax
import jax.numpy as jnp
from jax import lax
from jax.experimental import pallas as pl
from jax.experimental.pallas import tpu as pltpu


# ------------------------------ small helpers ------------------------------

def _rup(n, m):
    return ((n + m - 1) // m) * m


def _pad_axis(a, axis, target):
    cur = a.shape[axis]
    if cur == target:
        return a
    widths = [(0, 0)] * a.ndim
    widths[axis] = (0, target - cur)
    return jnp.pad(a, widths)


# ----------------------------- Pallas kernels ------------------------------

def _dense_kernel(x_ref, w_ref, b_ref, o_ref, *, apply_relu):
    acc = jnp.dot(x_ref[...], w_ref[...], preferred_element_type=jnp.float32)
    acc = acc + b_ref[...]
    if apply_relu:
        acc = jnp.maximum(acc, 0.0)
    o_ref[...] = acc.astype(o_ref.dtype)


def _pool_kernel(x_ref, o_ref):
    # x_ref: (T, 2, Wo, 2*C)  ->  o_ref: (T, Wo, C)
    c = o_ref.shape[-1]
    v = x_ref[...]
    v = jnp.maximum(v[:, 0], v[:, 1])           # vertical 2-tap max
    o_ref[...] = jnp.maximum(v[:, :, :c], v[:, :, c:])  # horizontal 2-tap max


# ------------------------------- wrappers ----------------------------------

def dense(x, w, b, *, relu, tm=256):
    """x: (M, K), w: (Kp, Np) pre-padded, b: (1, Np) -> (M, Np).

    Tiles over M with a real grid (auto-pipelined, "parallel" semantics).
    Kp / Np are multiples of 128 (done once at param prep); x is zero-padded
    here along K (to Kp) and M (to a tile multiple) — cheap under jit.
    """
    M, K = x.shape
    Kp, Np = w.shape
    assert Kp >= K and Kp % 8 == 0 and Np % 128 == 0

    if Kp != K:
        x = _pad_axis(x, 1, Kp)
    M8 = _rup(M, 8)
    TM = min(tm, M8)
    Mp = _rup(M8, TM)
    if Mp != M:
        x = _pad_axis(x, 0, Mp)

    kern = functools.partial(_dense_kernel, apply_relu=relu)
    out = pl.pallas_call(
        kern,
        grid=(Mp // TM,),
        out_shape=jax.ShapeDtypeStruct((Mp, Np), jnp.float32),
        in_specs=[
            pl.BlockSpec((TM, Kp), lambda i: (i, 0)),
            pl.BlockSpec((Kp, Np), lambda i: (0, 0)),
            pl.BlockSpec((1, Np), lambda i: (0, 0)),
        ],
        out_specs=pl.BlockSpec((TM, Np), lambda i: (i, 0)),
        compiler_params=pltpu.CompilerParams(
            dimension_semantics=("parallel",),
            vmem_limit_bytes=32 * 1024 * 1024,
        ),
    )(x, w, b)
    return out[:M]


def maxpool2_nhwc(x, tr=512):
    """nn.MaxPool2d(2) on NHWC: (N, H, W, C) -> (N, H//2, W//2, C).

    Uses a zero-copy reshape to (N*Ho, 2, Wo, 2*C) so the kernel sees one
    lane-dense slab (C is a multiple of 128) instead of four HBM-materialized
    strided taps.
    """
    N, H, W, C = x.shape
    Ho, Wo = H // 2, W // 2
    R = N * Ho
    xr = x.reshape(R, 2, Wo, 2 * C)

    TR = min(tr, _rup(R, 8))
    Rp = _rup(R, TR)
    if Rp != R:
        xr = _pad_axis(xr, 0, Rp)

    out = pl.pallas_call(
        _pool_kernel,
        grid=(Rp // TR,),
        out_shape=jax.ShapeDtypeStruct((Rp, Wo, C), x.dtype),
        in_specs=[pl.BlockSpec((TR, 2, Wo, 2 * C), lambda i: (i, 0, 0, 0))],
        out_specs=pl.BlockSpec((TR, Wo, C), lambda i: (i, 0, 0)),
        compiler_params=pltpu.CompilerParams(
            dimension_semantics=("parallel",),
            vmem_limit_bytes=32 * 1024 * 1024,
        ),
    )(xr)
    return out[:R].reshape(N, Ho, Wo, C)


def _im2col_nhwc(x, k):
    """(N, H, W, C) -> (N*Ho*Wo, k*k*C); last-dim order ((di,dj) major, C minor)
    matches weight rows built as w.transpose(2, 3, 1, 0).reshape(k*k*C, Cout)."""
    N, H, W, C = x.shape
    Ho, Wo = H - k + 1, W - k + 1
    cols = [x[:, di:di + Ho, dj:dj + Wo, :] for di in range(k) for dj in range(k)]
    patches = jnp.concatenate(cols, axis=-1)          # (N, Ho, Wo, k*k*C)
    return patches.reshape(N * Ho * Wo, k * k * C), (N, Ho, Wo)


# ------------------------------ forward pass -------------------------------

@functools.partial(jax.jit, static_argnames=("num_classes",))
def lenet5_forward(x_nchw, kp, num_classes):
    """Matches group_relaxed_L1LeNet5.forward: convs -> flatten -> fcs."""
    x = jnp.transpose(x_nchw, (0, 2, 3, 1))           # NHWC once, up front

    # conv1 (5x5 valid) + ReLU, then 2x2 maxpool -- channels padded to 128
    patches, (N, H1, W1) = _im2col_nhwc(x, 5)
    o = dense(patches, kp['conv1_w'], kp['conv1_b'], relu=True)
    o = maxpool2_nhwc(o.reshape(N, H1, W1, -1))

    # conv2 (5x5 valid) + ReLU, then 2x2 maxpool
    patches, (N, H2, W2) = _im2col_nhwc(o, 5)
    o = dense(patches, kp['conv2_w'], kp['conv2_b'], relu=True)
    o = maxpool2_nhwc(o.reshape(N, H2, W2, -1))

    # flatten (NHWC with padded C; fc1 rows were permuted/padded to match)
    o = o.reshape(N, -1)
    o = dense(o, kp['fc1_w'], kp['fc1_b'], relu=True)
    o = dense(o, kp['fc2_w'], kp['fc2_b'], relu=False)
    return o[:, :num_classes]


# ------------------------ parameters & preparation --------------------------

def init_params(key, num_classes=10, input_size=(1, 28, 28),
                conv_dims=(20, 50), fc_dims=500):
    """Raw parameters in PyTorch convention (conv OIHW, fc (in, out))."""
    ks = jax.random.split(key, 8)
    cin, H, W = input_size
    h1, w1 = (H - 4) // 2, (W - 4) // 2
    h2, w2 = (h1 - 4) // 2, (w1 - 4) // 2
    flat = conv_dims[1] * h2 * w2                     # 50 * 4 * 4 = 800

    def nrm(k, shape, fan_in):
        return jax.random.normal(k, shape, jnp.float32) / jnp.sqrt(float(fan_in))

    return {
        'conv1_w': nrm(ks[0], (conv_dims[0], cin, 5, 5), cin * 25),
        'conv1_b': nrm(ks[1], (conv_dims[0],), cin * 25),
        'conv2_w': nrm(ks[2], (conv_dims[1], conv_dims[0], 5, 5), conv_dims[0] * 25),
        'conv2_b': nrm(ks[3], (conv_dims[1],), conv_dims[0] * 25),
        'fc1_w': nrm(ks[4], (flat, fc_dims), flat),
        'fc1_b': nrm(ks[5], (fc_dims,), flat),
        'fc2_w': nrm(ks[6], (fc_dims, num_classes), fc_dims),
        'fc2_b': nrm(ks[7], (fc_dims if False else num_classes,), fc_dims),
    }


def prepare_kernel_params(params, input_size=(1, 28, 28)):
    """One-time conversion to kernel-friendly, lane-dense padded matrices.

    * conv weights -> (k*k*Cin_pad, Cout_pad) with rows ordered (di, dj, c),
      matching the NHWC im2col layout; cols/bias zero-padded to 128 multiples.
    * fc1 rows permuted from PyTorch's NCHW flatten to our NHWC(+pad) flatten.
    """
    cin, H, W = input_size
    c1w, c2w = params['conv1_w'], params['conv2_w']
    C1, C2 = c1w.shape[0], c2w.shape[0]
    C1p, C2p = _rup(C1, 128), _rup(C2, 128)

    # conv1: rows (di, dj, cin)
    w1 = c1w.transpose(2, 3, 1, 0).reshape(25 * cin, C1)
    w1 = _pad_axis(_pad_axis(w1, 0, _rup(25 * cin, 128)), 1, C1p)
    b1 = _pad_axis(params['conv1_b'], 0, C1p).reshape(1, C1p)

    # conv2: rows (di, dj, c) over the PADDED conv1 channel count
    w2 = c2w.transpose(2, 3, 1, 0)                    # (5, 5, C1, C2)
    w2 = _pad_axis(w2, 2, C1p).reshape(25 * C1p, C2)
    w2 = _pad_axis(_pad_axis(w2, 0, _rup(25 * C1p, 128)), 1, C2p)
    b2 = _pad_axis(params['conv2_b'], 0, C2p).reshape(1, C2p)

    # spatial dims after the two conv+pool stages
    hh1, ww1 = (H - 4) // 2, (W - 4) // 2
    hh2, ww2 = (hh1 - 4) // 2, (ww1 - 4) // 2

    fc_dims = params['fc1_w'].shape[1]
    Fp = _rup(fc_dims, 128)
    f1 = params['fc1_w'].reshape(C2, hh2, ww2, fc_dims)     # NCHW flatten order
    f1 = _pad_axis(f1, 0, C2p).transpose(1, 2, 0, 3)        # -> NHWC(+pad) order
    f1 = f1.reshape(hh2 * ww2 * C2p, fc_dims)
    f1 = _pad_axis(_pad_axis(f1, 0, _rup(hh2 * ww2 * C2p, 128)), 1, Fp)
    fb1 = _pad_axis(params['fc1_b'], 0, Fp).reshape(1, Fp)

    ncls = params['fc2_w'].shape[1]
    Cp = _rup(ncls, 128)
    f2 = _pad_axis(_pad_axis(params['fc2_w'], 0, Fp), 1, Cp)
    fb2 = _pad_axis(params['fc2_b'], 0, Cp).reshape(1, Cp)

    return {
        'conv1_w': w1, 'conv1_b': b1,
        'conv2_w': w2, 'conv2_b': b2,
        'fc1_w': f1, 'fc1_b': fb1,
        'fc2_w': f2, 'fc2_b': fb2,
    }


# ------------------------------- reference ----------------------------------

def reference_forward(x, params):
    def conv(x, w, b):
        y = lax.conv_general_dilated(x, w, (1, 1), 'VALID',
                                     dimension_numbers=('NCHW', 'OIHW', 'NCHW'))
        return jax.nn.relu(y + b.reshape(1, -1, 1, 1))

    def pool(x):
        return lax.reduce_window(x, -jnp.inf, lax.max,
                                 (1, 1, 2, 2), (1, 1, 2, 2), 'VALID')

    o = pool(conv(x, params['conv1_w'], params['conv1_b']))
    o = pool(conv(o, params['conv2_w'], params['conv2_b']))
    o = o.reshape(o.shape[0], -1)
    o = jax.nn.relu(o @ params['fc1_w'] + params['fc1_b'])
    return o @ params['fc2_w'] + params['fc2_b']


if __name__ == "__main__":
    key = jax.random.PRNGKey(0)
    pkey, xkey = jax.random.split(key)
    params = init_params(pkey, num_classes=10)
    kparams = prepare_kernel_params(params, input_size=(1, 28, 28))
    x = jax.random.normal(xkey, (2, 1, 28, 28), jnp.float32)  # NCHW like PyTorch

    out = jax.block_until_ready(lenet5_forward(x, kparams, num_classes=10))
    ref = reference_forward(x, params)

    assert out.shape == (2, 10), out.shape
    assert jnp.allclose(out, ref, rtol=1e-4, atol=1e-4), \
        float(jnp.max(jnp.abs(out - ref)))
    print("KERNEL_OK")
</pallas_src>

<mosaic_0001>
module attributes {stable_mosaic.version = 11 : i64} {
  func.func @_dense_kernel(%arg0: i32, %arg1: memref<256x128xf32, #tpu.memory_space<vmem>>, %arg2: memref<128x128xf32, #tpu.memory_space<vmem>>, %arg3: memref<1x128xf32, #tpu.memory_space<vmem>>, %arg4: memref<256x128xf32, #tpu.memory_space<vmem>>) attributes {dimension_semantics = [#tpu.dimension_semantics<parallel>], iteration_bounds = array<i64: 5>, scalar_prefetch = 0 : i64, scratch_operands = 0 : i64, tpu.core_type = #tpu.core_type<tc>, window_params = [{transform_indices = @transform_0, window_bounds = array<i64: 256, 128>}, {pipeline_mode = #tpu.pipeline_mode<synchronous>, transform_indices = @transform_1, window_bounds = array<i64: 128, 128>}, {pipeline_mode = #tpu.pipeline_mode<synchronous>, transform_indices = @transform_2, window_bounds = array<i64: 1, 128>}, {transform_indices = @transform_3, window_bounds = array<i64: 256, 128>}]} {
    %c0 = arith.constant 0 : index
    %c0_0 = arith.constant 0 : index
    %0 = vector.load %arg1[%c0, %c0_0] : memref<256x128xf32, #tpu.memory_space<vmem>>, vector<256x128xf32>
    %c0_1 = arith.constant 0 : index
    %c0_2 = arith.constant 0 : index
    %1 = vector.load %arg2[%c0_1, %c0_2] : memref<128x128xf32, #tpu.memory_space<vmem>>, vector<128x128xf32>
    %cst = arith.constant dense<0.000000e+00> : vector<256x128xf32>
    %2 = tpu.matmul %0, %1, %cst {dimension_numbers = #tpu.dot_dimension_numbers<[1], [0], [0], [1], [0, 0, 1, 1], [], []>} : vector<256x128xf32>, vector<128x128xf32>, vector<256x128xf32> -> vector<256x128xf32>
    %c0_3 = arith.constant 0 : index
    %c0_4 = arith.constant 0 : index
    %3 = vector.load %arg3[%c0_3, %c0_4] : memref<1x128xf32, #tpu.memory_space<vmem>>, vector<1x128xf32>
    %4 = vector.broadcast %3 : vector<1x128xf32> to vector<256x128xf32>
    %5 = arith.addf %2, %4 : vector<256x128xf32>
    %cst_5 = arith.constant 0.000000e+00 : f32
    %6 = vector.broadcast %cst_5 : f32 to vector<256x128xf32>
    %7 = arith.maximumf %5, %6 : vector<256x128xf32>
    %c0_6 = arith.constant 0 : index
    %c0_7 = arith.constant 0 : index
    %8 = vector.load %arg4[%c0_6, %c0_7] : memref<256x128xf32, #tpu.memory_space<vmem>>, vector<256x128xf32>
    tpu.vector_store %arg4[%c0_6, %c0_7], %7 {strides = array<i32>} : memref<256x128xf32, #tpu.memory_space<vmem>>, vector<256x128xf32>,
    return
  }
  func.func @transform_0(%arg0: i32) -> (i32, i32) {
    %c0_i32 = arith.constant 0 : i32
    %c0_i32_0 = arith.constant 0 : i32
    return %arg0, %c0_i32 : i32, i32
  }
  func.func @transform_1(%arg0: i32) -> (i32, i32) {
    %c0_i32 = arith.constant 0 : i32
    %c0_i32_0 = arith.constant 0 : i32
    %c0_i32_1 = arith.constant 0 : i32
    return %c0_i32, %c0_i32_0 : i32, i32
  }
  func.func @transform_2(%arg0: i32) -> (i32, i32) {
    %c0_i32 = arith.constant 0 : i32
    %c0_i32_0 = arith.constant 0 : i32
    %c0_i32_1 = arith.constant 0 : i32
    return %c0_i32, %c0_i32_0 : i32, i32
  }
  func.func @transform_3(%arg0: i32) -> (i32, i32) {
    %c0_i32 = arith.constant 0 : i32
    %c0_i32_0 = arith.constant 0 : i32
    return %arg0, %c0_i32 : i32, i32
  }
}

module attributes {stable_mosaic.version = 11 : i64} {
  func.func @_pool_kernel(%arg0: i32, %arg1: memref<24x2x12x256xf32, #tpu.memory_space<vmem>>, %arg2: memref<24x12x128xf32, #tpu.memory_space<vmem>>) attributes {dimension_semantics = [#tpu.dimension_semantics<parallel>], iteration_bounds = array<i64: 1>, scalar_prefetch = 0 : i64, scratch_operands = 0 : i64, tpu.core_type = #tpu.core_type<tc>, window_params = [{transform_indices = @transform_0, window_bounds = array<i64: 24, 2, 12, 256>}, {transform_indices = @transform_1, window_bounds = array<i64: 24, 12, 128>}]} {
    %c0 = arith.constant 0 : index
    %c0_0 = arith.constant 0 : index
    %c0_1 = arith.constant 0 : index
    %c0_2 = arith.constant 0 : index
    %0 = vector.load %arg1[%c0, %c0_0, %c0_1, %c0_2] : memref<24x2x12x256xf32, #tpu.memory_space<vmem>>, vector<24x2x12x256xf32>
    %1 = vector.extract_strided_slice %0 {offsets = [0, 0, 0, 0], sizes = [24, 1, 12, 256], strides = [1, 1, 1, 1]} : vector<24x2x12x256xf32> to vector<24x1x12x256xf32>
    %2 = vector.shape_cast %1 : vector<24x1x12x256xf32> to vector<24x12x256xf32>
    %3 = vector.extract_strided_slice %0 {offsets = [0, 1, 0, 0], sizes = [24, 1, 12, 256], strides = [1, 1, 1, 1]} : vector<24x2x12x256xf32> to vector<24x1x12x256xf32>
    %4 = vector.shape_cast %3 : vector<24x1x12x256xf32> to vector<24x12x256xf32>
    %5 = arith.maximumf %2, %4 : vector<24x12x256xf32>
    %6 = vector.extract_strided_slice %5 {offsets = [0, 0, 0], sizes = [24, 12, 128], strides = [1, 1, 1]} : vector<24x12x256xf32> to vector<24x12x128xf32>
    %7 = vector.extract_strided_slice %5 {offsets = [0, 0, 128], sizes = [24, 12, 128], strides = [1, 1, 1]} : vector<24x12x256xf32> to vector<24x12x128xf32>
    %8 = arith.maximumf %6, %7 : vector<24x12x128xf32>
    %c0_3 = arith.constant 0 : index
    %c0_4 = arith.constant 0 : index
    %c0_5 = arith.constant 0 : index
    %9 = vector.load %arg2[%c0_3, %c0_4, %c0_5] : memref<24x12x128xf32, #tpu.memory_space<vmem>>, vector<24x12x128xf32>
    tpu.vector_store %arg2[%c0_3, %c0_4, %c0_5], %8 {strides = array<i32>} : memref<24x12x128xf32, #tpu.memory_space<vmem>>, vector<24x12x128xf32>,
    return
  }
  func.func @transform_0(%arg0: i32) -> (i32, i32, i32, i32) {
    %c0_i32 = arith.constant 0 : i32
    %c0_i32_0 = arith.constant 0 : i32
    %c0_i32_1 = arith.constant 0 : i32
    %c0_i32_2 = arith.constant 0 : i32
    return %arg0, %c0_i32, %c0_i32_0, %c0_i32_1 : i32, i32, i32, i32
  }
  func.func @transform_1(%arg0: i32) -> (i32, i32, i32) {
    %c0_i32 = arith.constant 0 : i32
    %c0_i32_0 = arith.constant 0 : i32
    %c0_i32_1 = arith.constant 0 : i32
    return %arg0, %c0_i32, %c0_i32_0 : i32, i32, i32
  }
}

module attributes {stable_mosaic.version = 11 : i64} {
  func.func @_dense_kernel(%arg0: i32, %arg1: memref<128x3200xf32, #tpu.memory_space<vmem>>, %arg2: memref<3200x128xf32, #tpu.memory_space<vmem>>, %arg3: memref<1x128xf32, #tpu.memory_space<vmem>>, %arg4: memref<128x128xf32, #tpu.memory_space<vmem>>) attributes {dimension_semantics = [#tpu.dimension_semantics<parallel>], iteration_bounds = array<i64: 1>, scalar_prefetch = 0 : i64, scratch_operands = 0 : i64, tpu.core_type = #tpu.core_type<tc>, window_params = [{transform_indices = @transform_0, window_bounds = array<i64: 128, 3200>}, {pipeline_mode = #tpu.pipeline_mode<synchronous>, transform_indices = @transform_1, window_bounds = array<i64: 3200, 128>}, {pipeline_mode = #tpu.pipeline_mode<synchronous>, transform_indices = @transform_2, window_bounds = array<i64: 1, 128>}, {transform_indices = @transform_3, window_bounds = array<i64: 128, 128>}]} {
    %c0 = arith.constant 0 : index
    %c0_0 = arith.constant 0 : index
    %0 = vector.load %arg1[%c0, %c0_0] : memref<128x3200xf32, #tpu.memory_space<vmem>>, vector<128x3200xf32>
    %c0_1 = arith.constant 0 : index
    %c0_2 = arith.constant 0 : index
    %1 = vector.load %arg2[%c0_1, %c0_2] : memref<3200x128xf32, #tpu.memory_space<vmem>>, vector<3200x128xf32>
    %cst = arith.constant dense<0.000000e+00> : vector<128x128xf32>
    %2 = tpu.matmul %0, %1, %cst {dimension_numbers = #tpu.dot_dimension_numbers<[1], [0], [0], [1], [0, 0, 1, 1], [], []>} : vector<128x3200xf32>, vector<3200x128xf32>, vector<128x128xf32> -> vector<128x128xf32>
    %c0_3 = arith.constant 0 : index
    %c0_4 = arith.constant 0 : index
    %3 = vector.load %arg3[%c0_3, %c0_4] : memref<1x128xf32, #tpu.memory_space<vmem>>, vector<1x128xf32>
    %4 = vector.broadcast %3 : vector<1x128xf32> to vector<128x128xf32>
    %5 = arith.addf %2, %4 : vector<128x128xf32>
    %cst_5 = arith.constant 0.000000e+00 : f32
    %6 = vector.broadcast %cst_5 : f32 to vector<128x128xf32>
    %7 = arith.maximumf %5, %6 : vector<128x128xf32>
    %c0_6 = arith.constant 0 : index
    %c0_7 = arith.constant 0 : index
    %8 = vector.load %arg4[%c0_6, %c0_7] : memref<128x128xf32, #tpu.memory_space<vmem>>, vector<128x128xf32>
    tpu.vector_store %arg4[%c0_6, %c0_7], %7 {strides = array<i32>} : memref<128x128xf32, #tpu.memory_space<vmem>>, vector<128x128xf32>,
    return
  }
  func.func @transform_0(%arg0: i32) -> (i32, i32) {
    %c0_i32 = arith.constant 0 : i32
    %c0_i32_0 = arith.constant 0 : i32
    return %arg0, %c0_i32 : i32, i32
  }
  func.func @transform_1(%arg0: i32) -> (i32, i32) {
    %c0_i32 = arith.constant 0 : i32
    %c0_i32_0 = arith.constant 0 : i32
    %c0_i32_1 = arith.constant 0 : i32
    return %c0_i32, %c0_i32_0 : i32, i32
  }
  func.func @transform_2(%arg0: i32) -> (i32, i32) {
    %c0_i32 = arith.constant 0 : i32
    %c0_i32_0 = arith.constant 0 : i32
    %c0_i32_1 = arith.constant 0 : i32
    return %c0_i32, %c0_i32_0 : i32, i32
  }
  func.func @transform_3(%arg0: i32) -> (i32, i32) {
    %c0_i32 = arith.constant 0 : i32
    %c0_i32_0 = arith.constant 0 : i32
    return %arg0, %c0_i32 : i32, i32
  }
}

module attributes {stable_mosaic.version = 11 : i64} {
  func.func @_dense_kernel(%arg0: i32, %arg1: memref<8x2048xf32, #tpu.memory_space<vmem>>, %arg2: memref<2048x512xf32, #tpu.memory_space<vmem>>, %arg3: memref<1x512xf32, #tpu.memory_space<vmem>>, %arg4: memref<8x512xf32, #tpu.memory_space<vmem>>) attributes {dimension_semantics = [#tpu.dimension_semantics<parallel>], iteration_bounds = array<i64: 1>, scalar_prefetch = 0 : i64, scratch_operands = 0 : i64, tpu.core_type = #tpu.core_type<tc>, window_params = [{transform_indices = @transform_0, window_bounds = array<i64: 8, 2048>}, {pipeline_mode = #tpu.pipeline_mode<synchronous>, transform_indices = @transform_1, window_bounds = array<i64: 2048, 512>}, {pipeline_mode = #tpu.pipeline_mode<synchronous>, transform_indices = @transform_2, window_bounds = array<i64: 1, 512>}, {transform_indices = @transform_3, window_bounds = array<i64: 8, 512>}]} {
    %c0 = arith.constant 0 : index
    %c0_0 = arith.constant 0 : index
    %0 = vector.load %arg1[%c0, %c0_0] : memref<8x2048xf32, #tpu.memory_space<vmem>>, vector<8x2048xf32>
    %c0_1 = arith.constant 0 : index
    %c0_2 = arith.constant 0 : index
    %1 = vector.load %arg2[%c0_1, %c0_2] : memref<2048x512xf32, #tpu.memory_space<vmem>>, vector<2048x512xf32>
    %cst = arith.constant dense<0.000000e+00> : vector<8x512xf32>
    %2 = tpu.matmul %0, %1, %cst {dimension_numbers = #tpu.dot_dimension_numbers<[1], [0], [0], [1], [0, 0, 1, 1], [], []>} : vector<8x2048xf32>, vector<2048x512xf32>, vector<8x512xf32> -> vector<8x512xf32>
    %c0_3 = arith.constant 0 : index
    %c0_4 = arith.constant 0 : index
    %3 = vector.load %arg3[%c0_3, %c0_4] : memref<1x512xf32, #tpu.memory_space<vmem>>, vector<1x512xf32>
    %4 = vector.broadcast %3 : vector<1x512xf32> to vector<8x512xf32>
    %5 = arith.addf %2, %4 : vector<8x512xf32>
    %cst_5 = arith.constant 0.000000e+00 : f32
    %6 = vector.broadcast %cst_5 : f32 to vector<8x512xf32>
    %7 = arith.maximumf %5, %6 : vector<8x512xf32>
    %c0_6 = arith.constant 0 : index
    %c0_7 = arith.constant 0 : index
    %8 = vector.load %arg4[%c0_6, %c0_7] : memref<8x512xf32, #tpu.memory_space<vmem>>, vector<8x512xf32>
    tpu.vector_store %arg4[%c0_6, %c0_7], %7 {strides = array<i32>} : memref<8x512xf32, #tpu.memory_space<vmem>>, vector<8x512xf32>,
    return
  }
  func.func @transform_0(%arg0: i32) -> (i32, i32) {
    %c0_i32 = arith.constant 0 : i32
    %c0_i32_0 = arith.constant 0 : i32
    return %arg0, %c0_i32 : i32, i32
  }
  func.func @transform_1(%arg0: i32) -> (i32, i32) {
    %c0_i32 = arith.constant 0 : i32
    %c0_i32_0 = arith.constant 0 : i32
    %c0_i32_1 = arith.constant 0 : i32
    return %c0_i32, %c0_i32_0 : i32, i32
  }
  func.func @transform_2(%arg0: i32) -> (i32, i32) {
    %c0_i32 = arith.constant 0 : i32
    %c0_i32_0 = arith.constant 0 : i32
    %c0_i32_1 = arith.constant 0 : i32
    return %c0_i32, %c0_i32_0 : i32, i32
  }
  func.func @transform_3(%arg0: i32) -> (i32, i32) {
    %c0_i32 = arith.constant 0 : i32
    %c0_i32_0 = arith.constant 0 : i32
    return %arg0, %c0_i32 : i32, i32
  }
}

module attributes {stable_mosaic.version = 11 : i64} {
  func.func @_pool_kernel(%arg0: i32, %arg1: memref<8x2x4x256xf32, #tpu.memory_space<vmem>>, %arg2: memref<8x4x128xf32, #tpu.memory_space<vmem>>) attributes {dimension_semantics = [#tpu.dimension_semantics<parallel>], iteration_bounds = array<i64: 1>, scalar_prefetch = 0 : i64, scratch_operands = 0 : i64, tpu.core_type = #tpu.core_type<tc>, window_params = [{transform_indices = @transform_0, window_bounds = array<i64: 8, 2, 4, 256>}, {transform_indices = @transform_1, window_bounds = array<i64: 8, 4, 128>}]} {
    %c0 = arith.constant 0 : index
    %c0_0 = arith.constant 0 : index
    %c0_1 = arith.constant 0 : index
    %c0_2 = arith.constant 0 : index
    %0 = vector.load %arg1[%c0, %c0_0, %c0_1, %c0_2] : memref<8x2x4x256xf32, #tpu.memory_space<vmem>>, vector<8x2x4x256xf32>
    %1 = vector.extract_strided_slice %0 {offsets = [0, 0, 0, 0], sizes = [8, 1, 4, 256], strides = [1, 1, 1, 1]} : vector<8x2x4x256xf32> to vector<8x1x4x256xf32>
    %2 = vector.shape_cast %1 : vector<8x1x4x256xf32> to vector<8x4x256xf32>
    %3 = vector.extract_strided_slice %0 {offsets = [0, 1, 0, 0], sizes = [8, 1, 4, 256], strides = [1, 1, 1, 1]} : vector<8x2x4x256xf32> to vector<8x1x4x256xf32>
    %4 = vector.shape_cast %3 : vector<8x1x4x256xf32> to vector<8x4x256xf32>
    %5 = arith.maximumf %2, %4 : vector<8x4x256xf32>
    %6 = vector.extract_strided_slice %5 {offsets = [0, 0, 0], sizes = [8, 4, 128], strides = [1, 1, 1]} : vector<8x4x256xf32> to vector<8x4x128xf32>
    %7 = vector.extract_strided_slice %5 {offsets = [0, 0, 128], sizes = [8, 4, 128], strides = [1, 1, 1]} : vector<8x4x256xf32> to vector<8x4x128xf32>
    %8 = arith.maximumf %6, %7 : vector<8x4x128xf32>
    %c0_3 = arith.constant 0 : index
    %c0_4 = arith.constant 0 : index
    %c0_5 = arith.constant 0 : index
    %9 = vector.load %arg2[%c0_3, %c0_4, %c0_5] : memref<8x4x128xf32, #tpu.memory_space<vmem>>, vector<8x4x128xf32>
    tpu.vector_store %arg2[%c0_3, %c0_4, %c0_5], %8 {strides = array<i32>} : memref<8x4x128xf32, #tpu.memory_space<vmem>>, vector<8x4x128xf32>,
    return
  }
  func.func @transform_0(%arg0: i32) -> (i32, i32, i32, i32) {
    %c0_i32 = arith.constant 0 : i32
    %c0_i32_0 = arith.constant 0 : i32
    %c0_i32_1 = arith.constant 0 : i32
    %c0_i32_2 = arith.constant 0 : i32
    return %arg0, %c0_i32, %c0_i32_0, %c0_i32_1 : i32, i32, i32, i32
  }
  func.func @transform_1(%arg0: i32) -> (i32, i32, i32) {
    %c0_i32 = arith.constant 0 : i32
    %c0_i32_0 = arith.constant 0 : i32
    %c0_i32_1 = arith.constant 0 : i32
    return %arg0, %c0_i32, %c0_i32_0 : i32, i32, i32
  }
}

module attributes {stable_mosaic.version = 11 : i64} {
  func.func @_dense_kernel(%arg0: i32, %arg1: memref<8x512xf32, #tpu.memory_space<vmem>>, %arg2: memref<512x128xf32, #tpu.memory_space<vmem>>, %arg3: memref<1x128xf32, #tpu.memory_space<vmem>>, %arg4: memref<8x128xf32, #tpu.memory_space<vmem>>) attributes {dimension_semantics = [#tpu.dimension_semantics<parallel>], iteration_bounds = array<i64: 1>, scalar_prefetch = 0 : i64, scratch_operands = 0 : i64, tpu.core_type = #tpu.core_type<tc>, window_params = [{transform_indices = @transform_0, window_bounds = array<i64: 8, 512>}, {pipeline_mode = #tpu.pipeline_mode<synchronous>, transform_indices = @transform_1, window_bounds = array<i64: 512, 128>}, {pipeline_mode = #tpu.pipeline_mode<synchronous>, transform_indices = @transform_2, window_bounds = array<i64: 1, 128>}, {transform_indices = @transform_3, window_bounds = array<i64: 8, 128>}]} {
    %c0 = arith.constant 0 : index
    %c0_0 = arith.constant 0 : index
    %0 = vector.load %arg1[%c0, %c0_0] : memref<8x512xf32, #tpu.memory_space<vmem>>, vector<8x512xf32>
    %c0_1 = arith.constant 0 : index
    %c0_2 = arith.constant 0 : index
    %1 = vector.load %arg2[%c0_1, %c0_2] : memref<512x128xf32, #tpu.memory_space<vmem>>, vector<512x128xf32>
    %cst = arith.constant dense<0.000000e+00> : vector<8x128xf32>
    %2 = tpu.matmul %0, %1, %cst {dimension_numbers = #tpu.dot_dimension_numbers<[1], [0], [0], [1], [0, 0, 1, 1], [], []>} : vector<8x512xf32>, vector<512x128xf32>, vector<8x128xf32> -> vector<8x128xf32>
    %c0_3 = arith.constant 0 : index
    %c0_4 = arith.constant 0 : index
    %3 = vector.load %arg3[%c0_3, %c0_4] : memref<1x128xf32, #tpu.memory_space<vmem>>, vector<1x128xf32>
    %4 = vector.broadcast %3 : vector<1x128xf32> to vector<8x128xf32>
    %5 = arith.addf %2, %4 : vector<8x128xf32>
    %c0_5 = arith.constant 0 : index
    %c0_6 = arith.constant 0 : index
    %6 = vector.load %arg4[%c0_5, %c0_6] : memref<8x128xf32, #tpu.memory_space<vmem>>, vector<8x128xf32>
    tpu.vector_store %arg4[%c0_5, %c0_6], %5 {strides = array<i32>} : memref<8x128xf32, #tpu.memory_space<vmem>>, vector<8x128xf32>,
    return
  }
  func.func @transform_0(%arg0: i32) -> (i32, i32) {
    %c0_i32 = arith.constant 0 : i32
    %c0_i32_0 = arith.constant 0 : i32
    return %arg0, %c0_i32 : i32, i32
  }
  func.func @transform_1(%arg0: i32) -> (i32, i32) {
    %c0_i32 = arith.constant 0 : i32
    %c0_i32_0 = arith.constant 0 : i32
    %c0_i32_1 = arith.constant 0 : i32
    return %c0_i32, %c0_i32_0 : i32, i32
  }
  func.func @transform_2(%arg0: i32) -> (i32, i32) {
    %c0_i32 = arith.constant 0 : i32
    %c0_i32_0 = arith.constant 0 : i32
    %c0_i32_1 = arith.constant 0 : i32
    return %c0_i32, %c0_i32_0 : i32, i32
  }
  func.func @transform_3(%arg0: i32) -> (i32, i32) {
    %c0_i32 = arith.constant 0 : i32
    %c0_i32_0 = arith.constant 0 : i32
    return %arg0, %c0_i32 : i32, i32
  }
}

</mosaic_0001>

<llo_original>
// kernel: lenet5_forward.6
$region0: #{lenet5_forward.6}
  #allocation0 [shape = 'u32[]', space=smem, size = 0x4, offset = 0x4, fixed_abs, tag = 'smem constant byte address 0x4 - core index']
  #allocation1 [shape = 'u32[72,128]{1,0:T(1,128)}', space=vmem, size = 0x9000, scoped, tag = 'internal scratch']
  %s0 = inlined_call_operand.vmem [shape: f32[1280,128], index: 0, kind: input, shape index: {}]
  %s1 = inlined_call_operand.vmem [shape: f32[128,128], index: 1, kind: input, shape index: {}]
  %s2 = inlined_call_operand.vmem [shape: f32[1,128], index: 2, kind: input, shape index: {}]
  %s3 = inlined_call_operand.vmem [shape: f32[1280,128], index: 3, kind: output, shape index: {}]
  %s4 = sld [smem:[#allocation0]]
  $region45: #{lenet5_forward.6} parent=0
    _
  %s6 = ssub.s32 1, %s4
  %s7 = scalar_select 0, %s6, %s4
  loop: start=0, step=1, limit=7
  $region2: #{lenet5_forward.6} parent=0 // loop_pre_header
    _
  $region3: #{lenet5_forward.6} parent=0 // loop_header
    %s9 = sphi 0, %s13
    %p10 = scmp.ge.s32.totalorder %s9, 7
    %s19 = sphi 0, %s21
    %s22 = sphi 0, %s19
    %s23 = sphi 0, %s22
    %s39 = sphi 0, %s23
    %s43 = sphi 0, %s43
    %s45 = sphi 0, %s43
    %s46 = sphi 0, %s45
    %s60 = sphi 0, %s46
    %s64 = sphi 0, %s64
    %s66 = sphi 0, %s64
    %s67 = sphi 0, %s66
    %s81 = sphi 0, %s67
    %s87 = sphi 0, %s89
    %s90 = sphi 0, %s87
    %s91 = sphi 0, %s90
    %s107 = sphi 0, %s91
  $region4: #{lenet5_forward.6} parent=0 // loop_header_branch
    %12 = sbr.rel (%p10) target = $region8
  $region5: #{lenet5_forward.6} parent=0 // loop_body
    %s14 = ssub.s32 %s9, 1
    %s15 = ssub.s32 %s9, 2
    %s16 = sadd.s32 %s9, 1
    %s17 = ssub.s32 %s9, %s16
    %p18 = scmp.eq.s32.totalorder %s17, 0
    %s20 = sadd.s32 %s19, 1
    %s21 = scalar_select %p18, %s19, %s20
    %p24 = pneg %p18
    %p25 = scmp.eq.s32.totalorder %s9, 4
    %p26 = por %p24, %p25
    %p27 = scmp.ne.s32.totalorder %s19, %s22
    %p28 = scmp.eq.s32.totalorder %s9, 0
    %p29 = por %p27, %p28
    %p30 = scmp.ne.s32.totalorder %s19, %s22
    %p31 = scmp.eq.s32.totalorder %s14, 4
    %p32 = por %p30, %p31
    %p33 = scmp.ne.s32.totalorder %s22, %s23
    %p34 = scmp.eq.s32.totalorder %s14, 0
    %p35 = por %p33, %p34
    %p36 = scmp.ne.s32.totalorder %s22, %s23
    %p37 = scmp.eq.s32.totalorder %s15, 4
    %p38 = por %p36, %p37
    %p40 = scmp.ne.s32.totalorder %s23, %s39
    %p41 = scmp.eq.s32.totalorder %s15, 0
    %p42 = por %p40, %p41
    %s44 = sadd.s32 %s43, 1
    %p47 = scmp.eq.s32.totalorder %s9, 4
    %p48 = scmp.ne.s32.totalorder %s43, %s45
    %p49 = scmp.eq.s32.totalorder %s9, 0
    %p50 = por %p48, %p49
    %p51 = scmp.ne.s32.totalorder %s43, %s45
    %p52 = scmp.eq.s32.totalorder %s14, 4
    %p53 = por %p51, %p52
    %p54 = scmp.ne.s32.totalorder %s45, %s46
    %p55 = scmp.eq.s32.totalorder %s14, 0
    %p56 = por %p54, %p55
    %p57 = scmp.ne.s32.totalorder %s45, %s46
    %p58 = scmp.eq.s32.totalorder %s15, 4
    %p59 = por %p57, %p58
    %p61 = scmp.ne.s32.totalorder %s46, %s60
    %p62 = scmp.eq.s32.totalorder %s15, 0
    %p63 = por %p61, %p62
    %s65 = sadd.s32 %s64, 1
    %p68 = scmp.eq.s32.totalorder %s9, 4
    %p69 = scmp.ne.s32.totalorder %s64, %s66
    %p70 = scmp.eq.s32.totalorder %s9, 0
    %p71 = por %p69, %p70
    %p72 = scmp.ne.s32.totalorder %s64, %s66
    %p73 = scmp.eq.s32.totalorder %s14, 4
    %p74 = por %p72, %p73
    %p75 = scmp.ne.s32.totalorder %s66, %s67
    %p76 = scmp.eq.s32.totalorder %s14, 0
    %p77 = por %p75, %p76
    %p78 = scmp.ne.s32.totalorder %s66, %s67
    %p79 = scmp.eq.s32.totalorder %s15, 4
    %p80 = por %p78, %p79
    %p82 = scmp.ne.s32.totalorder %s67, %s81
    %p83 = scmp.eq.s32.totalorder %s15, 0
    %p84 = por %p82, %p83
    %s85 = ssub.s32 %s9, %s16
    %p86 = scmp.eq.s32.totalorder %s85, 0
    %s88 = sadd.s32 %s87, 1
    %s89 = scalar_select %p86, %s87, %s88
    %p92 = pneg %p86
    %p93 = scmp.eq.s32.totalorder %s9, 4
    %p94 = por %p92, %p93
    %p95 = scmp.ne.s32.totalorder %s87, %s90
    %p96 = scmp.eq.s32.totalorder %s9, 0
    %p97 = por %p95, %p96
    %p98 = scmp.ne.s32.totalorder %s87, %s90
    %p99 = scmp.eq.s32.totalorder %s14, 4
    %p100 = por %p98, %p99
    %p101 = scmp.ne.s32.totalorder %s90, %s91
    %p102 = scmp.eq.s32.totalorder %s14, 0
    %p103 = por %p101, %p102
    %p104 = scmp.ne.s32.totalorder %s90, %s91
    %p105 = scmp.eq.s32.totalorder %s15, 4
    %p106 = por %p104, %p105
    %p108 = scmp.ne.s32.totalorder %s91, %s107
    %p109 = scmp.eq.s32.totalorder %s15, 0
    %p110 = por %p108, %p109
    %p111 = scmp.le.s32.totalorder 1, %s9
    %p112 = scmp.lt.s32.totalorder %s9, 6
    %p113 = pnand %p111, %p112
    %p114 = pneg %p113
    // Predicated region
    $region9: #{lenet5_forward.6} parent=5 // pred_check
      _
    $region10: #{lenet5_forward.6} parent=5 // pred_check_branch
      %116 = sbr.rel (%p113) target = $region12
    $region11: #{lenet5_forward.6} parent=5 // pred_region
      %s117 = ssub.s32 %s9, 1
      // Predicated region
      $region13: #{lenet5_forward.6} parent=11 // pred_check
        %p118 = pneg %p56
      $region14: #{lenet5_forward.6} parent=11 // pred_check_branch
        %120 = sbr.rel (%p118) target = $region16
      $region15: #{lenet5_forward.6} parent=11 // pred_region
        _
      $region16: #{lenet5_forward.6} parent=11 // pred_fallthru
        _
      // Predicated region
      $region17: #{lenet5_forward.6} parent=11 // pred_check
        %p121 = pneg %p77
      $region18: #{lenet5_forward.6} parent=11 // pred_check_branch
        %123 = sbr.rel (%p121) target = $region20
      $region19: #{lenet5_forward.6} parent=11 // pred_region
        _
      $region20: #{lenet5_forward.6} parent=11 // pred_fallthru
        _
    $region12: #{lenet5_forward.6} parent=5 // pred_fallthru
      _
    %p124 = scmp.lt.s32.totalorder %s9, 5
    // Predicated region
    $region21: #{lenet5_forward.6} parent=5 // pred_check
      %p125 = pneg %p124
    $region22: #{lenet5_forward.6} parent=5 // pred_check_branch
      %127 = sbr.rel (%p125) target = $region24
    $region23: #{lenet5_forward.6} parent=5 // pred_region
      // Predicated region
      $region25: #{lenet5_forward.6} parent=23 // pred_check
        %p128 = pneg %p29
      $region26: #{lenet5_forward.6} parent=23 // pred_check_branch
        %130 = sbr.rel (%p128) target = $region28
      $region27: #{lenet5_forward.6} parent=23 // pred_region
        %s131 = smul.u32 32, %s9
        %p132 = scmp.lt.s32.totalorder %s131, 159
        %s133 = scalar_select %p132, %s131, 159
        %s134 = smul.addr %s133, 8
        %s135 = scalar_lea.vmem %s0, %s134
        %s136 = smul.u32 32, %s9
      $region28: #{lenet5_forward.6} parent=23 // pred_fallthru
        _
    $region24: #{lenet5_forward.6} parent=5 // pred_fallthru
      _
    %p137 = scmp.le.s32.totalorder 1, %s9
    %p138 = scmp.lt.s32.totalorder %s9, 6
    %p139 = pnand %p137, %p138
    %p140 = pneg %p139
    // Predicated region
    $region29: #{lenet5_forward.6} parent=5 // pred_check
      _
    $region30: #{lenet5_forward.6} parent=5 // pred_check_branch
      %142 = sbr.rel (%p139) target = $region32
    $region31: #{lenet5_forward.6} parent=5 // pred_region
      %s143 = ssub.s32 %s9, 1
      %s144 = smul.u32 32, %s14
      %p145 = scmp.lt.s32.totalorder %s144, 159
      %s146 = scalar_select %p145, %s144, 159
      %s147 = smul.addr %s146, 8
      %s148 = scalar_lea.vmem %s0, %s147
      %p149 = pneg %p35
      %p150 = pneg %p32
      %p151 = pneg %p56
      %p152 = pneg %p53
      %p153 = pneg %p77
      %p154 = pneg %p74
      %p155 = pneg %p103
      %p156 = pneg %p100
      %s157 = smul.u32 32, %s14
      %p158 = scmp.lt.s32.totalorder %s157, 159
      %s159 = scalar_select %p158, %s157, 159
      %s160 = smul.addr %s159, 8
      %s161 = scalar_lea.vmem %s3, %s160
      %s162 = smul.u32 32, %s14
      %p163 = scmp.lt.s32.totalorder %s162, 159
      %s164 = scalar_select %p163, %s162, 159
      %s165 = smul.addr %s164, 8
      %s166 = scalar_lea.vmem %s0, %s165
      %s167 = smul.u32 32, %s14
      %s168 = smul.u32 32, %s14
      %p169 = scmp.lt.s32.totalorder %s168, 159
      %s170 = scalar_select %p169, %s168, 159
      %s171 = smul.addr %s170, 8
      %s172 = scalar_lea.vmem %s3, %s171
      %s173 = smul.u32 32, %s14
      %v174 = vld [vmem:[%s166] sm:$0xff]
      %v175 = vld [vmem:[%s166 + $0x8] sm:$0xff]
      %v176 = vld [vmem:[%s166 + $0x10] sm:$0xff]
      %v177 = vld [vmem:[%s166 + $0x18] sm:$0xff]
      %v178 = vld [vmem:[%s166 + $0x20] sm:$0xff]
      %v179 = vld [vmem:[%s166 + $0x28] sm:$0xff]
      %v180 = vld [vmem:[%s166 + $0x30] sm:$0xff]
      %v181 = vld [vmem:[%s166 + $0x38] sm:$0xff]
      %v182 = vld [vmem:[%s166 + $0x40] sm:$0xff]
      %v183 = vld [vmem:[%s166 + $0x48] sm:$0xff]
      %v184 = vld [vmem:[%s166 + $0x50] sm:$0xff]
      %v185 = vld [vmem:[%s166 + $0x58] sm:$0xff]
      %v186 = vld [vmem:[%s166 + $0x60] sm:$0xff]
      %v187 = vld [vmem:[%s166 + $0x68] sm:$0xff]
      %v188 = vld [vmem:[%s166 + $0x70] sm:$0xff]
      %v189 = vld [vmem:[%s166 + $0x78] sm:$0xff]
      %v190 = vld [vmem:[%s166 + $0x80] sm:$0xff]
      %v191 = vld [vmem:[%s166 + $0x88] sm:$0xff]
      %v192 = vld [vmem:[%s166 + $0x90] sm:$0xff]
      %v193 = vld [vmem:[%s166 + $0x98] sm:$0xff]
      %v194 = vld [vmem:[%s166 + $0xa0] sm:$0xff]
      %v195 = vld [vmem:[%s166 + $0xa8] sm:$0xff]
      %v196 = vld [vmem:[%s166 + $0xb0] sm:$0xff]
      %v197 = vld [vmem:[%s166 + $0xb8] sm:$0xff]
      %v198 = vld [vmem:[%s166 + $0xc0] sm:$0xff]
      %v199 = vld [vmem:[%s166 + $0xc8] sm:$0xff]
      %v200 = vld [vmem:[%s166 + $0xd0] sm:$0xff]
      %v201 = vld [vmem:[%s166 + $0xd8] sm:$0xff]
      %v202 = vld [vmem:[%s166 + $0xe0] sm:$0xff]
      %v203 = vld [vmem:[%s166 + $0xe8] sm:$0xff]
      %v204 = vld [vmem:[%s166 + $0xf0] sm:$0xff]
      %v205 = vld [vmem:[%s166 + $0xf8] sm:$0xff]
      %v206 = vld [vmem:[%s1] sm:$0xff]
      %v207 = vld [vmem:[%s1 + $0x8] sm:$0xff]
      %v208 = vld [vmem:[%s1 + $0x10] sm:$0xff]
      %v209 = vld [vmem:[%s1 + $0x18] sm:$0xff]
      %v210 = vld [vmem:[%s1 + $0x20] sm:$0xff]
      %v211 = vld [vmem:[%s1 + $0x28] sm:$0xff]
      %v212 = vld [vmem:[%s1 + $0x30] sm:$0xff]
      %v213 = vld [vmem:[%s1 + $0x38] sm:$0xff]
      %v214 = vld [vmem:[%s1 + $0x40] sm:$0xff]
      %v215 = vld [vmem:[%s1 + $0x48] sm:$0xff]
      %v216 = vld [vmem:[%s1 + $0x50] sm:$0xff]
      %v217 = vld [vmem:[%s1 + $0x58] sm:$0xff]
      %v218 = vld [vmem:[%s1 + $0x60] sm:$0xff]
      %v219 = vld [vmem:[%s1 + $0x68] sm:$0xff]
      %v220 = vld [vmem:[%s1 + $0x70] sm:$0xff]
      %v221 = vld [vmem:[%s1 + $0x78] sm:$0xff]
      %v222 = vld [vmem:[%s2] sm:$0x1]
      %v224 = vperm.slane %v222, 0
      %226 = vmatpush.msra.mxu0 %v221
      %227 = vmatpush.msra.mxu0 %v220
      %228 = vmatpush.msra.mxu0 %v219
      %229 = vmatpush.msra.mxu0 %v218
      %230 = vmatpush.msra.mxu0 %v217
      %231 = vmatpush.msra.mxu0 %v216
      %232 = vmatpush.msra.mxu0 %v215
      %233 = vmatpush.msra.mxu0 %v214
      %234 = vmatpush.msra.mxu0 %v213
      %235 = vmatpush.msra.mxu0 %v212
      %236 = vmatpush.msra.mxu0 %v211
      %237 = vmatpush.msra.mxu0 %v210
      %238 = vmatpush.msra.mxu0 %v209
      %239 = vmatpush.msra.mxu0 %v208
      %240 = vmatpush.msra.mxu0 %v207
      %241 = vmatpush.msra.mxu0 %v206
      %242 = vmatmul.f32.gmra.mxu0 %v174
      %v243 = vpop.f32.mrf.mxu0
      %v244 = vadd.f32 %v224, %v243
      %245 = vmatmul.f32.gmra.mxu0 %v175
      %v246 = vpop.f32.mrf.mxu0
      %v247 = vadd.f32 %v224, %v246
      %248 = vmatmul.f32.gmra.mxu0 %v176
      %v249 = vpop.f32.mrf.mxu0
      %v250 = vadd.f32 %v224, %v249
      %251 = vmatmul.f32.gmra.mxu0 %v177
      %v252 = vpop.f32.mrf.mxu0
      %v253 = vadd.f32 %v224, %v252
      %254 = vmatmul.f32.gmra.mxu0 %v178
      %v255 = vpop.f32.mrf.mxu0
      %v256 = vadd.f32 %v224, %v255
      %257 = vmatmul.f32.gmra.mxu0 %v179
      %v258 = vpop.f32.mrf.mxu0
      %v259 = vadd.f32 %v224, %v258
      %260 = vmatmul.f32.gmra.mxu0 %v180
      %v261 = vpop.f32.mrf.mxu0
      %v262 = vadd.f32 %v224, %v261
      %263 = vmatmul.f32.gmra.mxu0 %v181
      %v264 = vpop.f32.mrf.mxu0
      %v265 = vadd.f32 %v224, %v264
      %266 = vmatmul.f32.gmra.mxu0 %v182
      %v267 = vpop.f32.mrf.mxu0
      %v268 = vadd.f32 %v224, %v267
      %269 = vmatmul.f32.gmra.mxu0 %v183
      %v270 = vpop.f32.mrf.mxu0
      %v271 = vadd.f32 %v224, %v270
      %272 = vmatmul.f32.gmra.mxu0 %v184
      %v273 = vpop.f32.mrf.mxu0
      %v274 = vadd.f32 %v224, %v273
      %275 = vmatmul.f32.gmra.mxu0 %v185
      %v276 = vpop.f32.mrf.mxu0
      %v277 = vadd.f32 %v224, %v276
      %278 = vmatmul.f32.gmra.mxu0 %v186
      %v279 = vpop.f32.mrf.mxu0
      %v280 = vadd.f32 %v224, %v279
      %281 = vmatmul.f32.gmra.mxu0 %v187
      %v282 = vpop.f32.mrf.mxu0
      %v283 = vadd.f32 %v224, %v282
      %284 = vmatmul.f32.gmra.mxu0 %v188
      %v285 = vpop.f32.mrf.mxu0
      %v286 = vadd.f32 %v224, %v285
      %287 = vmatmul.f32.gmra.mxu0 %v189
      %v288 = vpop.f32.mrf.mxu0
      %v289 = vadd.f32 %v224, %v288
      %290 = vmatmul.f32.gmra.mxu0 %v190
      %v291 = vpop.f32.mrf.mxu0
      %v292 = vadd.f32 %v224, %v291
      %293 = vmatmul.f32.gmra.mxu0 %v191
      %v294 = vpop.f32.mrf.mxu0
      %v295 = vadd.f32 %v224, %v294
      %296 = vmatmul.f32.gmra.mxu0 %v192
      %v297 = vpop.f32.mrf.mxu0
      %v298 = vadd.f32 %v224, %v297
      %299 = vmatmul.f32.gmra.mxu0 %v193
      %v300 = vpop.f32.mrf.mxu0
      %v301 = vadd.f32 %v224, %v300
      %302 = vmatmul.f32.gmra.mxu0 %v194
      %v303 = vpop.f32.mrf.mxu0
      %v304 = vadd.f32 %v224, %v303
      %305 = vmatmul.f32.gmra.mxu0 %v195
      %v306 = vpop.f32.mrf.mxu0
      %v307 = vadd.f32 %v224, %v306
      %308 = vmatmul.f32.gmra.mxu0 %v196
      %v309 = vpop.f32.mrf.mxu0
      %v310 = vadd.f32 %v224, %v309
      %311 = vmatmul.f32.gmra.mxu0 %v197
      %v312 = vpop.f32.mrf.mxu0
      %v313 = vadd.f32 %v224, %v312
      %314 = vmatmul.f32.gmra.mxu0 %v198
      %v315 = vpop.f32.mrf.mxu0
      %v316 = vadd.f32 %v224, %v315
      %317 = vmatmul.f32.gmra.mxu0 %v199
      %v318 = vpop.f32.mrf.mxu0
      %v319 = vadd.f32 %v224, %v318
      %320 = vmatmul.f32.gmra.mxu0 %v200
      %v321 = vpop.f32.mrf.mxu0
      %v322 = vadd.f32 %v224, %v321
      %323 = vmatmul.f32.gmra.mxu0 %v201
      %v324 = vpop.f32.mrf.mxu0
      %v325 = vadd.f32 %v224, %v324
      %326 = vmatmul.f32.gmra.mxu0 %v202
      %v327 = vpop.f32.mrf.mxu0
      %v328 = vadd.f32 %v224, %v327
      %329 = vmatmul.f32.gmra.mxu0 %v203
      %v330 = vpop.f32.mrf.mxu0
      %v331 = vadd.f32 %v224, %v330
      %332 = vmatmul.f32.gmra.mxu0 %v204
      %v333 = vpop.f32.mrf.mxu0
      %v334 = vadd.f32 %v224, %v333
      %335 = vmatmul.f32.gmra.mxu0 %v205
      %v336 = vpop.f32.mrf.mxu0
      %v337 = vadd.f32 %v224, %v336
      %338 = vdwg.mxu0
      %v339 = vmax.f32 %v244, 0.0
      %v340 = vmax.f32 %v247, 0.0
      %v341 = vmax.f32 %v250, 0.0
      %v342 = vmax.f32 %v253, 0.0
      %v343 = vmax.f32 %v256, 0.0
      %v344 = vmax.f32 %v259, 0.0
      %v345 = vmax.f32 %v262, 0.0
      %v346 = vmax.f32 %v265, 0.0
      %v347 = vmax.f32 %v268, 0.0
      %v348 = vmax.f32 %v271, 0.0
      %v349 = vmax.f32 %v274, 0.0
      %v350 = vmax.f32 %v277, 0.0
      %v351 = vmax.f32 %v280, 0.0
      %v352 = vmax.f32 %v283, 0.0
      %v353 = vmax.f32 %v286, 0.0
      %v354 = vmax.f32 %v289, 0.0
      %v355 = vmax.f32 %v292, 0.0
      %v356 = vmax.f32 %v295, 0.0
      %v357 = vmax.f32 %v298, 0.0
      %v358 = vmax.f32 %v301, 0.0
      %v359 = vmax.f32 %v304, 0.0
      %v360 = vmax.f32 %v307, 0.0
      %v361 = vmax.f32 %v310, 0.0
      %v362 = vmax.f32 %v313, 0.0
      %v363 = vmax.f32 %v316, 0.0
      %v364 = vmax.f32 %v319, 0.0
      %v365 = vmax.f32 %v322, 0.0
      %v366 = vmax.f32 %v325, 0.0
      %v367 = vmax.f32 %v328, 0.0
      %v368 = vmax.f32 %v331, 0.0
      %v369 = vmax.f32 %v334, 0.0
      %v370 = vmax.f32 %v337, 0.0
      %371 = vst [vmem:[%s172] sm:$0xff] %v339
      %372 = vst [vmem:[%s172 + $0x8] sm:$0xff] %v340
      %373 = vst [vmem:[%s172 + $0x10] sm:$0xff] %v341
      %374 = vst [vmem:[%s172 + $0x18] sm:$0xff] %v342
      %375 = vst [vmem:[%s172 + $0x20] sm:$0xff] %v343
      %376 = vst [vmem:[%s172 + $0x28] sm:$0xff] %v344
      %377 = vst [vmem:[%s172 + $0x30] sm:$0xff] %v345
      %378 = vst [vmem:[%s172 + $0x38] sm:$0xff] %v346
      %379 = vst [vmem:[%s172 + $0x40] sm:$0xff] %v347
      %380 = vst [vmem:[%s172 + $0x48] sm:$0xff] %v348
      %381 = vst [vmem:[%s172 + $0x50] sm:$0xff] %v349
      %382 = vst [vmem:[%s172 + $0x58] sm:$0xff] %v350
      %383 = vst [vmem:[%s172 + $0x60] sm:$0xff] %v351
      %384 = vst [vmem:[%s172 + $0x68] sm:$0xff] %v352
      %385 = vst [vmem:[%s172 + $0x70] sm:$0xff] %v353
      %386 = vst [vmem:[%s172 + $0x78] sm:$0xff] %v354
      %387 = vst [vmem:[%s172 + $0x80] sm:$0xff] %v355
      %388 = vst [vmem:[%s172 + $0x88] sm:$0xff] %v356
      %389 = vst [vmem:[%s172 + $0x90] sm:$0xff] %v357
      %390 = vst [vmem:[%s172 + $0x98] sm:$0xff] %v358
      %391 = vst [vmem:[%s172 + $0xa0] sm:$0xff] %v359
      %392 = vst [vmem:[%s172 + $0xa8] sm:$0xff] %v360
      %393 = vst [vmem:[%s172 + $0xb0] sm:$0xff] %v361
      %394 = vst [vmem:[%s172 + $0xb8] sm:$0xff] %v362
      %395 = vst [vmem:[%s172 + $0xc0] sm:$0xff] %v363
      %396 = vst [vmem:[%s172 + $0xc8] sm:$0xff] %v364
      %397 = vst [vmem:[%s172 + $0xd0] sm:$0xff] %v365
      %398 = vst [vmem:[%s172 + $0xd8] sm:$0xff] %v366
      %399 = vst [vmem:[%s172 + $0xe0] sm:$0xff] %v367
      %400 = vst [vmem:[%s172 + $0xe8] sm:$0xff] %v368
      %401 = vst [vmem:[%s172 + $0xf0] sm:$0xff] %v369
      %402 = vst [vmem:[%s172 + $0xf8] sm:$0xff] %v370
      %s403 = smul.u32 32, %s14
      %p404 = scmp.lt.s32.totalorder %s403, 159
      %s405 = scalar_select %p404, %s403, 159
      %s406 = smul.addr %s405, 8
      %s407 = scalar_lea.vmem %s3, %s406
      // Predicated region
      $region33: #{lenet5_forward.6} parent=31 // pred_check
        %p408 = pneg %p100
      $region34: #{lenet5_forward.6} parent=31 // pred_check_branch
        %410 = sbr.rel (%p408) target = $region36
      $region35: #{lenet5_forward.6} parent=31 // pred_region
        %s411 = smul.u32 32, %s14
      $region36: #{lenet5_forward.6} parent=31 // pred_fallthru
        _
    $region32: #{lenet5_forward.6} parent=5 // pred_fallthru
      _
    %p412 = scmp.le.s32.totalorder 2, %s9
    // Predicated region
    $region37: #{lenet5_forward.6} parent=5 // pred_check
      %p413 = pneg %p412
    $region38: #{lenet5_forward.6} parent=5 // pred_check_branch
      %415 = sbr.rel (%p413) target = $region40
    $region39: #{lenet5_forward.6} parent=5 // pred_region
      %s416 = ssub.s32 %s9, 2
      // Predicated region
      $region41: #{lenet5_forward.6} parent=39 // pred_check
        %p417 = pneg %p106
      $region42: #{lenet5_forward.6} parent=39 // pred_check_branch
        %419 = sbr.rel (%p417) target = $region44
      $region43: #{lenet5_forward.6} parent=39 // pred_region
        %s420 = smul.u32 32, %s15
        %p421 = scmp.lt.s32.totalorder %s420, 159
        %s422 = scalar_select %p421, %s420, 159
        %s423 = smul.addr %s422, 8
        %s424 = scalar_lea.vmem %s3, %s423
      $region44: #{lenet5_forward.6} parent=39 // pred_fallthru
        _
    $region40: #{lenet5_forward.6} parent=5 // pred_fallthru
      _
  $region6: #{lenet5_forward.6} parent=0 // loop_footer
    %s13 = sadd.s32 1, %s9
  $region7: #{lenet5_forward.6} parent=0 // loop_footer_branch
    %8 = sbr.rel target = $region3
  $region8: #{lenet5_forward.6} parent=0 // loop_exit
    _

// kernel: lenet5_forward.7
$region0: #{lenet5_forward.7}
  #allocation0 [shape = 'u32[]', space=smem, size = 0x4, offset = 0x4, fixed_abs, tag = 'smem constant byte address 0x4 - core index']
  #allocation1 [shape = 'u32[72,128]{1,0:T(1,128)}', space=vmem, size = 0x9000, scoped, tag = 'internal scratch']
  %s0 = inlined_call_operand.vmem [shape: f32[24,2,12,256], index: 0, kind: input, shape index: {}]
  %s1 = inlined_call_operand.vmem [shape: f32[24,12,128], index: 1, kind: output, shape index: {}]
  %s2 = sld [smem:[#allocation0]]
  $region14: #{lenet5_forward.7} parent=0
    _
  %s4 = ssub.s32 1, %s2
  %s5 = scalar_select 0, %s4, %s2
  // Predicated region
  $region2: #{lenet5_forward.7} parent=0 // pred_check
    _
  $region3: #{lenet5_forward.7} parent=0 // pred_check_branch
    %7 = sbr.rel (0) target = $region5
  $region4: #{lenet5_forward.7} parent=0 // pred_region
    _
  $region5: #{lenet5_forward.7} parent=0 // pred_fallthru
    _
  %v8 = vld [vmem:[%s0] sm:$0xff]
  %v9 = vld [vmem:[%s0 + $0x8] sm:$0xff]
  %v10 = vld [vmem:[%s0 + $0x10] sm:$0xf]
  %v11 = vld [vmem:[%s0 + $0x18] sm:$0xf]
  %v12 = vld [vmem:[%s0 + $0x20] sm:$0xff]
  %v13 = vld [vmem:[%s0 + $0x28] sm:$0xff]
  %v14 = vld [vmem:[%s0 + $0x30] sm:$0xf]
  %v15 = vld [vmem:[%s0 + $0x38] sm:$0xf]
  %v16 = vld [vmem:[%s0 + $0x40] sm:$0xff]
  %v17 = vld [vmem:[%s0 + $0x48] sm:$0xff]
  %v18 = vld [vmem:[%s0 + $0x50] sm:$0xf]
  %v19 = vld [vmem:[%s0 + $0x58] sm:$0xf]
  %v20 = vld [vmem:[%s0 + $0x60] sm:$0xff]
  %v21 = vld [vmem:[%s0 + $0x68] sm:$0xff]
  %v22 = vld [vmem:[%s0 + $0x70] sm:$0xf]
  %v23 = vld [vmem:[%s0 + $0x78] sm:$0xf]
  %v24 = vld [vmem:[%s0 + $0x80] sm:$0xff]
  %v25 = vld [vmem:[%s0 + $0x88] sm:$0xff]
  %v26 = vld [vmem:[%s0 + $0x90] sm:$0xf]
  %v27 = vld [vmem:[%s0 + $0x98] sm:$0xf]
  %v28 = vld [vmem:[%s0 + $0xa0] sm:$0xff]
  %v29 = vld [vmem:[%s0 + $0xa8] sm:$0xff]
  %v30 = vld [vmem:[%s0 + $0xb0] sm:$0xf]
  %v31 = vld [vmem:[%s0 + $0xb8] sm:$0xf]
  %v32 = vld [vmem:[%s0 + $0xc0] sm:$0xff]
  %v33 = vld [vmem:[%s0 + $0xc8] sm:$0xff]
  %v34 = vld [vmem:[%s0 + $0xd0] sm:$0xf]
  %v35 = vld [vmem:[%s0 + $0xd8] sm:$0xf]
  %v36 = vld [vmem:[%s0 + $0xe0] sm:$0xff]
  %v37 = vld [vmem:[%s0 + $0xe8] sm:$0xff]
  %v38 = vld [vmem:[%s0 + $0xf0] sm:$0xf]
  %v39 = vld [vmem:[%s0 + $0xf8] sm:$0xf]
  %v40 = vld [vmem:[%s0 + $0x100] sm:$0xff]
  %v41 = vld [vmem:[%s0 + $0x108] sm:$0xff]
  %v42 = vld [vmem:[%s0 + $0x110] sm:$0xf]
  %v43 = vld [vmem:[%s0 + $0x118] sm:$0xf]
  %v44 = vld [vmem:[%s0 + $0x120] sm:$0xff]
  %v45 = vld [vmem:[%s0 + $0x128] sm:$0xff]
  %v46 = vld [vmem:[%s0 + $0x130] sm:$0xf]
  %v47 = vld [vmem:[%s0 + $0x138] sm:$0xf]
  %v48 = vld [vmem:[%s0 + $0x140] sm:$0xff]
  %v49 = vld [vmem:[%s0 + $0x148] sm:$0xff]
  %v50 = vld [vmem:[%s0 + $0x150] sm:$0xf]
  %v51 = vld [vmem:[%s0 + $0x158] sm:$0xf]
  %v52 = vld [vmem:[%s0 + $0x160] sm:$0xff]
  %v53 = vld [vmem:[%s0 + $0x168] sm:$0xff]
  %v54 = vld [vmem:[%s0 + $0x170] sm:$0xf]
  %v55 = vld [vmem:[%s0 + $0x178] sm:$0xf]
  %v56 = vld [vmem:[%s0 + $0x180] sm:$0xff]
  %v57 = vld [vmem:[%s0 + $0x188] sm:$0xff]
  %v58 = vld [vmem:[%s0 + $0x190] sm:$0xf]
  %v59 = vld [vmem:[%s0 + $0x198] sm:$0xf]
  %v60 = vld [vmem:[%s0 + $0x1a0] sm:$0xff]
  %v61 = vld [vmem:[%s0 + $0x1a8] sm:$0xff]
  %v62 = vld [vmem:[%s0 + $0x1b0] sm:$0xf]
  %v63 = vld [vmem:[%s0 + $0x1b8] sm:$0xf]
  %v64 = vld [vmem:[%s0 + $0x1c0] sm:$0xff]
  %v65 = vld [vmem:[%s0 + $0x1c8] sm:$0xff]
  %v66 = vld [vmem:[%s0 + $0x1d0] sm:$0xf]
  %v67 = vld [vmem:[%s0 + $0x1d8] sm:$0xf]
  %v68 = vld [vmem:[%s0 + $0x1e0] sm:$0xff]
  %v69 = vld [vmem:[%s0 + $0x1e8] sm:$0xff]
  %v70 = vld [vmem:[%s0 + $0x1f0] sm:$0xf]
  %v71 = vld [vmem:[%s0 + $0x1f8] sm:$0xf]
  %v72 = vld [vmem:[%s0 + $0x200] sm:$0xff]
  %v73 = vld [vmem:[%s0 + $0x208] sm:$0xff]
  %v74 = vld [vmem:[%s0 + $0x210] sm:$0xf]
  %v75 = vld [vmem:[%s0 + $0x218] sm:$0xf]
  %v76 = vld [vmem:[%s0 + $0x220] sm:$0xff]
  %v77 = vld [vmem:[%s0 + $0x228] sm:$0xff]
  %v78 = vld [vmem:[%s0 + $0x230] sm:$0xf]
  %v79 = vld [vmem:[%s0 + $0x238] sm:$0xf]
  %v80 = vld [vmem:[%s0 + $0x240] sm:$0xff]
  %v81 = vld [vmem:[%s0 + $0x248] sm:$0xff]
  %v82 = vld [vmem:[%s0 + $0x250] sm:$0xf]
  %v83 = vld [vmem:[%s0 + $0x258] sm:$0xf]
  %v84 = vld [vmem:[%s0 + $0x260] sm:$0xff]
  %v85 = vld [vmem:[%s0 + $0x268] sm:$0xff]
  %v86 = vld [vmem:[%s0 + $0x270] sm:$0xf]
  %v87 = vld [vmem:[%s0 + $0x278] sm:$0xf]
  %v88 = vld [vmem:[%s0 + $0x280] sm:$0xff]
  %v89 = vld [vmem:[%s0 + $0x288] sm:$0xff]
  %v90 = vld [vmem:[%s0 + $0x290] sm:$0xf]
  %v91 = vld [vmem:[%s0 + $0x298] sm:$0xf]
  %v92 = vld [vmem:[%s0 + $0x2a0] sm:$0xff]
  %v93 = vld [vmem:[%s0 + $0x2a8] sm:$0xff]
  %v94 = vld [vmem:[%s0 + $0x2b0] sm:$0xf]
  %v95 = vld [vmem:[%s0 + $0x2b8] sm:$0xf]
  %v96 = vld [vmem:[%s0 + $0x2c0] sm:$0xff]
  %v97 = vld [vmem:[%s0 + $0x2c8] sm:$0xff]
  %v98 = vld [vmem:[%s0 + $0x2d0] sm:$0xf]
  %v99 = vld [vmem:[%s0 + $0x2d8] sm:$0xf]
  %v100 = vld [vmem:[%s0 + $0x2e0] sm:$0xff]
  %v101 = vld [vmem:[%s0 + $0x2e8] sm:$0xff]
  %v102 = vld [vmem:[%s0 + $0x2f0] sm:$0xf]
  %v103 = vld [vmem:[%s0 + $0x2f8] sm:$0xf]
  %v104 = vld [vmem:[%s0 + $0x300] sm:$0xff]
  %v105 = vld [vmem:[%s0 + $0x308] sm:$0xff]
  %v106 = vld [vmem:[%s0 + $0x310] sm:$0xf]
  %v107 = vld [vmem:[%s0 + $0x318] sm:$0xf]
  %v108 = vld [vmem:[%s0 + $0x320] sm:$0xff]
  %v109 = vld [vmem:[%s0 + $0x328] sm:$0xff]
  %v110 = vld [vmem:[%s0 + $0x330] sm:$0xf]
  %v111 = vld [vmem:[%s0 + $0x338] sm:$0xf]
  %v112 = vld [vmem:[%s0 + $0x340] sm:$0xff]
  %v113 = vld [vmem:[%s0 + $0x348] sm:$0xff]
  %v114 = vld [vmem:[%s0 + $0x350] sm:$0xf]
  %v115 = vld [vmem:[%s0 + $0x358] sm:$0xf]
  %v116 = vld [vmem:[%s0 + $0x360] sm:$0xff]
  %v117 = vld [vmem:[%s0 + $0x368] sm:$0xff]
  %v118 = vld [vmem:[%s0 + $0x370] sm:$0xf]
  %v119 = vld [vmem:[%s0 + $0x378] sm:$0xf]
  %v120 = vld [vmem:[%s0 + $0x380] sm:$0xff]
  %v121 = vld [vmem:[%s0 + $0x388] sm:$0xff]
  %v122 = vld [vmem:[%s0 + $0x390] sm:$0xf]
  %v123 = vld [vmem:[%s0 + $0x398] sm:$0xf]
  %v124 = vld [vmem:[%s0 + $0x3a0] sm:$0xff]
  %v125 = vld [vmem:[%s0 + $0x3a8] sm:$0xff]
  %v126 = vld [vmem:[%s0 + $0x3b0] sm:$0xf]
  %v127 = vld [vmem:[%s0 + $0x3b8] sm:$0xf]
  %v128 = vld [vmem:[%s0 + $0x3c0] sm:$0xff]
  %v129 = vld [vmem:[%s0 + $0x3c8] sm:$0xff]
  %v130 = vld [vmem:[%s0 + $0x3d0] sm:$0xf]
  %v131 = vld [vmem:[%s0 + $0x3d8] sm:$0xf]
  %v132 = vld [vmem:[%s0 + $0x3e0] sm:$0xff]
  %v133 = vld [vmem:[%s0 + $0x3e8] sm:$0xff]
  %v134 = vld [vmem:[%s0 + $0x3f0] sm:$0xf]
  %v135 = vld [vmem:[%s0 + $0x3f8] sm:$0xf]
  %v136 = vld [vmem:[%s0 + $0x400] sm:$0xff]
  %v137 = vld [vmem:[%s0 + $0x408] sm:$0xff]
  %v138 = vld [vmem:[%s0 + $0x410] sm:$0xf]
  %v139 = vld [vmem:[%s0 + $0x418] sm:$0xf]
  %v140 = vld [vmem:[%s0 + $0x420] sm:$0xff]
  %v141 = vld [vmem:[%s0 + $0x428] sm:$0xff]
  %v142 = vld [vmem:[%s0 + $0x430] sm:$0xf]
  %v143 = vld [vmem:[%s0 + $0x438] sm:$0xf]
  %v144 = vld [vmem:[%s0 + $0x440] sm:$0xff]
  %v145 = vld [vmem:[%s0 + $0x448] sm:$0xff]
  %v146 = vld [vmem:[%s0 + $0x450] sm:$0xf]
  %v147 = vld [vmem:[%s0 + $0x458] sm:$0xf]
  %v148 = vld [vmem:[%s0 + $0x460] sm:$0xff]
  %v149 = vld [vmem:[%s0 + $0x468] sm:$0xff]
  %v150 = vld [vmem:[%s0 + $0x470] sm:$0xf]
  %v151 = vld [vmem:[%s0 + $0x478] sm:$0xf]
  %v152 = vld [vmem:[%s0 + $0x480] sm:$0xff]
  %v153 = vld [vmem:[%s0 + $0x488] sm:$0xff]
  %v154 = vld [vmem:[%s0 + $0x490] sm:$0xf]
  %v155 = vld [vmem:[%s0 + $0x498] sm:$0xf]
  %v156 = vld [vmem:[%s0 + $0x4a0] sm:$0xff]
  %v157 = vld [vmem:[%s0 + $0x4a8] sm:$0xff]
  %v158 = vld [vmem:[%s0 + $0x4b0] sm:$0xf]
  %v159 = vld [vmem:[%s0 + $0x4b8] sm:$0xf]
  %v160 = vld [vmem:[%s0 + $0x4c0] sm:$0xff]
  %v161 = vld [vmem:[%s0 + $0x4c8] sm:$0xff]
  %v162 = vld [vmem:[%s0 + $0x4d0] sm:$0xf]
  %v163 = vld [vmem:[%s0 + $0x4d8] sm:$0xf]
  %v164 = vld [vmem:[%s0 + $0x4e0] sm:$0xff]
  %v165 = vld [vmem:[%s0 + $0x4e8] sm:$0xff]
  %v166 = vld [vmem:[%s0 + $0x4f0] sm:$0xf]
  %v167 = vld [vmem:[%s0 + $0x4f8] sm:$0xf]
  %v168 = vld [vmem:[%s0 + $0x500] sm:$0xff]
  %v169 = vld [vmem:[%s0 + $0x508] sm:$0xff]
  %v170 = vld [vmem:[%s0 + $0x510] sm:$0xf]
  %v171 = vld [vmem:[%s0 + $0x518] sm:$0xf]
  %v172 = vld [vmem:[%s0 + $0x520] sm:$0xff]
  %v173 = vld [vmem:[%s0 + $0x528] sm:$0xff]
  %v174 = vld [vmem:[%s0 + $0x530] sm:$0xf]
  %v175 = vld [vmem:[%s0 + $0x538] sm:$0xf]
  %v176 = vld [vmem:[%s0 + $0x540] sm:$0xff]
  %v177 = vld [vmem:[%s0 + $0x548] sm:$0xff]
  %v178 = vld [vmem:[%s0 + $0x550] sm:$0xf]
  %v179 = vld [vmem:[%s0 + $0x558] sm:$0xf]
  %v180 = vld [vmem:[%s0 + $0x560] sm:$0xff]
  %v181 = vld [vmem:[%s0 + $0x568] sm:$0xff]
  %v182 = vld [vmem:[%s0 + $0x570] sm:$0xf]
  %v183 = vld [vmem:[%s0 + $0x578] sm:$0xf]
  %v184 = vld [vmem:[%s0 + $0x580] sm:$0xff]
  %v185 = vld [vmem:[%s0 + $0x588] sm:$0xff]
  %v186 = vld [vmem:[%s0 + $0x590] sm:$0xf]
  %v187 = vld [vmem:[%s0 + $0x598] sm:$0xf]
  %v188 = vld [vmem:[%s0 + $0x5a0] sm:$0xff]
  %v189 = vld [vmem:[%s0 + $0x5a8] sm:$0xff]
  %v190 = vld [vmem:[%s0 + $0x5b0] sm:$0xf]
  %v191 = vld [vmem:[%s0 + $0x5b8] sm:$0xf]
  %v192 = vld [vmem:[%s0 + $0x5c0] sm:$0xff]
  %v193 = vld [vmem:[%s0 + $0x5c8] sm:$0xff]
  %v194 = vld [vmem:[%s0 + $0x5d0] sm:$0xf]
  %v195 = vld [vmem:[%s0 + $0x5d8] sm:$0xf]
  %v196 = vld [vmem:[%s0 + $0x5e0] sm:$0xff]
  %v197 = vld [vmem:[%s0 + $0x5e8] sm:$0xff]
  %v198 = vld [vmem:[%s0 + $0x5f0] sm:$0xf]
  %v199 = vld [vmem:[%s0 + $0x5f8] sm:$0xf]
  %v200 = vmax.f32 %v8, %v12
  %v201 = vmax.f32 %v9, %v13
  %v202 = vmax.f32 %v10, %v14
  %v203 = vmax.f32 %v11, %v15
  %v204 = vmax.f32 %v16, %v20
  %v205 = vmax.f32 %v17, %v21
  %v206 = vmax.f32 %v18, %v22
  %v207 = vmax.f32 %v19, %v23
  %v208 = vmax.f32 %v24, %v28
  %v209 = vmax.f32 %v25, %v29
  %v210 = vmax.f32 %v26, %v30
  %v211 = vmax.f32 %v27, %v31
  %v212 = vmax.f32 %v32, %v36
  %v213 = vmax.f32 %v33, %v37
  %v214 = vmax.f32 %v34, %v38
  %v215 = vmax.f32 %v35, %v39
  %v216 = vmax.f32 %v40, %v44
  %v217 = vmax.f32 %v41, %v45
  %v218 = vmax.f32 %v42, %v46
  %v219 = vmax.f32 %v43, %v47
  %v220 = vmax.f32 %v48, %v52
  %v221 = vmax.f32 %v49, %v53
  %v222 = vmax.f32 %v50, %v54
  %v223 = vmax.f32 %v51, %v55
  %v224 = vmax.f32 %v56, %v60
  %v225 = vmax.f32 %v57, %v61
  %v226 = vmax.f32 %v58, %v62
  %v227 = vmax.f32 %v59, %v63
  %v228 = vmax.f32 %v64, %v68
  %v229 = vmax.f32 %v65, %v69
  %v230 = vmax.f32 %v66, %v70
  %v231 = vmax.f32 %v67, %v71
  %v232 = vmax.f32 %v72, %v76
  %v233 = vmax.f32 %v73, %v77
  %v234 = vmax.f32 %v74, %v78
  %v235 = vmax.f32 %v75, %v79
  %v236 = vmax.f32 %v80, %v84
  %v237 = vmax.f32 %v81, %v85
  %v238 = vmax.f32 %v82, %v86
  %v239 = vmax.f32 %v83, %v87
  %v240 = vmax.f32 %v88, %v92
  %v241 = vmax.f32 %v89, %v93
  %v242 = vmax.f32 %v90, %v94
  %v243 = vmax.f32 %v91, %v95
  %v244 = vmax.f32 %v96, %v100
  %v245 = vmax.f32 %v97, %v101
  %v246 = vmax.f32 %v98, %v102
  %v247 = vmax.f32 %v99, %v103
  %v248 = vmax.f32 %v104, %v108
  %v249 = vmax.f32 %v105, %v109
  %v250 = vmax.f32 %v106, %v110
  %v251 = vmax.f32 %v107, %v111
  %v252 = vmax.f32 %v112, %v116
  %v253 = vmax.f32 %v113, %v117
  %v254 = vmax.f32 %v114, %v118
  %v255 = vmax.f32 %v115, %v119
  %v256 = vmax.f32 %v120, %v124
  %v257 = vmax.f32 %v121, %v125
  %v258 = vmax.f32 %v122, %v126
  %v259 = vmax.f32 %v123, %v127
  %v260 = vmax.f32 %v128, %v132
  %v261 = vmax.f32 %v129, %v133
  %v262 = vmax.f32 %v130, %v134
  %v263 = vmax.f32 %v131, %v135
  %v264 = vmax.f32 %v136, %v140
  %v265 = vmax.f32 %v137, %v141
  %v266 = vmax.f32 %v138, %v142
  %v267 = vmax.f32 %v139, %v143
  %v268 = vmax.f32 %v144, %v148
  %v269 = vmax.f32 %v145, %v149
  %v270 = vmax.f32 %v146, %v150
  %v271 = vmax.f32 %v147, %v151
  %v272 = vmax.f32 %v152, %v156
  %v273 = vmax.f32 %v153, %v157
  %v274 = vmax.f32 %v154, %v158
  %v275 = vmax.f32 %v155, %v159
  %v276 = vmax.f32 %v160, %v164
  %v277 = vmax.f32 %v161, %v165
  %v278 = vmax.f32 %v162, %v166
  %v279 = vmax.f32 %v163, %v167
  %v280 = vmax.f32 %v168, %v172
  %v281 = vmax.f32 %v169, %v173
  %v282 = vmax.f32 %v170, %v174
  %v283 = vmax.f32 %v171, %v175
  %v284 = vmax.f32 %v176, %v180
  %v285 = vmax.f32 %v177, %v181
  %v286 = vmax.f32 %v178, %v182
  %v287 = vmax.f32 %v179, %v183
  %v288 = vmax.f32 %v184, %v188
  %v289 = vmax.f32 %v185, %v189
  %v290 = vmax.f32 %v186, %v190
  %v291 = vmax.f32 %v187, %v191
  %v292 = vmax.f32 %v192, %v196
  %v293 = vmax.f32 %v193, %v197
  %v294 = vmax.f32 %v194, %v198
  %v295 = vmax.f32 %v195, %v199
  %v296 = vmax.f32 %v200, %v201
  %v297 = vmax.f32 %v202, %v203
  %v298 = vmax.f32 %v204, %v205
  %v299 = vmax.f32 %v206, %v207
  %v300 = vmax.f32 %v208, %v209
  %v301 = vmax.f32 %v210, %v211
  %v302 = vmax.f32 %v212, %v213
  %v303 = vmax.f32 %v214, %v215
  %v304 = vmax.f32 %v216, %v217
  %v305 = vmax.f32 %v218, %v219
  %v306 = vmax.f32 %v220, %v221
  %v307 = vmax.f32 %v222, %v223
  %v308 = vmax.f32 %v224, %v225
  %v309 = vmax.f32 %v226, %v227
  %v310 = vmax.f32 %v228, %v229
  %v311 = vmax.f32 %v230, %v231
  %v312 = vmax.f32 %v232, %v233
  %v313 = vmax.f32 %v234, %v235
  %v314 = vmax.f32 %v236, %v237
  %v315 = vmax.f32 %v238, %v239
  %v316 = vmax.f32 %v240, %v241
  %v317 = vmax.f32 %v242, %v243
  %v318 = vmax.f32 %v244, %v245
  %v319 = vmax.f32 %v246, %v247
  %v320 = vmax.f32 %v248, %v249
  %v321 = vmax.f32 %v250, %v251
  %v322 = vmax.f32 %v252, %v253
  %v323 = vmax.f32 %v254, %v255
  %v324 = vmax.f32 %v256, %v257
  %v325 = vmax.f32 %v258, %v259
  %v326 = vmax.f32 %v260, %v261
  %v327 = vmax.f32 %v262, %v263
  %v328 = vmax.f32 %v264, %v265
  %v329 = vmax.f32 %v266, %v267
  %v330 = vmax.f32 %v268, %v269
  %v331 = vmax.f32 %v270, %v271
  %v332 = vmax.f32 %v272, %v273
  %v333 = vmax.f32 %v274, %v275
  %v334 = vmax.f32 %v276, %v277
  %v335 = vmax.f32 %v278, %v279
  %v336 = vmax.f32 %v280, %v281
  %v337 = vmax.f32 %v282, %v283
  %v338 = vmax.f32 %v284, %v285
  %v339 = vmax.f32 %v286, %v287
  %v340 = vmax.f32 %v288, %v289
  %v341 = vmax.f32 %v290, %v291
  %v342 = vmax.f32 %v292, %v293
  %v343 = vmax.f32 %v294, %v295
  %344 = vst [vmem:[%s1] sm:$0xff] %v296
  %345 = vst [vmem:[%s1 + $0x8] sm:$0xf] %v297
  %346 = vst [vmem:[%s1 + $0x10] sm:$0xff] %v298
  %347 = vst [vmem:[%s1 + $0x18] sm:$0xf] %v299
  %348 = vst [vmem:[%s1 + $0x20] sm:$0xff] %v300
  %349 = vst [vmem:[%s1 + $0x28] sm:$0xf] %v301
  %350 = vst [vmem:[%s1 + $0x30] sm:$0xff] %v302
  %351 = vst [vmem:[%s1 + $0x38] sm:$0xf] %v303
  %352 = vst [vmem:[%s1 + $0x40] sm:$0xff] %v304
  %353 = vst [vmem:[%s1 + $0x48] sm:$0xf] %v305
  %354 = vst [vmem:[%s1 + $0x50] sm:$0xff] %v306
  %355 = vst [vmem:[%s1 + $0x58] sm:$0xf] %v307
  %356 = vst [vmem:[%s1 + $0x60] sm:$0xff] %v308
  %357 = vst [vmem:[%s1 + $0x68] sm:$0xf] %v309
  %358 = vst [vmem:[%s1 + $0x70] sm:$0xff] %v310
  %359 = vst [vmem:[%s1 + $0x78] sm:$0xf] %v311
  %360 = vst [vmem:[%s1 + $0x80] sm:$0xff] %v312
  %361 = vst [vmem:[%s1 + $0x88] sm:$0xf] %v313
  %362 = vst [vmem:[%s1 + $0x90] sm:$0xff] %v314
  %363 = vst [vmem:[%s1 + $0x98] sm:$0xf] %v315
  %364 = vst [vmem:[%s1 + $0xa0] sm:$0xff] %v316
  %365 = vst [vmem:[%s1 + $0xa8] sm:$0xf] %v317
  %366 = vst [vmem:[%s1 + $0xb0] sm:$0xff] %v318
  %367 = vst [vmem:[%s1 + $0xb8] sm:$0xf] %v319
  %368 = vst [vmem:[%s1 + $0xc0] sm:$0xff] %v320
  %369 = vst [vmem:[%s1 + $0xc8] sm:$0xf] %v321
  %370 = vst [vmem:[%s1 + $0xd0] sm:$0xff] %v322
  %371 = vst [vmem:[%s1 + $0xd8] sm:$0xf] %v323
  %372 = vst [vmem:[%s1 + $0xe0] sm:$0xff] %v324
  %373 = vst [vmem:[%s1 + $0xe8] sm:$0xf] %v325
  %374 = vst [vmem:[%s1 + $0xf0] sm:$0xff] %v326
  %375 = vst [vmem:[%s1 + $0xf8] sm:$0xf] %v327
  %376 = vst [vmem:[%s1 + $0x100] sm:$0xff] %v328
  %377 = vst [vmem:[%s1 + $0x108] sm:$0xf] %v329
  %378 = vst [vmem:[%s1 + $0x110] sm:$0xff] %v330
  %379 = vst [vmem:[%s1 + $0x118] sm:$0xf] %v331
  %380 = vst [vmem:[%s1 + $0x120] sm:$0xff] %v332
  %381 = vst [vmem:[%s1 + $0x128] sm:$0xf] %v333
  %382 = vst [vmem:[%s1 + $0x130] sm:$0xff] %v334
  %383 = vst [vmem:[%s1 + $0x138] sm:$0xf] %v335
  %384 = vst [vmem:[%s1 + $0x140] sm:$0xff] %v336
  %385 = vst [vmem:[%s1 + $0x148] sm:$0xf] %v337
  %386 = vst [vmem:[%s1 + $0x150] sm:$0xff] %v338
  %387 = vst [vmem:[%s1 + $0x158] sm:$0xf] %v339
  %388 = vst [vmem:[%s1 + $0x160] sm:$0xff] %v340
  %389 = vst [vmem:[%s1 + $0x168] sm:$0xf] %v341
  %390 = vst [vmem:[%s1 + $0x170] sm:$0xff] %v342
  %391 = vst [vmem:[%s1 + $0x178] sm:$0xf] %v343
  // Predicated region
  $region6: #{lenet5_forward.7} parent=0 // pred_check
    _
  $region7: #{lenet5_forward.7} parent=0 // pred_check_branch
    %393 = sbr.rel (0) target = $region9
  $region8: #{lenet5_forward.7} parent=0 // pred_region
    _
  $region9: #{lenet5_forward.7} parent=0 // pred_fallthru
    _
  // Predicated region
  $region10: #{lenet5_forward.7} parent=0 // pred_check
    _
  $region11: #{lenet5_forward.7} parent=0 // pred_check_branch
    %395 = sbr.rel (0) target = $region13
  $region12: #{lenet5_forward.7} parent=0 // pred_region
    _
  $region13: #{lenet5_forward.7} parent=0 // pred_fallthru
    _

// kernel: lenet5_forward.9
$region0: #{lenet5_forward.9}
  #allocation0 [shape = 'u32[]', space=smem, size = 0x4, offset = 0x4, fixed_abs, tag = 'smem constant byte address 0x4 - core index']
  #allocation1 [shape = 'u32[72,128]{1,0:T(1,128)}', space=vmem, size = 0x9000, scoped, tag = 'internal scratch']
  %s0 = inlined_call_operand.vmem [shape: f32[8,2,4,256], index: 0, kind: input, shape index: {}]
  %s1 = inlined_call_operand.vmem [shape: f32[8,4,128], index: 1, kind: output, shape index: {}]
  %s2 = sld [smem:[#allocation0]]
  $region14: #{lenet5_forward.9} parent=0
    _
  %s4 = ssub.s32 1, %s2
  %s5 = scalar_select 0, %s4, %s2
  // Predicated region
  $region2: #{lenet5_forward.9} parent=0 // pred_check
    _
  $region3: #{lenet5_forward.9} parent=0 // pred_check_branch
    %7 = sbr.rel (0) target = $region5
  $region4: #{lenet5_forward.9} parent=0 // pred_region
    _
  $region5: #{lenet5_forward.9} parent=0 // pred_fallthru
    _
  %v8 = vld [vmem:[%s0] sm:$0xff]
  %v9 = vld [vmem:[%s0 + $0x8] sm:$0xff]
  %v10 = vld [vmem:[%s0 + $0x10] sm:$0xff]
  %v11 = vld [vmem:[%s0 + $0x18] sm:$0xff]
  %v12 = vld [vmem:[%s0 + $0x20] sm:$0xff]
  %v13 = vld [vmem:[%s0 + $0x28] sm:$0xff]
  %v14 = vld [vmem:[%s0 + $0x30] sm:$0xff]
  %v15 = vld [vmem:[%s0 + $0x38] sm:$0xff]
  %v16 = vld [vmem:[%s0 + $0x40] sm:$0xff]
  %v17 = vld [vmem:[%s0 + $0x48] sm:$0xff]
  %v18 = vld [vmem:[%s0 + $0x50] sm:$0xff]
  %v19 = vld [vmem:[%s0 + $0x58] sm:$0xff]
  %v20 = vld [vmem:[%s0 + $0x60] sm:$0xff]
  %v21 = vld [vmem:[%s0 + $0x68] sm:$0xff]
  %v22 = vld [vmem:[%s0 + $0x70] sm:$0xff]
  %v23 = vld [vmem:[%s0 + $0x78] sm:$0xff]
  %v24 = vmax.f32 %v8, %v9
  %v25 = vmax.f32 %v10, %v11
  %v26 = vmax.f32 %v12, %v13
  %v27 = vmax.f32 %v14, %v15
  %v28 = vmax.f32 %v16, %v17
  %v29 = vmax.f32 %v18, %v19
  %v30 = vmax.f32 %v20, %v21
  %v31 = vmax.f32 %v22, %v23
  %v40 = vrot.slane %v24, 4
  %v41 = vrot.slane %v25, 4
  %v42 = vrot.slane %v26, 4
  %v43 = vrot.slane %v27, 4
  %v44 = vrot.slane %v28, 4
  %v45 = vrot.slane %v29, 4
  %v46 = vrot.slane %v30, 4
  %v47 = vrot.slane %v31, 4
  %v56 = vmax.f32 %v24, %v40
  %v57 = vmax.f32 %v25, %v41
  %v58 = vmax.f32 %v26, %v42
  %v59 = vmax.f32 %v27, %v43
  %v60 = vmax.f32 %v28, %v44
  %v61 = vmax.f32 %v29, %v45
  %v62 = vmax.f32 %v30, %v46
  %v63 = vmax.f32 %v31, %v47
  %64 = vst [vmem:[%s1] sm:$0xf] %v56
  %65 = vst [vmem:[%s1 + $0x4] sm:$0xf] %v57
  %66 = vst [vmem:[%s1 + $0x8] sm:$0xf] %v58
  %67 = vst [vmem:[%s1 + $0xc] sm:$0xf] %v59
  %68 = vst [vmem:[%s1 + $0x10] sm:$0xf] %v60
  %69 = vst [vmem:[%s1 + $0x14] sm:$0xf] %v61
  %70 = vst [vmem:[%s1 + $0x18] sm:$0xf] %v62
  %71 = vst [vmem:[%s1 + $0x1c] sm:$0xf] %v63
  // Predicated region
  $region6: #{lenet5_forward.9} parent=0 // pred_check
    _
  $region7: #{lenet5_forward.9} parent=0 // pred_check_branch
    %73 = sbr.rel (0) target = $region9
  $region8: #{lenet5_forward.9} parent=0 // pred_region
    _
  $region9: #{lenet5_forward.9} parent=0 // pred_fallthru
    _
  // Predicated region
  $region10: #{lenet5_forward.9} parent=0 // pred_check
    _
  $region11: #{lenet5_forward.9} parent=0 // pred_check_branch
    %75 = sbr.rel (0) target = $region13
  $region12: #{lenet5_forward.9} parent=0 // pred_region
    _
  $region13: #{lenet5_forward.9} parent=0 // pred_fallthru
    _

// kernel: lenet5_forward.11
$region0: #{lenet5_forward.11}
  #allocation0 [shape = 'u32[]', space=smem, size = 0x4, offset = 0x4, fixed_abs, tag = 'smem constant byte address 0x4 - core index']
  #allocation1 [shape = 'u32[72,128]{1,0:T(1,128)}', space=vmem, size = 0x9000, scoped, tag = 'internal scratch']
  %s0 = inlined_call_operand.vmem [shape: f32[8,512], index: 0, kind: input, shape index: {}]
  %s1 = inlined_call_operand.vmem [shape: f32[512,128], index: 1, kind: input, shape index: {}]
  %s2 = inlined_call_operand.vmem [shape: f32[1,128], index: 2, kind: input, shape index: {}]
  %s3 = inlined_call_operand.vmem [shape: f32[8,128], index: 3, kind: output, shape index: {}]
  %s4 = sld [smem:[#allocation0]]
  $region22: #{lenet5_forward.11} parent=0
    _
  %s6 = ssub.s32 1, %s4
  %s7 = scalar_select 0, %s6, %s4
  // Predicated region
  $region2: #{lenet5_forward.11} parent=0 // pred_check
    _
  $region3: #{lenet5_forward.11} parent=0 // pred_check_branch
    %9 = sbr.rel (0) target = $region5
  $region4: #{lenet5_forward.11} parent=0 // pred_region
    _
  $region5: #{lenet5_forward.11} parent=0 // pred_fallthru
    _
  // Predicated region
  $region6: #{lenet5_forward.11} parent=0 // pred_check
    _
  $region7: #{lenet5_forward.11} parent=0 // pred_check_branch
    %11 = sbr.rel (0) target = $region9
  $region8: #{lenet5_forward.11} parent=0 // pred_region
    _
  $region9: #{lenet5_forward.11} parent=0 // pred_fallthru
    _
  // Predicated region
  $region10: #{lenet5_forward.11} parent=0 // pred_check
    _
  $region11: #{lenet5_forward.11} parent=0 // pred_check_branch
    %13 = sbr.rel (0) target = $region13
  $region12: #{lenet5_forward.11} parent=0 // pred_region
    _
  $region13: #{lenet5_forward.11} parent=0 // pred_fallthru
    _
  %v14 = vld [vmem:[%s0] sm:$0xff]
  %v15 = vld [vmem:[%s0 + $0x8] sm:$0xff]
  %v16 = vld [vmem:[%s0 + $0x10] sm:$0xff]
  %v17 = vld [vmem:[%s0 + $0x18] sm:$0xff]
  %v18 = vld [vmem:[%s1] sm:$0xff]
  %v19 = vld [vmem:[%s1 + $0x8] sm:$0xff]
  %v20 = vld [vmem:[%s1 + $0x10] sm:$0xff]
  %v21 = vld [vmem:[%s1 + $0x18] sm:$0xff]
  %v22 = vld [vmem:[%s1 + $0x20] sm:$0xff]
  %v23 = vld [vmem:[%s1 + $0x28] sm:$0xff]
  %v24 = vld [vmem:[%s1 + $0x30] sm:$0xff]
  %v25 = vld [vmem:[%s1 + $0x38] sm:$0xff]
  %v26 = vld [vmem:[%s1 + $0x40] sm:$0xff]
  %v27 = vld [vmem:[%s1 + $0x48] sm:$0xff]
  %v28 = vld [vmem:[%s1 + $0x50] sm:$0xff]
  %v29 = vld [vmem:[%s1 + $0x58] sm:$0xff]
  %v30 = vld [vmem:[%s1 + $0x60] sm:$0xff]
  %v31 = vld [vmem:[%s1 + $0x68] sm:$0xff]
  %v32 = vld [vmem:[%s1 + $0x70] sm:$0xff]
  %v33 = vld [vmem:[%s1 + $0x78] sm:$0xff]
  %v34 = vld [vmem:[%s1 + $0x80] sm:$0xff]
  %v35 = vld [vmem:[%s1 + $0x88] sm:$0xff]
  %v36 = vld [vmem:[%s1 + $0x90] sm:$0xff]
  %v37 = vld [vmem:[%s1 + $0x98] sm:$0xff]
  %v38 = vld [vmem:[%s1 + $0xa0] sm:$0xff]
  %v39 = vld [vmem:[%s1 + $0xa8] sm:$0xff]
  %v40 = vld [vmem:[%s1 + $0xb0] sm:$0xff]
  %v41 = vld [vmem:[%s1 + $0xb8] sm:$0xff]
  %v42 = vld [vmem:[%s1 + $0xc0] sm:$0xff]
  %v43 = vld [vmem:[%s1 + $0xc8] sm:$0xff]
  %v44 = vld [vmem:[%s1 + $0xd0] sm:$0xff]
  %v45 = vld [vmem:[%s1 + $0xd8] sm:$0xff]
  %v46 = vld [vmem:[%s1 + $0xe0] sm:$0xff]
  %v47 = vld [vmem:[%s1 + $0xe8] sm:$0xff]
  %v48 = vld [vmem:[%s1 + $0xf0] sm:$0xff]
  %v49 = vld [vmem:[%s1 + $0xf8] sm:$0xff]
  %v50 = vld [vmem:[%s1 + $0x100] sm:$0xff]
  %v51 = vld [vmem:[%s1 + $0x108] sm:$0xff]
  %v52 = vld [vmem:[%s1 + $0x110] sm:$0xff]
  %v53 = vld [vmem:[%s1 + $0x118] sm:$0xff]
  %v54 = vld [vmem:[%s1 + $0x120] sm:$0xff]
  %v55 = vld [vmem:[%s1 + $0x128] sm:$0xff]
  %v56 = vld [vmem:[%s1 + $0x130] sm:$0xff]
  %v57 = vld [vmem:[%s1 + $0x138] sm:$0xff]
  %v58 = vld [vmem:[%s1 + $0x140] sm:$0xff]
  %v59 = vld [vmem:[%s1 + $0x148] sm:$0xff]
  %v60 = vld [vmem:[%s1 + $0x150] sm:$0xff]
  %v61 = vld [vmem:[%s1 + $0x158] sm:$0xff]
  %v62 = vld [vmem:[%s1 + $0x160] sm:$0xff]
  %v63 = vld [vmem:[%s1 + $0x168] sm:$0xff]
  %v64 = vld [vmem:[%s1 + $0x170] sm:$0xff]
  %v65 = vld [vmem:[%s1 + $0x178] sm:$0xff]
  %v66 = vld [vmem:[%s1 + $0x180] sm:$0xff]
  %v67 = vld [vmem:[%s1 + $0x188] sm:$0xff]
  %v68 = vld [vmem:[%s1 + $0x190] sm:$0xff]
  %v69 = vld [vmem:[%s1 + $0x198] sm:$0xff]
  %v70 = vld [vmem:[%s1 + $0x1a0] sm:$0xff]
  %v71 = vld [vmem:[%s1 + $0x1a8] sm:$0xff]
  %v72 = vld [vmem:[%s1 + $0x1b0] sm:$0xff]
  %v73 = vld [vmem:[%s1 + $0x1b8] sm:$0xff]
  %v74 = vld [vmem:[%s1 + $0x1c0] sm:$0xff]
  %v75 = vld [vmem:[%s1 + $0x1c8] sm:$0xff]
  %v76 = vld [vmem:[%s1 + $0x1d0] sm:$0xff]
  %v77 = vld [vmem:[%s1 + $0x1d8] sm:$0xff]
  %v78 = vld [vmem:[%s1 + $0x1e0] sm:$0xff]
  %v79 = vld [vmem:[%s1 + $0x1e8] sm:$0xff]
  %v80 = vld [vmem:[%s1 + $0x1f0] sm:$0xff]
  %v81 = vld [vmem:[%s1 + $0x1f8] sm:$0xff]
  %v82 = vld [vmem:[%s2] sm:$0x1]
  %v84 = vperm.slane %v82, 0
  %86 = vmatpush.msra.mxu0 %v33
  %87 = vmatpush.msra.mxu0 %v32
  %88 = vmatpush.msra.mxu0 %v31
  %89 = vmatpush.msra.mxu0 %v30
  %90 = vmatpush.msra.mxu0 %v29
  %91 = vmatpush.msra.mxu0 %v28
  %92 = vmatpush.msra.mxu0 %v27
  %93 = vmatpush.msra.mxu0 %v26
  %94 = vmatpush.msra.mxu0 %v25
  %95 = vmatpush.msra.mxu0 %v24
  %96 = vmatpush.msra.mxu0 %v23
  %97 = vmatpush.msra.mxu0 %v22
  %98 = vmatpush.msra.mxu0 %v21
  %99 = vmatpush.msra.mxu0 %v20
  %100 = vmatpush.msra.mxu0 %v19
  %101 = vmatpush.msra.mxu0 %v18
  %102 = vmatmul.f32.gmra.mxu0 %v14
  %v103 = vpop.f32.mrf.mxu0
  %v104 = vadd.f32 %v84, %v103
  %105 = vdwg.mxu0
  %106 = vmatpush.msra.mxu0 %v49
  %107 = vmatpush.msra.mxu0 %v48
  %108 = vmatpush.msra.mxu0 %v47
  %109 = vmatpush.msra.mxu0 %v46
  %110 = vmatpush.msra.mxu0 %v45
  %111 = vmatpush.msra.mxu0 %v44
  %112 = vmatpush.msra.mxu0 %v43
  %113 = vmatpush.msra.mxu0 %v42
  %114 = vmatpush.msra.mxu0 %v41
  %115 = vmatpush.msra.mxu0 %v40
  %116 = vmatpush.msra.mxu0 %v39
  %117 = vmatpush.msra.mxu0 %v38
  %118 = vmatpush.msra.mxu0 %v37
  %119 = vmatpush.msra.mxu0 %v36
  %120 = vmatpush.msra.mxu0 %v35
  %121 = vmatpush.msra.mxu0 %v34
  %122 = vmatmul.f32.gmra.mxu0 %v15
  %v123 = vpop.f32.mrf.mxu0
  %v124 = vadd.f32 %v104, %v123
  %125 = vdwg.mxu0
  %126 = vmatpush.msra.mxu0 %v65
  %127 = vmatpush.msra.mxu0 %v64
  %128 = vmatpush.msra.mxu0 %v63
  %129 = vmatpush.msra.mxu0 %v62
  %130 = vmatpush.msra.mxu0 %v61
  %131 = vmatpush.msra.mxu0 %v60
  %132 = vmatpush.msra.mxu0 %v59
  %133 = vmatpush.msra.mxu0 %v58
  %134 = vmatpush.msra.mxu0 %v57
  %135 = vmatpush.msra.mxu0 %v56
  %136 = vmatpush.msra.mxu0 %v55
  %137 = vmatpush.msra.mxu0 %v54
  %138 = vmatpush.msra.mxu0 %v53
  %139 = vmatpush.msra.mxu0 %v52
  %140 = vmatpush.msra.mxu0 %v51
  %141 = vmatpush.msra.mxu0 %v50
  %142 = vmatmul.f32.gmra.mxu0 %v16
  %v143 = vpop.f32.mrf.mxu0
  %v144 = vadd.f32 %v124, %v143
  %145 = vdwg.mxu0
  %146 = vmatpush.msra.mxu0 %v81
  %147 = vmatpush.msra.mxu0 %v80
  %148 = vmatpush.msra.mxu0 %v79
  %149 = vmatpush.msra.mxu0 %v78
  %150 = vmatpush.msra.mxu0 %v77
  %151 = vmatpush.msra.mxu0 %v76
  %152 = vmatpush.msra.mxu0 %v75
  %153 = vmatpush.msra.mxu0 %v74
  %154 = vmatpush.msra.mxu0 %v73
  %155 = vmatpush.msra.mxu0 %v72
  %156 = vmatpush.msra.mxu0 %v71
  %157 = vmatpush.msra.mxu0 %v70
  %158 = vmatpush.msra.mxu0 %v69
  %159 = vmatpush.msra.mxu0 %v68
  %160 = vmatpush.msra.mxu0 %v67
  %161 = vmatpush.msra.mxu0 %v66
  %162 = vmatmul.f32.gmra.mxu0 %v17
  %v163 = vpop.f32.mrf.mxu0
  %v164 = vadd.f32 %v144, %v163
  %165 = vdwg.mxu0
  %166 = vst [vmem:[%s3] sm:$0xff] %v164
  // Predicated region
  $region14: #{lenet5_forward.11} parent=0 // pred_check
    _
  $region15: #{lenet5_forward.11} parent=0 // pred_check_branch
    %168 = sbr.rel (0) target = $region17
  $region16: #{lenet5_forward.11} parent=0 // pred_region
    _
  $region17: #{lenet5_forward.11} parent=0 // pred_fallthru
    _
  // Predicated region
  $region18: #{lenet5_forward.11} parent=0 // pred_check
    _
  $region19: #{lenet5_forward.11} parent=0 // pred_check_branch
    %170 = sbr.rel (0) target = $region21
  $region20: #{lenet5_forward.11} parent=0 // pred_region
    _
  $region21: #{lenet5_forward.11} parent=0 // pred_fallthru
    _

// kernel: lenet5_forward.8
$region0: #{lenet5_forward.8}
  #allocation0 [shape = 'u32[]', space=smem, size = 0x4, offset = 0x4, fixed_abs, tag = 'smem constant byte address 0x4 - core index']
  #allocation1 [shape = 'u32[72,128]{1,0:T(1,128)}', space=vmem, size = 0x9000, scoped, tag = 'internal scratch']
  %s0 = inlined_call_operand.vmem [shape: f32[128,3200], index: 0, kind: input, shape index: {}]
  %s1 = inlined_call_operand.vmem [shape: f32[3200,128], index: 1, kind: input, shape index: {}]
  %s2 = inlined_call_operand.vmem [shape: f32[1,128], index: 2, kind: input, shape index: {}]
  %s3 = inlined_call_operand.vmem [shape: f32[128,128], index: 3, kind: output, shape index: {}]
  %s4 = sld [smem:[#allocation0]]
  $region22: #{lenet5_forward.8} parent=0
    _
  %s6 = ssub.s32 1, %s4
  %s7 = scalar_select 0, %s6, %s4
  // Predicated region
  $region2: #{lenet5_forward.8} parent=0 // pred_check
    _
  $region3: #{lenet5_forward.8} parent=0 // pred_check_branch
    %9 = sbr.rel (0) target = $region5
  $region4: #{lenet5_forward.8} parent=0 // pred_region
    _
  $region5: #{lenet5_forward.8} parent=0 // pred_fallthru
    _
  // Predicated region
  $region6: #{lenet5_forward.8} parent=0 // pred_check
    _
  $region7: #{lenet5_forward.8} parent=0 // pred_check_branch
    %11 = sbr.rel (0) target = $region9
  $region8: #{lenet5_forward.8} parent=0 // pred_region
    _
  $region9: #{lenet5_forward.8} parent=0 // pred_fallthru
    _
  // Predicated region
  $region10: #{lenet5_forward.8} parent=0 // pred_check
    _
  $region11: #{lenet5_forward.8} parent=0 // pred_check_branch
    %13 = sbr.rel (0) target = $region13
  $region12: #{lenet5_forward.8} parent=0 // pred_region
    _
  $region13: #{lenet5_forward.8} parent=0 // pred_fallthru
    _
  %v14 = vld [vmem:[%s0] sm:$0xff]
  %v15 = vld [vmem:[%s0 + $0x8] sm:$0xff]
  %v16 = vld [vmem:[%s0 + $0x10] sm:$0xff]
  %v17 = vld [vmem:[%s0 + $0x18] sm:$0xff]
  %v18 = vld [vmem:[%s0 + $0x20] sm:$0xff]
  %v19 = vld [vmem:[%s0 + $0x28] sm:$0xff]
  %v20 = vld [vmem:[%s0 + $0x30] sm:$0xff]
  %v21 = vld [vmem:[%s0 + $0x38] sm:$0xff]
  %v22 = vld [vmem:[%s0 + $0x40] sm:$0xff]
  %v23 = vld [vmem:[%s0 + $0x48] sm:$0xff]
  %v24 = vld [vmem:[%s0 + $0x50] sm:$0xff]
  %v25 = vld [vmem:[%s0 + $0x58] sm:$0xff]
  %v26 = vld [vmem:[%s0 + $0x60] sm:$0xff]
  %v27 = vld [vmem:[%s0 + $0x68] sm:$0xff]
  %v28 = vld [vmem:[%s0 + $0x70] sm:$0xff]
  %v29 = vld [vmem:[%s0 + $0x78] sm:$0xff]
  %v30 = vld [vmem:[%s0 + $0x80] sm:$0xff]
  %v31 = vld [vmem:[%s0 + $0x88] sm:$0xff]
  %v32 = vld [vmem:[%s0 + $0x90] sm:$0xff]
  %v33 = vld [vmem:[%s0 + $0x98] sm:$0xff]
  %v34 = vld [vmem:[%s0 + $0xa0] sm:$0xff]
  %v35 = vld [vmem:[%s0 + $0xa8] sm:$0xff]
  %v36 = vld [vmem:[%s0 + $0xb0] sm:$0xff]
  %v37 = vld [vmem:[%s0 + $0xb8] sm:$0xff]
  %v38 = vld [vmem:[%s0 + $0xc0] sm:$0xff]
  %v39 = vld [vmem:[%s0 + $0xc8] sm:$0xff]
  %v40 = vld [vmem:[%s0 + $0xd0] sm:$0xff]
  %v41 = vld [vmem:[%s0 + $0xd8] sm:$0xff]
  %v42 = vld [vmem:[%s0 + $0xe0] sm:$0xff]
  %v43 = vld [vmem:[%s0 + $0xe8] sm:$0xff]
  %v44 = vld [vmem:[%s0 + $0xf0] sm:$0xff]
  %v45 = vld [vmem:[%s0 + $0xf8] sm:$0xff]
  %v46 = vld [vmem:[%s0 + $0x100] sm:$0xff]
  %v47 = vld [vmem:[%s0 + $0x108] sm:$0xff]
  %v48 = vld [vmem:[%s0 + $0x110] sm:$0xff]
  %v49 = vld [vmem:[%s0 + $0x118] sm:$0xff]
  %v50 = vld [vmem:[%s0 + $0x120] sm:$0xff]
  %v51 = vld [vmem:[%s0 + $0x128] sm:$0xff]
  %v52 = vld [vmem:[%s0 + $0x130] sm:$0xff]
  %v53 = vld [vmem:[%s0 + $0x138] sm:$0xff]
  %v54 = vld [vmem:[%s0 + $0x140] sm:$0xff]
  %v55 = vld [vmem:[%s0 + $0x148] sm:$0xff]
  %v56 = vld [vmem:[%s0 + $0x150] sm:$0xff]
  %v57 = vld [vmem:[%s0 + $0x158] sm:$0xff]
  %v58 = vld [vmem:[%s0 + $0x160] sm:$0xff]
  %v59 = vld [vmem:[%s0 + $0x168] sm:$0xff]
  %v60 = vld [vmem:[%s0 + $0x170] sm:$0xff]
  %v61 = vld [vmem:[%s0 + $0x178] sm:$0xff]
  %v62 = vld [vmem:[%s0 + $0x180] sm:$0xff]
  %v63 = vld [vmem:[%s0 + $0x188] sm:$0xff]
  %v64 = vld [vmem:[%s0 + $0x190] sm:$0xff]
  %v65 = vld [vmem:[%s0 + $0x198] sm:$0xff]
  %v66 = vld [vmem:[%s0 + $0x1a0] sm:$0xff]
  %v67 = vld [vmem:[%s0 + $0x1a8] sm:$0xff]
  %v68 = vld [vmem:[%s0 + $0x1b0] sm:$0xff]
  %v69 = vld [vmem:[%s0 + $0x1b8] sm:$0xff]
  %v70 = vld [vmem:[%s0 + $0x1c0] sm:$0xff]
  %v71 = vld [vmem:[%s0 + $0x1c8] sm:$0xff]
  %v72 = vld [vmem:[%s0 + $0x1d0] sm:$0xff]
  %v73 = vld [vmem:[%s0 + $0x1d8] sm:$0xff]
  %v74 = vld [vmem:[%s0 + $0x1e0] sm:$0xff]
  %v75 = vld [vmem:[%s0 + $0x1e8] sm:$0xff]
  %v76 = vld [vmem:[%s0 + $0x1f0] sm:$0xff]
  %v77 = vld [vmem:[%s0 + $0x1f8] sm:$0xff]
  %v78 = vld [vmem:[%s0 + $0x200] sm:$0xff]
  %v79 = vld [vmem:[%s0 + $0x208] sm:$0xff]
  %v80 = vld [vmem:[%s0 + $0x210] sm:$0xff]
  %v81 = vld [vmem:[%s0 + $0x218] sm:$0xff]
  %v82 = vld [vmem:[%s0 + $0x220] sm:$0xff]
  %v83 = vld [vmem:[%s0 + $0x228] sm:$0xff]
  %v84 = vld [vmem:[%s0 + $0x230] sm:$0xff]
  %v85 = vld [vmem:[%s0 + $0x238] sm:$0xff]
  %v86 = vld [vmem:[%s0 + $0x240] sm:$0xff]
  %v87 = vld [vmem:[%s0 + $0x248] sm:$0xff]
  %v88 = vld [vmem:[%s0 + $0x250] sm:$0xff]
  %v89 = vld [vmem:[%s0 + $0x258] sm:$0xff]
  %v90 = vld [vmem:[%s0 + $0x260] sm:$0xff]
  %v91 = vld [vmem:[%s0 + $0x268] sm:$0xff]
  %v92 = vld [vmem:[%s0 + $0x270] sm:$0xff]
  %v93 = vld [vmem:[%s0 + $0x278] sm:$0xff]
  %v94 = vld [vmem:[%s0 + $0x280] sm:$0xff]
  %v95 = vld [vmem:[%s0 + $0x288] sm:$0xff]
  %v96 = vld [vmem:[%s0 + $0x290] sm:$0xff]
  %v97 = vld [vmem:[%s0 + $0x298] sm:$0xff]
  %v98 = vld [vmem:[%s0 + $0x2a0] sm:$0xff]
  %v99 = vld [vmem:[%s0 + $0x2a8] sm:$0xff]
  %v100 = vld [vmem:[%s0 + $0x2b0] sm:$0xff]
  %v101 = vld [vmem:[%s0 + $0x2b8] sm:$0xff]
  %v102 = vld [vmem:[%s0 + $0x2c0] sm:$0xff]
  %v103 = vld [vmem:[%s0 + $0x2c8] sm:$0xff]
  %v104 = vld [vmem:[%s0 + $0x2d0] sm:$0xff]
  %v105 = vld [vmem:[%s0 + $0x2d8] sm:$0xff]
  %v106 = vld [vmem:[%s0 + $0x2e0] sm:$0xff]
  %v107 = vld [vmem:[%s0 + $0x2e8] sm:$0xff]
  %v108 = vld [vmem:[%s0 + $0x2f0] sm:$0xff]
  %v109 = vld [vmem:[%s0 + $0x2f8] sm:$0xff]
  %v110 = vld [vmem:[%s0 + $0x300] sm:$0xff]
  %v111 = vld [vmem:[%s0 + $0x308] sm:$0xff]
  %v112 = vld [vmem:[%s0 + $0x310] sm:$0xff]
  %v113 = vld [vmem:[%s0 + $0x318] sm:$0xff]
  %v114 = vld [vmem:[%s0 + $0x320] sm:$0xff]
  %v115 = vld [vmem:[%s0 + $0x328] sm:$0xff]
  %v116 = vld [vmem:[%s0 + $0x330] sm:$0xff]
  %v117 = vld [vmem:[%s0 + $0x338] sm:$0xff]
  %v118 = vld [vmem:[%s0 + $0x340] sm:$0xff]
  %v119 = vld [vmem:[%s0 + $0x348] sm:$0xff]
  %v120 = vld [vmem:[%s0 + $0x350] sm:$0xff]
  %v121 = vld [vmem:[%s0 + $0x358] sm:$0xff]
  %v122 = vld [vmem:[%s0 + $0x360] sm:$0xff]
  %v123 = vld [vmem:[%s0 + $0x368] sm:$0xff]
  %v124 = vld [vmem:[%s0 + $0x370] sm:$0xff]
  %v125 = vld [vmem:[%s0 + $0x378] sm:$0xff]
  %v126 = vld [vmem:[%s0 + $0x380] sm:$0xff]
  %v127 = vld [vmem:[%s0 + $0x388] sm:$0xff]
  %v128 = vld [vmem:[%s0 + $0x390] sm:$0xff]
  %v129 = vld [vmem:[%s0 + $0x398] sm:$0xff]
  %v130 = vld [vmem:[%s0 + $0x3a0] sm:$0xff]
  %v131 = vld [vmem:[%s0 + $0x3a8] sm:$0xff]
  %v132 = vld [vmem:[%s0 + $0x3b0] sm:$0xff]
  %v133 = vld [vmem:[%s0 + $0x3b8] sm:$0xff]
  %v134 = vld [vmem:[%s0 + $0x3c0] sm:$0xff]
  %v135 = vld [vmem:[%s0 + $0x3c8] sm:$0xff]
  %v136 = vld [vmem:[%s0 + $0x3d0] sm:$0xff]
  %v137 = vld [vmem:[%s0 + $0x3d8] sm:$0xff]
  %v138 = vld [vmem:[%s0 + $0x3e0] sm:$0xff]
  %v139 = vld [vmem:[%s0 + $0x3e8] sm:$0xff]
  %v140 = vld [vmem:[%s0 + $0x3f0] sm:$0xff]
  %v141 = vld [vmem:[%s0 + $0x3f8] sm:$0xff]
  %v142 = vld [vmem:[%s0 + $0x400] sm:$0xff]
  %v143 = vld [vmem:[%s0 + $0x408] sm:$0xff]
  %v144 = vld [vmem:[%s0 + $0x410] sm:$0xff]
  %v145 = vld [vmem:[%s0 + $0x418] sm:$0xff]
  %v146 = vld [vmem:[%s0 + $0x420] sm:$0xff]
  %v147 = vld [vmem:[%s0 + $0x428] sm:$0xff]
  %v148 = vld [vmem:[%s0 + $0x430] sm:$0xff]
  %v149 = vld [vmem:[%s0 + $0x438] sm:$0xff]
  %v150 = vld [vmem:[%s0 + $0x440] sm:$0xff]
  %v151 = vld [vmem:[%s0 + $0x448] sm:$0xff]
  %v152 = vld [vmem:[%s0 + $0x450] sm:$0xff]
  %v153 = vld [vmem:[%s0 + $0x458] sm:$0xff]
  %v154 = vld [vmem:[%s0 + $0x460] sm:$0xff]
  %v155 = vld [vmem:[%s0 + $0x468] sm:$0xff]
  %v156 = vld [vmem:[%s0 + $0x470] sm:$0xff]
  %v157 = vld [vmem:[%s0 + $0x478] sm:$0xff]
  %v158 = vld [vmem:[%s0 + $0x480] sm:$0xff]
  %v159 = vld [vmem:[%s0 + $0x488] sm:$0xff]
  %v160 = vld [vmem:[%s0 + $0x490] sm:$0xff]
  %v161 = vld [vmem:[%s0 + $0x498] sm:$0xff]
  %v162 = vld [vmem:[%s0 + $0x4a0] sm:$0xff]
  %v163 = vld [vmem:[%s0 + $0x4a8] sm:$0xff]
  %v164 = vld [vmem:[%s0 + $0x4b0] sm:$0xff]
  %v165 = vld [vmem:[%s0 + $0x4b8] sm:$0xff]
  %v166 = vld [vmem:[%s0 + $0x4c0] sm:$0xff]
  %v167 = vld [vmem:[%s0 + $0x4c8] sm:$0xff]
  %v168 = vld [vmem:[%s0 + $0x4d0] sm:$0xff]
  %v169 = vld [vmem:[%s0 + $0x4d8] sm:$0xff]
  %v170 = vld [vmem:[%s0 + $0x4e0] sm:$0xff]
  %v171 = vld [vmem:[%s0 + $0x4e8] sm:$0xff]
  %v172 = vld [vmem:[%s0 + $0x4f0] sm:$0xff]
  %v173 = vld [vmem:[%s0 + $0x4f8] sm:$0xff]
  %v174 = vld [vmem:[%s0 + $0x500] sm:$0xff]
  %v175 = vld [vmem:[%s0 + $0x508] sm:$0xff]
  %v176 = vld [vmem:[%s0 + $0x510] sm:$0xff]
  %v177 = vld [vmem:[%s0 + $0x518] sm:$0xff]
  %v178 = vld [vmem:[%s0 + $0x520] sm:$0xff]
  %v179 = vld [vmem:[%s0 + $0x528] sm:$0xff]
  %v180 = vld [vmem:[%s0 + $0x530] sm:$0xff]
  %v181 = vld [vmem:[%s0 + $0x538] sm:$0xff]
  %v182 = vld [vmem:[%s0 + $0x540] sm:$0xff]
  %v183 = vld [vmem:[%s0 + $0x548] sm:$0xff]
  %v184 = vld [vmem:[%s0 + $0x550] sm:$0xff]
  %v185 = vld [vmem:[%s0 + $0x558] sm:$0xff]
  %v186 = vld [vmem:[%s0 + $0x560] sm:$0xff]
  %v187 = vld [vmem:[%s0 + $0x568] sm:$0xff]
  %v188 = vld [vmem:[%s0 + $0x570] sm:$0xff]
  %v189 = vld [vmem:[%s0 + $0x578] sm:$0xff]
  %v190 = vld [vmem:[%s0 + $0x580] sm:$0xff]
  %v191 = vld [vmem:[%s0 + $0x588] sm:$0xff]
  %v192 = vld [vmem:[%s0 + $0x590] sm:$0xff]
  %v193 = vld [vmem:[%s0 + $0x598] sm:$0xff]
  %v194 = vld [vmem:[%s0 + $0x5a0] sm:$0xff]
  %v195 = vld [vmem:[%s0 + $0x5a8] sm:$0xff]
  %v196 = vld [vmem:[%s0 + $0x5b0] sm:$0xff]
  %v197 = vld [vmem:[%s0 + $0x5b8] sm:$0xff]
  %v198 = vld [vmem:[%s0 + $0x5c0] sm:$0xff]
  %v199 = vld [vmem:[%s0 + $0x5c8] sm:$0xff]
  %v200 = vld [vmem:[%s0 + $0x5d0] sm:$0xff]
  %v201 = vld [vmem:[%s0 + $0x5d8] sm:$0xff]
  %v202 = vld [vmem:[%s0 + $0x5e0] sm:$0xff]
  %v203 = vld [vmem:[%s0 + $0x5e8] sm:$0xff]
  %v204 = vld [vmem:[%s0 + $0x5f0] sm:$0xff]
  %v205 = vld [vmem:[%s0 + $0x5f8] sm:$0xff]
  %v206 = vld [vmem:[%s0 + $0x600] sm:$0xff]
  %v207 = vld [vmem:[%s0 + $0x608] sm:$0xff]
  %v208 = vld [vmem:[%s0 + $0x610] sm:$0xff]
  %v209 = vld [vmem:[%s0 + $0x618] sm:$0xff]
  %v210 = vld [vmem:[%s0 + $0x620] sm:$0xff]
  %v211 = vld [vmem:[%s0 + $0x628] sm:$0xff]
  %v212 = vld [vmem:[%s0 + $0x630] sm:$0xff]
  %v213 = vld [vmem:[%s0 + $0x638] sm:$0xff]
  %v214 = vld [vmem:[%s0 + $0x640] sm:$0xff]
  %v215 = vld [vmem:[%s0 + $0x648] sm:$0xff]
  %v216 = vld [vmem:[%s0 + $0x650] sm:$0xff]
  %v217 = vld [vmem:[%s0 + $0x658] sm:$0xff]
  %v218 = vld [vmem:[%s0 + $0x660] sm:$0xff]
  %v219 = vld [vmem:[%s0 + $0x668] sm:$0xff]
  %v220 = vld [vmem:[%s0 + $0x670] sm:$0xff]
  %v221 = vld [vmem:[%s0 + $0x678] sm:$0xff]
  %v222 = vld [vmem:[%s0 + $0x680] sm:$0xff]
  %v223 = vld [vmem:[%s0 + $0x688] sm:$0xff]
  %v224 = vld [vmem:[%s0 + $0x690] sm:$0xff]
  %v225 = vld [vmem:[%s0 + $0x698] sm:$0xff]
  %v226 = vld [vmem:[%s0 + $0x6a0] sm:$0xff]
  %v227 = vld [vmem:[%s0 + $0x6a8] sm:$0xff]
  %v228 = vld [vmem:[%s0 + $0x6b0] sm:$0xff]
  %v229 = vld [vmem:[%s0 + $0x6b8] sm:$0xff]
  %v230 = vld [vmem:[%s0 + $0x6c0] sm:$0xff]
  %v231 = vld [vmem:[%s0 + $0x6c8] sm:$0xff]
  %v232 = vld [vmem:[%s0 + $0x6d0] sm:$0xff]
  %v233 = vld [vmem:[%s0 + $0x6d8] sm:$0xff]
  %v234 = vld [vmem:[%s0 + $0x6e0] sm:$0xff]
  %v235 = vld [vmem:[%s0 + $0x6e8] sm:$0xff]
  %v236 = vld [vmem:[%s0 + $0x6f0] sm:$0xff]
  %v237 = vld [vmem:[%s0 + $0x6f8] sm:$0xff]
  %v238 = vld [vmem:[%s0 + $0x700] sm:$0xff]
  %v239 = vld [vmem:[%s0 + $0x708] sm:$0xff]
  %v240 = vld [vmem:[%s0 + $0x710] sm:$0xff]
  %v241 = vld [vmem:[%s0 + $0x718] sm:$0xff]
  %v242 = vld [vmem:[%s0 + $0x720] sm:$0xff]
  %v243 = vld [vmem:[%s0 + $0x728] sm:$0xff]
  %v244 = vld [vmem:[%s0 + $0x730] sm:$0xff]
  %v245 = vld [vmem:[%s0 + $0x738] sm:$0xff]
  %v246 = vld [vmem:[%s0 + $0x740] sm:$0xff]
  %v247 = vld [vmem:[%s0 + $0x748] sm:$0xff]
  %v248 = vld [vmem:[%s0 + $0x750] sm:$0xff]
  %v249 = vld [vmem:[%s0 + $0x758] sm:$0xff]
  %v250 = vld [vmem:[%s0 + $0x760] sm:$0xff]
  %v251 = vld [vmem:[%s0 + $0x768] sm:$0xff]
  %v252 = vld [vmem:[%s0 + $0x770] sm:$0xff]
  %v253 = vld [vmem:[%s0 + $0x778] sm:$0xff]
  %v254 = vld [vmem:[%s0 + $0x780] sm:$0xff]
  %v255 = vld [vmem:[%s0 + $0x788] sm:$0xff]
  %v256 = vld [vmem:[%s0 + $0x790] sm:$0xff]
  %v257 = vld [vmem:[%s0 + $0x798] sm:$0xff]
  %v258 = vld [vmem:[%s0 + $0x7a0] sm:$0xff]
  %v259 = vld [vmem:[%s0 + $0x7a8] sm:$0xff]
  %v260 = vld [vmem:[%s0 + $0x7b0] sm:$0xff]
  %v261 = vld [vmem:[%s0 + $0x7b8] sm:$0xff]
  %v262 = vld [vmem:[%s0 + $0x7c0] sm:$0xff]
  %v263 = vld [vmem:[%s0 + $0x7c8] sm:$0xff]
  %v264 = vld [vmem:[%s0 + $0x7d0] sm:$0xff]
  %v265 = vld [vmem:[%s0 + $0x7d8] sm:$0xff]
  %v266 = vld [vmem:[%s0 + $0x7e0] sm:$0xff]
  %v267 = vld [vmem:[%s0 + $0x7e8] sm:$0xff]
  %v268 = vld [vmem:[%s0 + $0x7f0] sm:$0xff]
  %v269 = vld [vmem:[%s0 + $0x7f8] sm:$0xff]
  %v270 = vld [vmem:[%s0 + $0x800] sm:$0xff]
  %v271 = vld [vmem:[%s0 + $0x808] sm:$0xff]
  %v272 = vld [vmem:[%s0 + $0x810] sm:$0xff]
  %v273 = vld [vmem:[%s0 + $0x818] sm:$0xff]
  %v274 = vld [vmem:[%s0 + $0x820] sm:$0xff]
  %v275 = vld [vmem:[%s0 + $0x828] sm:$0xff]
  %v276 = vld [vmem:[%s0 + $0x830] sm:$0xff]
  %v277 = vld [vmem:[%s0 + $0x838] sm:$0xff]
  %v278 = vld [vmem:[%s0 + $0x840] sm:$0xff]
  %v279 = vld [vmem:[%s0 + $0x848] sm:$0xff]
  %v280 = vld [vmem:[%s0 + $0x850] sm:$0xff]
  %v281 = vld [vmem:[%s0 + $0x858] sm:$0xff]
  %v282 = vld [vmem:[%s0 + $0x860] sm:$0xff]
  %v283 = vld [vmem:[%s0 + $0x868] sm:$0xff]
  %v284 = vld [vmem:[%s0 + $0x870] sm:$0xff]
  %v285 = vld [vmem:[%s0 + $0x878] sm:$0xff]
  %v286 = vld [vmem:[%s0 + $0x880] sm:$0xff]
  %v287 = vld [vmem:[%s0 + $0x888] sm:$0xff]
  %v288 = vld [vmem:[%s0 + $0x890] sm:$0xff]
  %v289 = vld [vmem:[%s0 + $0x898] sm:$0xff]
  %v290 = vld [vmem:[%s0 + $0x8a0] sm:$0xff]
  %v291 = vld [vmem:[%s0 + $0x8a8] sm:$0xff]
  %v292 = vld [vmem:[%s0 + $0x8b0] sm:$0xff]
  %v293 = vld [vmem:[%s0 + $0x8b8] sm:$0xff]
  %v294 = vld [vmem:[%s0 + $0x8c0] sm:$0xff]
  %v295 = vld [vmem:[%s0 + $0x8c8] sm:$0xff]
  %v296 = vld [vmem:[%s0 + $0x8d0] sm:$0xff]
  %v297 = vld [vmem:[%s0 + $0x8d8] sm:$0xff]
  %v298 = vld [vmem:[%s0 + $0x8e0] sm:$0xff]
  %v299 = vld [vmem:[%s0 + $0x8e8] sm:$0xff]
  %v300 = vld [vmem:[%s0 + $0x8f0] sm:$0xff]
  %v301 = vld [vmem:[%s0 + $0x8f8] sm:$0xff]
  %v302 = vld [vmem:[%s0 + $0x900] sm:$0xff]
  %v303 = vld [vmem:[%s0 + $0x908] sm:$0xff]
  %v304 = vld [vmem:[%s0 + $0x910] sm:$0xff]
  %v305 = vld [vmem:[%s0 + $0x918] sm:$0xff]
  %v306 = vld [vmem:[%s0 + $0x920] sm:$0xff]
  %v307 = vld [vmem:[%s0 + $0x928] sm:$0xff]
  %v308 = vld [vmem:[%s0 + $0x930] sm:$0xff]
  %v309 = vld [vmem:[%s0 + $0x938] sm:$0xff]
  %v310 = vld [vmem:[%s0 + $0x940] sm:$0xff]
  %v311 = vld [vmem:[%s0 + $0x948] sm:$0xff]
  %v312 = vld [vmem:[%s0 + $0x950] sm:$0xff]
  %v313 = vld [vmem:[%s0 + $0x958] sm:$0xff]
  %v314 = vld [vmem:[%s0 + $0x960] sm:$0xff]
  %v315 = vld [vmem:[%s0 + $0x968] sm:$0xff]
  %v316 = vld [vmem:[%s0 + $0x970] sm:$0xff]
  %v317 = vld [vmem:[%s0 + $0x978] sm:$0xff]
  %v318 = vld [vmem:[%s0 + $0x980] sm:$0xff]
  %v319 = vld [vmem:[%s0 + $0x988] sm:$0xff]
  %v320 = vld [vmem:[%s0 + $0x990] sm:$0xff]
  %v321 = vld [vmem:[%s0 + $0x998] sm:$0xff]
  %v322 = vld [vmem:[%s0 + $0x9a0] sm:$0xff]
  %v323 = vld [vmem:[%s0 + $0x9a8] sm:$0xff]
  %v324 = vld [vmem:[%s0 + $0x9b0] sm:$0xff]
  %v325 = vld [vmem:[%s0 + $0x9b8] sm:$0xff]
  %v326 = vld [vmem:[%s0 + $0x9c0] sm:$0xff]
  %v327 = vld [vmem:[%s0 + $0x9c8] sm:$0xff]
  %v328 = vld [vmem:[%s0 + $0x9d0] sm:$0xff]
  %v329 = vld [vmem:[%s0 + $0x9d8] sm:$0xff]
  %v330 = vld [vmem:[%s0 + $0x9e0] sm:$0xff]
  %v331 = vld [vmem:[%s0 + $0x9e8] sm:$0xff]
  %v332 = vld [vmem:[%s0 + $0x9f0] sm:$0xff]
  %v333 = vld [vmem:[%s0 + $0x9f8] sm:$0xff]
  %v334 = vld [vmem:[%s0 + $0xa00] sm:$0xff]
  %v335 = vld [vmem:[%s0 + $0xa08] sm:$0xff]
  %v336 = vld [vmem:[%s0 + $0xa10] sm:$0xff]
  %v337 = vld [vmem:[%s0 + $0xa18] sm:$0xff]
  %v338 = vld [vmem:[%s0 + $0xa20] sm:$0xff]
  %v339 = vld [vmem:[%s0 + $0xa28] sm:$0xff]
  %v340 = vld [vmem:[%s0 + $0xa30] sm:$0xff]
  %v341 = vld [vmem:[%s0 + $0xa38] sm:$0xff]
  %v342 = vld [vmem:[%s0 + $0xa40] sm:$0xff]
  %v343 = vld [vmem:[%s0 + $0xa48] sm:$0xff]
  %v344 = vld [vmem:[%s0 + $0xa50] sm:$0xff]
  %v345 = vld [vmem:[%s0 + $0xa58] sm:$0xff]
  %v346 = vld [vmem:[%s0 + $0xa60] sm:$0xff]
  %v347 = vld [vmem:[%s0 + $0xa68] sm:$0xff]
  %v348 = vld [vmem:[%s0 + $0xa70] sm:$0xff]
  %v349 = vld [vmem:[%s0 + $0xa78] sm:$0xff]
  %v350 = vld [vmem:[%s0 + $0xa80] sm:$0xff]
  %v351 = vld [vmem:[%s0 + $0xa88] sm:$0xff]
  %v352 = vld [vmem:[%s0 + $0xa90] sm:$0xff]
  %v353 = vld [vmem:[%s0 + $0xa98] sm:$0xff]
  %v354 = vld [vmem:[%s0 + $0xaa0] sm:$0xff]
  %v355 = vld [vmem:[%s0 + $0xaa8] sm:$0xff]
  %v356 = vld [vmem:[%s0 + $0xab0] sm:$0xff]
  %v357 = vld [vmem:[%s0 + $0xab8] sm:$0xff]
  %v358 = vld [vmem:[%s0 + $0xac0] sm:$0xff]
  %v359 = vld [vmem:[%s0 + $0xac8] sm:$0xff]
  %v360 = vld [vmem:[%s0 + $0xad0] sm:$0xff]
  %v361 = vld [vmem:[%s0 + $0xad8] sm:$0xff]
  %v362 = vld [vmem:[%s0 + $0xae0] sm:$0xff]
  %v363 = vld [vmem:[%s0 + $0xae8] sm:$0xff]
  %v364 = vld [vmem:[%s0 + $0xaf0] sm:$0xff]
  %v365 = vld [vmem:[%s0 + $0xaf8] sm:$0xff]
  %v366 = vld [vmem:[%s0 + $0xb00] sm:$0xff]
  %v367 = vld [vmem:[%s0 + $0xb08] sm:$0xff]
  %v368 = vld [vmem:[%s0 + $0xb10] sm:$0xff]
  %v369 = vld [vmem:[%s0 + $0xb18] sm:$0xff]
  %v370 = vld [vmem:[%s0 + $0xb20] sm:$0xff]
  %v371 = vld [vmem:[%s0 + $0xb28] sm:$0xff]
  %v372 = vld [vmem:[%s0 + $0xb30] sm:$0xff]
  %v373 = vld [vmem:[%s0 + $0xb38] sm:$0xff]
  %v374 = vld [vmem:[%s0 + $0xb40] sm:$0xff]
  %v375 = vld [vmem:[%s0 + $0xb48] sm:$0xff]
  %v376 = vld [vmem:[%s0 + $0xb50] sm:$0xff]
  %v377 = vld [vmem:[%s0 + $0xb58] sm:$0xff]
  %v378 = vld [vmem:[%s0 + $0xb60] sm:$0xff]
  %v379 = vld [vmem:[%s0 + $0xb68] sm:$0xff]
  %v380 = vld [vmem:[%s0 + $0xb70] sm:$0xff]
  %v381 = vld [vmem:[%s0 + $0xb78] sm:$0xff]
  %v382 = vld [vmem:[%s0 + $0xb80] sm:$0xff]
  %v383 = vld [vmem:[%s0 + $0xb88] sm:$0xff]
  %v384 = vld [vmem:[%s0 + $0xb90] sm:$0xff]
  %v385 = vld [vmem:[%s0 + $0xb98] sm:$0xff]
  %v386 = vld [vmem:[%s0 + $0xba0] sm:$0xff]
  %v387 = vld [vmem:[%s0 + $0xba8] sm:$0xff]
  %v388 = vld [vmem:[%s0 + $0xbb0] sm:$0xff]
  %v389 = vld [vmem:[%s0 + $0xbb8] sm:$0xff]
  %v390 = vld [vmem:[%s0 + $0xbc0] sm:$0xff]
  %v391 = vld [vmem:[%s0 + $0xbc8] sm:$0xff]
  %v392 = vld [vmem:[%s0 + $0xbd0] sm:$0xff]
  %v393 = vld [vmem:[%s0 + $0xbd8] sm:$0xff]
  %v394 = vld [vmem:[%s0 + $0xbe0] sm:$0xff]
  %v395 = vld [vmem:[%s0 + $0xbe8] sm:$0xff]
  %v396 = vld [vmem:[%s0 + $0xbf0] sm:$0xff]
  %v397 = vld [vmem:[%s0 + $0xbf8] sm:$0xff]
  %v398 = vld [vmem:[%s0 + $0xc00] sm:$0xff]
  %v399 = vld [vmem:[%s0 + $0xc08] sm:$0xff]
  %v400 = vld [vmem:[%s0 + $0xc10] sm:$0xff]
  %v401 = vld [vmem:[%s0 + $0xc18] sm:$0xff]
  %v402 = vld [vmem:[%s0 + $0xc20] sm:$0xff]
  %v403 = vld [vmem:[%s0 + $0xc28] sm:$0xff]
  %v404 = vld [vmem:[%s0 + $0xc30] sm:$0xff]
  %v405 = vld [vmem:[%s0 + $0xc38] sm:$0xff]
  %v406 = vld [vmem:[%s0 + $0xc40] sm:$0xff]
  %v407 = vld [vmem:[%s0 + $0xc48] sm:$0xff]
  %v408 = vld [vmem:[%s0 + $0xc50] sm:$0xff]
  %v409 = vld [vmem:[%s0 + $0xc58] sm:$0xff]
  %v410 = vld [vmem:[%s0 + $0xc60] sm:$0xff]
  %v411 = vld [vmem:[%s0 + $0xc68] sm:$0xff]
  %v412 = vld [vmem:[%s0 + $0xc70] sm:$0xff]
  %v413 = vld [vmem:[%s0 + $0xc78] sm:$0xff]
  %v414 = vld [vmem:[%s1] sm:$0xff]
  %v415 = vld [vmem:[%s1 + $0x8] sm:$0xff]
  %v416 = vld [vmem:[%s1 + $0x10] sm:$0xff]
  %v417 = vld [vmem:[%s1 + $0x18] sm:$0xff]
  %v418 = vld [vmem:[%s1 + $0x20] sm:$0xff]
  %v419 = vld [vmem:[%s1 + $0x28] sm:$0xff]
  %v420 = vld [vmem:[%s1 + $0x30] sm:$0xff]
  %v421 = vld [vmem:[%s1 + $0x38] sm:$0xff]
  %v422 = vld [vmem:[%s1 + $0x40] sm:$0xff]
  %v423 = vld [vmem:[%s1 + $0x48] sm:$0xff]
  %v424 = vld [vmem:[%s1 + $0x50] sm:$0xff]
  %v425 = vld [vmem:[%s1 + $0x58] sm:$0xff]
  %v426 = vld [vmem:[%s1 + $0x60] sm:$0xff]
  %v427 = vld [vmem:[%s1 + $0x68] sm:$0xff]
  %v428 = vld [vmem:[%s1 + $0x70] sm:$0xff]
  %v429 = vld [vmem:[%s1 + $0x78] sm:$0xff]
  %v430 = vld [vmem:[%s1 + $0x80] sm:$0xff]
  %v431 = vld [vmem:[%s1 + $0x88] sm:$0xff]
  %v432 = vld [vmem:[%s1 + $0x90] sm:$0xff]
  %v433 = vld [vmem:[%s1 + $0x98] sm:$0xff]
  %v434 = vld [vmem:[%s1 + $0xa0] sm:$0xff]
  %v435 = vld [vmem:[%s1 + $0xa8] sm:$0xff]
  %v436 = vld [vmem:[%s1 + $0xb0] sm:$0xff]
  %v437 = vld [vmem:[%s1 + $0xb8] sm:$0xff]
  %v438 = vld [vmem:[%s1 + $0xc0] sm:$0xff]
  %v439 = vld [vmem:[%s1 + $0xc8] sm:$0xff]
  %v440 = vld [vmem:[%s1 + $0xd0] sm:$0xff]
  %v441 = vld [vmem:[%s1 + $0xd8] sm:$0xff]
  %v442 = vld [vmem:[%s1 + $0xe0] sm:$0xff]
  %v443 = vld [vmem:[%s1 + $0xe8] sm:$0xff]
  %v444 = vld [vmem:[%s1 + $0xf0] sm:$0xff]
  %v445 = vld [vmem:[%s1 + $0xf8] sm:$0xff]
  %v446 = vld [vmem:[%s1 + $0x100] sm:$0xff]
  %v447 = vld [vmem:[%s1 + $0x108] sm:$0xff]
  %v448 = vld [vmem:[%s1 + $0x110] sm:$0xff]
  %v449 = vld [vmem:[%s1 + $0x118] sm:$0xff]
  %v450 = vld [vmem:[%s1 + $0x120] sm:$0xff]
  %v451 = vld [vmem:[%s1 + $0x128] sm:$0xff]
  %v452 = vld [vmem:[%s1 + $0x130] sm:$0xff]
  %v453 = vld [vmem:[%s1 + $0x138] sm:$0xff]
  %v454 = vld [vmem:[%s1 + $0x140] sm:$0xff]
  %v455 = vld [vmem:[%s1 + $0x148] sm:$0xff]
  %v456 = vld [vmem:[%s1 + $0x150] sm:$0xff]
  %v457 = vld [vmem:[%s1 + $0x158] sm:$0xff]
  %v458 = vld [vmem:[%s1 + $0x160] sm:$0xff]
  %v459 = vld [vmem:[%s1 + $0x168] sm:$0xff]
  %v460 = vld [vmem:[%s1 + $0x170] sm:$0xff]
  %v461 = vld [vmem:[%s1 + $0x178] sm:$0xff]
  %v462 = vld [vmem:[%s1 + $0x180] sm:$0xff]
  %v463 = vld [vmem:[%s1 + $0x188] sm:$0xff]
  %v464 = vld [vmem:[%s1 + $0x190] sm:$0xff]
  %v465 = vld [vmem:[%s1 + $0x198] sm:$0xff]
  %v466 = vld [vmem:[%s1 + $0x1a0] sm:$0xff]
  %v467 = vld [vmem:[%s1 + $0x1a8] sm:$0xff]
  %v468 = vld [vmem:[%s1 + $0x1b0] sm:$0xff]
  %v469 = vld [vmem:[%s1 + $0x1b8] sm:$0xff]
  %v470 = vld [vmem:[%s1 + $0x1c0] sm:$0xff]
  %v471 = vld [vmem:[%s1 + $0x1c8] sm:$0xff]
  %v472 = vld [vmem:[%s1 + $0x1d0] sm:$0xff]
  %v473 = vld [vmem:[%s1 + $0x1d8] sm:$0xff]
  %v474 = vld [vmem:[%s1 + $0x1e0] sm:$0xff]
  %v475 = vld [vmem:[%s1 + $0x1e8] sm:$0xff]
  %v476 = vld [vmem:[%s1 + $0x1f0] sm:$0xff]
  %v477 = vld [vmem:[%s1 + $0x1f8] sm:$0xff]
  %v478 = vld [vmem:[%s1 + $0x200] sm:$0xff]
  %v479 = vld [vmem:[%s1 + $0x208] sm:$0xff]
  %v480 = vld [vmem:[%s1 + $0x210] sm:$0xff]
  %v481 = vld [vmem:[%s1 + $0x218] sm:$0xff]
  %v482 = vld [vmem:[%s1 + $0x220] sm:$0xff]
  %v483 = vld [vmem:[%s1 + $0x228] sm:$0xff]
  %v484 = vld [vmem:[%s1 + $0x230] sm:$0xff]
  %v485 = vld [vmem:[%s1 + $0x238] sm:$0xff]
  %v486 = vld [vmem:[%s1 + $0x240] sm:$0xff]
  %v487 = vld [vmem:[%s1 + $0x248] sm:$0xff]
  %v488 = vld [vmem:[%s1 + $0x250] sm:$0xff]
  %v489 = vld [vmem:[%s1 + $0x258] sm:$0xff]
  %v490 = vld [vmem:[%s1 + $0x260] sm:$0xff]
  %v491 = vld [vmem:[%s1 + $0x268] sm:$0xff]
  %v492 = vld [vmem:[%s1 + $0x270] sm:$0xff]
  %v493 = vld [vmem:[%s1 + $0x278] sm:$0xff]
  %v494 = vld [vmem:[%s1 + $0x280] sm:$0xff]
  %v495 = vld [vmem:[%s1 + $0x288] sm:$0xff]
  %v496 = vld [vmem:[%s1 + $0x290] sm:$0xff]
  %v497 = vld [vmem:[%s1 + $0x298] sm:$0xff]
  %v498 = vld [vmem:[%s1 + $0x2a0] sm:$0xff]
  %v499 = vld [vmem:[%s1 + $0x2a8] sm:$0xff]
  %v500 = vld [vmem:[%s1 + $0x2b0] sm:$0xff]
  %v501 = vld [vmem:[%s1 + $0x2b8] sm:$0xff]
  %v502 = vld [vmem:[%s1 + $0x2c0] sm:$0xff]
  %v503 = vld [vmem:[%s1 + $0x2c8] sm:$0xff]
  %v504 = vld [vmem:[%s1 + $0x2d0] sm:$0xff]
  %v505 = vld [vmem:[%s1 + $0x2d8] sm:$0xff]
  %v506 = vld [vmem:[%s1 + $0x2e0] sm:$0xff]
  %v507 = vld [vmem:[%s1 + $0x2e8] sm:$0xff]
  %v508 = vld [vmem:[%s1 + $0x2f0] sm:$0xff]
  %v509 = vld [vmem:[%s1 + $0x2f8] sm:$0xff]
  %v510 = vld [vmem:[%s1 + $0x300] sm:$0xff]
  %v511 = vld [vmem:[%s1 + $0x308] sm:$0xff]
  %v512 = vld [vmem:[%s1 + $0x310] sm:$0xff]
  %v513 = vld [vmem:[%s1 + $0x318] sm:$0xff]
  %v514 = vld [vmem:[%s1 + $0x320] sm:$0xff]
  %v515 = vld [vmem:[%s1 + $0x328] sm:$0xff]
  %v516 = vld [vmem:[%s1 + $0x330] sm:$0xff]
  %v517 = vld [vmem:[%s1 + $0x338] sm:$0xff]
  %v518 = vld [vmem:[%s1 + $0x340] sm:$0xff]
  %v519 = vld [vmem:[%s1 + $0x348] sm:$0xff]
  %v520 = vld [vmem:[%s1 + $0x350] sm:$0xff]
  %v521 = vld [vmem:[%s1 + $0x358] sm:$0xff]
  %v522 = vld [vmem:[%s1 + $0x360] sm:$0xff]
  %v523 = vld [vmem:[%s1 + $0x368] sm:$0xff]
  %v524 = vld [vmem:[%s1 + $0x370] sm:$0xff]
  %v525 = vld [vmem:[%s1 + $0x378] sm:$0xff]
  %v526 = vld [vmem:[%s1 + $0x380] sm:$0xff]
  %v527 = vld [vmem:[%s1 + $0x388] sm:$0xff]
  %v528 = vld [vmem:[%s1 + $0x390] sm:$0xff]
  %v529 = vld [vmem:[%s1 + $0x398] sm:$0xff]
  %v530 = vld [vmem:[%s1 + $0x3a0] sm:$0xff]
  %v531 = vld [vmem:[%s1 + $0x3a8] sm:$0xff]
  %v532 = vld [vmem:[%s1 + $0x3b0] sm:$0xff]
  %v533 = vld [vmem:[%s1 + $0x3b8] sm:$0xff]
  %v534 = vld [vmem:[%s1 + $0x3c0] sm:$0xff]
  %v535 = vld [vmem:[%s1 + $0x3c8] sm:$0xff]
  %v536 = vld [vmem:[%s1 + $0x3d0] sm:$0xff]
  %v537 = vld [vmem:[%s1 + $0x3d8] sm:$0xff]
  %v538 = vld [vmem:[%s1 + $0x3e0] sm:$0xff]
  %v539 = vld [vmem:[%s1 + $0x3e8] sm:$0xff]
  %v540 = vld [vmem:[%s1 + $0x3f0] sm:$0xff]
  %v541 = vld [vmem:[%s1 + $0x3f8] sm:$0xff]
  %v542 = vld [vmem:[%s1 + $0x400] sm:$0xff]
  %v543 = vld [vmem:[%s1 + $0x408] sm:$0xff]
  %v544 = vld [vmem:[%s1 + $0x410] sm:$0xff]
  %v545 = vld [vmem:[%s1 + $0x418] sm:$0xff]
  %v546 = vld [vmem:[%s1 + $0x420] sm:$0xff]
  %v547 = vld [vmem:[%s1 + $0x428] sm:$0xff]
  %v548 = vld [vmem:[%s1 + $0x430] sm:$0xff]
  %v549 = vld [vmem:[%s1 + $0x438] sm:$0xff]
  %v550 = vld [vmem:[%s1 + $0x440] sm:$0xff]
  %v551 = vld [vmem:[%s1 + $0x448] sm:$0xff]
  %v552 = vld [vmem:[%s1 + $0x450] sm:$0xff]
  %v553 = vld [vmem:[%s1 + $0x458] sm:$0xff]
  %v554 = vld [vmem:[%s1 + $0x460] sm:$0xff]
  %v555 = vld [vmem:[%s1 + $0x468] sm:$0xff]
  %v556 = vld [vmem:[%s1 + $0x470] sm:$0xff]
  %v557 = vld [vmem:[%s1 + $0x478] sm:$0xff]
  %v558 = vld [vmem:[%s1 + $0x480] sm:$0xff]
  %v559 = vld [vmem:[%s1 + $0x488] sm:$0xff]
  %v560 = vld [vmem:[%s1 + $0x490] sm:$0xff]
  %v561 = vld [vmem:[%s1 + $0x498] sm:$0xff]
  %v562 = vld [vmem:[%s1 + $0x4a0] sm:$0xff]
  %v563 = vld [vmem:[%s1 + $0x4a8] sm:$0xff]
  %v564 = vld [vmem:[%s1 + $0x4b0] sm:$0xff]
  %v565 = vld [vmem:[%s1 + $0x4b8] sm:$0xff]
  %v566 = vld [vmem:[%s1 + $0x4c0] sm:$0xff]
  %v567 = vld [vmem:[%s1 + $0x4c8] sm:$0xff]
  %v568 = vld [vmem:[%s1 + $0x4d0] sm:$0xff]
  %v569 = vld [vmem:[%s1 + $0x4d8] sm:$0xff]
  %v570 = vld [vmem:[%s1 + $0x4e0] sm:$0xff]
  %v571 = vld [vmem:[%s1 + $0x4e8] sm:$0xff]
  %v572 = vld [vmem:[%s1 + $0x4f0] sm:$0xff]
  %v573 = vld [vmem:[%s1 + $0x4f8] sm:$0xff]
  %v574 = vld [vmem:[%s1 + $0x500] sm:$0xff]
  %v575 = vld [vmem:[%s1 + $0x508] sm:$0xff]
  %v576 = vld [vmem:[%s1 + $0x510] sm:$0xff]
  %v577 = vld [vmem:[%s1 + $0x518] sm:$0xff]
  %v578 = vld [vmem:[%s1 + $0x520] sm:$0xff]
  %v579 = vld [vmem:[%s1 + $0x528] sm:$0xff]
  %v580 = vld [vmem:[%s1 + $0x530] sm:$0xff]
  %v581 = vld [vmem:[%s1 + $0x538] sm:$0xff]
  %v582 = vld [vmem:[%s1 + $0x540] sm:$0xff]
  %v583 = vld [vmem:[%s1 + $0x548] sm:$0xff]
  %v584 = vld [vmem:[%s1 + $0x550] sm:$0xff]
  %v585 = vld [vmem:[%s1 + $0x558] sm:$0xff]
  %v586 = vld [vmem:[%s1 + $0x560] sm:$0xff]
  %v587 = vld [vmem:[%s1 + $0x568] sm:$0xff]
  %v588 = vld [vmem:[%s1 + $0x570] sm:$0xff]
  %v589 = vld [vmem:[%s1 + $0x578] sm:$0xff]
  %v590 = vld [vmem:[%s1 + $0x580] sm:$0xff]
  %v591 = vld [vmem:[%s1 + $0x588] sm:$0xff]
  %v592 = vld [vmem:[%s1 + $0x590] sm:$0xff]
  %v593 = vld [vmem:[%s1 + $0x598] sm:$0xff]
  %v594 = vld [vmem:[%s1 + $0x5a0] sm:$0xff]
  %v595 = vld [vmem:[%s1 + $0x5a8] sm:$0xff]
  %v596 = vld [vmem:[%s1 + $0x5b0] sm:$0xff]
  %v597 = vld [vmem:[%s1 + $0x5b8] sm:$0xff]
  %v598 = vld [vmem:[%s1 + $0x5c0] sm:$0xff]
  %v599 = vld [vmem:[%s1 + $0x5c8] sm:$0xff]
  %v600 = vld [vmem:[%s1 + $0x5d0] sm:$0xff]
  %v601 = vld [vmem:[%s1 + $0x5d8] sm:$0xff]
  %v602 = vld [vmem:[%s1 + $0x5e0] sm:$0xff]
  %v603 = vld [vmem:[%s1 + $0x5e8] sm:$0xff]
  %v604 = vld [vmem:[%s1 + $0x5f0] sm:$0xff]
  %v605 = vld [vmem:[%s1 + $0x5f8] sm:$0xff]
  %v606 = vld [vmem:[%s1 + $0x600] sm:$0xff]
  %v607 = vld [vmem:[%s1 + $0x608] sm:$0xff]
  %v608 = vld [vmem:[%s1 + $0x610] sm:$0xff]
  %v609 = vld [vmem:[%s1 + $0x618] sm:$0xff]
  %v610 = vld [vmem:[%s1 + $0x620] sm:$0xff]
  %v611 = vld [vmem:[%s1 + $0x628] sm:$0xff]
  %v612 = vld [vmem:[%s1 + $0x630] sm:$0xff]
  %v613 = vld [vmem:[%s1 + $0x638] sm:$0xff]
  %v614 = vld [vmem:[%s1 + $0x640] sm:$0xff]
  %v615 = vld [vmem:[%s1 + $0x648] sm:$0xff]
  %v616 = vld [vmem:[%s1 + $0x650] sm:$0xff]
  %v617 = vld [vmem:[%s1 + $0x658] sm:$0xff]
  %v618 = vld [vmem:[%s1 + $0x660] sm:$0xff]
  %v619 = vld [vmem:[%s1 + $0x668] sm:$0xff]
  %v620 = vld [vmem:[%s1 + $0x670] sm:$0xff]
  %v621 = vld [vmem:[%s1 + $0x678] sm:$0xff]
  %v622 = vld [vmem:[%s1 + $0x680] sm:$0xff]
  %v623 = vld [vmem:[%s1 + $0x688] sm:$0xff]
  %v624 = vld [vmem:[%s1 + $0x690] sm:$0xff]
  %v625 = vld [vmem:[%s1 + $0x698] sm:$0xff]
  %v626 = vld [vmem:[%s1 + $0x6a0] sm:$0xff]
  %v627 = vld [vmem:[%s1 + $0x6a8] sm:$0xff]
  %v628 = vld [vmem:[%s1 + $0x6b0] sm:$0xff]
  %v629 = vld [vmem:[%s1 + $0x6b8] sm:$0xff]
  %v630 = vld [vmem:[%s1 + $0x6c0] sm:$0xff]
  %v631 = vld [vmem:[%s1 + $0x6c8] sm:$0xff]
  %v632 = vld [vmem:[%s1 + $0x6d0] sm:$0xff]
  %v633 = vld [vmem:[%s1 + $0x6d8] sm:$0xff]
  %v634 = vld [vmem:[%s1 + $0x6e0] sm:$0xff]
  %v635 = vld [vmem:[%s1 + $0x6e8] sm:$0xff]
  %v636 = vld [vmem:[%s1 + $0x6f0] sm:$0xff]
  %v637 = vld [vmem:[%s1 + $0x6f8] sm:$0xff]
  %v638 = vld [vmem:[%s1 + $0x700] sm:$0xff]
  %v639 = vld [vmem:[%s1 + $0x708] sm:$0xff]
  %v640 = vld [vmem:[%s1 + $0x710] sm:$0xff]
  %v641 = vld [vmem:[%s1 + $0x718] sm:$0xff]
  %v642 = vld [vmem:[%s1 + $0x720] sm:$0xff]
  %v643 = vld [vmem:[%s1 + $0x728] sm:$0xff]
  %v644 = vld [vmem:[%s1 + $0x730] sm:$0xff]
  %v645 = vld [vmem:[%s1 + $0x738] sm:$0xff]
  %v646 = vld [vmem:[%s1 + $0x740] sm:$0xff]
  %v647 = vld [vmem:[%s1 + $0x748] sm:$0xff]
  %v648 = vld [vmem:[%s1 + $0x750] sm:$0xff]
  %v649 = vld [vmem:[%s1 + $0x758] sm:$0xff]
  %v650 = vld [vmem:[%s1 + $0x760] sm:$0xff]
  %v651 = vld [vmem:[%s1 + $0x768] sm:$0xff]
  %v652 = vld [vmem:[%s1 + $0x770] sm:$0xff]
  %v653 = vld [vmem:[%s1 + $0x778] sm:$0xff]
  %v654 = vld [vmem:[%s1 + $0x780] sm:$0xff]
  %v655 = vld [vmem:[%s1 + $0x788] sm:$0xff]
  %v656 = vld [vmem:[%s1 + $0x790] sm:$0xff]
  %v657 = vld [vmem:[%s1 + $0x798] sm:$0xff]
  %v658 = vld [vmem:[%s1 + $0x7a0] sm:$0xff]
  %v659 = vld [vmem:[%s1 + $0x7a8] sm:$0xff]
  %v660 = vld [vmem:[%s1 + $0x7b0] sm:$0xff]
  %v661 = vld [vmem:[%s1 + $0x7b8] sm:$0xff]
  %v662 = vld [vmem:[%s1 + $0x7c0] sm:$0xff]
  %v663 = vld [vmem:[%s1 + $0x7c8] sm:$0xff]
  %v664 = vld [vmem:[%s1 + $0x7d0] sm:$0xff]
  %v665 = vld [vmem:[%s1 + $0x7d8] sm:$0xff]
  %v666 = vld [vmem:[%s1 + $0x7e0] sm:$0xff]
  %v667 = vld [vmem:[%s1 + $0x7e8] sm:$0xff]
  %v668 = vld [vmem:[%s1 + $0x7f0] sm:$0xff]
  %v669 = vld [vmem:[%s1 + $0x7f8] sm:$0xff]
  %v670 = vld [vmem:[%s1 + $0x800] sm:$0xff]
  %v671 = vld [vmem:[%s1 + $0x808] sm:$0xff]
  %v672 = vld [vmem:[%s1 + $0x810] sm:$0xff]
  %v673 = vld [vmem:[%s1 + $0x818] sm:$0xff]
  %v674 = vld [vmem:[%s1 + $0x820] sm:$0xff]
  %v675 = vld [vmem:[%s1 + $0x828] sm:$0xff]
  %v676 = vld [vmem:[%s1 + $0x830] sm:$0xff]
  %v677 = vld [vmem:[%s1 + $0x838] sm:$0xff]
  %v678 = vld [vmem:[%s1 + $0x840] sm:$0xff]
  %v679 = vld [vmem:[%s1 + $0x848] sm:$0xff]
  %v680 = vld [vmem:[%s1 + $0x850] sm:$0xff]
  %v681 = vld [vmem:[%s1 + $0x858] sm:$0xff]
  %v682 = vld [vmem:[%s1 + $0x860] sm:$0xff]
  %v683 = vld [vmem:[%s1 + $0x868] sm:$0xff]
  %v684 = vld [vmem:[%s1 + $0x870] sm:$0xff]
  %v685 = vld [vmem:[%s1 + $0x878] sm:$0xff]
  %v686 = vld [vmem:[%s1 + $0x880] sm:$0xff]
  %v687 = vld [vmem:[%s1 + $0x888] sm:$0xff]
  %v688 = vld [vmem:[%s1 + $0x890] sm:$0xff]
  %v689 = vld [vmem:[%s1 + $0x898] sm:$0xff]
  %v690 = vld [vmem:[%s1 + $0x8a0] sm:$0xff]
  %v691 = vld [vmem:[%s1 + $0x8a8] sm:$0xff]
  %v692 = vld [vmem:[%s1 + $0x8b0] sm:$0xff]
  %v693 = vld [vmem:[%s1 + $0x8b8] sm:$0xff]
  %v694 = vld [vmem:[%s1 + $0x8c0] sm:$0xff]
  %v695 = vld [vmem:[%s1 + $0x8c8] sm:$0xff]
  %v696 = vld [vmem:[%s1 + $0x8d0] sm:$0xff]
  %v697 = vld [vmem:[%s1 + $0x8d8] sm:$0xff]
  %v698 = vld [vmem:[%s1 + $0x8e0] sm:$0xff]
  %v699 = vld [vmem:[%s1 + $0x8e8] sm:$0xff]
  %v700 = vld [vmem:[%s1 + $0x8f0] sm:$0xff]
  %v701 = vld [vmem:[%s1 + $0x8f8] sm:$0xff]
  %v702 = vld [vmem:[%s1 + $0x900] sm:$0xff]
  %v703 = vld [vmem:[%s1 + $0x908] sm:$0xff]
  %v704 = vld [vmem:[%s1 + $0x910] sm:$0xff]
  %v705 = vld [vmem:[%s1 + $0x918] sm:$0xff]
  %v706 = vld [vmem:[%s1 + $0x920] sm:$0xff]
  %v707 = vld [vmem:[%s1 + $0x928] sm:$0xff]
  %v708 = vld [vmem:[%s1 + $0x930] sm:$0xff]
  %v709 = vld [vmem:[%s1 + $0x938] sm:$0xff]
  %v710 = vld [vmem:[%s1 + $0x940] sm:$0xff]
  %v711 = vld [vmem:[%s1 + $0x948] sm:$0xff]
  %v712 = vld [vmem:[%s1 + $0x950] sm:$0xff]
  %v713 = vld [vmem:[%s1 + $0x958] sm:$0xff]
  %v714 = vld [vmem:[%s1 + $0x960] sm:$0xff]
  %v715 = vld [vmem:[%s1 + $0x968] sm:$0xff]
  %v716 = vld [vmem:[%s1 + $0x970] sm:$0xff]
  %v717 = vld [vmem:[%s1 + $0x978] sm:$0xff]
  %v718 = vld [vmem:[%s1 + $0x980] sm:$0xff]
  %v719 = vld [vmem:[%s1 + $0x988] sm:$0xff]
  %v720 = vld [vmem:[%s1 + $0x990] sm:$0xff]
  %v721 = vld [vmem:[%s1 + $0x998] sm:$0xff]
  %v722 = vld [vmem:[%s1 + $0x9a0] sm:$0xff]
  %v723 = vld [vmem:[%s1 + $0x9a8] sm:$0xff]
  %v724 = vld [vmem:[%s1 + $0x9b0] sm:$0xff]
  %v725 = vld [vmem:[%s1 + $0x9b8] sm:$0xff]
  %v726 = vld [vmem:[%s1 + $0x9c0] sm:$0xff]
  %v727 = vld [vmem:[%s1 + $0x9c8] sm:$0xff]
  %v728 = vld [vmem:[%s1 + $0x9d0] sm:$0xff]
  %v729 = vld [vmem:[%s1 + $0x9d8] sm:$0xff]
  %v730 = vld [vmem:[%s1 + $0x9e0] sm:$0xff]
  %v731 = vld [vmem:[%s1 + $0x9e8] sm:$0xff]
  %v732 = vld [vmem:[%s1 + $0x9f0] sm:$0xff]
  %v733 = vld [vmem:[%s1 + $0x9f8] sm:$0xff]
  %v734 = vld [vmem:[%s1 + $0xa00] sm:$0xff]
  %v735 = vld [vmem:[%s1 + $0xa08] sm:$0xff]
  %v736 = vld [vmem:[%s1 + $0xa10] sm:$0xff]
  %v737 = vld [vmem:[%s1 + $0xa18] sm:$0xff]
  %v738 = vld [vmem:[%s1 + $0xa20] sm:$0xff]
  %v739 = vld [vmem:[%s1 + $0xa28] sm:$0xff]
  %v740 = vld [vmem:[%s1 + $0xa30] sm:$0xff]
  %v741 = vld [vmem:[%s1 + $0xa38] sm:$0xff]
  %v742 = vld [vmem:[%s1 + $0xa40] sm:$0xff]
  %v743 = vld [vmem:[%s1 + $0xa48] sm:$0xff]
  %v744 = vld [vmem:[%s1 + $0xa50] sm:$0xff]
  %v745 = vld [vmem:[%s1 + $0xa58] sm:$0xff]
  %v746 = vld [vmem:[%s1 + $0xa60] sm:$0xff]
  %v747 = vld [vmem:[%s1 + $0xa68] sm:$0xff]
  %v748 = vld [vmem:[%s1 + $0xa70] sm:$0xff]
  %v749 = vld [vmem:[%s1 + $0xa78] sm:$0xff]
  %v750 = vld [vmem:[%s1 + $0xa80] sm:$0xff]
  %v751 = vld [vmem:[%s1 + $0xa88] sm:$0xff]
  %v752 = vld [vmem:[%s1 + $0xa90] sm:$0xff]
  %v753 = vld [vmem:[%s1 + $0xa98] sm:$0xff]
  %v754 = vld [vmem:[%s1 + $0xaa0] sm:$0xff]
  %v755 = vld [vmem:[%s1 + $0xaa8] sm:$0xff]
  %v756 = vld [vmem:[%s1 + $0xab0] sm:$0xff]
  %v757 = vld [vmem:[%s1 + $0xab8] sm:$0xff]
  %v758 = vld [vmem:[%s1 + $0xac0] sm:$0xff]
  %v759 = vld [vmem:[%s1 + $0xac8] sm:$0xff]
  %v760 = vld [vmem:[%s1 + $0xad0] sm:$0xff]
  %v761 = vld [vmem:[%s1 + $0xad8] sm:$0xff]
  %v762 = vld [vmem:[%s1 + $0xae0] sm:$0xff]
  %v763 = vld [vmem:[%s1 + $0xae8] sm:$0xff]
  %v764 = vld [vmem:[%s1 + $0xaf0] sm:$0xff]
  %v765 = vld [vmem:[%s1 + $0xaf8] sm:$0xff]
  %v766 = vld [vmem:[%s1 + $0xb00] sm:$0xff]
  %v767 = vld [vmem:[%s1 + $0xb08] sm:$0xff]
  %v768 = vld [vmem:[%s1 + $0xb10] sm:$0xff]
  %v769 = vld [vmem:[%s1 + $0xb18] sm:$0xff]
  %v770 = vld [vmem:[%s1 + $0xb20] sm:$0xff]
  %v771 = vld [vmem:[%s1 + $0xb28] sm:$0xff]
  %v772 = vld [vmem:[%s1 + $0xb30] sm:$0xff]
  %v773 = vld [vmem:[%s1 + $0xb38] sm:$0xff]
  %v774 = vld [vmem:[%s1 + $0xb40] sm:$0xff]
  %v775 = vld [vmem:[%s1 + $0xb48] sm:$0xff]
  %v776 = vld [vmem:[%s1 + $0xb50] sm:$0xff]
  %v777 = vld [vmem:[%s1 + $0xb58] sm:$0xff]
  %v778 = vld [vmem:[%s1 + $0xb60] sm:$0xff]
  %v779 = vld [vmem:[%s1 + $0xb68] sm:$0xff]
  %v780 = vld [vmem:[%s1 + $0xb70] sm:$0xff]
  %v781 = vld [vmem:[%s1 + $0xb78] sm:$0xff]
  %v782 = vld [vmem:[%s1 + $0xb80] sm:$0xff]
  %v783 = vld [vmem:[%s1 + $0xb88] sm:$0xff]
  %v784 = vld [vmem:[%s1 + $0xb90] sm:$0xff]
  %v785 = vld [vmem:[%s1 + $0xb98] sm:$0xff]
  %v786 = vld [vmem:[%s1 + $0xba0] sm:$0xff]
  %v787 = vld [vmem:[%s1 + $0xba8] sm:$0xff]
  %v788 = vld [vmem:[%s1 + $0xbb0] sm:$0xff]
  %v789 = vld [vmem:[%s1 + $0xbb8] sm:$0xff]
  %v790 = vld [vmem:[%s1 + $0xbc0] sm:$0xff]
  %v791 = vld [vmem:[%s1 + $0xbc8] sm:$0xff]
  %v792 = vld [vmem:[%s1 + $0xbd0] sm:$0xff]
  %v793 = vld [vmem:[%s1 + $0xbd8] sm:$0xff]
  %v794 = vld [vmem:[%s1 + $0xbe0] sm:$0xff]
  %v795 = vld [vmem:[%s1 + $0xbe8] sm:$0xff]
  %v796 = vld [vmem:[%s1 + $0xbf0] sm:$0xff]
  %v797 = vld [vmem:[%s1 + $0xbf8] sm:$0xff]
  %v798 = vld [vmem:[%s1 + $0xc00] sm:$0xff]
  %v799 = vld [vmem:[%s1 + $0xc08] sm:$0xff]
  %v800 = vld [vmem:[%s1 + $0xc10] sm:$0xff]
  %v801 = vld [vmem:[%s1 + $0xc18] sm:$0xff]
  %v802 = vld [vmem:[%s1 + $0xc20] sm:$0xff]
  %v803 = vld [vmem:[%s1 + $0xc28] sm:$0xff]
  %v804 = vld [vmem:[%s1 + $0xc30] sm:$0xff]
  %v805 = vld [vmem:[%s1 + $0xc38] sm:$0xff]
  %v806 = vld [vmem:[%s1 + $0xc40] sm:$0xff]
  %v807 = vld [vmem:[%s1 + $0xc48] sm:$0xff]
  %v808 = vld [vmem:[%s1 + $0xc50] sm:$0xff]
  %v809 = vld [vmem:[%s1 + $0xc58] sm:$0xff]
  %v810 = vld [vmem:[%s1 + $0xc60] sm:$0xff]
  %v811 = vld [vmem:[%s1 + $0xc68] sm:$0xff]
  %v812 = vld [vmem:[%s1 + $0xc70] sm:$0xff]
  %v813 = vld [vmem:[%s1 + $0xc78] sm:$0xff]
  %v814 = vld [vmem:[%s2] sm:$0x1]
  %v816 = vperm.slane %v814, 0
  %818 = vmatpush.msra.mxu0 %v429
  %819 = vmatpush.msra.mxu0 %v428
  %820 = vmatpush.msra.mxu0 %v427
  %821 = vmatpush.msra.mxu0 %v426
  %822 = vmatpush.msra.mxu0 %v425
  %823 = vmatpush.msra.mxu0 %v424
  %824 = vmatpush.msra.mxu0 %v423
  %825 = vmatpush.msra.mxu0 %v422
  %826 = vmatpush.msra.mxu0 %v421
  %827 = vmatpush.msra.mxu0 %v420
  %828 = vmatpush.msra.mxu0 %v419
  %829 = vmatpush.msra.mxu0 %v418
  %830 = vmatpush.msra.mxu0 %v417
  %831 = vmatpush.msra.mxu0 %v416
  %832 = vmatpush.msra.mxu0 %v415
  %833 = vmatpush.msra.mxu0 %v414
  %834 = vmatmul.f32.gmra.mxu0 %v14
  %v835 = vpop.f32.mrf.mxu0
  %v836 = vadd.f32 %v816, %v835
  %837 = vmatmul.f32.gmra.mxu0 %v39
  %v838 = vpop.f32.mrf.mxu0
  %v839 = vadd.f32 %v816, %v838
  %840 = vmatmul.f32.gmra.mxu0 %v64
  %v841 = vpop.f32.mrf.mxu0
  %v842 = vadd.f32 %v816, %v841
  %843 = vmatmul.f32.gmra.mxu0 %v89
  %v844 = vpop.f32.mrf.mxu0
  %v845 = vadd.f32 %v816, %v844
  %846 = vmatmul.f32.gmra.mxu0 %v114
  %v847 = vpop.f32.mrf.mxu0
  %v848 = vadd.f32 %v816, %v847
  %849 = vmatmul.f32.gmra.mxu0 %v139
  %v850 = vpop.f32.mrf.mxu0
  %v851 = vadd.f32 %v816, %v850
  %852 = vmatmul.f32.gmra.mxu0 %v164
  %v853 = vpop.f32.mrf.mxu0
  %v854 = vadd.f32 %v816, %v853
  %855 = vmatmul.f32.gmra.mxu0 %v189
  %v856 = vpop.f32.mrf.mxu0
  %v857 = vadd.f32 %v816, %v856
  %858 = vmatmul.f32.gmra.mxu0 %v214
  %v859 = vpop.f32.mrf.mxu0
  %v860 = vadd.f32 %v816, %v859
  %861 = vmatmul.f32.gmra.mxu0 %v239
  %v862 = vpop.f32.mrf.mxu0
  %v863 = vadd.f32 %v816, %v862
  %864 = vmatmul.f32.gmra.mxu0 %v264
  %v865 = vpop.f32.mrf.mxu0
  %v866 = vadd.f32 %v816, %v865
  %867 = vmatmul.f32.gmra.mxu0 %v289
  %v868 = vpop.f32.mrf.mxu0
  %v869 = vadd.f32 %v816, %v868
  %870 = vmatmul.f32.gmra.mxu0 %v314
  %v871 = vpop.f32.mrf.mxu0
  %v872 = vadd.f32 %v816, %v871
  %873 = vmatmul.f32.gmra.mxu0 %v339
  %v874 = vpop.f32.mrf.mxu0
  %v875 = vadd.f32 %v816, %v874
  %876 = vmatmul.f32.gmra.mxu0 %v364
  %v877 = vpop.f32.mrf.mxu0
  %v878 = vadd.f32 %v816, %v877
  %879 = vmatmul.f32.gmra.mxu0 %v389
  %v880 = vpop.f32.mrf.mxu0
  %v881 = vadd.f32 %v816, %v880
  %882 = vdwg.mxu0
  %883 = vmatpush.msra.mxu0 %v445
  %884 = vmatpush.msra.mxu0 %v444
  %885 = vmatpush.msra.mxu0 %v443
  %886 = vmatpush.msra.mxu0 %v442
  %887 = vmatpush.msra.mxu0 %v441
  %888 = vmatpush.msra.mxu0 %v440
  %889 = vmatpush.msra.mxu0 %v439
  %890 = vmatpush.msra.mxu0 %v438
  %891 = vmatpush.msra.mxu0 %v437
  %892 = vmatpush.msra.mxu0 %v436
  %893 = vmatpush.msra.mxu0 %v435
  %894 = vmatpush.msra.mxu0 %v434
  %895 = vmatpush.msra.mxu0 %v433
  %896 = vmatpush.msra.mxu0 %v432
  %897 = vmatpush.msra.mxu0 %v431
  %898 = vmatpush.msra.mxu0 %v430
  %899 = vmatmul.f32.gmra.mxu0 %v15
  %v900 = vpop.f32.mrf.mxu0
  %v901 = vadd.f32 %v836, %v900
  %902 = vmatmul.f32.gmra.mxu0 %v40
  %v903 = vpop.f32.mrf.mxu0
  %v904 = vadd.f32 %v839, %v903
  %905 = vmatmul.f32.gmra.mxu0 %v65
  %v906 = vpop.f32.mrf.mxu0
  %v907 = vadd.f32 %v842, %v906
  %908 = vmatmul.f32.gmra.mxu0 %v90
  %v909 = vpop.f32.mrf.mxu0
  %v910 = vadd.f32 %v845, %v909
  %911 = vmatmul.f32.gmra.mxu0 %v115
  %v912 = vpop.f32.mrf.mxu0
  %v913 = vadd.f32 %v848, %v912
  %914 = vmatmul.f32.gmra.mxu0 %v140
  %v915 = vpop.f32.mrf.mxu0
  %v916 = vadd.f32 %v851, %v915
  %917 = vmatmul.f32.gmra.mxu0 %v165
  %v918 = vpop.f32.mrf.mxu0
  %v919 = vadd.f32 %v854, %v918
  %920 = vmatmul.f32.gmra.mxu0 %v190
  %v921 = vpop.f32.mrf.mxu0
  %v922 = vadd.f32 %v857, %v921
  %923 = vmatmul.f32.gmra.mxu0 %v215
  %v924 = vpop.f32.mrf.mxu0
  %v925 = vadd.f32 %v860, %v924
  %926 = vmatmul.f32.gmra.mxu0 %v240
  %v927 = vpop.f32.mrf.mxu0
  %v928 = vadd.f32 %v863, %v927
  %929 = vmatmul.f32.gmra.mxu0 %v265
  %v930 = vpop.f32.mrf.mxu0
  %v931 = vadd.f32 %v866, %v930
  %932 = vmatmul.f32.gmra.mxu0 %v290
  %v933 = vpop.f32.mrf.mxu0
  %v934 = vadd.f32 %v869, %v933
  %935 = vmatmul.f32.gmra.mxu0 %v315
  %v936 = vpop.f32.mrf.mxu0
  %v937 = vadd.f32 %v872, %v936
  %938 = vmatmul.f32.gmra.mxu0 %v340
  %v939 = vpop.f32.mrf.mxu0
  %v940 = vadd.f32 %v875, %v939
  %941 = vmatmul.f32.gmra.mxu0 %v365
  %v942 = vpop.f32.mrf.mxu0
  %v943 = vadd.f32 %v878, %v942
  %944 = vmatmul.f32.gmra.mxu0 %v390
  %v945 = vpop.f32.mrf.mxu0
  %v946 = vadd.f32 %v881, %v945
  %947 = vdwg.mxu0
  %948 = vmatpush.msra.mxu0 %v461
  %949 = vmatpush.msra.mxu0 %v460
  %950 = vmatpush.msra.mxu0 %v459
  %951 = vmatpush.msra.mxu0 %v458
  %952 = vmatpush.msra.mxu0 %v457
  %953 = vmatpush.msra.mxu0 %v456
  %954 = vmatpush.msra.mxu0 %v455
  %955 = vmatpush.msra.mxu0 %v454
  %956 = vmatpush.msra.mxu0 %v453
  %957 = vmatpush.msra.mxu0 %v452
  %958 = vmatpush.msra.mxu0 %v451
  %959 = vmatpush.msra.mxu0 %v450
  %960 = vmatpush.msra.mxu0 %v449
  %961 = vmatpush.msra.mxu0 %v448
  %962 = vmatpush.msra.mxu0 %v447
  %963 = vmatpush.msra.mxu0 %v446
  %964 = vmatmul.f32.gmra.mxu0 %v16
  %v965 = vpop.f32.mrf.mxu0
  %v966 = vadd.f32 %v901, %v965
  %967 = vmatmul.f32.gmra.mxu0 %v41
  %v968 = vpop.f32.mrf.mxu0
  %v969 = vadd.f32 %v904, %v968
  %970 = vmatmul.f32.gmra.mxu0 %v66
  %v971 = vpop.f32.mrf.mxu0
  %v972 = vadd.f32 %v907, %v971
  %973 = vmatmul.f32.gmra.mxu0 %v91
  %v974 = vpop.f32.mrf.mxu0
  %v975 = vadd.f32 %v910, %v974
  %976 = vmatmul.f32.gmra.mxu0 %v116
  %v977 = vpop.f32.mrf.mxu0
  %v978 = vadd.f32 %v913, %v977
  %979 = vmatmul.f32.gmra.mxu0 %v141
  %v980 = vpop.f32.mrf.mxu0
  %v981 = vadd.f32 %v916, %v980
  %982 = vmatmul.f32.gmra.mxu0 %v166
  %v983 = vpop.f32.mrf.mxu0
  %v984 = vadd.f32 %v919, %v983
  %985 = vmatmul.f32.gmra.mxu0 %v191
  %v986 = vpop.f32.mrf.mxu0
  %v987 = vadd.f32 %v922, %v986
  %988 = vmatmul.f32.gmra.mxu0 %v216
  %v989 = vpop.f32.mrf.mxu0
  %v990 = vadd.f32 %v925, %v989
  %991 = vmatmul.f32.gmra.mxu0 %v241
  %v992 = vpop.f32.mrf.mxu0
  %v993 = vadd.f32 %v928, %v992
  %994 = vmatmul.f32.gmra.mxu0 %v266
  %v995 = vpop.f32.mrf.mxu0
  %v996 = vadd.f32 %v931, %v995
  %997 = vmatmul.f32.gmra.mxu0 %v291
  %v998 = vpop.f32.mrf.mxu0
  %v999 = vadd.f32 %v934, %v998
  %1000 = vmatmul.f32.gmra.mxu0 %v316
  %v1001 = vpop.f32.mrf.mxu0
  %v1002 = vadd.f32 %v937, %v1001
  %1003 = vmatmul.f32.gmra.mxu0 %v341
  %v1004 = vpop.f32.mrf.mxu0
  %v1005 = vadd.f32 %v940, %v1004
  %1006 = vmatmul.f32.gmra.mxu0 %v366
  %v1007 = vpop.f32.mrf.mxu0
  %v1008 = vadd.f32 %v943, %v1007
  %1009 = vmatmul.f32.gmra.mxu0 %v391
  %v1010 = vpop.f32.mrf.mxu0
  %v1011 = vadd.f32 %v946, %v1010
  %1012 = vdwg.mxu0
  %1013 = vmatpush.msra.mxu0 %v477
  %1014 = vmatpush.msra.mxu0 %v476
  %1015 = vmatpush.msra.mxu0 %v475
  %1016 = vmatpush.msra.mxu0 %v474
  %1017 = vmatpush.msra.mxu0 %v473
  %1018 = vmatpush.msra.mxu0 %v472
  %1019 = vmatpush.msra.mxu0 %v471
  %1020 = vmatpush.msra.mxu0 %v470
  %1021 = vmatpush.msra.mxu0 %v469
  %1022 = vmatpush.msra.mxu0 %v468
  %1023 = vmatpush.msra.mxu0 %v467
  %1024 = vmatpush.msra.mxu0 %v466
  %1025 = vmatpush.msra.mxu0 %v465
  %1026 = vmatpush.msra.mxu0 %v464
  %1027 = vmatpush.msra.mxu0 %v463
  %1028 = vmatpush.msra.mxu0 %v462
  %1029 = vmatmul.f32.gmra.mxu0 %v17
  %v1030 = vpop.f32.mrf.mxu0
  %v1031 = vadd.f32 %v966, %v1030
  %1032 = vmatmul.f32.gmra.mxu0 %v42
  %v1033 = vpop.f32.mrf.mxu0
  %v1034 = vadd.f32 %v969, %v1033
  %1035 = vmatmul.f32.gmra.mxu0 %v67
  %v1036 = vpop.f32.mrf.mxu0
  %v1037 = vadd.f32 %v972, %v1036
  %1038 = vmatmul.f32.gmra.mxu0 %v92
  %v1039 = vpop.f32.mrf.mxu0
  %v1040 = vadd.f32 %v975, %v1039
  %1041 = vmatmul.f32.gmra.mxu0 %v117
  %v1042 = vpop.f32.mrf.mxu0
  %v1043 = vadd.f32 %v978, %v1042
  %1044 = vmatmul.f32.gmra.mxu0 %v142
  %v1045 = vpop.f32.mrf.mxu0
  %v1046 = vadd.f32 %v981, %v1045
  %1047 = vmatmul.f32.gmra.mxu0 %v167
  %v1048 = vpop.f32.mrf.mxu0
  %v1049 = vadd.f32 %v984, %v1048
  %1050 = vmatmul.f32.gmra.mxu0 %v192
  %v1051 = vpop.f32.mrf.mxu0
  %v1052 = vadd.f32 %v987, %v1051
  %1053 = vmatmul.f32.gmra.mxu0 %v217
  %v1054 = vpop.f32.mrf.mxu0
  %v1055 = vadd.f32 %v990, %v1054
  %1056 = vmatmul.f32.gmra.mxu0 %v242
  %v1057 = vpop.f32.mrf.mxu0
  %v1058 = vadd.f32 %v993, %v1057
  %1059 = vmatmul.f32.gmra.mxu0 %v267
  %v1060 = vpop.f32.mrf.mxu0
  %v1061 = vadd.f32 %v996, %v1060
  %1062 = vmatmul.f32.gmra.mxu0 %v292
  %v1063 = vpop.f32.mrf.mxu0
  %v1064 = vadd.f32 %v999, %v1063
  %1065 = vmatmul.f32.gmra.mxu0 %v317
  %v1066 = vpop.f32.mrf.mxu0
  %v1067 = vadd.f32 %v1002, %v1066
  %1068 = vmatmul.f32.gmra.mxu0 %v342
  %v1069 = vpop.f32.mrf.mxu0
  %v1070 = vadd.f32 %v1005, %v1069
  %1071 = vmatmul.f32.gmra.mxu0 %v367
  %v1072 = vpop.f32.mrf.mxu0
  %v1073 = vadd.f32 %v1008, %v1072
  %1074 = vmatmul.f32.gmra.mxu0 %v392
  %v1075 = vpop.f32.mrf.mxu0
  %v1076 = vadd.f32 %v1011, %v1075
  %1077 = vdwg.mxu0
  %1078 = vmatpush.msra.mxu0 %v493
  %1079 = vmatpush.msra.mxu0 %v492
  %1080 = vmatpush.msra.mxu0 %v491
  %1081 = vmatpush.msra.mxu0 %v490
  %1082 = vmatpush.msra.mxu0 %v489
  %1083 = vmatpush.msra.mxu0 %v488
  %1084 = vmatpush.msra.mxu0 %v487
  %1085 = vmatpush.msra.mxu0 %v486
  %1086 = vmatpush.msra.mxu0 %v485
  %1087 = vmatpush.msra.mxu0 %v484
  %1088 = vmatpush.msra.mxu0 %v483
  %1089 = vmatpush.msra.mxu0 %v482
  %1090 = vmatpush.msra.mxu0 %v481
  %1091 = vmatpush.msra.mxu0 %v480
  %1092 = vmatpush.msra.mxu0 %v479
  %1093 = vmatpush.msra.mxu0 %v478
  %1094 = vmatmul.f32.gmra.mxu0 %v18
  %v1095 = vpop.f32.mrf.mxu0
  %v1096 = vadd.f32 %v1031, %v1095
  %1097 = vmatmul.f32.gmra.mxu0 %v43
  %v1098 = vpop.f32.mrf.mxu0
  %v1099 = vadd.f32 %v1034, %v1098
  %1100 = vmatmul.f32.gmra.mxu0 %v68
  %v1101 = vpop.f32.mrf.mxu0
  %v1102 = vadd.f32 %v1037, %v1101
  %1103 = vmatmul.f32.gmra.mxu0 %v93
  %v1104 = vpop.f32.mrf.mxu0
  %v1105 = vadd.f32 %v1040, %v1104
  %1106 = vmatmul.f32.gmra.mxu0 %v118
  %v1107 = vpop.f32.mrf.mxu0
  %v1108 = vadd.f32 %v1043, %v1107
  %1109 = vmatmul.f32.gmra.mxu0 %v143
  %v1110 = vpop.f32.mrf.mxu0
  %v1111 = vadd.f32 %v1046, %v1110
  %1112 = vmatmul.f32.gmra.mxu0 %v168
  %v1113 = vpop.f32.mrf.mxu0
  %v1114 = vadd.f32 %v1049, %v1113
  %1115 = vmatmul.f32.gmra.mxu0 %v193
  %v1116 = vpop.f32.mrf.mxu0
  %v1117 = vadd.f32 %v1052, %v1116
  %1118 = vmatmul.f32.gmra.mxu0 %v218
  %v1119 = vpop.f32.mrf.mxu0
  %v1120 = vadd.f32 %v1055, %v1119
  %1121 = vmatmul.f32.gmra.mxu0 %v243
  %v1122 = vpop.f32.mrf.mxu0
  %v1123 = vadd.f32 %v1058, %v1122
  %1124 = vmatmul.f32.gmra.mxu0 %v268
  %v1125 = vpop.f32.mrf.mxu0
  %v1126 = vadd.f32 %v1061, %v1125
  %1127 = vmatmul.f32.gmra.mxu0 %v293
  %v1128 = vpop.f32.mrf.mxu0
  %v1129 = vadd.f32 %v1064, %v1128
  %1130 = vmatmul.f32.gmra.mxu0 %v318
  %v1131 = vpop.f32.mrf.mxu0
  %v1132 = vadd.f32 %v1067, %v1131
  %1133 = vmatmul.f32.gmra.mxu0 %v343
  %v1134 = vpop.f32.mrf.mxu0
  %v1135 = vadd.f32 %v1070, %v1134
  %1136 = vmatmul.f32.gmra.mxu0 %v368
  %v1137 = vpop.f32.mrf.mxu0
  %v1138 = vadd.f32 %v1073, %v1137
  %1139 = vmatmul.f32.gmra.mxu0 %v393
  %v1140 = vpop.f32.mrf.mxu0
  %v1141 = vadd.f32 %v1076, %v1140
  %1142 = vdwg.mxu0
  %1143 = vmatpush.msra.mxu0 %v509
  %1144 = vmatpush.msra.mxu0 %v508
  %1145 = vmatpush.msra.mxu0 %v507
  %1146 = vmatpush.msra.mxu0 %v506
  %1147 = vmatpush.msra.mxu0 %v505
  %1148 = vmatpush.msra.mxu0 %v504
  %1149 = vmatpush.msra.mxu0 %v503
  %1150 = vmatpush.msra.mxu0 %v502
  %1151 = vmatpush.msra.mxu0 %v501
  %1152 = vmatpush.msra.mxu0 %v500
  %1153 = vmatpush.msra.mxu0 %v499
  %1154 = vmatpush.msra.mxu0 %v498
  %1155 = vmatpush.msra.mxu0 %v497
  %1156 = vmatpush.msra.mxu0 %v496
  %1157 = vmatpush.msra.mxu0 %v495
  %1158 = vmatpush.msra.mxu0 %v494
  %1159 = vmatmul.f32.gmra.mxu0 %v19
  %v1160 = vpop.f32.mrf.mxu0
  %v1161 = vadd.f32 %v1096, %v1160
  %1162 = vmatmul.f32.gmra.mxu0 %v44
  %v1163 = vpop.f32.mrf.mxu0
  %v1164 = vadd.f32 %v1099, %v1163
  %1165 = vmatmul.f32.gmra.mxu0 %v69
  %v1166 = vpop.f32.mrf.mxu0
  %v1167 = vadd.f32 %v1102, %v1166
  %1168 = vmatmul.f32.gmra.mxu0 %v94
  %v1169 = vpop.f32.mrf.mxu0
  %v1170 = vadd.f32 %v1105, %v1169
  %1171 = vmatmul.f32.gmra.mxu0 %v119
  %v1172 = vpop.f32.mrf.mxu0
  %v1173 = vadd.f32 %v1108, %v1172
  %1174 = vmatmul.f32.gmra.mxu0 %v144
  %v1175 = vpop.f32.mrf.mxu0
  %v1176 = vadd.f32 %v1111, %v1175
  %1177 = vmatmul.f32.gmra.mxu0 %v169
  %v1178 = vpop.f32.mrf.mxu0
  %v1179 = vadd.f32 %v1114, %v1178
  %1180 = vmatmul.f32.gmra.mxu0 %v194
  %v1181 = vpop.f32.mrf.mxu0
  %v1182 = vadd.f32 %v1117, %v1181
  %1183 = vmatmul.f32.gmra.mxu0 %v219
  %v1184 = vpop.f32.mrf.mxu0
  %v1185 = vadd.f32 %v1120, %v1184
  %1186 = vmatmul.f32.gmra.mxu0 %v244
  %v1187 = vpop.f32.mrf.mxu0
  %v1188 = vadd.f32 %v1123, %v1187
  %1189 = vmatmul.f32.gmra.mxu0 %v269
  %v1190 = vpop.f32.mrf.mxu0
  %v1191 = vadd.f32 %v1126, %v1190
  %1192 = vmatmul.f32.gmra.mxu0 %v294
  %v1193 = vpop.f32.mrf.mxu0
  %v1194 = vadd.f32 %v1129, %v1193
  %1195 = vmatmul.f32.gmra.mxu0 %v319
  %v1196 = vpop.f32.mrf.mxu0
  %v1197 = vadd.f32 %v1132, %v1196
  %1198 = vmatmul.f32.gmra.mxu0 %v344
  %v1199 = vpop.f32.mrf.mxu0
  %v1200 = vadd.f32 %v1135, %v1199
  %1201 = vmatmul.f32.gmra.mxu0 %v369
  %v1202 = vpop.f32.mrf.mxu0
  %v1203 = vadd.f32 %v1138, %v1202
  %1204 = vmatmul.f32.gmra.mxu0 %v394
  %v1205 = vpop.f32.mrf.mxu0
  %v1206 = vadd.f32 %v1141, %v1205
  %1207 = vdwg.mxu0
  %1208 = vmatpush.msra.mxu0 %v525
  %1209 = vmatpush.msra.mxu0 %v524
  %1210 = vmatpush.msra.mxu0 %v523
  %1211 = vmatpush.msra.mxu0 %v522
  %1212 = vmatpush.msra.mxu0 %v521
  %1213 = vmatpush.msra.mxu0 %v520
  %1214 = vmatpush.msra.mxu0 %v519
  %1215 = vmatpush.msra.mxu0 %v518
  %1216 = vmatpush.msra.mxu0 %v517
  %1217 = vmatpush.msra.mxu0 %v516
  %1218 = vmatpush.msra.mxu0 %v515
  %1219 = vmatpush.msra.mxu0 %v514
  %1220 = vmatpush.msra.mxu0 %v513
  %1221 = vmatpush.msra.mxu0 %v512
  %1222 = vmatpush.msra.mxu0 %v511
  %1223 = vmatpush.msra.mxu0 %v510
  %1224 = vmatmul.f32.gmra.mxu0 %v20
  %v1225 = vpop.f32.mrf.mxu0
  %v1226 = vadd.f32 %v1161, %v1225
  %1227 = vmatmul.f32.gmra.mxu0 %v45
  %v1228 = vpop.f32.mrf.mxu0
  %v1229 = vadd.f32 %v1164, %v1228
  %1230 = vmatmul.f32.gmra.mxu0 %v70
  %v1231 = vpop.f32.mrf.mxu0
  %v1232 = vadd.f32 %v1167, %v1231
  %1233 = vmatmul.f32.gmra.mxu0 %v95
  %v1234 = vpop.f32.mrf.mxu0
  %v1235 = vadd.f32 %v1170, %v1234
  %1236 = vmatmul.f32.gmra.mxu0 %v120
  %v1237 = vpop.f32.mrf.mxu0
  %v1238 = vadd.f32 %v1173, %v1237
  %1239 = vmatmul.f32.gmra.mxu0 %v145
  %v1240 = vpop.f32.mrf.mxu0
  %v1241 = vadd.f32 %v1176, %v1240
  %1242 = vmatmul.f32.gmra.mxu0 %v170
  %v1243 = vpop.f32.mrf.mxu0
  %v1244 = vadd.f32 %v1179, %v1243
  %1245 = vmatmul.f32.gmra.mxu0 %v195
  %v1246 = vpop.f32.mrf.mxu0
  %v1247 = vadd.f32 %v1182, %v1246
  %1248 = vmatmul.f32.gmra.mxu0 %v220
  %v1249 = vpop.f32.mrf.mxu0
  %v1250 = vadd.f32 %v1185, %v1249
  %1251 = vmatmul.f32.gmra.mxu0 %v245
  %v1252 = vpop.f32.mrf.mxu0
  %v1253 = vadd.f32 %v1188, %v1252
  %1254 = vmatmul.f32.gmra.mxu0 %v270
  %v1255 = vpop.f32.mrf.mxu0
  %v1256 = vadd.f32 %v1191, %v1255
  %1257 = vmatmul.f32.gmra.mxu0 %v295
  %v1258 = vpop.f32.mrf.mxu0
  %v1259 = vadd.f32 %v1194, %v1258
  %1260 = vmatmul.f32.gmra.mxu0 %v320
  %v1261 = vpop.f32.mrf.mxu0
  %v1262 = vadd.f32 %v1197, %v1261
  %1263 = vmatmul.f32.gmra.mxu0 %v345
  %v1264 = vpop.f32.mrf.mxu0
  %v1265 = vadd.f32 %v1200, %v1264
  %1266 = vmatmul.f32.gmra.mxu0 %v370
  %v1267 = vpop.f32.mrf.mxu0
  %v1268 = vadd.f32 %v1203, %v1267
  %1269 = vmatmul.f32.gmra.mxu0 %v395
  %v1270 = vpop.f32.mrf.mxu0
  %v1271 = vadd.f32 %v1206, %v1270
  %1272 = vdwg.mxu0
  %1273 = vmatpush.msra.mxu0 %v541
  %1274 = vmatpush.msra.mxu0 %v540
  %1275 = vmatpush.msra.mxu0 %v539
  %1276 = vmatpush.msra.mxu0 %v538
  %1277 = vmatpush.msra.mxu0 %v537
  %1278 = vmatpush.msra.mxu0 %v536
  %1279 = vmatpush.msra.mxu0 %v535
  %1280 = vmatpush.msra.mxu0 %v534
  %1281 = vmatpush.msra.mxu0 %v533
  %1282 = vmatpush.msra.mxu0 %v532
  %1283 = vmatpush.msra.mxu0 %v531
  %1284 = vmatpush.msra.mxu0 %v530
  %1285 = vmatpush.msra.mxu0 %v529
  %1286 = vmatpush.msra.mxu0 %v528
  %1287 = vmatpush.msra.mxu0 %v527
  %1288 = vmatpush.msra.mxu0 %v526
  %1289 = vmatmul.f32.gmra.mxu0 %v21
  %v1290 = vpop.f32.mrf.mxu0
  %v1291 = vadd.f32 %v1226, %v1290
  %1292 = vmatmul.f32.gmra.mxu0 %v46
  %v1293 = vpop.f32.mrf.mxu0
  %v1294 = vadd.f32 %v1229, %v1293
  %1295 = vmatmul.f32.gmra.mxu0 %v71
  %v1296 = vpop.f32.mrf.mxu0
  %v1297 = vadd.f32 %v1232, %v1296
  %1298 = vmatmul.f32.gmra.mxu0 %v96
  %v1299 = vpop.f32.mrf.mxu0
  %v1300 = vadd.f32 %v1235, %v1299
  %1301 = vmatmul.f32.gmra.mxu0 %v121
  %v1302 = vpop.f32.mrf.mxu0
  %v1303 = vadd.f32 %v1238, %v1302
  %1304 = vmatmul.f32.gmra.mxu0 %v146
  %v1305 = vpop.f32.mrf.mxu0
  %v1306 = vadd.f32 %v1241, %v1305
  %1307 = vmatmul.f32.gmra.mxu0 %v171
  %v1308 = vpop.f32.mrf.mxu0
  %v1309 = vadd.f32 %v1244, %v1308
  %1310 = vmatmul.f32.gmra.mxu0 %v196
  %v1311 = vpop.f32.mrf.mxu0
  %v1312 = vadd.f32 %v1247, %v1311
  %1313 = vmatmul.f32.gmra.mxu0 %v221
  %v1314 = vpop.f32.mrf.mxu0
  %v1315 = vadd.f32 %v1250, %v1314
  %1316 = vmatmul.f32.gmra.mxu0 %v246
  %v1317 = vpop.f32.mrf.mxu0
  %v1318 = vadd.f32 %v1253, %v1317
  %1319 = vmatmul.f32.gmra.mxu0 %v271
  %v1320 = vpop.f32.mrf.mxu0
  %v1321 = vadd.f32 %v1256, %v1320
  %1322 = vmatmul.f32.gmra.mxu0 %v296
  %v1323 = vpop.f32.mrf.mxu0
  %v1324 = vadd.f32 %v1259, %v1323
  %1325 = vmatmul.f32.gmra.mxu0 %v321
  %v1326 = vpop.f32.mrf.mxu0
  %v1327 = vadd.f32 %v1262, %v1326
  %1328 = vmatmul.f32.gmra.mxu0 %v346
  %v1329 = vpop.f32.mrf.mxu0
  %v1330 = vadd.f32 %v1265, %v1329
  %1331 = vmatmul.f32.gmra.mxu0 %v371
  %v1332 = vpop.f32.mrf.mxu0
  %v1333 = vadd.f32 %v1268, %v1332
  %1334 = vmatmul.f32.gmra.mxu0 %v396
  %v1335 = vpop.f32.mrf.mxu0
  %v1336 = vadd.f32 %v1271, %v1335
  %1337 = vdwg.mxu0
  %1338 = vmatpush.msra.mxu0 %v557
  %1339 = vmatpush.msra.mxu0 %v556
  %1340 = vmatpush.msra.mxu0 %v555
  %1341 = vmatpush.msra.mxu0 %v554
  %1342 = vmatpush.msra.mxu0 %v553
  %1343 = vmatpush.msra.mxu0 %v552
  %1344 = vmatpush.msra.mxu0 %v551
  %1345 = vmatpush.msra.mxu0 %v550
  %1346 = vmatpush.msra.mxu0 %v549
  %1347 = vmatpush.msra.mxu0 %v548
  %1348 = vmatpush.msra.mxu0 %v547
  %1349 = vmatpush.msra.mxu0 %v546
  %1350 = vmatpush.msra.mxu0 %v545
  %1351 = vmatpush.msra.mxu0 %v544
  %1352 = vmatpush.msra.mxu0 %v543
  %1353 = vmatpush.msra.mxu0 %v542
  %1354 = vmatmul.f32.gmra.mxu0 %v22
  %v1355 = vpop.f32.mrf.mxu0
  %v1356 = vadd.f32 %v1291, %v1355
  %1357 = vmatmul.f32.gmra.mxu0 %v47
  %v1358 = vpop.f32.mrf.mxu0
  %v1359 = vadd.f32 %v1294, %v1358
  %1360 = vmatmul.f32.gmra.mxu0 %v72
  %v1361 = vpop.f32.mrf.mxu0
  %v1362 = vadd.f32 %v1297, %v1361
  %1363 = vmatmul.f32.gmra.mxu0 %v97
  %v1364 = vpop.f32.mrf.mxu0
  %v1365 = vadd.f32 %v1300, %v1364
  %1366 = vmatmul.f32.gmra.mxu0 %v122
  %v1367 = vpop.f32.mrf.mxu0
  %v1368 = vadd.f32 %v1303, %v1367
  %1369 = vmatmul.f32.gmra.mxu0 %v147
  %v1370 = vpop.f32.mrf.mxu0
  %v1371 = vadd.f32 %v1306, %v1370
  %1372 = vmatmul.f32.gmra.mxu0 %v172
  %v1373 = vpop.f32.mrf.mxu0
  %v1374 = vadd.f32 %v1309, %v1373
  %1375 = vmatmul.f32.gmra.mxu0 %v197
  %v1376 = vpop.f32.mrf.mxu0
  %v1377 = vadd.f32 %v1312, %v1376
  %1378 = vmatmul.f32.gmra.mxu0 %v222
  %v1379 = vpop.f32.mrf.mxu0
  %v1380 = vadd.f32 %v1315, %v1379
  %1381 = vmatmul.f32.gmra.mxu0 %v247
  %v1382 = vpop.f32.mrf.mxu0
  %v1383 = vadd.f32 %v1318, %v1382
  %1384 = vmatmul.f32.gmra.mxu0 %v272
  %v1385 = vpop.f32.mrf.mxu0
  %v1386 = vadd.f32 %v1321, %v1385
  %1387 = vmatmul.f32.gmra.mxu0 %v297
  %v1388 = vpop.f32.mrf.mxu0
  %v1389 = vadd.f32 %v1324, %v1388
  %1390 = vmatmul.f32.gmra.mxu0 %v322
  %v1391 = vpop.f32.mrf.mxu0
  %v1392 = vadd.f32 %v1327, %v1391
  %1393 = vmatmul.f32.gmra.mxu0 %v347
  %v1394 = vpop.f32.mrf.mxu0
  %v1395 = vadd.f32 %v1330, %v1394
  %1396 = vmatmul.f32.gmra.mxu0 %v372
  %v1397 = vpop.f32.mrf.mxu0
  %v1398 = vadd.f32 %v1333, %v1397
  %1399 = vmatmul.f32.gmra.mxu0 %v397
  %v1400 = vpop.f32.mrf.mxu0
  %v1401 = vadd.f32 %v1336, %v1400
  %1402 = vdwg.mxu0
  %1403 = vmatpush.msra.mxu0 %v573
  %1404 = vmatpush.msra.mxu0 %v572
  %1405 = vmatpush.msra.mxu0 %v571
  %1406 = vmatpush.msra.mxu0 %v570
  %1407 = vmatpush.msra.mxu0 %v569
  %1408 = vmatpush.msra.mxu0 %v568
  %1409 = vmatpush.msra.mxu0 %v567
  %1410 = vmatpush.msra.mxu0 %v566
  %1411 = vmatpush.msra.mxu0 %v565
  %1412 = vmatpush.msra.mxu0 %v564
  %1413 = vmatpush.msra.mxu0 %v563
  %1414 = vmatpush.msra.mxu0 %v562
  %1415 = vmatpush.msra.mxu0 %v561
  %1416 = vmatpush.msra.mxu0 %v560
  %1417 = vmatpush.msra.mxu0 %v559
  %1418 = vmatpush.msra.mxu0 %v558
  %1419 = vmatmul.f32.gmra.mxu0 %v23
  %v1420 = vpop.f32.mrf.mxu0
  %v1421 = vadd.f32 %v1356, %v1420
  %1422 = vmatmul.f32.gmra.mxu0 %v48
  %v1423 = vpop.f32.mrf.mxu0
  %v1424 = vadd.f32 %v1359, %v1423
  %1425 = vmatmul.f32.gmra.mxu0 %v73
  %v1426 = vpop.f32.mrf.mxu0
  %v1427 = vadd.f32 %v1362, %v1426
  %1428 = vmatmul.f32.gmra.mxu0 %v98
  %v1429 = vpop.f32.mrf.mxu0
  %v1430 = vadd.f32 %v1365, %v1429
  %1431 = vmatmul.f32.gmra.mxu0 %v123
  %v1432 = vpop.f32.mrf.mxu0
  %v1433 = vadd.f32 %v1368, %v1432
  %1434 = vmatmul.f32.gmra.mxu0 %v148
  %v1435 = vpop.f32.mrf.mxu0
  %v1436 = vadd.f32 %v1371, %v1435
  %1437 = vmatmul.f32.gmra.mxu0 %v173
  %v1438 = vpop.f32.mrf.mxu0
  %v1439 = vadd.f32 %v1374, %v1438
  %1440 = vmatmul.f32.gmra.mxu0 %v198
  %v1441 = vpop.f32.mrf.mxu0
  %v1442 = vadd.f32 %v1377, %v1441
  %1443 = vmatmul.f32.gmra.mxu0 %v223
  %v1444 = vpop.f32.mrf.mxu0
  %v1445 = vadd.f32 %v1380, %v1444
  %1446 = vmatmul.f32.gmra.mxu0 %v248
  %v1447 = vpop.f32.mrf.mxu0
  %v1448 = vadd.f32 %v1383, %v1447
  %1449 = vmatmul.f32.gmra.mxu0 %v273
  %v1450 = vpop.f32.mrf.mxu0
  %v1451 = vadd.f32 %v1386, %v1450
  %1452 = vmatmul.f32.gmra.mxu0 %v298
  %v1453 = vpop.f32.mrf.mxu0
  %v1454 = vadd.f32 %v1389, %v1453
  %1455 = vmatmul.f32.gmra.mxu0 %v323
  %v1456 = vpop.f32.mrf.mxu0
  %v1457 = vadd.f32 %v1392, %v1456
  %1458 = vmatmul.f32.gmra.mxu0 %v348
  %v1459 = vpop.f32.mrf.mxu0
  %v1460 = vadd.f32 %v1395, %v1459
  %1461 = vmatmul.f32.gmra.mxu0 %v373
  %v1462 = vpop.f32.mrf.mxu0
  %v1463 = vadd.f32 %v1398, %v1462
  %1464 = vmatmul.f32.gmra.mxu0 %v398
  %v1465 = vpop.f32.mrf.mxu0
  %v1466 = vadd.f32 %v1401, %v1465
  %1467 = vdwg.mxu0
  %1468 = vmatpush.msra.mxu0 %v589
  %1469 = vmatpush.msra.mxu0 %v588
  %1470 = vmatpush.msra.mxu0 %v587
  %1471 = vmatpush.msra.mxu0 %v586
  %1472 = vmatpush.msra.mxu0 %v585
  %1473 = vmatpush.msra.mxu0 %v584
  %1474 = vmatpush.msra.mxu0 %v583
  %1475 = vmatpush.msra.mxu0 %v582
  %1476 = vmatpush.msra.mxu0 %v581
  %1477 = vmatpush.msra.mxu0 %v580
  %1478 = vmatpush.msra.mxu0 %v579
  %1479 = vmatpush.msra.mxu0 %v578
  %1480 = vmatpush.msra.mxu0 %v577
  %1481 = vmatpush.msra.mxu0 %v576
  %1482 = vmatpush.msra.mxu0 %v575
  %1483 = vmatpush.msra.mxu0 %v574
  %1484 = vmatmul.f32.gmra.mxu0 %v24
  %v1485 = vpop.f32.mrf.mxu0
  %v1486 = vadd.f32 %v1421, %v1485
  %1487 = vmatmul.f32.gmra.mxu0 %v49
  %v1488 = vpop.f32.mrf.mxu0
  %v1489 = vadd.f32 %v1424, %v1488
  %1490 = vmatmul.f32.gmra.mxu0 %v74
  %v1491 = vpop.f32.mrf.mxu0
  %v1492 = vadd.f32 %v1427, %v1491
  %1493 = vmatmul.f32.gmra.mxu0 %v99
  %v1494 = vpop.f32.mrf.mxu0
  %v1495 = vadd.f32 %v1430, %v1494
  %1496 = vmatmul.f32.gmra.mxu0 %v124
  %v1497 = vpop.f32.mrf.mxu0
  %v1498 = vadd.f32 %v1433, %v1497
  %1499 = vmatmul.f32.gmra.mxu0 %v149
  %v1500 = vpop.f32.mrf.mxu0
  %v1501 = vadd.f32 %v1436, %v1500
  %1502 = vmatmul.f32.gmra.mxu0 %v174
  %v1503 = vpop.f32.mrf.mxu0
  %v1504 = vadd.f32 %v1439, %v1503
  %1505 = vmatmul.f32.gmra.mxu0 %v199
  %v1506 = vpop.f32.mrf.mxu0
  %v1507 = vadd.f32 %v1442, %v1506
  %1508 = vmatmul.f32.gmra.mxu0 %v224
  %v1509 = vpop.f32.mrf.mxu0
  %v1510 = vadd.f32 %v1445, %v1509
  %1511 = vmatmul.f32.gmra.mxu0 %v249
  %v1512 = vpop.f32.mrf.mxu0
  %v1513 = vadd.f32 %v1448, %v1512
  %1514 = vmatmul.f32.gmra.mxu0 %v274
  %v1515 = vpop.f32.mrf.mxu0
  %v1516 = vadd.f32 %v1451, %v1515
  %1517 = vmatmul.f32.gmra.mxu0 %v299
  %v1518 = vpop.f32.mrf.mxu0
  %v1519 = vadd.f32 %v1454, %v1518
  %1520 = vmatmul.f32.gmra.mxu0 %v324
  %v1521 = vpop.f32.mrf.mxu0
  %v1522 = vadd.f32 %v1457, %v1521
  %1523 = vmatmul.f32.gmra.mxu0 %v349
  %v1524 = vpop.f32.mrf.mxu0
  %v1525 = vadd.f32 %v1460, %v1524
  %1526 = vmatmul.f32.gmra.mxu0 %v374
  %v1527 = vpop.f32.mrf.mxu0
  %v1528 = vadd.f32 %v1463, %v1527
  %1529 = vmatmul.f32.gmra.mxu0 %v399
  %v1530 = vpop.f32.mrf.mxu0
  %v1531 = vadd.f32 %v1466, %v1530
  %1532 = vdwg.mxu0
  %1533 = vmatpush.msra.mxu0 %v605
  %1534 = vmatpush.msra.mxu0 %v604
  %1535 = vmatpush.msra.mxu0 %v603
  %1536 = vmatpush.msra.mxu0 %v602
  %1537 = vmatpush.msra.mxu0 %v601
  %1538 = vmatpush.msra.mxu0 %v600
  %1539 = vmatpush.msra.mxu0 %v599
  %1540 = vmatpush.msra.mxu0 %v598
  %1541 = vmatpush.msra.mxu0 %v597
  %1542 = vmatpush.msra.mxu0 %v596
  %1543 = vmatpush.msra.mxu0 %v595
  %1544 = vmatpush.msra.mxu0 %v594
  %1545 = vmatpush.msra.mxu0 %v593
  %1546 = vmatpush.msra.mxu0 %v592
  %1547 = vmatpush.msra.mxu0 %v591
  %1548 = vmatpush.msra.mxu0 %v590
  %1549 = vmatmul.f32.gmra.mxu0 %v25
  %v1550 = vpop.f32.mrf.mxu0
  %v1551 = vadd.f32 %v1486, %v1550
  %1552 = vmatmul.f32.gmra.mxu0 %v50
  %v1553 = vpop.f32.mrf.mxu0
  %v1554 = vadd.f32 %v1489, %v1553
  %1555 = vmatmul.f32.gmra.mxu0 %v75
  %v1556 = vpop.f32.mrf.mxu0
  %v1557 = vadd.f32 %v1492, %v1556
  %1558 = vmatmul.f32.gmra.mxu0 %v100
  %v1559 = vpop.f32.mrf.mxu0
  %v1560 = vadd.f32 %v1495, %v1559
  %1561 = vmatmul.f32.gmra.mxu0 %v125
  %v1562 = vpop.f32.mrf.mxu0
  %v1563 = vadd.f32 %v1498, %v1562
  %1564 = vmatmul.f32.gmra.mxu0 %v150
  %v1565 = vpop.f32.mrf.mxu0
  %v1566 = vadd.f32 %v1501, %v1565
  %1567 = vmatmul.f32.gmra.mxu0 %v175
  %v1568 = vpop.f32.mrf.mxu0
  %v1569 = vadd.f32 %v1504, %v1568
  %1570 = vmatmul.f32.gmra.mxu0 %v200
  %v1571 = vpop.f32.mrf.mxu0
  %v1572 = vadd.f32 %v1507, %v1571
  %1573 = vmatmul.f32.gmra.mxu0 %v225
  %v1574 = vpop.f32.mrf.mxu0
  %v1575 = vadd.f32 %v1510, %v1574
  %1576 = vmatmul.f32.gmra.mxu0 %v250
  %v1577 = vpop.f32.mrf.mxu0
  %v1578 = vadd.f32 %v1513, %v1577
  %1579 = vmatmul.f32.gmra.mxu0 %v275
  %v1580 = vpop.f32.mrf.mxu0
  %v1581 = vadd.f32 %v1516, %v1580
  %1582 = vmatmul.f32.gmra.mxu0 %v300
  %v1583 = vpop.f32.mrf.mxu0
  %v1584 = vadd.f32 %v1519, %v1583
  %1585 = vmatmul.f32.gmra.mxu0 %v325
  %v1586 = vpop.f32.mrf.mxu0
  %v1587 = vadd.f32 %v1522, %v1586
  %1588 = vmatmul.f32.gmra.mxu0 %v350
  %v1589 = vpop.f32.mrf.mxu0
  %v1590 = vadd.f32 %v1525, %v1589
  %1591 = vmatmul.f32.gmra.mxu0 %v375
  %v1592 = vpop.f32.mrf.mxu0
  %v1593 = vadd.f32 %v1528, %v1592
  %1594 = vmatmul.f32.gmra.mxu0 %v400
  %v1595 = vpop.f32.mrf.mxu0
  %v1596 = vadd.f32 %v1531, %v1595
  %1597 = vdwg.mxu0
  %1598 = vmatpush.msra.mxu0 %v621
  %1599 = vmatpush.msra.mxu0 %v620
  %1600 = vmatpush.msra.mxu0 %v619
  %1601 = vmatpush.msra.mxu0 %v618
  %1602 = vmatpush.msra.mxu0 %v617
  %1603 = vmatpush.msra.mxu0 %v616
  %1604 = vmatpush.msra.mxu0 %v615
  %1605 = vmatpush.msra.mxu0 %v614
  %1606 = vmatpush.msra.mxu0 %v613
  %1607 = vmatpush.msra.mxu0 %v612
  %1608 = vmatpush.msra.mxu0 %v611
  %1609 = vmatpush.msra.mxu0 %v610
  %1610 = vmatpush.msra.mxu0 %v609
  %1611 = vmatpush.msra.mxu0 %v608
  %1612 = vmatpush.msra.mxu0 %v607
  %1613 = vmatpush.msra.mxu0 %v606
  %1614 = vmatmul.f32.gmra.mxu0 %v26
  %v1615 = vpop.f32.mrf.mxu0
  %v1616 = vadd.f32 %v1551, %v1615
  %1617 = vmatmul.f32.gmra.mxu0 %v51
  %v1618 = vpop.f32.mrf.mxu0
  %v1619 = vadd.f32 %v1554, %v1618
  %1620 = vmatmul.f32.gmra.mxu0 %v76
  %v1621 = vpop.f32.mrf.mxu0
  %v1622 = vadd.f32 %v1557, %v1621
  %1623 = vmatmul.f32.gmra.mxu0 %v101
  %v1624 = vpop.f32.mrf.mxu0
  %v1625 = vadd.f32 %v1560, %v1624
  %1626 = vmatmul.f32.gmra.mxu0 %v126
  %v1627 = vpop.f32.mrf.mxu0
  %v1628 = vadd.f32 %v1563, %v1627
  %1629 = vmatmul.f32.gmra.mxu0 %v151
  %v1630 = vpop.f32.mrf.mxu0
  %v1631 = vadd.f32 %v1566, %v1630
  %1632 = vmatmul.f32.gmra.mxu0 %v176
  %v1633 = vpop.f32.mrf.mxu0
  %v1634 = vadd.f32 %v1569, %v1633
  %1635 = vmatmul.f32.gmra.mxu0 %v201
  %v1636 = vpop.f32.mrf.mxu0
  %v1637 = vadd.f32 %v1572, %v1636
  %1638 = vmatmul.f32.gmra.mxu0 %v226
  %v1639 = vpop.f32.mrf.mxu0
  %v1640 = vadd.f32 %v1575, %v1639
  %1641 = vmatmul.f32.gmra.mxu0 %v251
  %v1642 = vpop.f32.mrf.mxu0
  %v1643 = vadd.f32 %v1578, %v1642
  %1644 = vmatmul.f32.gmra.mxu0 %v276
  %v1645 = vpop.f32.mrf.mxu0
  %v1646 = vadd.f32 %v1581, %v1645
  %1647 = vmatmul.f32.gmra.mxu0 %v301
  %v1648 = vpop.f32.mrf.mxu0
  %v1649 = vadd.f32 %v1584, %v1648
  %1650 = vmatmul.f32.gmra.mxu0 %v326
  %v1651 = vpop.f32.mrf.mxu0
  %v1652 = vadd.f32 %v1587, %v1651
  %1653 = vmatmul.f32.gmra.mxu0 %v351
  %v1654 = vpop.f32.mrf.mxu0
  %v1655 = vadd.f32 %v1590, %v1654
  %1656 = vmatmul.f32.gmra.mxu0 %v376
  %v1657 = vpop.f32.mrf.mxu0
  %v1658 = vadd.f32 %v1593, %v1657
  %1659 = vmatmul.f32.gmra.mxu0 %v401
  %v1660 = vpop.f32.mrf.mxu0
  %v1661 = vadd.f32 %v1596, %v1660
  %1662 = vdwg.mxu0
  %1663 = vmatpush.msra.mxu0 %v637
  %1664 = vmatpush.msra.mxu0 %v636
  %1665 = vmatpush.msra.mxu0 %v635
  %1666 = vmatpush.msra.mxu0 %v634
  %1667 = vmatpush.msra.mxu0 %v633
  %1668 = vmatpush.msra.mxu0 %v632
  %1669 = vmatpush.msra.mxu0 %v631
  %1670 = vmatpush.msra.mxu0 %v630
  %1671 = vmatpush.msra.mxu0 %v629
  %1672 = vmatpush.msra.mxu0 %v628
  %1673 = vmatpush.msra.mxu0 %v627
  %1674 = vmatpush.msra.mxu0 %v626
  %1675 = vmatpush.msra.mxu0 %v625
  %1676 = vmatpush.msra.mxu0 %v624
  %1677 = vmatpush.msra.mxu0 %v623
  %1678 = vmatpush.msra.mxu0 %v622
  %1679 = vmatmul.f32.gmra.mxu0 %v27
  %v1680 = vpop.f32.mrf.mxu0
  %v1681 = vadd.f32 %v1616, %v1680
  %1682 = vmatmul.f32.gmra.mxu0 %v52
  %v1683 = vpop.f32.mrf.mxu0
  %v1684 = vadd.f32 %v1619, %v1683
  %1685 = vmatmul.f32.gmra.mxu0 %v77
  %v1686 = vpop.f32.mrf.mxu0
  %v1687 = vadd.f32 %v1622, %v1686
  %1688 = vmatmul.f32.gmra.mxu0 %v102
  %v1689 = vpop.f32.mrf.mxu0
  %v1690 = vadd.f32 %v1625, %v1689
  %1691 = vmatmul.f32.gmra.mxu0 %v127
  %v1692 = vpop.f32.mrf.mxu0
  %v1693 = vadd.f32 %v1628, %v1692
  %1694 = vmatmul.f32.gmra.mxu0 %v152
  %v1695 = vpop.f32.mrf.mxu0
  %v1696 = vadd.f32 %v1631, %v1695
  %1697 = vmatmul.f32.gmra.mxu0 %v177
  %v1698 = vpop.f32.mrf.mxu0
  %v1699 = vadd.f32 %v1634, %v1698
  %1700 = vmatmul.f32.gmra.mxu0 %v202
  %v1701 = vpop.f32.mrf.mxu0
  %v1702 = vadd.f32 %v1637, %v1701
  %1703 = vmatmul.f32.gmra.mxu0 %v227
  %v1704 = vpop.f32.mrf.mxu0
  %v1705 = vadd.f32 %v1640, %v1704
  %1706 = vmatmul.f32.gmra.mxu0 %v252
  %v1707 = vpop.f32.mrf.mxu0
  %v1708 = vadd.f32 %v1643, %v1707
  %1709 = vmatmul.f32.gmra.mxu0 %v277
  %v1710 = vpop.f32.mrf.mxu0
  %v1711 = vadd.f32 %v1646, %v1710
  %1712 = vmatmul.f32.gmra.mxu0 %v302
  %v1713 = vpop.f32.mrf.mxu0
  %v1714 = vadd.f32 %v1649, %v1713
  %1715 = vmatmul.f32.gmra.mxu0 %v327
  %v1716 = vpop.f32.mrf.mxu0
  %v1717 = vadd.f32 %v1652, %v1716
  %1718 = vmatmul.f32.gmra.mxu0 %v352
  %v1719 = vpop.f32.mrf.mxu0
  %v1720 = vadd.f32 %v1655, %v1719
  %1721 = vmatmul.f32.gmra.mxu0 %v377
  %v1722 = vpop.f32.mrf.mxu0
  %v1723 = vadd.f32 %v1658, %v1722
  %1724 = vmatmul.f32.gmra.mxu0 %v402
  %v1725 = vpop.f32.mrf.mxu0
  %v1726 = vadd.f32 %v1661, %v1725
  %1727 = vdwg.mxu0
  %1728 = vmatpush.msra.mxu0 %v653
  %1729 = vmatpush.msra.mxu0 %v652
  %1730 = vmatpush.msra.mxu0 %v651
  %1731 = vmatpush.msra.mxu0 %v650
  %1732 = vmatpush.msra.mxu0 %v649
  %1733 = vmatpush.msra.mxu0 %v648
  %1734 = vmatpush.msra.mxu0 %v647
  %1735 = vmatpush.msra.mxu0 %v646
  %1736 = vmatpush.msra.mxu0 %v645
  %1737 = vmatpush.msra.mxu0 %v644
  %1738 = vmatpush.msra.mxu0 %v643
  %1739 = vmatpush.msra.mxu0 %v642
  %1740 = vmatpush.msra.mxu0 %v641
  %1741 = vmatpush.msra.mxu0 %v640
  %1742 = vmatpush.msra.mxu0 %v639
  %1743 = vmatpush.msra.mxu0 %v638
  %1744 = vmatmul.f32.gmra.mxu0 %v28
  %v1745 = vpop.f32.mrf.mxu0
  %v1746 = vadd.f32 %v1681, %v1745
  %1747 = vmatmul.f32.gmra.mxu0 %v53
  %v1748 = vpop.f32.mrf.mxu0
  %v1749 = vadd.f32 %v1684, %v1748
  %1750 = vmatmul.f32.gmra.mxu0 %v78
  %v1751 = vpop.f32.mrf.mxu0
  %v1752 = vadd.f32 %v1687, %v1751
  %1753 = vmatmul.f32.gmra.mxu0 %v103
  %v1754 = vpop.f32.mrf.mxu0
  %v1755 = vadd.f32 %v1690, %v1754
  %1756 = vmatmul.f32.gmra.mxu0 %v128
  %v1757 = vpop.f32.mrf.mxu0
  %v1758 = vadd.f32 %v1693, %v1757
  %1759 = vmatmul.f32.gmra.mxu0 %v153
  %v1760 = vpop.f32.mrf.mxu0
  %v1761 = vadd.f32 %v1696, %v1760
  %1762 = vmatmul.f32.gmra.mxu0 %v178
  %v1763 = vpop.f32.mrf.mxu0
  %v1764 = vadd.f32 %v1699, %v1763
  %1765 = vmatmul.f32.gmra.mxu0 %v203
  %v1766 = vpop.f32.mrf.mxu0
  %v1767 = vadd.f32 %v1702, %v1766
  %1768 = vmatmul.f32.gmra.mxu0 %v228
  %v1769 = vpop.f32.mrf.mxu0
  %v1770 = vadd.f32 %v1705, %v1769
  %1771 = vmatmul.f32.gmra.mxu0 %v253
  %v1772 = vpop.f32.mrf.mxu0
  %v1773 = vadd.f32 %v1708, %v1772
  %1774 = vmatmul.f32.gmra.mxu0 %v278
  %v1775 = vpop.f32.mrf.mxu0
  %v1776 = vadd.f32 %v1711, %v1775
  %1777 = vmatmul.f32.gmra.mxu0 %v303
  %v1778 = vpop.f32.mrf.mxu0
  %v1779 = vadd.f32 %v1714, %v1778
  %1780 = vmatmul.f32.gmra.mxu0 %v328
  %v1781 = vpop.f32.mrf.mxu0
  %v1782 = vadd.f32 %v1717, %v1781
  %1783 = vmatmul.f32.gmra.mxu0 %v353
  %v1784 = vpop.f32.mrf.mxu0
  %v1785 = vadd.f32 %v1720, %v1784
  %1786 = vmatmul.f32.gmra.mxu0 %v378
  %v1787 = vpop.f32.mrf.mxu0
  %v1788 = vadd.f32 %v1723, %v1787
  %1789 = vmatmul.f32.gmra.mxu0 %v403
  %v1790 = vpop.f32.mrf.mxu0
  %v1791 = vadd.f32 %v1726, %v1790
  %1792 = vdwg.mxu0
  %1793 = vmatpush.msra.mxu0 %v669
  %1794 = vmatpush.msra.mxu0 %v668
  %1795 = vmatpush.msra.mxu0 %v667
  %1796 = vmatpush.msra.mxu0 %v666
  %1797 = vmatpush.msra.mxu0 %v665
  %1798 = vmatpush.msra.mxu0 %v664
  %1799 = vmatpush.msra.mxu0 %v663
  %1800 = vmatpush.msra.mxu0 %v662
  %1801 = vmatpush.msra.mxu0 %v661
  %1802 = vmatpush.msra.mxu0 %v660
  %1803 = vmatpush.msra.mxu0 %v659
  %1804 = vmatpush.msra.mxu0 %v658
  %1805 = vmatpush.msra.mxu0 %v657
  %1806 = vmatpush.msra.mxu0 %v656
  %1807 = vmatpush.msra.mxu0 %v655
  %1808 = vmatpush.msra.mxu0 %v654
  %1809 = vmatmul.f32.gmra.mxu0 %v29
  %v1810 = vpop.f32.mrf.mxu0
  %v1811 = vadd.f32 %v1746, %v1810
  %1812 = vmatmul.f32.gmra.mxu0 %v54
  %v1813 = vpop.f32.mrf.mxu0
  %v1814 = vadd.f32 %v1749, %v1813
  %1815 = vmatmul.f32.gmra.mxu0 %v79
  %v1816 = vpop.f32.mrf.mxu0
  %v1817 = vadd.f32 %v1752, %v1816
  %1818 = vmatmul.f32.gmra.mxu0 %v104
  %v1819 = vpop.f32.mrf.mxu0
  %v1820 = vadd.f32 %v1755, %v1819
  %1821 = vmatmul.f32.gmra.mxu0 %v129
  %v1822 = vpop.f32.mrf.mxu0
  %v1823 = vadd.f32 %v1758, %v1822
  %1824 = vmatmul.f32.gmra.mxu0 %v154
  %v1825 = vpop.f32.mrf.mxu0
  %v1826 = vadd.f32 %v1761, %v1825
  %1827 = vmatmul.f32.gmra.mxu0 %v179
  %v1828 = vpop.f32.mrf.mxu0
  %v1829 = vadd.f32 %v1764, %v1828
  %1830 = vmatmul.f32.gmra.mxu0 %v204
  %v1831 = vpop.f32.mrf.mxu0
  %v1832 = vadd.f32 %v1767, %v1831
  %1833 = vmatmul.f32.gmra.mxu0 %v229
  %v1834 = vpop.f32.mrf.mxu0
  %v1835 = vadd.f32 %v1770, %v1834
  %1836 = vmatmul.f32.gmra.mxu0 %v254
  %v1837 = vpop.f32.mrf.mxu0
  %v1838 = vadd.f32 %v1773, %v1837
  %1839 = vmatmul.f32.gmra.mxu0 %v279
  %v1840 = vpop.f32.mrf.mxu0
  %v1841 = vadd.f32 %v1776, %v1840
  %1842 = vmatmul.f32.gmra.mxu0 %v304
  %v1843 = vpop.f32.mrf.mxu0
  %v1844 = vadd.f32 %v1779, %v1843
  %1845 = vmatmul.f32.gmra.mxu0 %v329
  %v1846 = vpop.f32.mrf.mxu0
  %v1847 = vadd.f32 %v1782, %v1846
  %1848 = vmatmul.f32.gmra.mxu0 %v354
  %v1849 = vpop.f32.mrf.mxu0
  %v1850 = vadd.f32 %v1785, %v1849
  %1851 = vmatmul.f32.gmra.mxu0 %v379
  %v1852 = vpop.f32.mrf.mxu0
  %v1853 = vadd.f32 %v1788, %v1852
  %1854 = vmatmul.f32.gmra.mxu0 %v404
  %v1855 = vpop.f32.mrf.mxu0
  %v1856 = vadd.f32 %v1791, %v1855
  %1857 = vdwg.mxu0
  %1858 = vmatpush.msra.mxu0 %v685
  %1859 = vmatpush.msra.mxu0 %v684
  %1860 = vmatpush.msra.mxu0 %v683
  %1861 = vmatpush.msra.mxu0 %v682
  %1862 = vmatpush.msra.mxu0 %v681
  %1863 = vmatpush.msra.mxu0 %v680
  %1864 = vmatpush.msra.mxu0 %v679
  %1865 = vmatpush.msra.mxu0 %v678
  %1866 = vmatpush.msra.mxu0 %v677
  %1867 = vmatpush.msra.mxu0 %v676
  %1868 = vmatpush.msra.mxu0 %v675
  %1869 = vmatpush.msra.mxu0 %v674
  %1870 = vmatpush.msra.mxu0 %v673
  %1871 = vmatpush.msra.mxu0 %v672
  %1872 = vmatpush.msra.mxu0 %v671
  %1873 = vmatpush.msra.mxu0 %v670
  %1874 = vmatmul.f32.gmra.mxu0 %v30
  %v1875 = vpop.f32.mrf.mxu0
  %v1876 = vadd.f32 %v1811, %v1875
  %1877 = vmatmul.f32.gmra.mxu0 %v55
  %v1878 = vpop.f32.mrf.mxu0
  %v1879 = vadd.f32 %v1814, %v1878
  %1880 = vmatmul.f32.gmra.mxu0 %v80
  %v1881 = vpop.f32.mrf.mxu0
  %v1882 = vadd.f32 %v1817, %v1881
  %1883 = vmatmul.f32.gmra.mxu0 %v105
  %v1884 = vpop.f32.mrf.mxu0
  %v1885 = vadd.f32 %v1820, %v1884
  %1886 = vmatmul.f32.gmra.mxu0 %v130
  %v1887 = vpop.f32.mrf.mxu0
  %v1888 = vadd.f32 %v1823, %v1887
  %1889 = vmatmul.f32.gmra.mxu0 %v155
  %v1890 = vpop.f32.mrf.mxu0
  %v1891 = vadd.f32 %v1826, %v1890
  %1892 = vmatmul.f32.gmra.mxu0 %v180
  %v1893 = vpop.f32.mrf.mxu0
  %v1894 = vadd.f32 %v1829, %v1893
  %1895 = vmatmul.f32.gmra.mxu0 %v205
  %v1896 = vpop.f32.mrf.mxu0
  %v1897 = vadd.f32 %v1832, %v1896
  %1898 = vmatmul.f32.gmra.mxu0 %v230
  %v1899 = vpop.f32.mrf.mxu0
  %v1900 = vadd.f32 %v1835, %v1899
  %1901 = vmatmul.f32.gmra.mxu0 %v255
  %v1902 = vpop.f32.mrf.mxu0
  %v1903 = vadd.f32 %v1838, %v1902
  %1904 = vmatmul.f32.gmra.mxu0 %v280
  %v1905 = vpop.f32.mrf.mxu0
  %v1906 = vadd.f32 %v1841, %v1905
  %1907 = vmatmul.f32.gmra.mxu0 %v305
  %v1908 = vpop.f32.mrf.mxu0
  %v1909 = vadd.f32 %v1844, %v1908
  %1910 = vmatmul.f32.gmra.mxu0 %v330
  %v1911 = vpop.f32.mrf.mxu0
  %v1912 = vadd.f32 %v1847, %v1911
  %1913 = vmatmul.f32.gmra.mxu0 %v355
  %v1914 = vpop.f32.mrf.mxu0
  %v1915 = vadd.f32 %v1850, %v1914
  %1916 = vmatmul.f32.gmra.mxu0 %v380
  %v1917 = vpop.f32.mrf.mxu0
  %v1918 = vadd.f32 %v1853, %v1917
  %1919 = vmatmul.f32.gmra.mxu0 %v405
  %v1920 = vpop.f32.mrf.mxu0
  %v1921 = vadd.f32 %v1856, %v1920
  %1922 = vdwg.mxu0
  %1923 = vmatpush.msra.mxu0 %v701
  %1924 = vmatpush.msra.mxu0 %v700
  %1925 = vmatpush.msra.mxu0 %v699
  %1926 = vmatpush.msra.mxu0 %v698
  %1927 = vmatpush.msra.mxu0 %v697
  %1928 = vmatpush.msra.mxu0 %v696
  %1929 = vmatpush.msra.mxu0 %v695
  %1930 = vmatpush.msra.mxu0 %v694
  %1931 = vmatpush.msra.mxu0 %v693
  %1932 = vmatpush.msra.mxu0 %v692
  %1933 = vmatpush.msra.mxu0 %v691
  %1934 = vmatpush.msra.mxu0 %v690
  %1935 = vmatpush.msra.mxu0 %v689
  %1936 = vmatpush.msra.mxu0 %v688
  %1937 = vmatpush.msra.mxu0 %v687
  %1938 = vmatpush.msra.mxu0 %v686
  %1939 = vmatmul.f32.gmra.mxu0 %v31
  %v1940 = vpop.f32.mrf.mxu0
  %v1941 = vadd.f32 %v1876, %v1940
  %1942 = vmatmul.f32.gmra.mxu0 %v56
  %v1943 = vpop.f32.mrf.mxu0
  %v1944 = vadd.f32 %v1879, %v1943
  %1945 = vmatmul.f32.gmra.mxu0 %v81
  %v1946 = vpop.f32.mrf.mxu0
  %v1947 = vadd.f32 %v1882, %v1946
  %1948 = vmatmul.f32.gmra.mxu0 %v106
  %v1949 = vpop.f32.mrf.mxu0
  %v1950 = vadd.f32 %v1885, %v1949
  %1951 = vmatmul.f32.gmra.mxu0 %v131
  %v1952 = vpop.f32.mrf.mxu0
  %v1953 = vadd.f32 %v1888, %v1952
  %1954 = vmatmul.f32.gmra.mxu0 %v156
  %v1955 = vpop.f32.mrf.mxu0
  %v1956 = vadd.f32 %v1891, %v1955
  %1957 = vmatmul.f32.gmra.mxu0 %v181
  %v1958 = vpop.f32.mrf.mxu0
  %v1959 = vadd.f32 %v1894, %v1958
  %1960 = vmatmul.f32.gmra.mxu0 %v206
  %v1961 = vpop.f32.mrf.mxu0
  %v1962 = vadd.f32 %v1897, %v1961
  %1963 = vmatmul.f32.gmra.mxu0 %v231
  %v1964 = vpop.f32.mrf.mxu0
  %v1965 = vadd.f32 %v1900, %v1964
  %1966 = vmatmul.f32.gmra.mxu0 %v256
  %v1967 = vpop.f32.mrf.mxu0
  %v1968 = vadd.f32 %v1903, %v1967
  %1969 = vmatmul.f32.gmra.mxu0 %v281
  %v1970 = vpop.f32.mrf.mxu0
  %v1971 = vadd.f32 %v1906, %v1970
  %1972 = vmatmul.f32.gmra.mxu0 %v306
  %v1973 = vpop.f32.mrf.mxu0
  %v1974 = vadd.f32 %v1909, %v1973
  %1975 = vmatmul.f32.gmra.mxu0 %v331
  %v1976 = vpop.f32.mrf.mxu0
  %v1977 = vadd.f32 %v1912, %v1976
  %1978 = vmatmul.f32.gmra.mxu0 %v356
  %v1979 = vpop.f32.mrf.mxu0
  %v1980 = vadd.f32 %v1915, %v1979
  %1981 = vmatmul.f32.gmra.mxu0 %v381
  %v1982 = vpop.f32.mrf.mxu0
  %v1983 = vadd.f32 %v1918, %v1982
  %1984 = vmatmul.f32.gmra.mxu0 %v406
  %v1985 = vpop.f32.mrf.mxu0
  %v1986 = vadd.f32 %v1921, %v1985
  %1987 = vdwg.mxu0
  %1988 = vmatpush.msra.mxu0 %v717
  %1989 = vmatpush.msra.mxu0 %v716
  %1990 = vmatpush.msra.mxu0 %v715
  %1991 = vmatpush.msra.mxu0 %v714
  %1992 = vmatpush.msra.mxu0 %v713
  %1993 = vmatpush.msra.mxu0 %v712
  %1994 = vmatpush.msra.mxu0 %v711
  %1995 = vmatpush.msra.mxu0 %v710
  %1996 = vmatpush.msra.mxu0 %v709
  %1997 = vmatpush.msra.mxu0 %v708
  %1998 = vmatpush.msra.mxu0 %v707
  %1999 = vmatpush.msra.mxu0 %v706
  %2000 = vmatpush.msra.mxu0 %v705
  %2001 = vmatpush.msra.mxu0 %v704
  %2002 = vmatpush.msra.mxu0 %v703
  %2003 = vmatpush.msra.mxu0 %v702
  %2004 = vmatmul.f32.gmra.mxu0 %v32
  %v2005 = vpop.f32.mrf.mxu0
  %v2006 = vadd.f32 %v1941, %v2005
  %2007 = vmatmul.f32.gmra.mxu0 %v57
  %v2008 = vpop.f32.mrf.mxu0
  %v2009 = vadd.f32 %v1944, %v2008
  %2010 = vmatmul.f32.gmra.mxu0 %v82
  %v2011 = vpop.f32.mrf.mxu0
  %v2012 = vadd.f32 %v1947, %v2011
  %2013 = vmatmul.f32.gmra.mxu0 %v107
  %v2014 = vpop.f32.mrf.mxu0
  %v2015 = vadd.f32 %v1950, %v2014
  %2016 = vmatmul.f32.gmra.mxu0 %v132
  %v2017 = vpop.f32.mrf.mxu0
  %v2018 = vadd.f32 %v1953, %v2017
  %2019 = vmatmul.f32.gmra.mxu0 %v157
  %v2020 = vpop.f32.mrf.mxu0
  %v2021 = vadd.f32 %v1956, %v2020
  %2022 = vmatmul.f32.gmra.mxu0 %v182
  %v2023 = vpop.f32.mrf.mxu0
  %v2024 = vadd.f32 %v1959, %v2023
  %2025 = vmatmul.f32.gmra.mxu0 %v207
  %v2026 = vpop.f32.mrf.mxu0
  %v2027 = vadd.f32 %v1962, %v2026
  %2028 = vmatmul.f32.gmra.mxu0 %v232
  %v2029 = vpop.f32.mrf.mxu0
  %v2030 = vadd.f32 %v1965, %v2029
  %2031 = vmatmul.f32.gmra.mxu0 %v257
  %v2032 = vpop.f32.mrf.mxu0
  %v2033 = vadd.f32 %v1968, %v2032
  %2034 = vmatmul.f32.gmra.mxu0 %v282
  %v2035 = vpop.f32.mrf.mxu0
  %v2036 = vadd.f32 %v1971, %v2035
  %2037 = vmatmul.f32.gmra.mxu0 %v307
  %v2038 = vpop.f32.mrf.mxu0
  %v2039 = vadd.f32 %v1974, %v2038
  %2040 = vmatmul.f32.gmra.mxu0 %v332
  %v2041 = vpop.f32.mrf.mxu0
  %v2042 = vadd.f32 %v1977, %v2041
  %2043 = vmatmul.f32.gmra.mxu0 %v357
  %v2044 = vpop.f32.mrf.mxu0
  %v2045 = vadd.f32 %v1980, %v2044
  %2046 = vmatmul.f32.gmra.mxu0 %v382
  %v2047 = vpop.f32.mrf.mxu0
  %v2048 = vadd.f32 %v1983, %v2047
  %2049 = vmatmul.f32.gmra.mxu0 %v407
  %v2050 = vpop.f32.mrf.mxu0
  %v2051 = vadd.f32 %v1986, %v2050
  %2052 = vdwg.mxu0
  %2053 = vmatpush.msra.mxu0 %v733
  %2054 = vmatpush.msra.mxu0 %v732
  %2055 = vmatpush.msra.mxu0 %v731
  %2056 = vmatpush.msra.mxu0 %v730
  %2057 = vmatpush.msra.mxu0 %v729
  %2058 = vmatpush.msra.mxu0 %v728
  %2059 = vmatpush.msra.mxu0 %v727
  %2060 = vmatpush.msra.mxu0 %v726
  %2061 = vmatpush.msra.mxu0 %v725
  %2062 = vmatpush.msra.mxu0 %v724
  %2063 = vmatpush.msra.mxu0 %v723
  %2064 = vmatpush.msra.mxu0 %v722
  %2065 = vmatpush.msra.mxu0 %v721
  %2066 = vmatpush.msra.mxu0 %v720
  %2067 = vmatpush.msra.mxu0 %v719
  %2068 = vmatpush.msra.mxu0 %v718
  %2069 = vmatmul.f32.gmra.mxu0 %v33
  %v2070 = vpop.f32.mrf.mxu0
  %v2071 = vadd.f32 %v2006, %v2070
  %2072 = vmatmul.f32.gmra.mxu0 %v58
  %v2073 = vpop.f32.mrf.mxu0
  %v2074 = vadd.f32 %v2009, %v2073
  %2075 = vmatmul.f32.gmra.mxu0 %v83
  %v2076 = vpop.f32.mrf.mxu0
  %v2077 = vadd.f32 %v2012, %v2076
  %2078 = vmatmul.f32.gmra.mxu0 %v108
  %v2079 = vpop.f32.mrf.mxu0
  %v2080 = vadd.f32 %v2015, %v2079
  %2081 = vmatmul.f32.gmra.mxu0 %v133
  %v2082 = vpop.f32.mrf.mxu0
  %v2083 = vadd.f32 %v2018, %v2082
  %2084 = vmatmul.f32.gmra.mxu0 %v158
  %v2085 = vpop.f32.mrf.mxu0
  %v2086 = vadd.f32 %v2021, %v2085
  %2087 = vmatmul.f32.gmra.mxu0 %v183
  %v2088 = vpop.f32.mrf.mxu0
  %v2089 = vadd.f32 %v2024, %v2088
  %2090 = vmatmul.f32.gmra.mxu0 %v208
  %v2091 = vpop.f32.mrf.mxu0
  %v2092 = vadd.f32 %v2027, %v2091
  %2093 = vmatmul.f32.gmra.mxu0 %v233
  %v2094 = vpop.f32.mrf.mxu0
  %v2095 = vadd.f32 %v2030, %v2094
  %2096 = vmatmul.f32.gmra.mxu0 %v258
  %v2097 = vpop.f32.mrf.mxu0
  %v2098 = vadd.f32 %v2033, %v2097
  %2099 = vmatmul.f32.gmra.mxu0 %v283
  %v2100 = vpop.f32.mrf.mxu0
  %v2101 = vadd.f32 %v2036, %v2100
  %2102 = vmatmul.f32.gmra.mxu0 %v308
  %v2103 = vpop.f32.mrf.mxu0
  %v2104 = vadd.f32 %v2039, %v2103
  %2105 = vmatmul.f32.gmra.mxu0 %v333
  %v2106 = vpop.f32.mrf.mxu0
  %v2107 = vadd.f32 %v2042, %v2106
  %2108 = vmatmul.f32.gmra.mxu0 %v358
  %v2109 = vpop.f32.mrf.mxu0
  %v2110 = vadd.f32 %v2045, %v2109
  %2111 = vmatmul.f32.gmra.mxu0 %v383
  %v2112 = vpop.f32.mrf.mxu0
  %v2113 = vadd.f32 %v2048, %v2112
  %2114 = vmatmul.f32.gmra.mxu0 %v408
  %v2115 = vpop.f32.mrf.mxu0
  %v2116 = vadd.f32 %v2051, %v2115
  %2117 = vdwg.mxu0
  %2118 = vmatpush.msra.mxu0 %v749
  %2119 = vmatpush.msra.mxu0 %v748
  %2120 = vmatpush.msra.mxu0 %v747
  %2121 = vmatpush.msra.mxu0 %v746
  %2122 = vmatpush.msra.mxu0 %v745
  %2123 = vmatpush.msra.mxu0 %v744
  %2124 = vmatpush.msra.mxu0 %v743
  %2125 = vmatpush.msra.mxu0 %v742
  %2126 = vmatpush.msra.mxu0 %v741
  %2127 = vmatpush.msra.mxu0 %v740
  %2128 = vmatpush.msra.mxu0 %v739
  %2129 = vmatpush.msra.mxu0 %v738
  %2130 = vmatpush.msra.mxu0 %v737
  %2131 = vmatpush.msra.mxu0 %v736
  %2132 = vmatpush.msra.mxu0 %v735
  %2133 = vmatpush.msra.mxu0 %v734
  %2134 = vmatmul.f32.gmra.mxu0 %v34
  %v2135 = vpop.f32.mrf.mxu0
  %v2136 = vadd.f32 %v2071, %v2135
  %2137 = vmatmul.f32.gmra.mxu0 %v59
  %v2138 = vpop.f32.mrf.mxu0
  %v2139 = vadd.f32 %v2074, %v2138
  %2140 = vmatmul.f32.gmra.mxu0 %v84
  %v2141 = vpop.f32.mrf.mxu0
  %v2142 = vadd.f32 %v2077, %v2141
  %2143 = vmatmul.f32.gmra.mxu0 %v109
  %v2144 = vpop.f32.mrf.mxu0
  %v2145 = vadd.f32 %v2080, %v2144
  %2146 = vmatmul.f32.gmra.mxu0 %v134
  %v2147 = vpop.f32.mrf.mxu0
  %v2148 = vadd.f32 %v2083, %v2147
  %2149 = vmatmul.f32.gmra.mxu0 %v159
  %v2150 = vpop.f32.mrf.mxu0
  %v2151 = vadd.f32 %v2086, %v2150
  %2152 = vmatmul.f32.gmra.mxu0 %v184
  %v2153 = vpop.f32.mrf.mxu0
  %v2154 = vadd.f32 %v2089, %v2153
  %2155 = vmatmul.f32.gmra.mxu0 %v209
  %v2156 = vpop.f32.mrf.mxu0
  %v2157 = vadd.f32 %v2092, %v2156
  %2158 = vmatmul.f32.gmra.mxu0 %v234
  %v2159 = vpop.f32.mrf.mxu0
  %v2160 = vadd.f32 %v2095, %v2159
  %2161 = vmatmul.f32.gmra.mxu0 %v259
  %v2162 = vpop.f32.mrf.mxu0
  %v2163 = vadd.f32 %v2098, %v2162
  %2164 = vmatmul.f32.gmra.mxu0 %v284
  %v2165 = vpop.f32.mrf.mxu0
  %v2166 = vadd.f32 %v2101, %v2165
  %2167 = vmatmul.f32.gmra.mxu0 %v309
  %v2168 = vpop.f32.mrf.mxu0
  %v2169 = vadd.f32 %v2104, %v2168
  %2170 = vmatmul.f32.gmra.mxu0 %v334
  %v2171 = vpop.f32.mrf.mxu0
  %v2172 = vadd.f32 %v2107, %v2171
  %2173 = vmatmul.f32.gmra.mxu0 %v359
  %v2174 = vpop.f32.mrf.mxu0
  %v2175 = vadd.f32 %v2110, %v2174
  %2176 = vmatmul.f32.gmra.mxu0 %v384
  %v2177 = vpop.f32.mrf.mxu0
  %v2178 = vadd.f32 %v2113, %v2177
  %2179 = vmatmul.f32.gmra.mxu0 %v409
  %v2180 = vpop.f32.mrf.mxu0
  %v2181 = vadd.f32 %v2116, %v2180
  %2182 = vdwg.mxu0
  %2183 = vmatpush.msra.mxu0 %v765
  %2184 = vmatpush.msra.mxu0 %v764
  %2185 = vmatpush.msra.mxu0 %v763
  %2186 = vmatpush.msra.mxu0 %v762
  %2187 = vmatpush.msra.mxu0 %v761
  %2188 = vmatpush.msra.mxu0 %v760
  %2189 = vmatpush.msra.mxu0 %v759
  %2190 = vmatpush.msra.mxu0 %v758
  %2191 = vmatpush.msra.mxu0 %v757
  %2192 = vmatpush.msra.mxu0 %v756
  %2193 = vmatpush.msra.mxu0 %v755
  %2194 = vmatpush.msra.mxu0 %v754
  %2195 = vmatpush.msra.mxu0 %v753
  %2196 = vmatpush.msra.mxu0 %v752
  %2197 = vmatpush.msra.mxu0 %v751
  %2198 = vmatpush.msra.mxu0 %v750
  %2199 = vmatmul.f32.gmra.mxu0 %v35
  %v2200 = vpop.f32.mrf.mxu0
  %v2201 = vadd.f32 %v2136, %v2200
  %2202 = vmatmul.f32.gmra.mxu0 %v60
  %v2203 = vpop.f32.mrf.mxu0
  %v2204 = vadd.f32 %v2139, %v2203
  %2205 = vmatmul.f32.gmra.mxu0 %v85
  %v2206 = vpop.f32.mrf.mxu0
  %v2207 = vadd.f32 %v2142, %v2206
  %2208 = vmatmul.f32.gmra.mxu0 %v110
  %v2209 = vpop.f32.mrf.mxu0
  %v2210 = vadd.f32 %v2145, %v2209
  %2211 = vmatmul.f32.gmra.mxu0 %v135
  %v2212 = vpop.f32.mrf.mxu0
  %v2213 = vadd.f32 %v2148, %v2212
  %2214 = vmatmul.f32.gmra.mxu0 %v160
  %v2215 = vpop.f32.mrf.mxu0
  %v2216 = vadd.f32 %v2151, %v2215
  %2217 = vmatmul.f32.gmra.mxu0 %v185
  %v2218 = vpop.f32.mrf.mxu0
  %v2219 = vadd.f32 %v2154, %v2218
  %2220 = vmatmul.f32.gmra.mxu0 %v210
  %v2221 = vpop.f32.mrf.mxu0
  %v2222 = vadd.f32 %v2157, %v2221
  %2223 = vmatmul.f32.gmra.mxu0 %v235
  %v2224 = vpop.f32.mrf.mxu0
  %v2225 = vadd.f32 %v2160, %v2224
  %2226 = vmatmul.f32.gmra.mxu0 %v260
  %v2227 = vpop.f32.mrf.mxu0
  %v2228 = vadd.f32 %v2163, %v2227
  %2229 = vmatmul.f32.gmra.mxu0 %v285
  %v2230 = vpop.f32.mrf.mxu0
  %v2231 = vadd.f32 %v2166, %v2230
  %2232 = vmatmul.f32.gmra.mxu0 %v310
  %v2233 = vpop.f32.mrf.mxu0
  %v2234 = vadd.f32 %v2169, %v2233
  %2235 = vmatmul.f32.gmra.mxu0 %v335
  %v2236 = vpop.f32.mrf.mxu0
  %v2237 = vadd.f32 %v2172, %v2236
  %2238 = vmatmul.f32.gmra.mxu0 %v360
  %v2239 = vpop.f32.mrf.mxu0
  %v2240 = vadd.f32 %v2175, %v2239
  %2241 = vmatmul.f32.gmra.mxu0 %v385
  %v2242 = vpop.f32.mrf.mxu0
  %v2243 = vadd.f32 %v2178, %v2242
  %2244 = vmatmul.f32.gmra.mxu0 %v410
  %v2245 = vpop.f32.mrf.mxu0
  %v2246 = vadd.f32 %v2181, %v2245
  %2247 = vdwg.mxu0
  %2248 = vmatpush.msra.mxu0 %v781
  %2249 = vmatpush.msra.mxu0 %v780
  %2250 = vmatpush.msra.mxu0 %v779
  %2251 = vmatpush.msra.mxu0 %v778
  %2252 = vmatpush.msra.mxu0 %v777
  %2253 = vmatpush.msra.mxu0 %v776
  %2254 = vmatpush.msra.mxu0 %v775
  %2255 = vmatpush.msra.mxu0 %v774
  %2256 = vmatpush.msra.mxu0 %v773
  %2257 = vmatpush.msra.mxu0 %v772
  %2258 = vmatpush.msra.mxu0 %v771
  %2259 = vmatpush.msra.mxu0 %v770
  %2260 = vmatpush.msra.mxu0 %v769
  %2261 = vmatpush.msra.mxu0 %v768
  %2262 = vmatpush.msra.mxu0 %v767
  %2263 = vmatpush.msra.mxu0 %v766
  %2264 = vmatmul.f32.gmra.mxu0 %v36
  %v2265 = vpop.f32.mrf.mxu0
  %v2266 = vadd.f32 %v2201, %v2265
  %2267 = vmatmul.f32.gmra.mxu0 %v61
  %v2268 = vpop.f32.mrf.mxu0
  %v2269 = vadd.f32 %v2204, %v2268
  %2270 = vmatmul.f32.gmra.mxu0 %v86
  %v2271 = vpop.f32.mrf.mxu0
  %v2272 = vadd.f32 %v2207, %v2271
  %2273 = vmatmul.f32.gmra.mxu0 %v111
  %v2274 = vpop.f32.mrf.mxu0
  %v2275 = vadd.f32 %v2210, %v2274
  %2276 = vmatmul.f32.gmra.mxu0 %v136
  %v2277 = vpop.f32.mrf.mxu0
  %v2278 = vadd.f32 %v2213, %v2277
  %2279 = vmatmul.f32.gmra.mxu0 %v161
  %v2280 = vpop.f32.mrf.mxu0
  %v2281 = vadd.f32 %v2216, %v2280
  %2282 = vmatmul.f32.gmra.mxu0 %v186
  %v2283 = vpop.f32.mrf.mxu0
  %v2284 = vadd.f32 %v2219, %v2283
  %2285 = vmatmul.f32.gmra.mxu0 %v211
  %v2286 = vpop.f32.mrf.mxu0
  %v2287 = vadd.f32 %v2222, %v2286
  %2288 = vmatmul.f32.gmra.mxu0 %v236
  %v2289 = vpop.f32.mrf.mxu0
  %v2290 = vadd.f32 %v2225, %v2289
  %2291 = vmatmul.f32.gmra.mxu0 %v261
  %v2292 = vpop.f32.mrf.mxu0
  %v2293 = vadd.f32 %v2228, %v2292
  %2294 = vmatmul.f32.gmra.mxu0 %v286
  %v2295 = vpop.f32.mrf.mxu0
  %v2296 = vadd.f32 %v2231, %v2295
  %2297 = vmatmul.f32.gmra.mxu0 %v311
  %v2298 = vpop.f32.mrf.mxu0
  %v2299 = vadd.f32 %v2234, %v2298
  %2300 = vmatmul.f32.gmra.mxu0 %v336
  %v2301 = vpop.f32.mrf.mxu0
  %v2302 = vadd.f32 %v2237, %v2301
  %2303 = vmatmul.f32.gmra.mxu0 %v361
  %v2304 = vpop.f32.mrf.mxu0
  %v2305 = vadd.f32 %v2240, %v2304
  %2306 = vmatmul.f32.gmra.mxu0 %v386
  %v2307 = vpop.f32.mrf.mxu0
  %v2308 = vadd.f32 %v2243, %v2307
  %2309 = vmatmul.f32.gmra.mxu0 %v411
  %v2310 = vpop.f32.mrf.mxu0
  %v2311 = vadd.f32 %v2246, %v2310
  %2312 = vdwg.mxu0
  %2313 = vmatpush.msra.mxu0 %v797
  %2314 = vmatpush.msra.mxu0 %v796
  %2315 = vmatpush.msra.mxu0 %v795
  %2316 = vmatpush.msra.mxu0 %v794
  %2317 = vmatpush.msra.mxu0 %v793
  %2318 = vmatpush.msra.mxu0 %v792
  %2319 = vmatpush.msra.mxu0 %v791
  %2320 = vmatpush.msra.mxu0 %v790
  %2321 = vmatpush.msra.mxu0 %v789
  %2322 = vmatpush.msra.mxu0 %v788
  %2323 = vmatpush.msra.mxu0 %v787
  %2324 = vmatpush.msra.mxu0 %v786
  %2325 = vmatpush.msra.mxu0 %v785
  %2326 = vmatpush.msra.mxu0 %v784
  %2327 = vmatpush.msra.mxu0 %v783
  %2328 = vmatpush.msra.mxu0 %v782
  %2329 = vmatmul.f32.gmra.mxu0 %v37
  %v2330 = vpop.f32.mrf.mxu0
  %v2331 = vadd.f32 %v2266, %v2330
  %2332 = vmatmul.f32.gmra.mxu0 %v62
  %v2333 = vpop.f32.mrf.mxu0
  %v2334 = vadd.f32 %v2269, %v2333
  %2335 = vmatmul.f32.gmra.mxu0 %v87
  %v2336 = vpop.f32.mrf.mxu0
  %v2337 = vadd.f32 %v2272, %v2336
  %2338 = vmatmul.f32.gmra.mxu0 %v112
  %v2339 = vpop.f32.mrf.mxu0
  %v2340 = vadd.f32 %v2275, %v2339
  %2341 = vmatmul.f32.gmra.mxu0 %v137
  %v2342 = vpop.f32.mrf.mxu0
  %v2343 = vadd.f32 %v2278, %v2342
  %2344 = vmatmul.f32.gmra.mxu0 %v162
  %v2345 = vpop.f32.mrf.mxu0
  %v2346 = vadd.f32 %v2281, %v2345
  %2347 = vmatmul.f32.gmra.mxu0 %v187
  %v2348 = vpop.f32.mrf.mxu0
  %v2349 = vadd.f32 %v2284, %v2348
  %2350 = vmatmul.f32.gmra.mxu0 %v212
  %v2351 = vpop.f32.mrf.mxu0
  %v2352 = vadd.f32 %v2287, %v2351
  %2353 = vmatmul.f32.gmra.mxu0 %v237
  %v2354 = vpop.f32.mrf.mxu0
  %v2355 = vadd.f32 %v2290, %v2354
  %2356 = vmatmul.f32.gmra.mxu0 %v262
  %v2357 = vpop.f32.mrf.mxu0
  %v2358 = vadd.f32 %v2293, %v2357
  %2359 = vmatmul.f32.gmra.mxu0 %v287
  %v2360 = vpop.f32.mrf.mxu0
  %v2361 = vadd.f32 %v2296, %v2360
  %2362 = vmatmul.f32.gmra.mxu0 %v312
  %v2363 = vpop.f32.mrf.mxu0
  %v2364 = vadd.f32 %v2299, %v2363
  %2365 = vmatmul.f32.gmra.mxu0 %v337
  %v2366 = vpop.f32.mrf.mxu0
  %v2367 = vadd.f32 %v2302, %v2366
  %2368 = vmatmul.f32.gmra.mxu0 %v362
  %v2369 = vpop.f32.mrf.mxu0
  %v2370 = vadd.f32 %v2305, %v2369
  %2371 = vmatmul.f32.gmra.mxu0 %v387
  %v2372 = vpop.f32.mrf.mxu0
  %v2373 = vadd.f32 %v2308, %v2372
  %2374 = vmatmul.f32.gmra.mxu0 %v412
  %v2375 = vpop.f32.mrf.mxu0
  %v2376 = vadd.f32 %v2311, %v2375
  %2377 = vdwg.mxu0
  %2378 = vmatpush.msra.mxu0 %v813
  %2379 = vmatpush.msra.mxu0 %v812
  %2380 = vmatpush.msra.mxu0 %v811
  %2381 = vmatpush.msra.mxu0 %v810
  %2382 = vmatpush.msra.mxu0 %v809
  %2383 = vmatpush.msra.mxu0 %v808
  %2384 = vmatpush.msra.mxu0 %v807
  %2385 = vmatpush.msra.mxu0 %v806
  %2386 = vmatpush.msra.mxu0 %v805
  %2387 = vmatpush.msra.mxu0 %v804
  %2388 = vmatpush.msra.mxu0 %v803
  %2389 = vmatpush.msra.mxu0 %v802
  %2390 = vmatpush.msra.mxu0 %v801
  %2391 = vmatpush.msra.mxu0 %v800
  %2392 = vmatpush.msra.mxu0 %v799
  %2393 = vmatpush.msra.mxu0 %v798
  %2394 = vmatmul.f32.gmra.mxu0 %v38
  %v2395 = vpop.f32.mrf.mxu0
  %v2396 = vadd.f32 %v2331, %v2395
  %2397 = vmatmul.f32.gmra.mxu0 %v63
  %v2398 = vpop.f32.mrf.mxu0
  %v2399 = vadd.f32 %v2334, %v2398
  %2400 = vmatmul.f32.gmra.mxu0 %v88
  %v2401 = vpop.f32.mrf.mxu0
  %v2402 = vadd.f32 %v2337, %v2401
  %2403 = vmatmul.f32.gmra.mxu0 %v113
  %v2404 = vpop.f32.mrf.mxu0
  %v2405 = vadd.f32 %v2340, %v2404
  %2406 = vmatmul.f32.gmra.mxu0 %v138
  %v2407 = vpop.f32.mrf.mxu0
  %v2408 = vadd.f32 %v2343, %v2407
  %2409 = vmatmul.f32.gmra.mxu0 %v163
  %v2410 = vpop.f32.mrf.mxu0
  %v2411 = vadd.f32 %v2346, %v2410
  %2412 = vmatmul.f32.gmra.mxu0 %v188
  %v2413 = vpop.f32.mrf.mxu0
  %v2414 = vadd.f32 %v2349, %v2413
  %2415 = vmatmul.f32.gmra.mxu0 %v213
  %v2416 = vpop.f32.mrf.mxu0
  %v2417 = vadd.f32 %v2352, %v2416
  %2418 = vmatmul.f32.gmra.mxu0 %v238
  %v2419 = vpop.f32.mrf.mxu0
  %v2420 = vadd.f32 %v2355, %v2419
  %2421 = vmatmul.f32.gmra.mxu0 %v263
  %v2422 = vpop.f32.mrf.mxu0
  %v2423 = vadd.f32 %v2358, %v2422
  %2424 = vmatmul.f32.gmra.mxu0 %v288
  %v2425 = vpop.f32.mrf.mxu0
  %v2426 = vadd.f32 %v2361, %v2425
  %2427 = vmatmul.f32.gmra.mxu0 %v313
  %v2428 = vpop.f32.mrf.mxu0
  %v2429 = vadd.f32 %v2364, %v2428
  %2430 = vmatmul.f32.gmra.mxu0 %v338
  %v2431 = vpop.f32.mrf.mxu0
  %v2432 = vadd.f32 %v2367, %v2431
  %2433 = vmatmul.f32.gmra.mxu0 %v363
  %v2434 = vpop.f32.mrf.mxu0
  %v2435 = vadd.f32 %v2370, %v2434
  %2436 = vmatmul.f32.gmra.mxu0 %v388
  %v2437 = vpop.f32.mrf.mxu0
  %v2438 = vadd.f32 %v2373, %v2437
  %2439 = vmatmul.f32.gmra.mxu0 %v413
  %v2440 = vpop.f32.mrf.mxu0
  %v2441 = vadd.f32 %v2376, %v2440
  %2442 = vdwg.mxu0
  %v2443 = vmax.f32 %v2396, 0.0
  %v2444 = vmax.f32 %v2399, 0.0
  %v2445 = vmax.f32 %v2402, 0.0
  %v2446 = vmax.f32 %v2405, 0.0
  %v2447 = vmax.f32 %v2408, 0.0
  %v2448 = vmax.f32 %v2411, 0.0
  %v2449 = vmax.f32 %v2414, 0.0
  %v2450 = vmax.f32 %v2417, 0.0
  %v2451 = vmax.f32 %v2420, 0.0
  %v2452 = vmax.f32 %v2423, 0.0
  %v2453 = vmax.f32 %v2426, 0.0
  %v2454 = vmax.f32 %v2429, 0.0
  %v2455 = vmax.f32 %v2432, 0.0
  %v2456 = vmax.f32 %v2435, 0.0
  %v2457 = vmax.f32 %v2438, 0.0
  %v2458 = vmax.f32 %v2441, 0.0
  %2459 = vst [vmem:[%s3] sm:$0xff] %v2443
  %2460 = vst [vmem:[%s3 + $0x8] sm:$0xff] %v2444
  %2461 = vst [vmem:[%s3 + $0x10] sm:$0xff] %v2445
  %2462 = vst [vmem:[%s3 + $0x18] sm:$0xff] %v2446
  %2463 = vst [vmem:[%s3 + $0x20] sm:$0xff] %v2447
  %2464 = vst [vmem:[%s3 + $0x28] sm:$0xff] %v2448
  %2465 = vst [vmem:[%s3 + $0x30] sm:$0xff] %v2449
  %2466 = vst [vmem:[%s3 + $0x38] sm:$0xff] %v2450
  %2467 = vst [vmem:[%s3 + $0x40] sm:$0xff] %v2451
  %2468 = vst [vmem:[%s3 + $0x48] sm:$0xff] %v2452
  %2469 = vst [vmem:[%s3 + $0x50] sm:$0xff] %v2453
  %2470 = vst [vmem:[%s3 + $0x58] sm:$0xff] %v2454
  %2471 = vst [vmem:[%s3 + $0x60] sm:$0xff] %v2455
  %2472 = vst [vmem:[%s3 + $0x68] sm:$0xff] %v2456
  %2473 = vst [vmem:[%s3 + $0x70] sm:$0xff] %v2457
  %2474 = vst [vmem:[%s3 + $0x78] sm:$0xff] %v2458
  // Predicated region
  $region14: #{lenet5_forward.8} parent=0 // pred_check
    _
  $region15: #{lenet5_forward.8} parent=0 // pred_check_branch
    %2476 = sbr.rel (0) target = $region17
  $region16: #{lenet5_forward.8} parent=0 // pred_region
    _
  $region17: #{lenet5_forward.8} parent=0 // pred_fallthru
    _
  // Predicated region
  $region18: #{lenet5_forward.8} parent=0 // pred_check
    _
  $region19: #{lenet5_forward.8} parent=0 // pred_check_branch
    %2478 = sbr.rel (0) target = $region21
  $region20: #{lenet5_forward.8} parent=0 // pred_region
    _
  $region21: #{lenet5_forward.8} parent=0 // pred_fallthru
    _

// kernel: lenet5_forward.10
$region0: #{lenet5_forward.10}
  #allocation0 [shape = 'u32[]', space=smem, size = 0x4, offset = 0x4, fixed_abs, tag = 'smem constant byte address 0x4 - core index']
  #allocation1 [shape = 'u32[72,128]{1,0:T(1,128)}', space=vmem, size = 0x9000, scoped, tag = 'internal scratch']
  %s0 = inlined_call_operand.vmem [shape: f32[8,2048], index: 0, kind: input, shape index: {}]
  %s1 = inlined_call_operand.vmem [shape: f32[2048,512], index: 1, kind: input, shape index: {}]
  %s2 = inlined_call_operand.vmem [shape: f32[1,512], index: 2, kind: input, shape index: {}]
  %s3 = inlined_call_operand.vmem [shape: f32[8,512], index: 3, kind: output, shape index: {}]
  %s4 = sld [smem:[#allocation0]]
  $region22: #{lenet5_forward.10} parent=0
    _
  %s6 = ssub.s32 1, %s4
  %s7 = scalar_select 0, %s6, %s4
  // Predicated region
  $region2: #{lenet5_forward.10} parent=0 // pred_check
    _
  $region3: #{lenet5_forward.10} parent=0 // pred_check_branch
    %9 = sbr.rel (0) target = $region5
  $region4: #{lenet5_forward.10} parent=0 // pred_region
    _
  $region5: #{lenet5_forward.10} parent=0 // pred_fallthru
    _
  // Predicated region
  $region6: #{lenet5_forward.10} parent=0 // pred_check
    _
  $region7: #{lenet5_forward.10} parent=0 // pred_check_branch
    %11 = sbr.rel (0) target = $region9
  $region8: #{lenet5_forward.10} parent=0 // pred_region
    _
  $region9: #{lenet5_forward.10} parent=0 // pred_fallthru
    _
  // Predicated region
  $region10: #{lenet5_forward.10} parent=0 // pred_check
    _
  $region11: #{lenet5_forward.10} parent=0 // pred_check_branch
    %13 = sbr.rel (0) target = $region13
  $region12: #{lenet5_forward.10} parent=0 // pred_region
    _
  $region13: #{lenet5_forward.10} parent=0 // pred_fallthru
    _
  %v14 = vld [vmem:[%s0] sm:$0xff]
  %v15 = vld [vmem:[%s0 + $0x8] sm:$0xff]
  %v16 = vld [vmem:[%s0 + $0x10] sm:$0xff]
  %v17 = vld [vmem:[%s0 + $0x18] sm:$0xff]
  %v18 = vld [vmem:[%s0 + $0x20] sm:$0xff]
  %v19 = vld [vmem:[%s0 + $0x28] sm:$0xff]
  %v20 = vld [vmem:[%s0 + $0x30] sm:$0xff]
  %v21 = vld [vmem:[%s0 + $0x38] sm:$0xff]
  %v22 = vld [vmem:[%s0 + $0x40] sm:$0xff]
  %v23 = vld [vmem:[%s0 + $0x48] sm:$0xff]
  %v24 = vld [vmem:[%s0 + $0x50] sm:$0xff]
  %v25 = vld [vmem:[%s0 + $0x58] sm:$0xff]
  %v26 = vld [vmem:[%s0 + $0x60] sm:$0xff]
  %v27 = vld [vmem:[%s0 + $0x68] sm:$0xff]
  %v28 = vld [vmem:[%s0 + $0x70] sm:$0xff]
  %v29 = vld [vmem:[%s0 + $0x78] sm:$0xff]
  %v30 = vld [vmem:[%s1] sm:$0xff]
  %v31 = vld [vmem:[%s1 + $0x8] sm:$0xff]
  %v32 = vld [vmem:[%s1 + $0x10] sm:$0xff]
  %v33 = vld [vmem:[%s1 + $0x18] sm:$0xff]
  %v34 = vld [vmem:[%s1 + $0x20] sm:$0xff]
  %v35 = vld [vmem:[%s1 + $0x28] sm:$0xff]
  %v36 = vld [vmem:[%s1 + $0x30] sm:$0xff]
  %v37 = vld [vmem:[%s1 + $0x38] sm:$0xff]
  %v38 = vld [vmem:[%s1 + $0x40] sm:$0xff]
  %v39 = vld [vmem:[%s1 + $0x48] sm:$0xff]
  %v40 = vld [vmem:[%s1 + $0x50] sm:$0xff]
  %v41 = vld [vmem:[%s1 + $0x58] sm:$0xff]
  %v42 = vld [vmem:[%s1 + $0x60] sm:$0xff]
  %v43 = vld [vmem:[%s1 + $0x68] sm:$0xff]
  %v44 = vld [vmem:[%s1 + $0x70] sm:$0xff]
  %v45 = vld [vmem:[%s1 + $0x78] sm:$0xff]
  %v46 = vld [vmem:[%s1 + $0x80] sm:$0xff]
  %v47 = vld [vmem:[%s1 + $0x88] sm:$0xff]
  %v48 = vld [vmem:[%s1 + $0x90] sm:$0xff]
  %v49 = vld [vmem:[%s1 + $0x98] sm:$0xff]
  %v50 = vld [vmem:[%s1 + $0xa0] sm:$0xff]
  %v51 = vld [vmem:[%s1 + $0xa8] sm:$0xff]
  %v52 = vld [vmem:[%s1 + $0xb0] sm:$0xff]
  %v53 = vld [vmem:[%s1 + $0xb8] sm:$0xff]
  %v54 = vld [vmem:[%s1 + $0xc0] sm:$0xff]
  %v55 = vld [vmem:[%s1 + $0xc8] sm:$0xff]
  %v56 = vld [vmem:[%s1 + $0xd0] sm:$0xff]
  %v57 = vld [vmem:[%s1 + $0xd8] sm:$0xff]
  %v58 = vld [vmem:[%s1 + $0xe0] sm:$0xff]
  %v59 = vld [vmem:[%s1 + $0xe8] sm:$0xff]
  %v60 = vld [vmem:[%s1 + $0xf0] sm:$0xff]
  %v61 = vld [vmem:[%s1 + $0xf8] sm:$0xff]
  %v62 = vld [vmem:[%s1 + $0x100] sm:$0xff]
  %v63 = vld [vmem:[%s1 + $0x108] sm:$0xff]
  %v64 = vld [vmem:[%s1 + $0x110] sm:$0xff]
  %v65 = vld [vmem:[%s1 + $0x118] sm:$0xff]
  %v66 = vld [vmem:[%s1 + $0x120] sm:$0xff]
  %v67 = vld [vmem:[%s1 + $0x128] sm:$0xff]
  %v68 = vld [vmem:[%s1 + $0x130] sm:$0xff]
  %v69 = vld [vmem:[%s1 + $0x138] sm:$0xff]
  %v70 = vld [vmem:[%s1 + $0x140] sm:$0xff]
  %v71 = vld [vmem:[%s1 + $0x148] sm:$0xff]
  %v72 = vld [vmem:[%s1 + $0x150] sm:$0xff]
  %v73 = vld [vmem:[%s1 + $0x158] sm:$0xff]
  %v74 = vld [vmem:[%s1 + $0x160] sm:$0xff]
  %v75 = vld [vmem:[%s1 + $0x168] sm:$0xff]
  %v76 = vld [vmem:[%s1 + $0x170] sm:$0xff]
  %v77 = vld [vmem:[%s1 + $0x178] sm:$0xff]
  %v78 = vld [vmem:[%s1 + $0x180] sm:$0xff]
  %v79 = vld [vmem:[%s1 + $0x188] sm:$0xff]
  %v80 = vld [vmem:[%s1 + $0x190] sm:$0xff]
  %v81 = vld [vmem:[%s1 + $0x198] sm:$0xff]
  %v82 = vld [vmem:[%s1 + $0x1a0] sm:$0xff]
  %v83 = vld [vmem:[%s1 + $0x1a8] sm:$0xff]
  %v84 = vld [vmem:[%s1 + $0x1b0] sm:$0xff]
  %v85 = vld [vmem:[%s1 + $0x1b8] sm:$0xff]
  %v86 = vld [vmem:[%s1 + $0x1c0] sm:$0xff]
  %v87 = vld [vmem:[%s1 + $0x1c8] sm:$0xff]
  %v88 = vld [vmem:[%s1 + $0x1d0] sm:$0xff]
  %v89 = vld [vmem:[%s1 + $0x1d8] sm:$0xff]
  %v90 = vld [vmem:[%s1 + $0x1e0] sm:$0xff]
  %v91 = vld [vmem:[%s1 + $0x1e8] sm:$0xff]
  %v92 = vld [vmem:[%s1 + $0x1f0] sm:$0xff]
  %v93 = vld [vmem:[%s1 + $0x1f8] sm:$0xff]
  %v94 = vld [vmem:[%s1 + $0x200] sm:$0xff]
  %v95 = vld [vmem:[%s1 + $0x208] sm:$0xff]
  %v96 = vld [vmem:[%s1 + $0x210] sm:$0xff]
  %v97 = vld [vmem:[%s1 + $0x218] sm:$0xff]
  %v98 = vld [vmem:[%s1 + $0x220] sm:$0xff]
  %v99 = vld [vmem:[%s1 + $0x228] sm:$0xff]
  %v100 = vld [vmem:[%s1 + $0x230] sm:$0xff]
  %v101 = vld [vmem:[%s1 + $0x238] sm:$0xff]
  %v102 = vld [vmem:[%s1 + $0x240] sm:$0xff]
  %v103 = vld [vmem:[%s1 + $0x248] sm:$0xff]
  %v104 = vld [vmem:[%s1 + $0x250] sm:$0xff]
  %v105 = vld [vmem:[%s1 + $0x258] sm:$0xff]
  %v106 = vld [vmem:[%s1 + $0x260] sm:$0xff]
  %v107 = vld [vmem:[%s1 + $0x268] sm:$0xff]
  %v108 = vld [vmem:[%s1 + $0x270] sm:$0xff]
  %v109 = vld [vmem:[%s1 + $0x278] sm:$0xff]
  %v110 = vld [vmem:[%s1 + $0x280] sm:$0xff]
  %v111 = vld [vmem:[%s1 + $0x288] sm:$0xff]
  %v112 = vld [vmem:[%s1 + $0x290] sm:$0xff]
  %v113 = vld [vmem:[%s1 + $0x298] sm:$0xff]
  %v114 = vld [vmem:[%s1 + $0x2a0] sm:$0xff]
  %v115 = vld [vmem:[%s1 + $0x2a8] sm:$0xff]
  %v116 = vld [vmem:[%s1 + $0x2b0] sm:$0xff]
  %v117 = vld [vmem:[%s1 + $0x2b8] sm:$0xff]
  %v118 = vld [vmem:[%s1 + $0x2c0] sm:$0xff]
  %v119 = vld [vmem:[%s1 + $0x2c8] sm:$0xff]
  %v120 = vld [vmem:[%s1 + $0x2d0] sm:$0xff]
  %v121 = vld [vmem:[%s1 + $0x2d8] sm:$0xff]
  %v122 = vld [vmem:[%s1 + $0x2e0] sm:$0xff]
  %v123 = vld [vmem:[%s1 + $0x2e8] sm:$0xff]
  %v124 = vld [vmem:[%s1 + $0x2f0] sm:$0xff]
  %v125 = vld [vmem:[%s1 + $0x2f8] sm:$0xff]
  %v126 = vld [vmem:[%s1 + $0x300] sm:$0xff]
  %v127 = vld [vmem:[%s1 + $0x308] sm:$0xff]
  %v128 = vld [vmem:[%s1 + $0x310] sm:$0xff]
  %v129 = vld [vmem:[%s1 + $0x318] sm:$0xff]
  %v130 = vld [vmem:[%s1 + $0x320] sm:$0xff]
  %v131 = vld [vmem:[%s1 + $0x328] sm:$0xff]
  %v132 = vld [vmem:[%s1 + $0x330] sm:$0xff]
  %v133 = vld [vmem:[%s1 + $0x338] sm:$0xff]
  %v134 = vld [vmem:[%s1 + $0x340] sm:$0xff]
  %v135 = vld [vmem:[%s1 + $0x348] sm:$0xff]
  %v136 = vld [vmem:[%s1 + $0x350] sm:$0xff]
  %v137 = vld [vmem:[%s1 + $0x358] sm:$0xff]
  %v138 = vld [vmem:[%s1 + $0x360] sm:$0xff]
  %v139 = vld [vmem:[%s1 + $0x368] sm:$0xff]
  %v140 = vld [vmem:[%s1 + $0x370] sm:$0xff]
  %v141 = vld [vmem:[%s1 + $0x378] sm:$0xff]
  %v142 = vld [vmem:[%s1 + $0x380] sm:$0xff]
  %v143 = vld [vmem:[%s1 + $0x388] sm:$0xff]
  %v144 = vld [vmem:[%s1 + $0x390] sm:$0xff]
  %v145 = vld [vmem:[%s1 + $0x398] sm:$0xff]
  %v146 = vld [vmem:[%s1 + $0x3a0] sm:$0xff]
  %v147 = vld [vmem:[%s1 + $0x3a8] sm:$0xff]
  %v148 = vld [vmem:[%s1 + $0x3b0] sm:$0xff]
  %v149 = vld [vmem:[%s1 + $0x3b8] sm:$0xff]
  %v150 = vld [vmem:[%s1 + $0x3c0] sm:$0xff]
  %v151 = vld [vmem:[%s1 + $0x3c8] sm:$0xff]
  %v152 = vld [vmem:[%s1 + $0x3d0] sm:$0xff]
  %v153 = vld [vmem:[%s1 + $0x3d8] sm:$0xff]
  %v154 = vld [vmem:[%s1 + $0x3e0] sm:$0xff]
  %v155 = vld [vmem:[%s1 + $0x3e8] sm:$0xff]
  %v156 = vld [vmem:[%s1 + $0x3f0] sm:$0xff]
  %v157 = vld [vmem:[%s1 + $0x3f8] sm:$0xff]
  %v158 = vld [vmem:[%s1 + $0x400] sm:$0xff]
  %v159 = vld [vmem:[%s1 + $0x408] sm:$0xff]
  %v160 = vld [vmem:[%s1 + $0x410] sm:$0xff]
  %v161 = vld [vmem:[%s1 + $0x418] sm:$0xff]
  %v162 = vld [vmem:[%s1 + $0x420] sm:$0xff]
  %v163 = vld [vmem:[%s1 + $0x428] sm:$0xff]
  %v164 = vld [vmem:[%s1 + $0x430] sm:$0xff]
  %v165 = vld [vmem:[%s1 + $0x438] sm:$0xff]
  %v166 = vld [vmem:[%s1 + $0x440] sm:$0xff]
  %v167 = vld [vmem:[%s1 + $0x448] sm:$0xff]
  %v168 = vld [vmem:[%s1 + $0x450] sm:$0xff]
  %v169 = vld [vmem:[%s1 + $0x458] sm:$0xff]
  %v170 = vld [vmem:[%s1 + $0x460] sm:$0xff]
  %v171 = vld [vmem:[%s1 + $0x468] sm:$0xff]
  %v172 = vld [vmem:[%s1 + $0x470] sm:$0xff]
  %v173 = vld [vmem:[%s1 + $0x478] sm:$0xff]
  %v174 = vld [vmem:[%s1 + $0x480] sm:$0xff]
  %v175 = vld [vmem:[%s1 + $0x488] sm:$0xff]
  %v176 = vld [vmem:[%s1 + $0x490] sm:$0xff]
  %v177 = vld [vmem:[%s1 + $0x498] sm:$0xff]
  %v178 = vld [vmem:[%s1 + $0x4a0] sm:$0xff]
  %v179 = vld [vmem:[%s1 + $0x4a8] sm:$0xff]
  %v180 = vld [vmem:[%s1 + $0x4b0] sm:$0xff]
  %v181 = vld [vmem:[%s1 + $0x4b8] sm:$0xff]
  %v182 = vld [vmem:[%s1 + $0x4c0] sm:$0xff]
  %v183 = vld [vmem:[%s1 + $0x4c8] sm:$0xff]
  %v184 = vld [vmem:[%s1 + $0x4d0] sm:$0xff]
  %v185 = vld [vmem:[%s1 + $0x4d8] sm:$0xff]
  %v186 = vld [vmem:[%s1 + $0x4e0] sm:$0xff]
  %v187 = vld [vmem:[%s1 + $0x4e8] sm:$0xff]
  %v188 = vld [vmem:[%s1 + $0x4f0] sm:$0xff]
  %v189 = vld [vmem:[%s1 + $0x4f8] sm:$0xff]
  %v190 = vld [vmem:[%s1 + $0x500] sm:$0xff]
  %v191 = vld [vmem:[%s1 + $0x508] sm:$0xff]
  %v192 = vld [vmem:[%s1 + $0x510] sm:$0xff]
  %v193 = vld [vmem:[%s1 + $0x518] sm:$0xff]
  %v194 = vld [vmem:[%s1 + $0x520] sm:$0xff]
  %v195 = vld [vmem:[%s1 + $0x528] sm:$0xff]
  %v196 = vld [vmem:[%s1 + $0x530] sm:$0xff]
  %v197 = vld [vmem:[%s1 + $0x538] sm:$0xff]
  %v198 = vld [vmem:[%s1 + $0x540] sm:$0xff]
  %v199 = vld [vmem:[%s1 + $0x548] sm:$0xff]
  %v200 = vld [vmem:[%s1 + $0x550] sm:$0xff]
  %v201 = vld [vmem:[%s1 + $0x558] sm:$0xff]
  %v202 = vld [vmem:[%s1 + $0x560] sm:$0xff]
  %v203 = vld [vmem:[%s1 + $0x568] sm:$0xff]
  %v204 = vld [vmem:[%s1 + $0x570] sm:$0xff]
  %v205 = vld [vmem:[%s1 + $0x578] sm:$0xff]
  %v206 = vld [vmem:[%s1 + $0x580] sm:$0xff]
  %v207 = vld [vmem:[%s1 + $0x588] sm:$0xff]
  %v208 = vld [vmem:[%s1 + $0x590] sm:$0xff]
  %v209 = vld [vmem:[%s1 + $0x598] sm:$0xff]
  %v210 = vld [vmem:[%s1 + $0x5a0] sm:$0xff]
  %v211 = vld [vmem:[%s1 + $0x5a8] sm:$0xff]
  %v212 = vld [vmem:[%s1 + $0x5b0] sm:$0xff]
  %v213 = vld [vmem:[%s1 + $0x5b8] sm:$0xff]
  %v214 = vld [vmem:[%s1 + $0x5c0] sm:$0xff]
  %v215 = vld [vmem:[%s1 + $0x5c8] sm:$0xff]
  %v216 = vld [vmem:[%s1 + $0x5d0] sm:$0xff]
  %v217 = vld [vmem:[%s1 + $0x5d8] sm:$0xff]
  %v218 = vld [vmem:[%s1 + $0x5e0] sm:$0xff]
  %v219 = vld [vmem:[%s1 + $0x5e8] sm:$0xff]
  %v220 = vld [vmem:[%s1 + $0x5f0] sm:$0xff]
  %v221 = vld [vmem:[%s1 + $0x5f8] sm:$0xff]
  %v222 = vld [vmem:[%s1 + $0x600] sm:$0xff]
  %v223 = vld [vmem:[%s1 + $0x608] sm:$0xff]
  %v224 = vld [vmem:[%s1 + $0x610] sm:$0xff]
  %v225 = vld [vmem:[%s1 + $0x618] sm:$0xff]
  %v226 = vld [vmem:[%s1 + $0x620] sm:$0xff]
  %v227 = vld [vmem:[%s1 + $0x628] sm:$0xff]
  %v228 = vld [vmem:[%s1 + $0x630] sm:$0xff]
  %v229 = vld [vmem:[%s1 + $0x638] sm:$0xff]
  %v230 = vld [vmem:[%s1 + $0x640] sm:$0xff]
  %v231 = vld [vmem:[%s1 + $0x648] sm:$0xff]
  %v232 = vld [vmem:[%s1 + $0x650] sm:$0xff]
  %v233 = vld [vmem:[%s1 + $0x658] sm:$0xff]
  %v234 = vld [vmem:[%s1 + $0x660] sm:$0xff]
  %v235 = vld [vmem:[%s1 + $0x668] sm:$0xff]
  %v236 = vld [vmem:[%s1 + $0x670] sm:$0xff]
  %v237 = vld [vmem:[%s1 + $0x678] sm:$0xff]
  %v238 = vld [vmem:[%s1 + $0x680] sm:$0xff]
  %v239 = vld [vmem:[%s1 + $0x688] sm:$0xff]
  %v240 = vld [vmem:[%s1 + $0x690] sm:$0xff]
  %v241 = vld [vmem:[%s1 + $0x698] sm:$0xff]
  %v242 = vld [vmem:[%s1 + $0x6a0] sm:$0xff]
  %v243 = vld [vmem:[%s1 + $0x6a8] sm:$0xff]
  %v244 = vld [vmem:[%s1 + $0x6b0] sm:$0xff]
  %v245 = vld [vmem:[%s1 + $0x6b8] sm:$0xff]
  %v246 = vld [vmem:[%s1 + $0x6c0] sm:$0xff]
  %v247 = vld [vmem:[%s1 + $0x6c8] sm:$0xff]
  %v248 = vld [vmem:[%s1 + $0x6d0] sm:$0xff]
  %v249 = vld [vmem:[%s1 + $0x6d8] sm:$0xff]
  %v250 = vld [vmem:[%s1 + $0x6e0] sm:$0xff]
  %v251 = vld [vmem:[%s1 + $0x6e8] sm:$0xff]
  %v252 = vld [vmem:[%s1 + $0x6f0] sm:$0xff]
  %v253 = vld [vmem:[%s1 + $0x6f8] sm:$0xff]
  %v254 = vld [vmem:[%s1 + $0x700] sm:$0xff]
  %v255 = vld [vmem:[%s1 + $0x708] sm:$0xff]
  %v256 = vld [vmem:[%s1 + $0x710] sm:$0xff]
  %v257 = vld [vmem:[%s1 + $0x718] sm:$0xff]
  %v258 = vld [vmem:[%s1 + $0x720] sm:$0xff]
  %v259 = vld [vmem:[%s1 + $0x728] sm:$0xff]
  %v260 = vld [vmem:[%s1 + $0x730] sm:$0xff]
  %v261 = vld [vmem:[%s1 + $0x738] sm:$0xff]
  %v262 = vld [vmem:[%s1 + $0x740] sm:$0xff]
  %v263 = vld [vmem:[%s1 + $0x748] sm:$0xff]
  %v264 = vld [vmem:[%s1 + $0x750] sm:$0xff]
  %v265 = vld [vmem:[%s1 + $0x758] sm:$0xff]
  %v266 = vld [vmem:[%s1 + $0x760] sm:$0xff]
  %v267 = vld [vmem:[%s1 + $0x768] sm:$0xff]
  %v268 = vld [vmem:[%s1 + $0x770] sm:$0xff]
  %v269 = vld [vmem:[%s1 + $0x778] sm:$0xff]
  %v270 = vld [vmem:[%s1 + $0x780] sm:$0xff]
  %v271 = vld [vmem:[%s1 + $0x788] sm:$0xff]
  %v272 = vld [vmem:[%s1 + $0x790] sm:$0xff]
  %v273 = vld [vmem:[%s1 + $0x798] sm:$0xff]
  %v274 = vld [vmem:[%s1 + $0x7a0] sm:$0xff]
  %v275 = vld [vmem:[%s1 + $0x7a8] sm:$0xff]
  %v276 = vld [vmem:[%s1 + $0x7b0] sm:$0xff]
  %v277 = vld [vmem:[%s1 + $0x7b8] sm:$0xff]
  %v278 = vld [vmem:[%s1 + $0x7c0] sm:$0xff]
  %v279 = vld [vmem:[%s1 + $0x7c8] sm:$0xff]
  %v280 = vld [vmem:[%s1 + $0x7d0] sm:$0xff]
  %v281 = vld [vmem:[%s1 + $0x7d8] sm:$0xff]
  %v282 = vld [vmem:[%s1 + $0x7e0] sm:$0xff]
  %v283 = vld [vmem:[%s1 + $0x7e8] sm:$0xff]
  %v284 = vld [vmem:[%s1 + $0x7f0] sm:$0xff]
  %v285 = vld [vmem:[%s1 + $0x7f8] sm:$0xff]
  %v286 = vld [vmem:[%s1 + $0x800] sm:$0xff]
  %v287 = vld [vmem:[%s1 + $0x808] sm:$0xff]
  %v288 = vld [vmem:[%s1 + $0x810] sm:$0xff]
  %v289 = vld [vmem:[%s1 + $0x818] sm:$0xff]
  %v290 = vld [vmem:[%s1 + $0x820] sm:$0xff]
  %v291 = vld [vmem:[%s1 + $0x828] sm:$0xff]
  %v292 = vld [vmem:[%s1 + $0x830] sm:$0xff]
  %v293 = vld [vmem:[%s1 + $0x838] sm:$0xff]
  %v294 = vld [vmem:[%s1 + $0x840] sm:$0xff]
  %v295 = vld [vmem:[%s1 + $0x848] sm:$0xff]
  %v296 = vld [vmem:[%s1 + $0x850] sm:$0xff]
  %v297 = vld [vmem:[%s1 + $0x858] sm:$0xff]
  %v298 = vld [vmem:[%s1 + $0x860] sm:$0xff]
  %v299 = vld [vmem:[%s1 + $0x868] sm:$0xff]
  %v300 = vld [vmem:[%s1 + $0x870] sm:$0xff]
  %v301 = vld [vmem:[%s1 + $0x878] sm:$0xff]
  %v302 = vld [vmem:[%s1 + $0x880] sm:$0xff]
  %v303 = vld [vmem:[%s1 + $0x888] sm:$0xff]
  %v304 = vld [vmem:[%s1 + $0x890] sm:$0xff]
  %v305 = vld [vmem:[%s1 + $0x898] sm:$0xff]
  %v306 = vld [vmem:[%s1 + $0x8a0] sm:$0xff]
  %v307 = vld [vmem:[%s1 + $0x8a8] sm:$0xff]
  %v308 = vld [vmem:[%s1 + $0x8b0] sm:$0xff]
  %v309 = vld [vmem:[%s1 + $0x8b8] sm:$0xff]
  %v310 = vld [vmem:[%s1 + $0x8c0] sm:$0xff]
  %v311 = vld [vmem:[%s1 + $0x8c8] sm:$0xff]
  %v312 = vld [vmem:[%s1 + $0x8d0] sm:$0xff]
  %v313 = vld [vmem:[%s1 + $0x8d8] sm:$0xff]
  %v314 = vld [vmem:[%s1 + $0x8e0] sm:$0xff]
  %v315 = vld [vmem:[%s1 + $0x8e8] sm:$0xff]
  %v316 = vld [vmem:[%s1 + $0x8f0] sm:$0xff]
  %v317 = vld [vmem:[%s1 + $0x8f8] sm:$0xff]
  %v318 = vld [vmem:[%s1 + $0x900] sm:$0xff]
  %v319 = vld [vmem:[%s1 + $0x908] sm:$0xff]
  %v320 = vld [vmem:[%s1 + $0x910] sm:$0xff]
  %v321 = vld [vmem:[%s1 + $0x918] sm:$0xff]
  %v322 = vld [vmem:[%s1 + $0x920] sm:$0xff]
  %v323 = vld [vmem:[%s1 + $0x928] sm:$0xff]
  %v324 = vld [vmem:[%s1 + $0x930] sm:$0xff]
  %v325 = vld [vmem:[%s1 + $0x938] sm:$0xff]
  %v326 = vld [vmem:[%s1 + $0x940] sm:$0xff]
  %v327 = vld [vmem:[%s1 + $0x948] sm:$0xff]
  %v328 = vld [vmem:[%s1 + $0x950] sm:$0xff]
  %v329 = vld [vmem:[%s1 + $0x958] sm:$0xff]
  %v330 = vld [vmem:[%s1 + $0x960] sm:$0xff]
  %v331 = vld [vmem:[%s1 + $0x968] sm:$0xff]
  %v332 = vld [vmem:[%s1 + $0x970] sm:$0xff]
  %v333 = vld [vmem:[%s1 + $0x978] sm:$0xff]
  %v334 = vld [vmem:[%s1 + $0x980] sm:$0xff]
  %v335 = vld [vmem:[%s1 + $0x988] sm:$0xff]
  %v336 = vld [vmem:[%s1 + $0x990] sm:$0xff]
  %v337 = vld [vmem:[%s1 + $0x998] sm:$0xff]
  %v338 = vld [vmem:[%s1 + $0x9a0] sm:$0xff]
  %v339 = vld [vmem:[%s1 + $0x9a8] sm:$0xff]
  %v340 = vld [vmem:[%s1 + $0x9b0] sm:$0xff]
  %v341 = vld [vmem:[%s1 + $0x9b8] sm:$0xff]
  %v342 = vld [vmem:[%s1 + $0x9c0] sm:$0xff]
  %v343 = vld [vmem:[%s1 + $0x9c8] sm:$0xff]
  %v344 = vld [vmem:[%s1 + $0x9d0] sm:$0xff]
  %v345 = vld [vmem:[%s1 + $0x9d8] sm:$0xff]
  %v346 = vld [vmem:[%s1 + $0x9e0] sm:$0xff]
  %v347 = vld [vmem:[%s1 + $0x9e8] sm:$0xff]
  %v348 = vld [vmem:[%s1 + $0x9f0] sm:$0xff]
  %v349 = vld [vmem:[%s1 + $0x9f8] sm:$0xff]
  %v350 = vld [vmem:[%s1 + $0xa00] sm:$0xff]
  %v351 = vld [vmem:[%s1 + $0xa08] sm:$0xff]
  %v352 = vld [vmem:[%s1 + $0xa10] sm:$0xff]
  %v353 = vld [vmem:[%s1 + $0xa18] sm:$0xff]
  %v354 = vld [vmem:[%s1 + $0xa20] sm:$0xff]
  %v355 = vld [vmem:[%s1 + $0xa28] sm:$0xff]
  %v356 = vld [vmem:[%s1 + $0xa30] sm:$0xff]
  %v357 = vld [vmem:[%s1 + $0xa38] sm:$0xff]
  %v358 = vld [vmem:[%s1 + $0xa40] sm:$0xff]
  %v359 = vld [vmem:[%s1 + $0xa48] sm:$0xff]
  %v360 = vld [vmem:[%s1 + $0xa50] sm:$0xff]
  %v361 = vld [vmem:[%s1 + $0xa58] sm:$0xff]
  %v362 = vld [vmem:[%s1 + $0xa60] sm:$0xff]
  %v363 = vld [vmem:[%s1 + $0xa68] sm:$0xff]
  %v364 = vld [vmem:[%s1 + $0xa70] sm:$0xff]
  %v365 = vld [vmem:[%s1 + $0xa78] sm:$0xff]
  %v366 = vld [vmem:[%s1 + $0xa80] sm:$0xff]
  %v367 = vld [vmem:[%s1 + $0xa88] sm:$0xff]
  %v368 = vld [vmem:[%s1 + $0xa90] sm:$0xff]
  %v369 = vld [vmem:[%s1 + $0xa98] sm:$0xff]
  %v370 = vld [vmem:[%s1 + $0xaa0] sm:$0xff]
  %v371 = vld [vmem:[%s1 + $0xaa8] sm:$0xff]
  %v372 = vld [vmem:[%s1 + $0xab0] sm:$0xff]
  %v373 = vld [vmem:[%s1 + $0xab8] sm:$0xff]
  %v374 = vld [vmem:[%s1 + $0xac0] sm:$0xff]
  %v375 = vld [vmem:[%s1 + $0xac8] sm:$0xff]
  %v376 = vld [vmem:[%s1 + $0xad0] sm:$0xff]
  %v377 = vld [vmem:[%s1 + $0xad8] sm:$0xff]
  %v378 = vld [vmem:[%s1 + $0xae0] sm:$0xff]
  %v379 = vld [vmem:[%s1 + $0xae8] sm:$0xff]
  %v380 = vld [vmem:[%s1 + $0xaf0] sm:$0xff]
  %v381 = vld [vmem:[%s1 + $0xaf8] sm:$0xff]
  %v382 = vld [vmem:[%s1 + $0xb00] sm:$0xff]
  %v383 = vld [vmem:[%s1 + $0xb08] sm:$0xff]
  %v384 = vld [vmem:[%s1 + $0xb10] sm:$0xff]
  %v385 = vld [vmem:[%s1 + $0xb18] sm:$0xff]
  %v386 = vld [vmem:[%s1 + $0xb20] sm:$0xff]
  %v387 = vld [vmem:[%s1 + $0xb28] sm:$0xff]
  %v388 = vld [vmem:[%s1 + $0xb30] sm:$0xff]
  %v389 = vld [vmem:[%s1 + $0xb38] sm:$0xff]
  %v390 = vld [vmem:[%s1 + $0xb40] sm:$0xff]
  %v391 = vld [vmem:[%s1 + $0xb48] sm:$0xff]
  %v392 = vld [vmem:[%s1 + $0xb50] sm:$0xff]
  %v393 = vld [vmem:[%s1 + $0xb58] sm:$0xff]
  %v394 = vld [vmem:[%s1 + $0xb60] sm:$0xff]
  %v395 = vld [vmem:[%s1 + $0xb68] sm:$0xff]
  %v396 = vld [vmem:[%s1 + $0xb70] sm:$0xff]
  %v397 = vld [vmem:[%s1 + $0xb78] sm:$0xff]
  %v398 = vld [vmem:[%s1 + $0xb80] sm:$0xff]
  %v399 = vld [vmem:[%s1 + $0xb88] sm:$0xff]
  %v400 = vld [vmem:[%s1 + $0xb90] sm:$0xff]
  %v401 = vld [vmem:[%s1 + $0xb98] sm:$0xff]
  %v402 = vld [vmem:[%s1 + $0xba0] sm:$0xff]
  %v403 = vld [vmem:[%s1 + $0xba8] sm:$0xff]
  %v404 = vld [vmem:[%s1 + $0xbb0] sm:$0xff]
  %v405 = vld [vmem:[%s1 + $0xbb8] sm:$0xff]
  %v406 = vld [vmem:[%s1 + $0xbc0] sm:$0xff]
  %v407 = vld [vmem:[%s1 + $0xbc8] sm:$0xff]
  %v408 = vld [vmem:[%s1 + $0xbd0] sm:$0xff]
  %v409 = vld [vmem:[%s1 + $0xbd8] sm:$0xff]
  %v410 = vld [vmem:[%s1 + $0xbe0] sm:$0xff]
  %v411 = vld [vmem:[%s1 + $0xbe8] sm:$0xff]
  %v412 = vld [vmem:[%s1 + $0xbf0] sm:$0xff]
  %v413 = vld [vmem:[%s1 + $0xbf8] sm:$0xff]
  %v414 = vld [vmem:[%s1 + $0xc00] sm:$0xff]
  %v415 = vld [vmem:[%s1 + $0xc08] sm:$0xff]
  %v416 = vld [vmem:[%s1 + $0xc10] sm:$0xff]
  %v417 = vld [vmem:[%s1 + $0xc18] sm:$0xff]
  %v418 = vld [vmem:[%s1 + $0xc20] sm:$0xff]
  %v419 = vld [vmem:[%s1 + $0xc28] sm:$0xff]
  %v420 = vld [vmem:[%s1 + $0xc30] sm:$0xff]
  %v421 = vld [vmem:[%s1 + $0xc38] sm:$0xff]
  %v422 = vld [vmem:[%s1 + $0xc40] sm:$0xff]
  %v423 = vld [vmem:[%s1 + $0xc48] sm:$0xff]
  %v424 = vld [vmem:[%s1 + $0xc50] sm:$0xff]
  %v425 = vld [vmem:[%s1 + $0xc58] sm:$0xff]
  %v426 = vld [vmem:[%s1 + $0xc60] sm:$0xff]
  %v427 = vld [vmem:[%s1 + $0xc68] sm:$0xff]
  %v428 = vld [vmem:[%s1 + $0xc70] sm:$0xff]
  %v429 = vld [vmem:[%s1 + $0xc78] sm:$0xff]
  %v430 = vld [vmem:[%s1 + $0xc80] sm:$0xff]
  %v431 = vld [vmem:[%s1 + $0xc88] sm:$0xff]
  %v432 = vld [vmem:[%s1 + $0xc90] sm:$0xff]
  %v433 = vld [vmem:[%s1 + $0xc98] sm:$0xff]
  %v434 = vld [vmem:[%s1 + $0xca0] sm:$0xff]
  %v435 = vld [vmem:[%s1 + $0xca8] sm:$0xff]
  %v436 = vld [vmem:[%s1 + $0xcb0] sm:$0xff]
  %v437 = vld [vmem:[%s1 + $0xcb8] sm:$0xff]
  %v438 = vld [vmem:[%s1 + $0xcc0] sm:$0xff]
  %v439 = vld [vmem:[%s1 + $0xcc8] sm:$0xff]
  %v440 = vld [vmem:[%s1 + $0xcd0] sm:$0xff]
  %v441 = vld [vmem:[%s1 + $0xcd8] sm:$0xff]
  %v442 = vld [vmem:[%s1 + $0xce0] sm:$0xff]
  %v443 = vld [vmem:[%s1 + $0xce8] sm:$0xff]
  %v444 = vld [vmem:[%s1 + $0xcf0] sm:$0xff]
  %v445 = vld [vmem:[%s1 + $0xcf8] sm:$0xff]
  %v446 = vld [vmem:[%s1 + $0xd00] sm:$0xff]
  %v447 = vld [vmem:[%s1 + $0xd08] sm:$0xff]
  %v448 = vld [vmem:[%s1 + $0xd10] sm:$0xff]
  %v449 = vld [vmem:[%s1 + $0xd18] sm:$0xff]
  %v450 = vld [vmem:[%s1 + $0xd20] sm:$0xff]
  %v451 = vld [vmem:[%s1 + $0xd28] sm:$0xff]
  %v452 = vld [vmem:[%s1 + $0xd30] sm:$0xff]
  %v453 = vld [vmem:[%s1 + $0xd38] sm:$0xff]
  %v454 = vld [vmem:[%s1 + $0xd40] sm:$0xff]
  %v455 = vld [vmem:[%s1 + $0xd48] sm:$0xff]
  %v456 = vld [vmem:[%s1 + $0xd50] sm:$0xff]
  %v457 = vld [vmem:[%s1 + $0xd58] sm:$0xff]
  %v458 = vld [vmem:[%s1 + $0xd60] sm:$0xff]
  %v459 = vld [vmem:[%s1 + $0xd68] sm:$0xff]
  %v460 = vld [vmem:[%s1 + $0xd70] sm:$0xff]
  %v461 = vld [vmem:[%s1 + $0xd78] sm:$0xff]
  %v462 = vld [vmem:[%s1 + $0xd80] sm:$0xff]
  %v463 = vld [vmem:[%s1 + $0xd88] sm:$0xff]
  %v464 = vld [vmem:[%s1 + $0xd90] sm:$0xff]
  %v465 = vld [vmem:[%s1 + $0xd98] sm:$0xff]
  %v466 = vld [vmem:[%s1 + $0xda0] sm:$0xff]
  %v467 = vld [vmem:[%s1 + $0xda8] sm:$0xff]
  %v468 = vld [vmem:[%s1 + $0xdb0] sm:$0xff]
  %v469 = vld [vmem:[%s1 + $0xdb8] sm:$0xff]
  %v470 = vld [vmem:[%s1 + $0xdc0] sm:$0xff]
  %v471 = vld [vmem:[%s1 + $0xdc8] sm:$0xff]
  %v472 = vld [vmem:[%s1 + $0xdd0] sm:$0xff]
  %v473 = vld [vmem:[%s1 + $0xdd8] sm:$0xff]
  %v474 = vld [vmem:[%s1 + $0xde0] sm:$0xff]
  %v475 = vld [vmem:[%s1 + $0xde8] sm:$0xff]
  %v476 = vld [vmem:[%s1 + $0xdf0] sm:$0xff]
  %v477 = vld [vmem:[%s1 + $0xdf8] sm:$0xff]
  %v478 = vld [vmem:[%s1 + $0xe00] sm:$0xff]
  %v479 = vld [vmem:[%s1 + $0xe08] sm:$0xff]
  %v480 = vld [vmem:[%s1 + $0xe10] sm:$0xff]
  %v481 = vld [vmem:[%s1 + $0xe18] sm:$0xff]
  %v482 = vld [vmem:[%s1 + $0xe20] sm:$0xff]
  %v483 = vld [vmem:[%s1 + $0xe28] sm:$0xff]
  %v484 = vld [vmem:[%s1 + $0xe30] sm:$0xff]
  %v485 = vld [vmem:[%s1 + $0xe38] sm:$0xff]
  %v486 = vld [vmem:[%s1 + $0xe40] sm:$0xff]
  %v487 = vld [vmem:[%s1 + $0xe48] sm:$0xff]
  %v488 = vld [vmem:[%s1 + $0xe50] sm:$0xff]
  %v489 = vld [vmem:[%s1 + $0xe58] sm:$0xff]
  %v490 = vld [vmem:[%s1 + $0xe60] sm:$0xff]
  %v491 = vld [vmem:[%s1 + $0xe68] sm:$0xff]
  %v492 = vld [vmem:[%s1 + $0xe70] sm:$0xff]
  %v493 = vld [vmem:[%s1 + $0xe78] sm:$0xff]
  %v494 = vld [vmem:[%s1 + $0xe80] sm:$0xff]
  %v495 = vld [vmem:[%s1 + $0xe88] sm:$0xff]
  %v496 = vld [vmem:[%s1 + $0xe90] sm:$0xff]
  %v497 = vld [vmem:[%s1 + $0xe98] sm:$0xff]
  %v498 = vld [vmem:[%s1 + $0xea0] sm:$0xff]
  %v499 = vld [vmem:[%s1 + $0xea8] sm:$0xff]
  %v500 = vld [vmem:[%s1 + $0xeb0] sm:$0xff]
  %v501 = vld [vmem:[%s1 + $0xeb8] sm:$0xff]
  %v502 = vld [vmem:[%s1 + $0xec0] sm:$0xff]
  %v503 = vld [vmem:[%s1 + $0xec8] sm:$0xff]
  %v504 = vld [vmem:[%s1 + $0xed0] sm:$0xff]
  %v505 = vld [vmem:[%s1 + $0xed8] sm:$0xff]
  %v506 = vld [vmem:[%s1 + $0xee0] sm:$0xff]
  %v507 = vld [vmem:[%s1 + $0xee8] sm:$0xff]
  %v508 = vld [vmem:[%s1 + $0xef0] sm:$0xff]
  %v509 = vld [vmem:[%s1 + $0xef8] sm:$0xff]
  %v510 = vld [vmem:[%s1 + $0xf00] sm:$0xff]
  %v511 = vld [vmem:[%s1 + $0xf08] sm:$0xff]
  %v512 = vld [vmem:[%s1 + $0xf10] sm:$0xff]
  %v513 = vld [vmem:[%s1 + $0xf18] sm:$0xff]
  %v514 = vld [vmem:[%s1 + $0xf20] sm:$0xff]
  %v515 = vld [vmem:[%s1 + $0xf28] sm:$0xff]
  %v516 = vld [vmem:[%s1 + $0xf30] sm:$0xff]
  %v517 = vld [vmem:[%s1 + $0xf38] sm:$0xff]
  %v518 = vld [vmem:[%s1 + $0xf40] sm:$0xff]
  %v519 = vld [vmem:[%s1 + $0xf48] sm:$0xff]
  %v520 = vld [vmem:[%s1 + $0xf50] sm:$0xff]
  %v521 = vld [vmem:[%s1 + $0xf58] sm:$0xff]
  %v522 = vld [vmem:[%s1 + $0xf60] sm:$0xff]
  %v523 = vld [vmem:[%s1 + $0xf68] sm:$0xff]
  %v524 = vld [vmem:[%s1 + $0xf70] sm:$0xff]
  %v525 = vld [vmem:[%s1 + $0xf78] sm:$0xff]
  %v526 = vld [vmem:[%s1 + $0xf80] sm:$0xff]
  %v527 = vld [vmem:[%s1 + $0xf88] sm:$0xff]
  %v528 = vld [vmem:[%s1 + $0xf90] sm:$0xff]
  %v529 = vld [vmem:[%s1 + $0xf98] sm:$0xff]
  %v530 = vld [vmem:[%s1 + $0xfa0] sm:$0xff]
  %v531 = vld [vmem:[%s1 + $0xfa8] sm:$0xff]
  %v532 = vld [vmem:[%s1 + $0xfb0] sm:$0xff]
  %v533 = vld [vmem:[%s1 + $0xfb8] sm:$0xff]
  %v534 = vld [vmem:[%s1 + $0xfc0] sm:$0xff]
  %v535 = vld [vmem:[%s1 + $0xfc8] sm:$0xff]
  %v536 = vld [vmem:[%s1 + $0xfd0] sm:$0xff]
  %v537 = vld [vmem:[%s1 + $0xfd8] sm:$0xff]
  %v538 = vld [vmem:[%s1 + $0xfe0] sm:$0xff]
  %v539 = vld [vmem:[%s1 + $0xfe8] sm:$0xff]
  %v540 = vld [vmem:[%s1 + $0xff0] sm:$0xff]
  %v541 = vld [vmem:[%s1 + $0xff8] sm:$0xff]
  %v542 = vld [vmem:[%s1 + $0x1000] sm:$0xff]
  %v543 = vld [vmem:[%s1 + $0x1008] sm:$0xff]
  %v544 = vld [vmem:[%s1 + $0x1010] sm:$0xff]
  %v545 = vld [vmem:[%s1 + $0x1018] sm:$0xff]
  %v546 = vld [vmem:[%s1 + $0x1020] sm:$0xff]
  %v547 = vld [vmem:[%s1 + $0x1028] sm:$0xff]
  %v548 = vld [vmem:[%s1 + $0x1030] sm:$0xff]
  %v549 = vld [vmem:[%s1 + $0x1038] sm:$0xff]
  %v550 = vld [vmem:[%s1 + $0x1040] sm:$0xff]
  %v551 = vld [vmem:[%s1 + $0x1048] sm:$0xff]
  %v552 = vld [vmem:[%s1 + $0x1050] sm:$0xff]
  %v553 = vld [vmem:[%s1 + $0x1058] sm:$0xff]
  %v554 = vld [vmem:[%s1 + $0x1060] sm:$0xff]
  %v555 = vld [vmem:[%s1 + $0x1068] sm:$0xff]
  %v556 = vld [vmem:[%s1 + $0x1070] sm:$0xff]
  %v557 = vld [vmem:[%s1 + $0x1078] sm:$0xff]
  %v558 = vld [vmem:[%s1 + $0x1080] sm:$0xff]
  %v559 = vld [vmem:[%s1 + $0x1088] sm:$0xff]
  %v560 = vld [vmem:[%s1 + $0x1090] sm:$0xff]
  %v561 = vld [vmem:[%s1 + $0x1098] sm:$0xff]
  %v562 = vld [vmem:[%s1 + $0x10a0] sm:$0xff]
  %v563 = vld [vmem:[%s1 + $0x10a8] sm:$0xff]
  %v564 = vld [vmem:[%s1 + $0x10b0] sm:$0xff]
  %v565 = vld [vmem:[%s1 + $0x10b8] sm:$0xff]
  %v566 = vld [vmem:[%s1 + $0x10c0] sm:$0xff]
  %v567 = vld [vmem:[%s1 + $0x10c8] sm:$0xff]
  %v568 = vld [vmem:[%s1 + $0x10d0] sm:$0xff]
  %v569 = vld [vmem:[%s1 + $0x10d8] sm:$0xff]
  %v570 = vld [vmem:[%s1 + $0x10e0] sm:$0xff]
  %v571 = vld [vmem:[%s1 + $0x10e8] sm:$0xff]
  %v572 = vld [vmem:[%s1 + $0x10f0] sm:$0xff]
  %v573 = vld [vmem:[%s1 + $0x10f8] sm:$0xff]
  %v574 = vld [vmem:[%s1 + $0x1100] sm:$0xff]
  %v575 = vld [vmem:[%s1 + $0x1108] sm:$0xff]
  %v576 = vld [vmem:[%s1 + $0x1110] sm:$0xff]
  %v577 = vld [vmem:[%s1 + $0x1118] sm:$0xff]
  %v578 = vld [vmem:[%s1 + $0x1120] sm:$0xff]
  %v579 = vld [vmem:[%s1 + $0x1128] sm:$0xff]
  %v580 = vld [vmem:[%s1 + $0x1130] sm:$0xff]
  %v581 = vld [vmem:[%s1 + $0x1138] sm:$0xff]
  %v582 = vld [vmem:[%s1 + $0x1140] sm:$0xff]
  %v583 = vld [vmem:[%s1 + $0x1148] sm:$0xff]
  %v584 = vld [vmem:[%s1 + $0x1150] sm:$0xff]
  %v585 = vld [vmem:[%s1 + $0x1158] sm:$0xff]
  %v586 = vld [vmem:[%s1 + $0x1160] sm:$0xff]
  %v587 = vld [vmem:[%s1 + $0x1168] sm:$0xff]
  %v588 = vld [vmem:[%s1 + $0x1170] sm:$0xff]
  %v589 = vld [vmem:[%s1 + $0x1178] sm:$0xff]
  %v590 = vld [vmem:[%s1 + $0x1180] sm:$0xff]
  %v591 = vld [vmem:[%s1 + $0x1188] sm:$0xff]
  %v592 = vld [vmem:[%s1 + $0x1190] sm:$0xff]
  %v593 = vld [vmem:[%s1 + $0x1198] sm:$0xff]
  %v594 = vld [vmem:[%s1 + $0x11a0] sm:$0xff]
  %v595 = vld [vmem:[%s1 + $0x11a8] sm:$0xff]
  %v596 = vld [vmem:[%s1 + $0x11b0] sm:$0xff]
  %v597 = vld [vmem:[%s1 + $0x11b8] sm:$0xff]
  %v598 = vld [vmem:[%s1 + $0x11c0] sm:$0xff]
  %v599 = vld [vmem:[%s1 + $0x11c8] sm:$0xff]
  %v600 = vld [vmem:[%s1 + $0x11d0] sm:$0xff]
  %v601 = vld [vmem:[%s1 + $0x11d8] sm:$0xff]
  %v602 = vld [vmem:[%s1 + $0x11e0] sm:$0xff]
  %v603 = vld [vmem:[%s1 + $0x11e8] sm:$0xff]
  %v604 = vld [vmem:[%s1 + $0x11f0] sm:$0xff]
  %v605 = vld [vmem:[%s1 + $0x11f8] sm:$0xff]
  %v606 = vld [vmem:[%s1 + $0x1200] sm:$0xff]
  %v607 = vld [vmem:[%s1 + $0x1208] sm:$0xff]
  %v608 = vld [vmem:[%s1 + $0x1210] sm:$0xff]
  %v609 = vld [vmem:[%s1 + $0x1218] sm:$0xff]
  %v610 = vld [vmem:[%s1 + $0x1220] sm:$0xff]
  %v611 = vld [vmem:[%s1 + $0x1228] sm:$0xff]
  %v612 = vld [vmem:[%s1 + $0x1230] sm:$0xff]
  %v613 = vld [vmem:[%s1 + $0x1238] sm:$0xff]
  %v614 = vld [vmem:[%s1 + $0x1240] sm:$0xff]
  %v615 = vld [vmem:[%s1 + $0x1248] sm:$0xff]
  %v616 = vld [vmem:[%s1 + $0x1250] sm:$0xff]
  %v617 = vld [vmem:[%s1 + $0x1258] sm:$0xff]
  %v618 = vld [vmem:[%s1 + $0x1260] sm:$0xff]
  %v619 = vld [vmem:[%s1 + $0x1268] sm:$0xff]
  %v620 = vld [vmem:[%s1 + $0x1270] sm:$0xff]
  %v621 = vld [vmem:[%s1 + $0x1278] sm:$0xff]
  %v622 = vld [vmem:[%s1 + $0x1280] sm:$0xff]
  %v623 = vld [vmem:[%s1 + $0x1288] sm:$0xff]
  %v624 = vld [vmem:[%s1 + $0x1290] sm:$0xff]
  %v625 = vld [vmem:[%s1 + $0x1298] sm:$0xff]
  %v626 = vld [vmem:[%s1 + $0x12a0] sm:$0xff]
  %v627 = vld [vmem:[%s1 + $0x12a8] sm:$0xff]
  %v628 = vld [vmem:[%s1 + $0x12b0] sm:$0xff]
  %v629 = vld [vmem:[%s1 + $0x12b8] sm:$0xff]
  %v630 = vld [vmem:[%s1 + $0x12c0] sm:$0xff]
  %v631 = vld [vmem:[%s1 + $0x12c8] sm:$0xff]
  %v632 = vld [vmem:[%s1 + $0x12d0] sm:$0xff]
  %v633 = vld [vmem:[%s1 + $0x12d8] sm:$0xff]
  %v634 = vld [vmem:[%s1 + $0x12e0] sm:$0xff]
  %v635 = vld [vmem:[%s1 + $0x12e8] sm:$0xff]
  %v636 = vld [vmem:[%s1 + $0x12f0] sm:$0xff]
  %v637 = vld [vmem:[%s1 + $0x12f8] sm:$0xff]
  %v638 = vld [vmem:[%s1 + $0x1300] sm:$0xff]
  %v639 = vld [vmem:[%s1 + $0x1308] sm:$0xff]
  %v640 = vld [vmem:[%s1 + $0x1310] sm:$0xff]
  %v641 = vld [vmem:[%s1 + $0x1318] sm:$0xff]
  %v642 = vld [vmem:[%s1 + $0x1320] sm:$0xff]
  %v643 = vld [vmem:[%s1 + $0x1328] sm:$0xff]
  %v644 = vld [vmem:[%s1 + $0x1330] sm:$0xff]
  %v645 = vld [vmem:[%s1 + $0x1338] sm:$0xff]
  %v646 = vld [vmem:[%s1 + $0x1340] sm:$0xff]
  %v647 = vld [vmem:[%s1 + $0x1348] sm:$0xff]
  %v648 = vld [vmem:[%s1 + $0x1350] sm:$0xff]
  %v649 = vld [vmem:[%s1 + $0x1358] sm:$0xff]
  %v650 = vld [vmem:[%s1 + $0x1360] sm:$0xff]
  %v651 = vld [vmem:[%s1 + $0x1368] sm:$0xff]
  %v652 = vld [vmem:[%s1 + $0x1370] sm:$0xff]
  %v653 = vld [vmem:[%s1 + $0x1378] sm:$0xff]
  %v654 = vld [vmem:[%s1 + $0x1380] sm:$0xff]
  %v655 = vld [vmem:[%s1 + $0x1388] sm:$0xff]
  %v656 = vld [vmem:[%s1 + $0x1390] sm:$0xff]
  %v657 = vld [vmem:[%s1 + $0x1398] sm:$0xff]
  %v658 = vld [vmem:[%s1 + $0x13a0] sm:$0xff]
  %v659 = vld [vmem:[%s1 + $0x13a8] sm:$0xff]
  %v660 = vld [vmem:[%s1 + $0x13b0] sm:$0xff]
  %v661 = vld [vmem:[%s1 + $0x13b8] sm:$0xff]
  %v662 = vld [vmem:[%s1 + $0x13c0] sm:$0xff]
  %v663 = vld [vmem:[%s1 + $0x13c8] sm:$0xff]
  %v664 = vld [vmem:[%s1 + $0x13d0] sm:$0xff]
  %v665 = vld [vmem:[%s1 + $0x13d8] sm:$0xff]
  %v666 = vld [vmem:[%s1 + $0x13e0] sm:$0xff]
  %v667 = vld [vmem:[%s1 + $0x13e8] sm:$0xff]
  %v668 = vld [vmem:[%s1 + $0x13f0] sm:$0xff]
  %v669 = vld [vmem:[%s1 + $0x13f8] sm:$0xff]
  %v670 = vld [vmem:[%s1 + $0x1400] sm:$0xff]
  %v671 = vld [vmem:[%s1 + $0x1408] sm:$0xff]
  %v672 = vld [vmem:[%s1 + $0x1410] sm:$0xff]
  %v673 = vld [vmem:[%s1 + $0x1418] sm:$0xff]
  %v674 = vld [vmem:[%s1 + $0x1420] sm:$0xff]
  %v675 = vld [vmem:[%s1 + $0x1428] sm:$0xff]
  %v676 = vld [vmem:[%s1 + $0x1430] sm:$0xff]
  %v677 = vld [vmem:[%s1 + $0x1438] sm:$0xff]
  %v678 = vld [vmem:[%s1 + $0x1440] sm:$0xff]
  %v679 = vld [vmem:[%s1 + $0x1448] sm:$0xff]
  %v680 = vld [vmem:[%s1 + $0x1450] sm:$0xff]
  %v681 = vld [vmem:[%s1 + $0x1458] sm:$0xff]
  %v682 = vld [vmem:[%s1 + $0x1460] sm:$0xff]
  %v683 = vld [vmem:[%s1 + $0x1468] sm:$0xff]
  %v684 = vld [vmem:[%s1 + $0x1470] sm:$0xff]
  %v685 = vld [vmem:[%s1 + $0x1478] sm:$0xff]
  %v686 = vld [vmem:[%s1 + $0x1480] sm:$0xff]
  %v687 = vld [vmem:[%s1 + $0x1488] sm:$0xff]
  %v688 = vld [vmem:[%s1 + $0x1490] sm:$0xff]
  %v689 = vld [vmem:[%s1 + $0x1498] sm:$0xff]
  %v690 = vld [vmem:[%s1 + $0x14a0] sm:$0xff]
  %v691 = vld [vmem:[%s1 + $0x14a8] sm:$0xff]
  %v692 = vld [vmem:[%s1 + $0x14b0] sm:$0xff]
  %v693 = vld [vmem:[%s1 + $0x14b8] sm:$0xff]
  %v694 = vld [vmem:[%s1 + $0x14c0] sm:$0xff]
  %v695 = vld [vmem:[%s1 + $0x14c8] sm:$0xff]
  %v696 = vld [vmem:[%s1 + $0x14d0] sm:$0xff]
  %v697 = vld [vmem:[%s1 + $0x14d8] sm:$0xff]
  %v698 = vld [vmem:[%s1 + $0x14e0] sm:$0xff]
  %v699 = vld [vmem:[%s1 + $0x14e8] sm:$0xff]
  %v700 = vld [vmem:[%s1 + $0x14f0] sm:$0xff]
  %v701 = vld [vmem:[%s1 + $0x14f8] sm:$0xff]
  %v702 = vld [vmem:[%s1 + $0x1500] sm:$0xff]
  %v703 = vld [vmem:[%s1 + $0x1508] sm:$0xff]
  %v704 = vld [vmem:[%s1 + $0x1510] sm:$0xff]
  %v705 = vld [vmem:[%s1 + $0x1518] sm:$0xff]
  %v706 = vld [vmem:[%s1 + $0x1520] sm:$0xff]
  %v707 = vld [vmem:[%s1 + $0x1528] sm:$0xff]
  %v708 = vld [vmem:[%s1 + $0x1530] sm:$0xff]
  %v709 = vld [vmem:[%s1 + $0x1538] sm:$0xff]
  %v710 = vld [vmem:[%s1 + $0x1540] sm:$0xff]
  %v711 = vld [vmem:[%s1 + $0x1548] sm:$0xff]
  %v712 = vld [vmem:[%s1 + $0x1550] sm:$0xff]
  %v713 = vld [vmem:[%s1 + $0x1558] sm:$0xff]
  %v714 = vld [vmem:[%s1 + $0x1560] sm:$0xff]
  %v715 = vld [vmem:[%s1 + $0x1568] sm:$0xff]
  %v716 = vld [vmem:[%s1 + $0x1570] sm:$0xff]
  %v717 = vld [vmem:[%s1 + $0x1578] sm:$0xff]
  %v718 = vld [vmem:[%s1 + $0x1580] sm:$0xff]
  %v719 = vld [vmem:[%s1 + $0x1588] sm:$0xff]
  %v720 = vld [vmem:[%s1 + $0x1590] sm:$0xff]
  %v721 = vld [vmem:[%s1 + $0x1598] sm:$0xff]
  %v722 = vld [vmem:[%s1 + $0x15a0] sm:$0xff]
  %v723 = vld [vmem:[%s1 + $0x15a8] sm:$0xff]
  %v724 = vld [vmem:[%s1 + $0x15b0] sm:$0xff]
  %v725 = vld [vmem:[%s1 + $0x15b8] sm:$0xff]
  %v726 = vld [vmem:[%s1 + $0x15c0] sm:$0xff]
  %v727 = vld [vmem:[%s1 + $0x15c8] sm:$0xff]
  %v728 = vld [vmem:[%s1 + $0x15d0] sm:$0xff]
  %v729 = vld [vmem:[%s1 + $0x15d8] sm:$0xff]
  %v730 = vld [vmem:[%s1 + $0x15e0] sm:$0xff]
  %v731 = vld [vmem:[%s1 + $0x15e8] sm:$0xff]
  %v732 = vld [vmem:[%s1 + $0x15f0] sm:$0xff]
  %v733 = vld [vmem:[%s1 + $0x15f8] sm:$0xff]
  %v734 = vld [vmem:[%s1 + $0x1600] sm:$0xff]
  %v735 = vld [vmem:[%s1 + $0x1608] sm:$0xff]
  %v736 = vld [vmem:[%s1 + $0x1610] sm:$0xff]
  %v737 = vld [vmem:[%s1 + $0x1618] sm:$0xff]
  %v738 = vld [vmem:[%s1 + $0x1620] sm:$0xff]
  %v739 = vld [vmem:[%s1 + $0x1628] sm:$0xff]
  %v740 = vld [vmem:[%s1 + $0x1630] sm:$0xff]
  %v741 = vld [vmem:[%s1 + $0x1638] sm:$0xff]
  %v742 = vld [vmem:[%s1 + $0x1640] sm:$0xff]
  %v743 = vld [vmem:[%s1 + $0x1648] sm:$0xff]
  %v744 = vld [vmem:[%s1 + $0x1650] sm:$0xff]
  %v745 = vld [vmem:[%s1 + $0x1658] sm:$0xff]
  %v746 = vld [vmem:[%s1 + $0x1660] sm:$0xff]
  %v747 = vld [vmem:[%s1 + $0x1668] sm:$0xff]
  %v748 = vld [vmem:[%s1 + $0x1670] sm:$0xff]
  %v749 = vld [vmem:[%s1 + $0x1678] sm:$0xff]
  %v750 = vld [vmem:[%s1 + $0x1680] sm:$0xff]
  %v751 = vld [vmem:[%s1 + $0x1688] sm:$0xff]
  %v752 = vld [vmem:[%s1 + $0x1690] sm:$0xff]
  %v753 = vld [vmem:[%s1 + $0x1698] sm:$0xff]
  %v754 = vld [vmem:[%s1 + $0x16a0] sm:$0xff]
  %v755 = vld [vmem:[%s1 + $0x16a8] sm:$0xff]
  %v756 = vld [vmem:[%s1 + $0x16b0] sm:$0xff]
  %v757 = vld [vmem:[%s1 + $0x16b8] sm:$0xff]
  %v758 = vld [vmem:[%s1 + $0x16c0] sm:$0xff]
  %v759 = vld [vmem:[%s1 + $0x16c8] sm:$0xff]
  %v760 = vld [vmem:[%s1 + $0x16d0] sm:$0xff]
  %v761 = vld [vmem:[%s1 + $0x16d8] sm:$0xff]
  %v762 = vld [vmem:[%s1 + $0x16e0] sm:$0xff]
  %v763 = vld [vmem:[%s1 + $0x16e8] sm:$0xff]
  %v764 = vld [vmem:[%s1 + $0x16f0] sm:$0xff]
  %v765 = vld [vmem:[%s1 + $0x16f8] sm:$0xff]
  %v766 = vld [vmem:[%s1 + $0x1700] sm:$0xff]
  %v767 = vld [vmem:[%s1 + $0x1708] sm:$0xff]
  %v768 = vld [vmem:[%s1 + $0x1710] sm:$0xff]
  %v769 = vld [vmem:[%s1 + $0x1718] sm:$0xff]
  %v770 = vld [vmem:[%s1 + $0x1720] sm:$0xff]
  %v771 = vld [vmem:[%s1 + $0x1728] sm:$0xff]
  %v772 = vld [vmem:[%s1 + $0x1730] sm:$0xff]
  %v773 = vld [vmem:[%s1 + $0x1738] sm:$0xff]
  %v774 = vld [vmem:[%s1 + $0x1740] sm:$0xff]
  %v775 = vld [vmem:[%s1 + $0x1748] sm:$0xff]
  %v776 = vld [vmem:[%s1 + $0x1750] sm:$0xff]
  %v777 = vld [vmem:[%s1 + $0x1758] sm:$0xff]
  %v778 = vld [vmem:[%s1 + $0x1760] sm:$0xff]
  %v779 = vld [vmem:[%s1 + $0x1768] sm:$0xff]
  %v780 = vld [vmem:[%s1 + $0x1770] sm:$0xff]
  %v781 = vld [vmem:[%s1 + $0x1778] sm:$0xff]
  %v782 = vld [vmem:[%s1 + $0x1780] sm:$0xff]
  %v783 = vld [vmem:[%s1 + $0x1788] sm:$0xff]
  %v784 = vld [vmem:[%s1 + $0x1790] sm:$0xff]
  %v785 = vld [vmem:[%s1 + $0x1798] sm:$0xff]
  %v786 = vld [vmem:[%s1 + $0x17a0] sm:$0xff]
  %v787 = vld [vmem:[%s1 + $0x17a8] sm:$0xff]
  %v788 = vld [vmem:[%s1 + $0x17b0] sm:$0xff]
  %v789 = vld [vmem:[%s1 + $0x17b8] sm:$0xff]
  %v790 = vld [vmem:[%s1 + $0x17c0] sm:$0xff]
  %v791 = vld [vmem:[%s1 + $0x17c8] sm:$0xff]
  %v792 = vld [vmem:[%s1 + $0x17d0] sm:$0xff]
  %v793 = vld [vmem:[%s1 + $0x17d8] sm:$0xff]
  %v794 = vld [vmem:[%s1 + $0x17e0] sm:$0xff]
  %v795 = vld [vmem:[%s1 + $0x17e8] sm:$0xff]
  %v796 = vld [vmem:[%s1 + $0x17f0] sm:$0xff]
  %v797 = vld [vmem:[%s1 + $0x17f8] sm:$0xff]
  %v798 = vld [vmem:[%s1 + $0x1800] sm:$0xff]
  %v799 = vld [vmem:[%s1 + $0x1808] sm:$0xff]
  %v800 = vld [vmem:[%s1 + $0x1810] sm:$0xff]
  %v801 = vld [vmem:[%s1 + $0x1818] sm:$0xff]
  %v802 = vld [vmem:[%s1 + $0x1820] sm:$0xff]
  %v803 = vld [vmem:[%s1 + $0x1828] sm:$0xff]
  %v804 = vld [vmem:[%s1 + $0x1830] sm:$0xff]
  %v805 = vld [vmem:[%s1 + $0x1838] sm:$0xff]
  %v806 = vld [vmem:[%s1 + $0x1840] sm:$0xff]
  %v807 = vld [vmem:[%s1 + $0x1848] sm:$0xff]
  %v808 = vld [vmem:[%s1 + $0x1850] sm:$0xff]
  %v809 = vld [vmem:[%s1 + $0x1858] sm:$0xff]
  %v810 = vld [vmem:[%s1 + $0x1860] sm:$0xff]
  %v811 = vld [vmem:[%s1 + $0x1868] sm:$0xff]
  %v812 = vld [vmem:[%s1 + $0x1870] sm:$0xff]
  %v813 = vld [vmem:[%s1 + $0x1878] sm:$0xff]
  %v814 = vld [vmem:[%s1 + $0x1880] sm:$0xff]
  %v815 = vld [vmem:[%s1 + $0x1888] sm:$0xff]
  %v816 = vld [vmem:[%s1 + $0x1890] sm:$0xff]
  %v817 = vld [vmem:[%s1 + $0x1898] sm:$0xff]
  %v818 = vld [vmem:[%s1 + $0x18a0] sm:$0xff]
  %v819 = vld [vmem:[%s1 + $0x18a8] sm:$0xff]
  %v820 = vld [vmem:[%s1 + $0x18b0] sm:$0xff]
  %v821 = vld [vmem:[%s1 + $0x18b8] sm:$0xff]
  %v822 = vld [vmem:[%s1 + $0x18c0] sm:$0xff]
  %v823 = vld [vmem:[%s1 + $0x18c8] sm:$0xff]
  %v824 = vld [vmem:[%s1 + $0x18d0] sm:$0xff]
  %v825 = vld [vmem:[%s1 + $0x18d8] sm:$0xff]
  %v826 = vld [vmem:[%s1 + $0x18e0] sm:$0xff]
  %v827 = vld [vmem:[%s1 + $0x18e8] sm:$0xff]
  %v828 = vld [vmem:[%s1 + $0x18f0] sm:$0xff]
  %v829 = vld [vmem:[%s1 + $0x18f8] sm:$0xff]
  %v830 = vld [vmem:[%s1 + $0x1900] sm:$0xff]
  %v831 = vld [vmem:[%s1 + $0x1908] sm:$0xff]
  %v832 = vld [vmem:[%s1 + $0x1910] sm:$0xff]
  %v833 = vld [vmem:[%s1 + $0x1918] sm:$0xff]
  %v834 = vld [vmem:[%s1 + $0x1920] sm:$0xff]
  %v835 = vld [vmem:[%s1 + $0x1928] sm:$0xff]
  %v836 = vld [vmem:[%s1 + $0x1930] sm:$0xff]
  %v837 = vld [vmem:[%s1 + $0x1938] sm:$0xff]
  %v838 = vld [vmem:[%s1 + $0x1940] sm:$0xff]
  %v839 = vld [vmem:[%s1 + $0x1948] sm:$0xff]
  %v840 = vld [vmem:[%s1 + $0x1950] sm:$0xff]
  %v841 = vld [vmem:[%s1 + $0x1958] sm:$0xff]
  %v842 = vld [vmem:[%s1 + $0x1960] sm:$0xff]
  %v843 = vld [vmem:[%s1 + $0x1968] sm:$0xff]
  %v844 = vld [vmem:[%s1 + $0x1970] sm:$0xff]
  %v845 = vld [vmem:[%s1 + $0x1978] sm:$0xff]
  %v846 = vld [vmem:[%s1 + $0x1980] sm:$0xff]
  %v847 = vld [vmem:[%s1 + $0x1988] sm:$0xff]
  %v848 = vld [vmem:[%s1 + $0x1990] sm:$0xff]
  %v849 = vld [vmem:[%s1 + $0x1998] sm:$0xff]
  %v850 = vld [vmem:[%s1 + $0x19a0] sm:$0xff]
  %v851 = vld [vmem:[%s1 + $0x19a8] sm:$0xff]
  %v852 = vld [vmem:[%s1 + $0x19b0] sm:$0xff]
  %v853 = vld [vmem:[%s1 + $0x19b8] sm:$0xff]
  %v854 = vld [vmem:[%s1 + $0x19c0] sm:$0xff]
  %v855 = vld [vmem:[%s1 + $0x19c8] sm:$0xff]
  %v856 = vld [vmem:[%s1 + $0x19d0] sm:$0xff]
  %v857 = vld [vmem:[%s1 + $0x19d8] sm:$0xff]
  %v858 = vld [vmem:[%s1 + $0x19e0] sm:$0xff]
  %v859 = vld [vmem:[%s1 + $0x19e8] sm:$0xff]
  %v860 = vld [vmem:[%s1 + $0x19f0] sm:$0xff]
  %v861 = vld [vmem:[%s1 + $0x19f8] sm:$0xff]
  %v862 = vld [vmem:[%s1 + $0x1a00] sm:$0xff]
  %v863 = vld [vmem:[%s1 + $0x1a08] sm:$0xff]
  %v864 = vld [vmem:[%s1 + $0x1a10] sm:$0xff]
  %v865 = vld [vmem:[%s1 + $0x1a18] sm:$0xff]
  %v866 = vld [vmem:[%s1 + $0x1a20] sm:$0xff]
  %v867 = vld [vmem:[%s1 + $0x1a28] sm:$0xff]
  %v868 = vld [vmem:[%s1 + $0x1a30] sm:$0xff]
  %v869 = vld [vmem:[%s1 + $0x1a38] sm:$0xff]
  %v870 = vld [vmem:[%s1 + $0x1a40] sm:$0xff]
  %v871 = vld [vmem:[%s1 + $0x1a48] sm:$0xff]
  %v872 = vld [vmem:[%s1 + $0x1a50] sm:$0xff]
  %v873 = vld [vmem:[%s1 + $0x1a58] sm:$0xff]
  %v874 = vld [vmem:[%s1 + $0x1a60] sm:$0xff]
  %v875 = vld [vmem:[%s1 + $0x1a68] sm:$0xff]
  %v876 = vld [vmem:[%s1 + $0x1a70] sm:$0xff]
  %v877 = vld [vmem:[%s1 + $0x1a78] sm:$0xff]
  %v878 = vld [vmem:[%s1 + $0x1a80] sm:$0xff]
  %v879 = vld [vmem:[%s1 + $0x1a88] sm:$0xff]
  %v880 = vld [vmem:[%s1 + $0x1a90] sm:$0xff]
  %v881 = vld [vmem:[%s1 + $0x1a98] sm:$0xff]
  %v882 = vld [vmem:[%s1 + $0x1aa0] sm:$0xff]
  %v883 = vld [vmem:[%s1 + $0x1aa8] sm:$0xff]
  %v884 = vld [vmem:[%s1 + $0x1ab0] sm:$0xff]
  %v885 = vld [vmem:[%s1 + $0x1ab8] sm:$0xff]
  %v886 = vld [vmem:[%s1 + $0x1ac0] sm:$0xff]
  %v887 = vld [vmem:[%s1 + $0x1ac8] sm:$0xff]
  %v888 = vld [vmem:[%s1 + $0x1ad0] sm:$0xff]
  %v889 = vld [vmem:[%s1 + $0x1ad8] sm:$0xff]
  %v890 = vld [vmem:[%s1 + $0x1ae0] sm:$0xff]
  %v891 = vld [vmem:[%s1 + $0x1ae8] sm:$0xff]
  %v892 = vld [vmem:[%s1 + $0x1af0] sm:$0xff]
  %v893 = vld [vmem:[%s1 + $0x1af8] sm:$0xff]
  %v894 = vld [vmem:[%s1 + $0x1b00] sm:$0xff]
  %v895 = vld [vmem:[%s1 + $0x1b08] sm:$0xff]
  %v896 = vld [vmem:[%s1 + $0x1b10] sm:$0xff]
  %v897 = vld [vmem:[%s1 + $0x1b18] sm:$0xff]
  %v898 = vld [vmem:[%s1 + $0x1b20] sm:$0xff]
  %v899 = vld [vmem:[%s1 + $0x1b28] sm:$0xff]
  %v900 = vld [vmem:[%s1 + $0x1b30] sm:$0xff]
  %v901 = vld [vmem:[%s1 + $0x1b38] sm:$0xff]
  %v902 = vld [vmem:[%s1 + $0x1b40] sm:$0xff]
  %v903 = vld [vmem:[%s1 + $0x1b48] sm:$0xff]
  %v904 = vld [vmem:[%s1 + $0x1b50] sm:$0xff]
  %v905 = vld [vmem:[%s1 + $0x1b58] sm:$0xff]
  %v906 = vld [vmem:[%s1 + $0x1b60] sm:$0xff]
  %v907 = vld [vmem:[%s1 + $0x1b68] sm:$0xff]
  %v908 = vld [vmem:[%s1 + $0x1b70] sm:$0xff]
  %v909 = vld [vmem:[%s1 + $0x1b78] sm:$0xff]
  %v910 = vld [vmem:[%s1 + $0x1b80] sm:$0xff]
  %v911 = vld [vmem:[%s1 + $0x1b88] sm:$0xff]
  %v912 = vld [vmem:[%s1 + $0x1b90] sm:$0xff]
  %v913 = vld [vmem:[%s1 + $0x1b98] sm:$0xff]
  %v914 = vld [vmem:[%s1 + $0x1ba0] sm:$0xff]
  %v915 = vld [vmem:[%s1 + $0x1ba8] sm:$0xff]
  %v916 = vld [vmem:[%s1 + $0x1bb0] sm:$0xff]
  %v917 = vld [vmem:[%s1 + $0x1bb8] sm:$0xff]
  %v918 = vld [vmem:[%s1 + $0x1bc0] sm:$0xff]
  %v919 = vld [vmem:[%s1 + $0x1bc8] sm:$0xff]
  %v920 = vld [vmem:[%s1 + $0x1bd0] sm:$0xff]
  %v921 = vld [vmem:[%s1 + $0x1bd8] sm:$0xff]
  %v922 = vld [vmem:[%s1 + $0x1be0] sm:$0xff]
  %v923 = vld [vmem:[%s1 + $0x1be8] sm:$0xff]
  %v924 = vld [vmem:[%s1 + $0x1bf0] sm:$0xff]
  %v925 = vld [vmem:[%s1 + $0x1bf8] sm:$0xff]
  %v926 = vld [vmem:[%s1 + $0x1c00] sm:$0xff]
  %v927 = vld [vmem:[%s1 + $0x1c08] sm:$0xff]
  %v928 = vld [vmem:[%s1 + $0x1c10] sm:$0xff]
  %v929 = vld [vmem:[%s1 + $0x1c18] sm:$0xff]
  %v930 = vld [vmem:[%s1 + $0x1c20] sm:$0xff]
  %v931 = vld [vmem:[%s1 + $0x1c28] sm:$0xff]
  %v932 = vld [vmem:[%s1 + $0x1c30] sm:$0xff]
  %v933 = vld [vmem:[%s1 + $0x1c38] sm:$0xff]
  %v934 = vld [vmem:[%s1 + $0x1c40] sm:$0xff]
  %v935 = vld [vmem:[%s1 + $0x1c48] sm:$0xff]
  %v936 = vld [vmem:[%s1 + $0x1c50] sm:$0xff]
  %v937 = vld [vmem:[%s1 + $0x1c58] sm:$0xff]
  %v938 = vld [vmem:[%s1 + $0x1c60] sm:$0xff]
  %v939 = vld [vmem:[%s1 + $0x1c68] sm:$0xff]
  %v940 = vld [vmem:[%s1 + $0x1c70] sm:$0xff]
  %v941 = vld [vmem:[%s1 + $0x1c78] sm:$0xff]
  %v942 = vld [vmem:[%s1 + $0x1c80] sm:$0xff]
  %v943 = vld [vmem:[%s1 + $0x1c88] sm:$0xff]
  %v944 = vld [vmem:[%s1 + $0x1c90] sm:$0xff]
  %v945 = vld [vmem:[%s1 + $0x1c98] sm:$0xff]
  %v946 = vld [vmem:[%s1 + $0x1ca0] sm:$0xff]
  %v947 = vld [vmem:[%s1 + $0x1ca8] sm:$0xff]
  %v948 = vld [vmem:[%s1 + $0x1cb0] sm:$0xff]
  %v949 = vld [vmem:[%s1 + $0x1cb8] sm:$0xff]
  %v950 = vld [vmem:[%s1 + $0x1cc0] sm:$0xff]
  %v951 = vld [vmem:[%s1 + $0x1cc8] sm:$0xff]
  %v952 = vld [vmem:[%s1 + $0x1cd0] sm:$0xff]
  %v953 = vld [vmem:[%s1 + $0x1cd8] sm:$0xff]
  %v954 = vld [vmem:[%s1 + $0x1ce0] sm:$0xff]
  %v955 = vld [vmem:[%s1 + $0x1ce8] sm:$0xff]
  %v956 = vld [vmem:[%s1 + $0x1cf0] sm:$0xff]
  %v957 = vld [vmem:[%s1 + $0x1cf8] sm:$0xff]
  %v958 = vld [vmem:[%s1 + $0x1d00] sm:$0xff]
  %v959 = vld [vmem:[%s1 + $0x1d08] sm:$0xff]
  %v960 = vld [vmem:[%s1 + $0x1d10] sm:$0xff]
  %v961 = vld [vmem:[%s1 + $0x1d18] sm:$0xff]
  %v962 = vld [vmem:[%s1 + $0x1d20] sm:$0xff]
  %v963 = vld [vmem:[%s1 + $0x1d28] sm:$0xff]
  %v964 = vld [vmem:[%s1 + $0x1d30] sm:$0xff]
  %v965 = vld [vmem:[%s1 + $0x1d38] sm:$0xff]
  %v966 = vld [vmem:[%s1 + $0x1d40] sm:$0xff]
  %v967 = vld [vmem:[%s1 + $0x1d48] sm:$0xff]
  %v968 = vld [vmem:[%s1 + $0x1d50] sm:$0xff]
  %v969 = vld [vmem:[%s1 + $0x1d58] sm:$0xff]
  %v970 = vld [vmem:[%s1 + $0x1d60] sm:$0xff]
  %v971 = vld [vmem:[%s1 + $0x1d68] sm:$0xff]
  %v972 = vld [vmem:[%s1 + $0x1d70] sm:$0xff]
  %v973 = vld [vmem:[%s1 + $0x1d78] sm:$0xff]
  %v974 = vld [vmem:[%s1 + $0x1d80] sm:$0xff]
  %v975 = vld [vmem:[%s1 + $0x1d88] sm:$0xff]
  %v976 = vld [vmem:[%s1 + $0x1d90] sm:$0xff]
  %v977 = vld [vmem:[%s1 + $0x1d98] sm:$0xff]
  %v978 = vld [vmem:[%s1 + $0x1da0] sm:$0xff]
  %v979 = vld [vmem:[%s1 + $0x1da8] sm:$0xff]
  %v980 = vld [vmem:[%s1 + $0x1db0] sm:$0xff]
  %v981 = vld [vmem:[%s1 + $0x1db8] sm:$0xff]
  %v982 = vld [vmem:[%s1 + $0x1dc0] sm:$0xff]
  %v983 = vld [vmem:[%s1 + $0x1dc8] sm:$0xff]
  %v984 = vld [vmem:[%s1 + $0x1dd0] sm:$0xff]
  %v985 = vld [vmem:[%s1 + $0x1dd8] sm:$0xff]
  %v986 = vld [vmem:[%s1 + $0x1de0] sm:$0xff]
  %v987 = vld [vmem:[%s1 + $0x1de8] sm:$0xff]
  %v988 = vld [vmem:[%s1 + $0x1df0] sm:$0xff]
  %v989 = vld [vmem:[%s1 + $0x1df8] sm:$0xff]
  %v990 = vld [vmem:[%s1 + $0x1e00] sm:$0xff]
  %v991 = vld [vmem:[%s1 + $0x1e08] sm:$0xff]
  %v992 = vld [vmem:[%s1 + $0x1e10] sm:$0xff]
  %v993 = vld [vmem:[%s1 + $0x1e18] sm:$0xff]
  %v994 = vld [vmem:[%s1 + $0x1e20] sm:$0xff]
  %v995 = vld [vmem:[%s1 + $0x1e28] sm:$0xff]
  %v996 = vld [vmem:[%s1 + $0x1e30] sm:$0xff]
  %v997 = vld [vmem:[%s1 + $0x1e38] sm:$0xff]
  %v998 = vld [vmem:[%s1 + $0x1e40] sm:$0xff]
  %v999 = vld [vmem:[%s1 + $0x1e48] sm:$0xff]
  %v1000 = vld [vmem:[%s1 + $0x1e50] sm:$0xff]
  %v1001 = vld [vmem:[%s1 + $0x1e58] sm:$0xff]
  %v1002 = vld [vmem:[%s1 + $0x1e60] sm:$0xff]
  %v1003 = vld [vmem:[%s1 + $0x1e68] sm:$0xff]
  %v1004 = vld [vmem:[%s1 + $0x1e70] sm:$0xff]
  %v1005 = vld [vmem:[%s1 + $0x1e78] sm:$0xff]
  %v1006 = vld [vmem:[%s1 + $0x1e80] sm:$0xff]
  %v1007 = vld [vmem:[%s1 + $0x1e88] sm:$0xff]
  %v1008 = vld [vmem:[%s1 + $0x1e90] sm:$0xff]
  %v1009 = vld [vmem:[%s1 + $0x1e98] sm:$0xff]
  %v1010 = vld [vmem:[%s1 + $0x1ea0] sm:$0xff]
  %v1011 = vld [vmem:[%s1 + $0x1ea8] sm:$0xff]
  %v1012 = vld [vmem:[%s1 + $0x1eb0] sm:$0xff]
  %v1013 = vld [vmem:[%s1 + $0x1eb8] sm:$0xff]
  %v1014 = vld [vmem:[%s1 + $0x1ec0] sm:$0xff]
  %v1015 = vld [vmem:[%s1 + $0x1ec8] sm:$0xff]
  %v1016 = vld [vmem:[%s1 + $0x1ed0] sm:$0xff]
  %v1017 = vld [vmem:[%s1 + $0x1ed8] sm:$0xff]
  %v1018 = vld [vmem:[%s1 + $0x1ee0] sm:$0xff]
  %v1019 = vld [vmem:[%s1 + $0x1ee8] sm:$0xff]
  %v1020 = vld [vmem:[%s1 + $0x1ef0] sm:$0xff]
  %v1021 = vld [vmem:[%s1 + $0x1ef8] sm:$0xff]
  %v1022 = vld [vmem:[%s1 + $0x1f00] sm:$0xff]
  %v1023 = vld [vmem:[%s1 + $0x1f08] sm:$0xff]
  %v1024 = vld [vmem:[%s1 + $0x1f10] sm:$0xff]
  %v1025 = vld [vmem:[%s1 + $0x1f18] sm:$0xff]
  %v1026 = vld [vmem:[%s1 + $0x1f20] sm:$0xff]
  %v1027 = vld [vmem:[%s1 + $0x1f28] sm:$0xff]
  %v1028 = vld [vmem:[%s1 + $0x1f30] sm:$0xff]
  %v1029 = vld [vmem:[%s1 + $0x1f38] sm:$0xff]
  %v1030 = vld [vmem:[%s1 + $0x1f40] sm:$0xff]
  %v1031 = vld [vmem:[%s1 + $0x1f48] sm:$0xff]
  %v1032 = vld [vmem:[%s1 + $0x1f50] sm:$0xff]
  %v1033 = vld [vmem:[%s1 + $0x1f58] sm:$0xff]
  %v1034 = vld [vmem:[%s1 + $0x1f60] sm:$0xff]
  %v1035 = vld [vmem:[%s1 + $0x1f68] sm:$0xff]
  %v1036 = vld [vmem:[%s1 + $0x1f70] sm:$0xff]
  %v1037 = vld [vmem:[%s1 + $0x1f78] sm:$0xff]
  %v1038 = vld [vmem:[%s1 + $0x1f80] sm:$0xff]
  %v1039 = vld [vmem:[%s1 + $0x1f88] sm:$0xff]
  %v1040 = vld [vmem:[%s1 + $0x1f90] sm:$0xff]
  %v1041 = vld [vmem:[%s1 + $0x1f98] sm:$0xff]
  %v1042 = vld [vmem:[%s1 + $0x1fa0] sm:$0xff]
  %v1043 = vld [vmem:[%s1 + $0x1fa8] sm:$0xff]
  %v1044 = vld [vmem:[%s1 + $0x1fb0] sm:$0xff]
  %v1045 = vld [vmem:[%s1 + $0x1fb8] sm:$0xff]
  %v1046 = vld [vmem:[%s1 + $0x1fc0] sm:$0xff]
  %v1047 = vld [vmem:[%s1 + $0x1fc8] sm:$0xff]
  %v1048 = vld [vmem:[%s1 + $0x1fd0] sm:$0xff]
  %v1049 = vld [vmem:[%s1 + $0x1fd8] sm:$0xff]
  %v1050 = vld [vmem:[%s1 + $0x1fe0] sm:$0xff]
  %v1051 = vld [vmem:[%s1 + $0x1fe8] sm:$0xff]
  %v1052 = vld [vmem:[%s1 + $0x1ff0] sm:$0xff]
  %v1053 = vld [vmem:[%s1 + $0x1ff8] sm:$0xff]
  %v1054 = vld [vmem:[%s2] sm:$0xf]
  %v1056 = vperm.slane %v1054, 0
  %v1057 = vperm.slane %v1054, 1
  %v1058 = vperm.slane %v1054, 2
  %v1059 = vperm.slane %v1054, 3
  %1064 = vmatpush.msra.mxu0 %v90
  %1065 = vmatpush.msra.mxu0 %v86
  %1066 = vmatpush.msra.mxu0 %v82
  %1067 = vmatpush.msra.mxu0 %v78
  %1068 = vmatpush.msra.mxu0 %v74
  %1069 = vmatpush.msra.mxu0 %v70
  %1070 = vmatpush.msra.mxu0 %v66
  %1071 = vmatpush.msra.mxu0 %v62
  %1072 = vmatpush.msra.mxu0 %v58
  %1073 = vmatpush.msra.mxu0 %v54
  %1074 = vmatpush.msra.mxu0 %v50
  %1075 = vmatpush.msra.mxu0 %v46
  %1076 = vmatpush.msra.mxu0 %v42
  %1077 = vmatpush.msra.mxu0 %v38
  %1078 = vmatpush.msra.mxu0 %v34
  %1079 = vmatpush.msra.mxu0 %v30
  %1080 = vmatmul.f32.gmra.mxu0 %v14
  %v1081 = vpop.f32.mrf.mxu0
  %v1082 = vadd.f32 %v1056, %v1081
  %1083 = vdwg.mxu0
  %1084 = vmatpush.msra.mxu0 %v154
  %1085 = vmatpush.msra.mxu0 %v150
  %1086 = vmatpush.msra.mxu0 %v146
  %1087 = vmatpush.msra.mxu0 %v142
  %1088 = vmatpush.msra.mxu0 %v138
  %1089 = vmatpush.msra.mxu0 %v134
  %1090 = vmatpush.msra.mxu0 %v130
  %1091 = vmatpush.msra.mxu0 %v126
  %1092 = vmatpush.msra.mxu0 %v122
  %1093 = vmatpush.msra.mxu0 %v118
  %1094 = vmatpush.msra.mxu0 %v114
  %1095 = vmatpush.msra.mxu0 %v110
  %1096 = vmatpush.msra.mxu0 %v106
  %1097 = vmatpush.msra.mxu0 %v102
  %1098 = vmatpush.msra.mxu0 %v98
  %1099 = vmatpush.msra.mxu0 %v94
  %1100 = vmatmul.f32.gmra.mxu0 %v15
  %v1101 = vpop.f32.mrf.mxu0
  %v1102 = vadd.f32 %v1082, %v1101
  %1103 = vdwg.mxu0
  %1104 = vmatpush.msra.mxu0 %v218
  %1105 = vmatpush.msra.mxu0 %v214
  %1106 = vmatpush.msra.mxu0 %v210
  %1107 = vmatpush.msra.mxu0 %v206
  %1108 = vmatpush.msra.mxu0 %v202
  %1109 = vmatpush.msra.mxu0 %v198
  %1110 = vmatpush.msra.mxu0 %v194
  %1111 = vmatpush.msra.mxu0 %v190
  %1112 = vmatpush.msra.mxu0 %v186
  %1113 = vmatpush.msra.mxu0 %v182
  %1114 = vmatpush.msra.mxu0 %v178
  %1115 = vmatpush.msra.mxu0 %v174
  %1116 = vmatpush.msra.mxu0 %v170
  %1117 = vmatpush.msra.mxu0 %v166
  %1118 = vmatpush.msra.mxu0 %v162
  %1119 = vmatpush.msra.mxu0 %v158
  %1120 = vmatmul.f32.gmra.mxu0 %v16
  %v1121 = vpop.f32.mrf.mxu0
  %v1122 = vadd.f32 %v1102, %v1121
  %1123 = vdwg.mxu0
  %1124 = vmatpush.msra.mxu0 %v282
  %1125 = vmatpush.msra.mxu0 %v278
  %1126 = vmatpush.msra.mxu0 %v274
  %1127 = vmatpush.msra.mxu0 %v270
  %1128 = vmatpush.msra.mxu0 %v266
  %1129 = vmatpush.msra.mxu0 %v262
  %1130 = vmatpush.msra.mxu0 %v258
  %1131 = vmatpush.msra.mxu0 %v254
  %1132 = vmatpush.msra.mxu0 %v250
  %1133 = vmatpush.msra.mxu0 %v246
  %1134 = vmatpush.msra.mxu0 %v242
  %1135 = vmatpush.msra.mxu0 %v238
  %1136 = vmatpush.msra.mxu0 %v234
  %1137 = vmatpush.msra.mxu0 %v230
  %1138 = vmatpush.msra.mxu0 %v226
  %1139 = vmatpush.msra.mxu0 %v222
  %1140 = vmatmul.f32.gmra.mxu0 %v17
  %v1141 = vpop.f32.mrf.mxu0
  %v1142 = vadd.f32 %v1122, %v1141
  %1143 = vdwg.mxu0
  %1144 = vmatpush.msra.mxu0 %v346
  %1145 = vmatpush.msra.mxu0 %v342
  %1146 = vmatpush.msra.mxu0 %v338
  %1147 = vmatpush.msra.mxu0 %v334
  %1148 = vmatpush.msra.mxu0 %v330
  %1149 = vmatpush.msra.mxu0 %v326
  %1150 = vmatpush.msra.mxu0 %v322
  %1151 = vmatpush.msra.mxu0 %v318
  %1152 = vmatpush.msra.mxu0 %v314
  %1153 = vmatpush.msra.mxu0 %v310
  %1154 = vmatpush.msra.mxu0 %v306
  %1155 = vmatpush.msra.mxu0 %v302
  %1156 = vmatpush.msra.mxu0 %v298
  %1157 = vmatpush.msra.mxu0 %v294
  %1158 = vmatpush.msra.mxu0 %v290
  %1159 = vmatpush.msra.mxu0 %v286
  %1160 = vmatmul.f32.gmra.mxu0 %v18
  %v1161 = vpop.f32.mrf.mxu0
  %v1162 = vadd.f32 %v1142, %v1161
  %1163 = vdwg.mxu0
  %1164 = vmatpush.msra.mxu0 %v410
  %1165 = vmatpush.msra.mxu0 %v406
  %1166 = vmatpush.msra.mxu0 %v402
  %1167 = vmatpush.msra.mxu0 %v398
  %1168 = vmatpush.msra.mxu0 %v394
  %1169 = vmatpush.msra.mxu0 %v390
  %1170 = vmatpush.msra.mxu0 %v386
  %1171 = vmatpush.msra.mxu0 %v382
  %1172 = vmatpush.msra.mxu0 %v378
  %1173 = vmatpush.msra.mxu0 %v374
  %1174 = vmatpush.msra.mxu0 %v370
  %1175 = vmatpush.msra.mxu0 %v366
  %1176 = vmatpush.msra.mxu0 %v362
  %1177 = vmatpush.msra.mxu0 %v358
  %1178 = vmatpush.msra.mxu0 %v354
  %1179 = vmatpush.msra.mxu0 %v350
  %1180 = vmatmul.f32.gmra.mxu0 %v19
  %v1181 = vpop.f32.mrf.mxu0
  %v1182 = vadd.f32 %v1162, %v1181
  %1183 = vdwg.mxu0
  %1184 = vmatpush.msra.mxu0 %v474
  %1185 = vmatpush.msra.mxu0 %v470
  %1186 = vmatpush.msra.mxu0 %v466
  %1187 = vmatpush.msra.mxu0 %v462
  %1188 = vmatpush.msra.mxu0 %v458
  %1189 = vmatpush.msra.mxu0 %v454
  %1190 = vmatpush.msra.mxu0 %v450
  %1191 = vmatpush.msra.mxu0 %v446
  %1192 = vmatpush.msra.mxu0 %v442
  %1193 = vmatpush.msra.mxu0 %v438
  %1194 = vmatpush.msra.mxu0 %v434
  %1195 = vmatpush.msra.mxu0 %v430
  %1196 = vmatpush.msra.mxu0 %v426
  %1197 = vmatpush.msra.mxu0 %v422
  %1198 = vmatpush.msra.mxu0 %v418
  %1199 = vmatpush.msra.mxu0 %v414
  %1200 = vmatmul.f32.gmra.mxu0 %v20
  %v1201 = vpop.f32.mrf.mxu0
  %v1202 = vadd.f32 %v1182, %v1201
  %1203 = vdwg.mxu0
  %1204 = vmatpush.msra.mxu0 %v538
  %1205 = vmatpush.msra.mxu0 %v534
  %1206 = vmatpush.msra.mxu0 %v530
  %1207 = vmatpush.msra.mxu0 %v526
  %1208 = vmatpush.msra.mxu0 %v522
  %1209 = vmatpush.msra.mxu0 %v518
  %1210 = vmatpush.msra.mxu0 %v514
  %1211 = vmatpush.msra.mxu0 %v510
  %1212 = vmatpush.msra.mxu0 %v506
  %1213 = vmatpush.msra.mxu0 %v502
  %1214 = vmatpush.msra.mxu0 %v498
  %1215 = vmatpush.msra.mxu0 %v494
  %1216 = vmatpush.msra.mxu0 %v490
  %1217 = vmatpush.msra.mxu0 %v486
  %1218 = vmatpush.msra.mxu0 %v482
  %1219 = vmatpush.msra.mxu0 %v478
  %1220 = vmatmul.f32.gmra.mxu0 %v21
  %v1221 = vpop.f32.mrf.mxu0
  %v1222 = vadd.f32 %v1202, %v1221
  %1223 = vdwg.mxu0
  %1224 = vmatpush.msra.mxu0 %v602
  %1225 = vmatpush.msra.mxu0 %v598
  %1226 = vmatpush.msra.mxu0 %v594
  %1227 = vmatpush.msra.mxu0 %v590
  %1228 = vmatpush.msra.mxu0 %v586
  %1229 = vmatpush.msra.mxu0 %v582
  %1230 = vmatpush.msra.mxu0 %v578
  %1231 = vmatpush.msra.mxu0 %v574
  %1232 = vmatpush.msra.mxu0 %v570
  %1233 = vmatpush.msra.mxu0 %v566
  %1234 = vmatpush.msra.mxu0 %v562
  %1235 = vmatpush.msra.mxu0 %v558
  %1236 = vmatpush.msra.mxu0 %v554
  %1237 = vmatpush.msra.mxu0 %v550
  %1238 = vmatpush.msra.mxu0 %v546
  %1239 = vmatpush.msra.mxu0 %v542
  %1240 = vmatmul.f32.gmra.mxu0 %v22
  %v1241 = vpop.f32.mrf.mxu0
  %v1242 = vadd.f32 %v1222, %v1241
  %1243 = vdwg.mxu0
  %1244 = vmatpush.msra.mxu0 %v666
  %1245 = vmatpush.msra.mxu0 %v662
  %1246 = vmatpush.msra.mxu0 %v658
  %1247 = vmatpush.msra.mxu0 %v654
  %1248 = vmatpush.msra.mxu0 %v650
  %1249 = vmatpush.msra.mxu0 %v646
  %1250 = vmatpush.msra.mxu0 %v642
  %1251 = vmatpush.msra.mxu0 %v638
  %1252 = vmatpush.msra.mxu0 %v634
  %1253 = vmatpush.msra.mxu0 %v630
  %1254 = vmatpush.msra.mxu0 %v626
  %1255 = vmatpush.msra.mxu0 %v622
  %1256 = vmatpush.msra.mxu0 %v618
  %1257 = vmatpush.msra.mxu0 %v614
  %1258 = vmatpush.msra.mxu0 %v610
  %1259 = vmatpush.msra.mxu0 %v606
  %1260 = vmatmul.f32.gmra.mxu0 %v23
  %v1261 = vpop.f32.mrf.mxu0
  %v1262 = vadd.f32 %v1242, %v1261
  %1263 = vdwg.mxu0
  %1264 = vmatpush.msra.mxu0 %v730
  %1265 = vmatpush.msra.mxu0 %v726
  %1266 = vmatpush.msra.mxu0 %v722
  %1267 = vmatpush.msra.mxu0 %v718
  %1268 = vmatpush.msra.mxu0 %v714
  %1269 = vmatpush.msra.mxu0 %v710
  %1270 = vmatpush.msra.mxu0 %v706
  %1271 = vmatpush.msra.mxu0 %v702
  %1272 = vmatpush.msra.mxu0 %v698
  %1273 = vmatpush.msra.mxu0 %v694
  %1274 = vmatpush.msra.mxu0 %v690
  %1275 = vmatpush.msra.mxu0 %v686
  %1276 = vmatpush.msra.mxu0 %v682
  %1277 = vmatpush.msra.mxu0 %v678
  %1278 = vmatpush.msra.mxu0 %v674
  %1279 = vmatpush.msra.mxu0 %v670
  %1280 = vmatmul.f32.gmra.mxu0 %v24
  %v1281 = vpop.f32.mrf.mxu0
  %v1282 = vadd.f32 %v1262, %v1281
  %1283 = vdwg.mxu0
  %1284 = vmatpush.msra.mxu0 %v794
  %1285 = vmatpush.msra.mxu0 %v790
  %1286 = vmatpush.msra.mxu0 %v786
  %1287 = vmatpush.msra.mxu0 %v782
  %1288 = vmatpush.msra.mxu0 %v778
  %1289 = vmatpush.msra.mxu0 %v774
  %1290 = vmatpush.msra.mxu0 %v770
  %1291 = vmatpush.msra.mxu0 %v766
  %1292 = vmatpush.msra.mxu0 %v762
  %1293 = vmatpush.msra.mxu0 %v758
  %1294 = vmatpush.msra.mxu0 %v754
  %1295 = vmatpush.msra.mxu0 %v750
  %1296 = vmatpush.msra.mxu0 %v746
  %1297 = vmatpush.msra.mxu0 %v742
  %1298 = vmatpush.msra.mxu0 %v738
  %1299 = vmatpush.msra.mxu0 %v734
  %1300 = vmatmul.f32.gmra.mxu0 %v25
  %v1301 = vpop.f32.mrf.mxu0
  %v1302 = vadd.f32 %v1282, %v1301
  %1303 = vdwg.mxu0
  %1304 = vmatpush.msra.mxu0 %v858
  %1305 = vmatpush.msra.mxu0 %v854
  %1306 = vmatpush.msra.mxu0 %v850
  %1307 = vmatpush.msra.mxu0 %v846
  %1308 = vmatpush.msra.mxu0 %v842
  %1309 = vmatpush.msra.mxu0 %v838
  %1310 = vmatpush.msra.mxu0 %v834
  %1311 = vmatpush.msra.mxu0 %v830
  %1312 = vmatpush.msra.mxu0 %v826
  %1313 = vmatpush.msra.mxu0 %v822
  %1314 = vmatpush.msra.mxu0 %v818
  %1315 = vmatpush.msra.mxu0 %v814
  %1316 = vmatpush.msra.mxu0 %v810
  %1317 = vmatpush.msra.mxu0 %v806
  %1318 = vmatpush.msra.mxu0 %v802
  %1319 = vmatpush.msra.mxu0 %v798
  %1320 = vmatmul.f32.gmra.mxu0 %v26
  %v1321 = vpop.f32.mrf.mxu0
  %v1322 = vadd.f32 %v1302, %v1321
  %1323 = vdwg.mxu0
  %1324 = vmatpush.msra.mxu0 %v922
  %1325 = vmatpush.msra.mxu0 %v918
  %1326 = vmatpush.msra.mxu0 %v914
  %1327 = vmatpush.msra.mxu0 %v910
  %1328 = vmatpush.msra.mxu0 %v906
  %1329 = vmatpush.msra.mxu0 %v902
  %1330 = vmatpush.msra.mxu0 %v898
  %1331 = vmatpush.msra.mxu0 %v894
  %1332 = vmatpush.msra.mxu0 %v890
  %1333 = vmatpush.msra.mxu0 %v886
  %1334 = vmatpush.msra.mxu0 %v882
  %1335 = vmatpush.msra.mxu0 %v878
  %1336 = vmatpush.msra.mxu0 %v874
  %1337 = vmatpush.msra.mxu0 %v870
  %1338 = vmatpush.msra.mxu0 %v866
  %1339 = vmatpush.msra.mxu0 %v862
  %1340 = vmatmul.f32.gmra.mxu0 %v27
  %v1341 = vpop.f32.mrf.mxu0
  %v1342 = vadd.f32 %v1322, %v1341
  %1343 = vdwg.mxu0
  %1344 = vmatpush.msra.mxu0 %v986
  %1345 = vmatpush.msra.mxu0 %v982
  %1346 = vmatpush.msra.mxu0 %v978
  %1347 = vmatpush.msra.mxu0 %v974
  %1348 = vmatpush.msra.mxu0 %v970
  %1349 = vmatpush.msra.mxu0 %v966
  %1350 = vmatpush.msra.mxu0 %v962
  %1351 = vmatpush.msra.mxu0 %v958
  %1352 = vmatpush.msra.mxu0 %v954
  %1353 = vmatpush.msra.mxu0 %v950
  %1354 = vmatpush.msra.mxu0 %v946
  %1355 = vmatpush.msra.mxu0 %v942
  %1356 = vmatpush.msra.mxu0 %v938
  %1357 = vmatpush.msra.mxu0 %v934
  %1358 = vmatpush.msra.mxu0 %v930
  %1359 = vmatpush.msra.mxu0 %v926
  %1360 = vmatmul.f32.gmra.mxu0 %v28
  %v1361 = vpop.f32.mrf.mxu0
  %v1362 = vadd.f32 %v1342, %v1361
  %1363 = vdwg.mxu0
  %1364 = vmatpush.msra.mxu0 %v1050
  %1365 = vmatpush.msra.mxu0 %v1046
  %1366 = vmatpush.msra.mxu0 %v1042
  %1367 = vmatpush.msra.mxu0 %v1038
  %1368 = vmatpush.msra.mxu0 %v1034
  %1369 = vmatpush.msra.mxu0 %v1030
  %1370 = vmatpush.msra.mxu0 %v1026
  %1371 = vmatpush.msra.mxu0 %v1022
  %1372 = vmatpush.msra.mxu0 %v1018
  %1373 = vmatpush.msra.mxu0 %v1014
  %1374 = vmatpush.msra.mxu0 %v1010
  %1375 = vmatpush.msra.mxu0 %v1006
  %1376 = vmatpush.msra.mxu0 %v1002
  %1377 = vmatpush.msra.mxu0 %v998
  %1378 = vmatpush.msra.mxu0 %v994
  %1379 = vmatpush.msra.mxu0 %v990
  %1380 = vmatmul.f32.gmra.mxu0 %v29
  %v1381 = vpop.f32.mrf.mxu0
  %v1382 = vadd.f32 %v1362, %v1381
  %1383 = vdwg.mxu0
  %1384 = vmatpush.msra.mxu0 %v91
  %1385 = vmatpush.msra.mxu0 %v87
  %1386 = vmatpush.msra.mxu0 %v83
  %1387 = vmatpush.msra.mxu0 %v79
  %1388 = vmatpush.msra.mxu0 %v75
  %1389 = vmatpush.msra.mxu0 %v71
  %1390 = vmatpush.msra.mxu0 %v67
  %1391 = vmatpush.msra.mxu0 %v63
  %1392 = vmatpush.msra.mxu0 %v59
  %1393 = vmatpush.msra.mxu0 %v55
  %1394 = vmatpush.msra.mxu0 %v51
  %1395 = vmatpush.msra.mxu0 %v47
  %1396 = vmatpush.msra.mxu0 %v43
  %1397 = vmatpush.msra.mxu0 %v39
  %1398 = vmatpush.msra.mxu0 %v35
  %1399 = vmatpush.msra.mxu0 %v31
  %1400 = vmatmul.f32.gmra.mxu0 %v14
  %v1401 = vpop.f32.mrf.mxu0
  %v1402 = vadd.f32 %v1057, %v1401
  %1403 = vdwg.mxu0
  %1404 = vmatpush.msra.mxu0 %v155
  %1405 = vmatpush.msra.mxu0 %v151
  %1406 = vmatpush.msra.mxu0 %v147
  %1407 = vmatpush.msra.mxu0 %v143
  %1408 = vmatpush.msra.mxu0 %v139
  %1409 = vmatpush.msra.mxu0 %v135
  %1410 = vmatpush.msra.mxu0 %v131
  %1411 = vmatpush.msra.mxu0 %v127
  %1412 = vmatpush.msra.mxu0 %v123
  %1413 = vmatpush.msra.mxu0 %v119
  %1414 = vmatpush.msra.mxu0 %v115
  %1415 = vmatpush.msra.mxu0 %v111
  %1416 = vmatpush.msra.mxu0 %v107
  %1417 = vmatpush.msra.mxu0 %v103
  %1418 = vmatpush.msra.mxu0 %v99
  %1419 = vmatpush.msra.mxu0 %v95
  %1420 = vmatmul.f32.gmra.mxu0 %v15
  %v1421 = vpop.f32.mrf.mxu0
  %v1422 = vadd.f32 %v1402, %v1421
  %1423 = vdwg.mxu0
  %1424 = vmatpush.msra.mxu0 %v219
  %1425 = vmatpush.msra.mxu0 %v215
  %1426 = vmatpush.msra.mxu0 %v211
  %1427 = vmatpush.msra.mxu0 %v207
  %1428 = vmatpush.msra.mxu0 %v203
  %1429 = vmatpush.msra.mxu0 %v199
  %1430 = vmatpush.msra.mxu0 %v195
  %1431 = vmatpush.msra.mxu0 %v191
  %1432 = vmatpush.msra.mxu0 %v187
  %1433 = vmatpush.msra.mxu0 %v183
  %1434 = vmatpush.msra.mxu0 %v179
  %1435 = vmatpush.msra.mxu0 %v175
  %1436 = vmatpush.msra.mxu0 %v171
  %1437 = vmatpush.msra.mxu0 %v167
  %1438 = vmatpush.msra.mxu0 %v163
  %1439 = vmatpush.msra.mxu0 %v159
  %1440 = vmatmul.f32.gmra.mxu0 %v16
  %v1441 = vpop.f32.mrf.mxu0
  %v1442 = vadd.f32 %v1422, %v1441
  %1443 = vdwg.mxu0
  %1444 = vmatpush.msra.mxu0 %v283
  %1445 = vmatpush.msra.mxu0 %v279
  %1446 = vmatpush.msra.mxu0 %v275
  %1447 = vmatpush.msra.mxu0 %v271
  %1448 = vmatpush.msra.mxu0 %v267
  %1449 = vmatpush.msra.mxu0 %v263
  %1450 = vmatpush.msra.mxu0 %v259
  %1451 = vmatpush.msra.mxu0 %v255
  %1452 = vmatpush.msra.mxu0 %v251
  %1453 = vmatpush.msra.mxu0 %v247
  %1454 = vmatpush.msra.mxu0 %v243
  %1455 = vmatpush.msra.mxu0 %v239
  %1456 = vmatpush.msra.mxu0 %v235
  %1457 = vmatpush.msra.mxu0 %v231
  %1458 = vmatpush.msra.mxu0 %v227
  %1459 = vmatpush.msra.mxu0 %v223
  %1460 = vmatmul.f32.gmra.mxu0 %v17
  %v1461 = vpop.f32.mrf.mxu0
  %v1462 = vadd.f32 %v1442, %v1461
  %1463 = vdwg.mxu0
  %1464 = vmatpush.msra.mxu0 %v347
  %1465 = vmatpush.msra.mxu0 %v343
  %1466 = vmatpush.msra.mxu0 %v339
  %1467 = vmatpush.msra.mxu0 %v335
  %1468 = vmatpush.msra.mxu0 %v331
  %1469 = vmatpush.msra.mxu0 %v327
  %1470 = vmatpush.msra.mxu0 %v323
  %1471 = vmatpush.msra.mxu0 %v319
  %1472 = vmatpush.msra.mxu0 %v315
  %1473 = vmatpush.msra.mxu0 %v311
  %1474 = vmatpush.msra.mxu0 %v307
  %1475 = vmatpush.msra.mxu0 %v303
  %1476 = vmatpush.msra.mxu0 %v299
  %1477 = vmatpush.msra.mxu0 %v295
  %1478 = vmatpush.msra.mxu0 %v291
  %1479 = vmatpush.msra.mxu0 %v287
  %1480 = vmatmul.f32.gmra.mxu0 %v18
  %v1481 = vpop.f32.mrf.mxu0
  %v1482 = vadd.f32 %v1462, %v1481
  %1483 = vdwg.mxu0
  %1484 = vmatpush.msra.mxu0 %v411
  %1485 = vmatpush.msra.mxu0 %v407
  %1486 = vmatpush.msra.mxu0 %v403
  %1487 = vmatpush.msra.mxu0 %v399
  %1488 = vmatpush.msra.mxu0 %v395
  %1489 = vmatpush.msra.mxu0 %v391
  %1490 = vmatpush.msra.mxu0 %v387
  %1491 = vmatpush.msra.mxu0 %v383
  %1492 = vmatpush.msra.mxu0 %v379
  %1493 = vmatpush.msra.mxu0 %v375
  %1494 = vmatpush.msra.mxu0 %v371
  %1495 = vmatpush.msra.mxu0 %v367
  %1496 = vmatpush.msra.mxu0 %v363
  %1497 = vmatpush.msra.mxu0 %v359
  %1498 = vmatpush.msra.mxu0 %v355
  %1499 = vmatpush.msra.mxu0 %v351
  %1500 = vmatmul.f32.gmra.mxu0 %v19
  %v1501 = vpop.f32.mrf.mxu0
  %v1502 = vadd.f32 %v1482, %v1501
  %1503 = vdwg.mxu0
  %1504 = vmatpush.msra.mxu0 %v475
  %1505 = vmatpush.msra.mxu0 %v471
  %1506 = vmatpush.msra.mxu0 %v467
  %1507 = vmatpush.msra.mxu0 %v463
  %1508 = vmatpush.msra.mxu0 %v459
  %1509 = vmatpush.msra.mxu0 %v455
  %1510 = vmatpush.msra.mxu0 %v451
  %1511 = vmatpush.msra.mxu0 %v447
  %1512 = vmatpush.msra.mxu0 %v443
  %1513 = vmatpush.msra.mxu0 %v439
  %1514 = vmatpush.msra.mxu0 %v435
  %1515 = vmatpush.msra.mxu0 %v431
  %1516 = vmatpush.msra.mxu0 %v427
  %1517 = vmatpush.msra.mxu0 %v423
  %1518 = vmatpush.msra.mxu0 %v419
  %1519 = vmatpush.msra.mxu0 %v415
  %1520 = vmatmul.f32.gmra.mxu0 %v20
  %v1521 = vpop.f32.mrf.mxu0
  %v1522 = vadd.f32 %v1502, %v1521
  %1523 = vdwg.mxu0
  %1524 = vmatpush.msra.mxu0 %v539
  %1525 = vmatpush.msra.mxu0 %v535
  %1526 = vmatpush.msra.mxu0 %v531
  %1527 = vmatpush.msra.mxu0 %v527
  %1528 = vmatpush.msra.mxu0 %v523
  %1529 = vmatpush.msra.mxu0 %v519
  %1530 = vmatpush.msra.mxu0 %v515
  %1531 = vmatpush.msra.mxu0 %v511
  %1532 = vmatpush.msra.mxu0 %v507
  %1533 = vmatpush.msra.mxu0 %v503
  %1534 = vmatpush.msra.mxu0 %v499
  %1535 = vmatpush.msra.mxu0 %v495
  %1536 = vmatpush.msra.mxu0 %v491
  %1537 = vmatpush.msra.mxu0 %v487
  %1538 = vmatpush.msra.mxu0 %v483
  %1539 = vmatpush.msra.mxu0 %v479
  %1540 = vmatmul.f32.gmra.mxu0 %v21
  %v1541 = vpop.f32.mrf.mxu0
  %v1542 = vadd.f32 %v1522, %v1541
  %1543 = vdwg.mxu0
  %1544 = vmatpush.msra.mxu0 %v603
  %1545 = vmatpush.msra.mxu0 %v599
  %1546 = vmatpush.msra.mxu0 %v595
  %1547 = vmatpush.msra.mxu0 %v591
  %1548 = vmatpush.msra.mxu0 %v587
  %1549 = vmatpush.msra.mxu0 %v583
  %1550 = vmatpush.msra.mxu0 %v579
  %1551 = vmatpush.msra.mxu0 %v575
  %1552 = vmatpush.msra.mxu0 %v571
  %1553 = vmatpush.msra.mxu0 %v567
  %1554 = vmatpush.msra.mxu0 %v563
  %1555 = vmatpush.msra.mxu0 %v559
  %1556 = vmatpush.msra.mxu0 %v555
  %1557 = vmatpush.msra.mxu0 %v551
  %1558 = vmatpush.msra.mxu0 %v547
  %1559 = vmatpush.msra.mxu0 %v543
  %1560 = vmatmul.f32.gmra.mxu0 %v22
  %v1561 = vpop.f32.mrf.mxu0
  %v1562 = vadd.f32 %v1542, %v1561
  %1563 = vdwg.mxu0
  %1564 = vmatpush.msra.mxu0 %v667
  %1565 = vmatpush.msra.mxu0 %v663
  %1566 = vmatpush.msra.mxu0 %v659
  %1567 = vmatpush.msra.mxu0 %v655
  %1568 = vmatpush.msra.mxu0 %v651
  %1569 = vmatpush.msra.mxu0 %v647
  %1570 = vmatpush.msra.mxu0 %v643
  %1571 = vmatpush.msra.mxu0 %v639
  %1572 = vmatpush.msra.mxu0 %v635
  %1573 = vmatpush.msra.mxu0 %v631
  %1574 = vmatpush.msra.mxu0 %v627
  %1575 = vmatpush.msra.mxu0 %v623
  %1576 = vmatpush.msra.mxu0 %v619
  %1577 = vmatpush.msra.mxu0 %v615
  %1578 = vmatpush.msra.mxu0 %v611
  %1579 = vmatpush.msra.mxu0 %v607
  %1580 = vmatmul.f32.gmra.mxu0 %v23
  %v1581 = vpop.f32.mrf.mxu0
  %v1582 = vadd.f32 %v1562, %v1581
  %1583 = vdwg.mxu0
  %1584 = vmatpush.msra.mxu0 %v731
  %1585 = vmatpush.msra.mxu0 %v727
  %1586 = vmatpush.msra.mxu0 %v723
  %1587 = vmatpush.msra.mxu0 %v719
  %1588 = vmatpush.msra.mxu0 %v715
  %1589 = vmatpush.msra.mxu0 %v711
  %1590 = vmatpush.msra.mxu0 %v707
  %1591 = vmatpush.msra.mxu0 %v703
  %1592 = vmatpush.msra.mxu0 %v699
  %1593 = vmatpush.msra.mxu0 %v695
  %1594 = vmatpush.msra.mxu0 %v691
  %1595 = vmatpush.msra.mxu0 %v687
  %1596 = vmatpush.msra.mxu0 %v683
  %1597 = vmatpush.msra.mxu0 %v679
  %1598 = vmatpush.msra.mxu0 %v675
  %1599 = vmatpush.msra.mxu0 %v671
  %1600 = vmatmul.f32.gmra.mxu0 %v24
  %v1601 = vpop.f32.mrf.mxu0
  %v1602 = vadd.f32 %v1582, %v1601
  %1603 = vdwg.mxu0
  %1604 = vmatpush.msra.mxu0 %v795
  %1605 = vmatpush.msra.mxu0 %v791
  %1606 = vmatpush.msra.mxu0 %v787
  %1607 = vmatpush.msra.mxu0 %v783
  %1608 = vmatpush.msra.mxu0 %v779
  %1609 = vmatpush.msra.mxu0 %v775
  %1610 = vmatpush.msra.mxu0 %v771
  %1611 = vmatpush.msra.mxu0 %v767
  %1612 = vmatpush.msra.mxu0 %v763
  %1613 = vmatpush.msra.mxu0 %v759
  %1614 = vmatpush.msra.mxu0 %v755
  %1615 = vmatpush.msra.mxu0 %v751
  %1616 = vmatpush.msra.mxu0 %v747
  %1617 = vmatpush.msra.mxu0 %v743
  %1618 = vmatpush.msra.mxu0 %v739
  %1619 = vmatpush.msra.mxu0 %v735
  %1620 = vmatmul.f32.gmra.mxu0 %v25
  %v1621 = vpop.f32.mrf.mxu0
  %v1622 = vadd.f32 %v1602, %v1621
  %1623 = vdwg.mxu0
  %1624 = vmatpush.msra.mxu0 %v859
  %1625 = vmatpush.msra.mxu0 %v855
  %1626 = vmatpush.msra.mxu0 %v851
  %1627 = vmatpush.msra.mxu0 %v847
  %1628 = vmatpush.msra.mxu0 %v843
  %1629 = vmatpush.msra.mxu0 %v839
  %1630 = vmatpush.msra.mxu0 %v835
  %1631 = vmatpush.msra.mxu0 %v831
  %1632 = vmatpush.msra.mxu0 %v827
  %1633 = vmatpush.msra.mxu0 %v823
  %1634 = vmatpush.msra.mxu0 %v819
  %1635 = vmatpush.msra.mxu0 %v815
  %1636 = vmatpush.msra.mxu0 %v811
  %1637 = vmatpush.msra.mxu0 %v807
  %1638 = vmatpush.msra.mxu0 %v803
  %1639 = vmatpush.msra.mxu0 %v799
  %1640 = vmatmul.f32.gmra.mxu0 %v26
  %v1641 = vpop.f32.mrf.mxu0
  %v1642 = vadd.f32 %v1622, %v1641
  %1643 = vdwg.mxu0
  %1644 = vmatpush.msra.mxu0 %v923
  %1645 = vmatpush.msra.mxu0 %v919
  %1646 = vmatpush.msra.mxu0 %v915
  %1647 = vmatpush.msra.mxu0 %v911
  %1648 = vmatpush.msra.mxu0 %v907
  %1649 = vmatpush.msra.mxu0 %v903
  %1650 = vmatpush.msra.mxu0 %v899
  %1651 = vmatpush.msra.mxu0 %v895
  %1652 = vmatpush.msra.mxu0 %v891
  %1653 = vmatpush.msra.mxu0 %v887
  %1654 = vmatpush.msra.mxu0 %v883
  %1655 = vmatpush.msra.mxu0 %v879
  %1656 = vmatpush.msra.mxu0 %v875
  %1657 = vmatpush.msra.mxu0 %v871
  %1658 = vmatpush.msra.mxu0 %v867
  %1659 = vmatpush.msra.mxu0 %v863
  %1660 = vmatmul.f32.gmra.mxu0 %v27
  %v1661 = vpop.f32.mrf.mxu0
  %v1662 = vadd.f32 %v1642, %v1661
  %1663 = vdwg.mxu0
  %1664 = vmatpush.msra.mxu0 %v987
  %1665 = vmatpush.msra.mxu0 %v983
  %1666 = vmatpush.msra.mxu0 %v979
  %1667 = vmatpush.msra.mxu0 %v975
  %1668 = vmatpush.msra.mxu0 %v971
  %1669 = vmatpush.msra.mxu0 %v967
  %1670 = vmatpush.msra.mxu0 %v963
  %1671 = vmatpush.msra.mxu0 %v959
  %1672 = vmatpush.msra.mxu0 %v955
  %1673 = vmatpush.msra.mxu0 %v951
  %1674 = vmatpush.msra.mxu0 %v947
  %1675 = vmatpush.msra.mxu0 %v943
  %1676 = vmatpush.msra.mxu0 %v939
  %1677 = vmatpush.msra.mxu0 %v935
  %1678 = vmatpush.msra.mxu0 %v931
  %1679 = vmatpush.msra.mxu0 %v927
  %1680 = vmatmul.f32.gmra.mxu0 %v28
  %v1681 = vpop.f32.mrf.mxu0
  %v1682 = vadd.f32 %v1662, %v1681
  %1683 = vdwg.mxu0
  %1684 = vmatpush.msra.mxu0 %v1051
  %1685 = vmatpush.msra.mxu0 %v1047
  %1686 = vmatpush.msra.mxu0 %v1043
  %1687 = vmatpush.msra.mxu0 %v1039
  %1688 = vmatpush.msra.mxu0 %v1035
  %1689 = vmatpush.msra.mxu0 %v1031
  %1690 = vmatpush.msra.mxu0 %v1027
  %1691 = vmatpush.msra.mxu0 %v1023
  %1692 = vmatpush.msra.mxu0 %v1019
  %1693 = vmatpush.msra.mxu0 %v1015
  %1694 = vmatpush.msra.mxu0 %v1011
  %1695 = vmatpush.msra.mxu0 %v1007
  %1696 = vmatpush.msra.mxu0 %v1003
  %1697 = vmatpush.msra.mxu0 %v999
  %1698 = vmatpush.msra.mxu0 %v995
  %1699 = vmatpush.msra.mxu0 %v991
  %1700 = vmatmul.f32.gmra.mxu0 %v29
  %v1701 = vpop.f32.mrf.mxu0
  %v1702 = vadd.f32 %v1682, %v1701
  %1703 = vdwg.mxu0
  %1704 = vmatpush.msra.mxu0 %v92
  %1705 = vmatpush.msra.mxu0 %v88
  %1706 = vmatpush.msra.mxu0 %v84
  %1707 = vmatpush.msra.mxu0 %v80
  %1708 = vmatpush.msra.mxu0 %v76
  %1709 = vmatpush.msra.mxu0 %v72
  %1710 = vmatpush.msra.mxu0 %v68
  %1711 = vmatpush.msra.mxu0 %v64
  %1712 = vmatpush.msra.mxu0 %v60
  %1713 = vmatpush.msra.mxu0 %v56
  %1714 = vmatpush.msra.mxu0 %v52
  %1715 = vmatpush.msra.mxu0 %v48
  %1716 = vmatpush.msra.mxu0 %v44
  %1717 = vmatpush.msra.mxu0 %v40
  %1718 = vmatpush.msra.mxu0 %v36
  %1719 = vmatpush.msra.mxu0 %v32
  %1720 = vmatmul.f32.gmra.mxu0 %v14
  %v1721 = vpop.f32.mrf.mxu0
  %v1722 = vadd.f32 %v1058, %v1721
  %1723 = vdwg.mxu0
  %1724 = vmatpush.msra.mxu0 %v156
  %1725 = vmatpush.msra.mxu0 %v152
  %1726 = vmatpush.msra.mxu0 %v148
  %1727 = vmatpush.msra.mxu0 %v144
  %1728 = vmatpush.msra.mxu0 %v140
  %1729 = vmatpush.msra.mxu0 %v136
  %1730 = vmatpush.msra.mxu0 %v132
  %1731 = vmatpush.msra.mxu0 %v128
  %1732 = vmatpush.msra.mxu0 %v124
  %1733 = vmatpush.msra.mxu0 %v120
  %1734 = vmatpush.msra.mxu0 %v116
  %1735 = vmatpush.msra.mxu0 %v112
  %1736 = vmatpush.msra.mxu0 %v108
  %1737 = vmatpush.msra.mxu0 %v104
  %1738 = vmatpush.msra.mxu0 %v100
  %1739 = vmatpush.msra.mxu0 %v96
  %1740 = vmatmul.f32.gmra.mxu0 %v15
  %v1741 = vpop.f32.mrf.mxu0
  %v1742 = vadd.f32 %v1722, %v1741
  %1743 = vdwg.mxu0
  %1744 = vmatpush.msra.mxu0 %v220
  %1745 = vmatpush.msra.mxu0 %v216
  %1746 = vmatpush.msra.mxu0 %v212
  %1747 = vmatpush.msra.mxu0 %v208
  %1748 = vmatpush.msra.mxu0 %v204
  %1749 = vmatpush.msra.mxu0 %v200
  %1750 = vmatpush.msra.mxu0 %v196
  %1751 = vmatpush.msra.mxu0 %v192
  %1752 = vmatpush.msra.mxu0 %v188
  %1753 = vmatpush.msra.mxu0 %v184
  %1754 = vmatpush.msra.mxu0 %v180
  %1755 = vmatpush.msra.mxu0 %v176
  %1756 = vmatpush.msra.mxu0 %v172
  %1757 = vmatpush.msra.mxu0 %v168
  %1758 = vmatpush.msra.mxu0 %v164
  %1759 = vmatpush.msra.mxu0 %v160
  %1760 = vmatmul.f32.gmra.mxu0 %v16
  %v1761 = vpop.f32.mrf.mxu0
  %v1762 = vadd.f32 %v1742, %v1761
  %1763 = vdwg.mxu0
  %1764 = vmatpush.msra.mxu0 %v284
  %1765 = vmatpush.msra.mxu0 %v280
  %1766 = vmatpush.msra.mxu0 %v276
  %1767 = vmatpush.msra.mxu0 %v272
  %1768 = vmatpush.msra.mxu0 %v268
  %1769 = vmatpush.msra.mxu0 %v264
  %1770 = vmatpush.msra.mxu0 %v260
  %1771 = vmatpush.msra.mxu0 %v256
  %1772 = vmatpush.msra.mxu0 %v252
  %1773 = vmatpush.msra.mxu0 %v248
  %1774 = vmatpush.msra.mxu0 %v244
  %1775 = vmatpush.msra.mxu0 %v240
  %1776 = vmatpush.msra.mxu0 %v236
  %1777 = vmatpush.msra.mxu0 %v232
  %1778 = vmatpush.msra.mxu0 %v228
  %1779 = vmatpush.msra.mxu0 %v224
  %1780 = vmatmul.f32.gmra.mxu0 %v17
  %v1781 = vpop.f32.mrf.mxu0
  %v1782 = vadd.f32 %v1762, %v1781
  %1783 = vdwg.mxu0
  %1784 = vmatpush.msra.mxu0 %v348
  %1785 = vmatpush.msra.mxu0 %v344
  %1786 = vmatpush.msra.mxu0 %v340
  %1787 = vmatpush.msra.mxu0 %v336
  %1788 = vmatpush.msra.mxu0 %v332
  %1789 = vmatpush.msra.mxu0 %v328
  %1790 = vmatpush.msra.mxu0 %v324
  %1791 = vmatpush.msra.mxu0 %v320
  %1792 = vmatpush.msra.mxu0 %v316
  %1793 = vmatpush.msra.mxu0 %v312
  %1794 = vmatpush.msra.mxu0 %v308
  %1795 = vmatpush.msra.mxu0 %v304
  %1796 = vmatpush.msra.mxu0 %v300
  %1797 = vmatpush.msra.mxu0 %v296
  %1798 = vmatpush.msra.mxu0 %v292
  %1799 = vmatpush.msra.mxu0 %v288
  %1800 = vmatmul.f32.gmra.mxu0 %v18
  %v1801 = vpop.f32.mrf.mxu0
  %v1802 = vadd.f32 %v1782, %v1801
  %1803 = vdwg.mxu0
  %1804 = vmatpush.msra.mxu0 %v412
  %1805 = vmatpush.msra.mxu0 %v408
  %1806 = vmatpush.msra.mxu0 %v404
  %1807 = vmatpush.msra.mxu0 %v400
  %1808 = vmatpush.msra.mxu0 %v396
  %1809 = vmatpush.msra.mxu0 %v392
  %1810 = vmatpush.msra.mxu0 %v388
  %1811 = vmatpush.msra.mxu0 %v384
  %1812 = vmatpush.msra.mxu0 %v380
  %1813 = vmatpush.msra.mxu0 %v376
  %1814 = vmatpush.msra.mxu0 %v372
  %1815 = vmatpush.msra.mxu0 %v368
  %1816 = vmatpush.msra.mxu0 %v364
  %1817 = vmatpush.msra.mxu0 %v360
  %1818 = vmatpush.msra.mxu0 %v356
  %1819 = vmatpush.msra.mxu0 %v352
  %1820 = vmatmul.f32.gmra.mxu0 %v19
  %v1821 = vpop.f32.mrf.mxu0
  %v1822 = vadd.f32 %v1802, %v1821
  %1823 = vdwg.mxu0
  %1824 = vmatpush.msra.mxu0 %v476
  %1825 = vmatpush.msra.mxu0 %v472
  %1826 = vmatpush.msra.mxu0 %v468
  %1827 = vmatpush.msra.mxu0 %v464
  %1828 = vmatpush.msra.mxu0 %v460
  %1829 = vmatpush.msra.mxu0 %v456
  %1830 = vmatpush.msra.mxu0 %v452
  %1831 = vmatpush.msra.mxu0 %v448
  %1832 = vmatpush.msra.mxu0 %v444
  %1833 = vmatpush.msra.mxu0 %v440
  %1834 = vmatpush.msra.mxu0 %v436
  %1835 = vmatpush.msra.mxu0 %v432
  %1836 = vmatpush.msra.mxu0 %v428
  %1837 = vmatpush.msra.mxu0 %v424
  %1838 = vmatpush.msra.mxu0 %v420
  %1839 = vmatpush.msra.mxu0 %v416
  %1840 = vmatmul.f32.gmra.mxu0 %v20
  %v1841 = vpop.f32.mrf.mxu0
  %v1842 = vadd.f32 %v1822, %v1841
  %1843 = vdwg.mxu0
  %1844 = vmatpush.msra.mxu0 %v540
  %1845 = vmatpush.msra.mxu0 %v536
  %1846 = vmatpush.msra.mxu0 %v532
  %1847 = vmatpush.msra.mxu0 %v528
  %1848 = vmatpush.msra.mxu0 %v524
  %1849 = vmatpush.msra.mxu0 %v520
  %1850 = vmatpush.msra.mxu0 %v516
  %1851 = vmatpush.msra.mxu0 %v512
  %1852 = vmatpush.msra.mxu0 %v508
  %1853 = vmatpush.msra.mxu0 %v504
  %1854 = vmatpush.msra.mxu0 %v500
  %1855 = vmatpush.msra.mxu0 %v496
  %1856 = vmatpush.msra.mxu0 %v492
  %1857 = vmatpush.msra.mxu0 %v488
  %1858 = vmatpush.msra.mxu0 %v484
  %1859 = vmatpush.msra.mxu0 %v480
  %1860 = vmatmul.f32.gmra.mxu0 %v21
  %v1861 = vpop.f32.mrf.mxu0
  %v1862 = vadd.f32 %v1842, %v1861
  %1863 = vdwg.mxu0
  %1864 = vmatpush.msra.mxu0 %v604
  %1865 = vmatpush.msra.mxu0 %v600
  %1866 = vmatpush.msra.mxu0 %v596
  %1867 = vmatpush.msra.mxu0 %v592
  %1868 = vmatpush.msra.mxu0 %v588
  %1869 = vmatpush.msra.mxu0 %v584
  %1870 = vmatpush.msra.mxu0 %v580
  %1871 = vmatpush.msra.mxu0 %v576
  %1872 = vmatpush.msra.mxu0 %v572
  %1873 = vmatpush.msra.mxu0 %v568
  %1874 = vmatpush.msra.mxu0 %v564
  %1875 = vmatpush.msra.mxu0 %v560
  %1876 = vmatpush.msra.mxu0 %v556
  %1877 = vmatpush.msra.mxu0 %v552
  %1878 = vmatpush.msra.mxu0 %v548
  %1879 = vmatpush.msra.mxu0 %v544
  %1880 = vmatmul.f32.gmra.mxu0 %v22
  %v1881 = vpop.f32.mrf.mxu0
  %v1882 = vadd.f32 %v1862, %v1881
  %1883 = vdwg.mxu0
  %1884 = vmatpush.msra.mxu0 %v668
  %1885 = vmatpush.msra.mxu0 %v664
  %1886 = vmatpush.msra.mxu0 %v660
  %1887 = vmatpush.msra.mxu0 %v656
  %1888 = vmatpush.msra.mxu0 %v652
  %1889 = vmatpush.msra.mxu0 %v648
  %1890 = vmatpush.msra.mxu0 %v644
  %1891 = vmatpush.msra.mxu0 %v640
  %1892 = vmatpush.msra.mxu0 %v636
  %1893 = vmatpush.msra.mxu0 %v632
  %1894 = vmatpush.msra.mxu0 %v628
  %1895 = vmatpush.msra.mxu0 %v624
  %1896 = vmatpush.msra.mxu0 %v620
  %1897 = vmatpush.msra.mxu0 %v616
  %1898 = vmatpush.msra.mxu0 %v612
  %1899 = vmatpush.msra.mxu0 %v608
  %1900 = vmatmul.f32.gmra.mxu0 %v23
  %v1901 = vpop.f32.mrf.mxu0
  %v1902 = vadd.f32 %v1882, %v1901
  %1903 = vdwg.mxu0
  %1904 = vmatpush.msra.mxu0 %v732
  %1905 = vmatpush.msra.mxu0 %v728
  %1906 = vmatpush.msra.mxu0 %v724
  %1907 = vmatpush.msra.mxu0 %v720
  %1908 = vmatpush.msra.mxu0 %v716
  %1909 = vmatpush.msra.mxu0 %v712
  %1910 = vmatpush.msra.mxu0 %v708
  %1911 = vmatpush.msra.mxu0 %v704
  %1912 = vmatpush.msra.mxu0 %v700
  %1913 = vmatpush.msra.mxu0 %v696
  %1914 = vmatpush.msra.mxu0 %v692
  %1915 = vmatpush.msra.mxu0 %v688
  %1916 = vmatpush.msra.mxu0 %v684
  %1917 = vmatpush.msra.mxu0 %v680
  %1918 = vmatpush.msra.mxu0 %v676
  %1919 = vmatpush.msra.mxu0 %v672
  %1920 = vmatmul.f32.gmra.mxu0 %v24
  %v1921 = vpop.f32.mrf.mxu0
  %v1922 = vadd.f32 %v1902, %v1921
  %1923 = vdwg.mxu0
  %1924 = vmatpush.msra.mxu0 %v796
  %1925 = vmatpush.msra.mxu0 %v792
  %1926 = vmatpush.msra.mxu0 %v788
  %1927 = vmatpush.msra.mxu0 %v784
  %1928 = vmatpush.msra.mxu0 %v780
  %1929 = vmatpush.msra.mxu0 %v776
  %1930 = vmatpush.msra.mxu0 %v772
  %1931 = vmatpush.msra.mxu0 %v768
  %1932 = vmatpush.msra.mxu0 %v764
  %1933 = vmatpush.msra.mxu0 %v760
  %1934 = vmatpush.msra.mxu0 %v756
  %1935 = vmatpush.msra.mxu0 %v752
  %1936 = vmatpush.msra.mxu0 %v748
  %1937 = vmatpush.msra.mxu0 %v744
  %1938 = vmatpush.msra.mxu0 %v740
  %1939 = vmatpush.msra.mxu0 %v736
  %1940 = vmatmul.f32.gmra.mxu0 %v25
  %v1941 = vpop.f32.mrf.mxu0
  %v1942 = vadd.f32 %v1922, %v1941
  %1943 = vdwg.mxu0
  %1944 = vmatpush.msra.mxu0 %v860
  %1945 = vmatpush.msra.mxu0 %v856
  %1946 = vmatpush.msra.mxu0 %v852
  %1947 = vmatpush.msra.mxu0 %v848
  %1948 = vmatpush.msra.mxu0 %v844
  %1949 = vmatpush.msra.mxu0 %v840
  %1950 = vmatpush.msra.mxu0 %v836
  %1951 = vmatpush.msra.mxu0 %v832
  %1952 = vmatpush.msra.mxu0 %v828
  %1953 = vmatpush.msra.mxu0 %v824
  %1954 = vmatpush.msra.mxu0 %v820
  %1955 = vmatpush.msra.mxu0 %v816
  %1956 = vmatpush.msra.mxu0 %v812
  %1957 = vmatpush.msra.mxu0 %v808
  %1958 = vmatpush.msra.mxu0 %v804
  %1959 = vmatpush.msra.mxu0 %v800
  %1960 = vmatmul.f32.gmra.mxu0 %v26
  %v1961 = vpop.f32.mrf.mxu0
  %v1962 = vadd.f32 %v1942, %v1961
  %1963 = vdwg.mxu0
  %1964 = vmatpush.msra.mxu0 %v924
  %1965 = vmatpush.msra.mxu0 %v920
  %1966 = vmatpush.msra.mxu0 %v916
  %1967 = vmatpush.msra.mxu0 %v912
  %1968 = vmatpush.msra.mxu0 %v908
  %1969 = vmatpush.msra.mxu0 %v904
  %1970 = vmatpush.msra.mxu0 %v900
  %1971 = vmatpush.msra.mxu0 %v896
  %1972 = vmatpush.msra.mxu0 %v892
  %1973 = vmatpush.msra.mxu0 %v888
  %1974 = vmatpush.msra.mxu0 %v884
  %1975 = vmatpush.msra.mxu0 %v880
  %1976 = vmatpush.msra.mxu0 %v876
  %1977 = vmatpush.msra.mxu0 %v872
  %1978 = vmatpush.msra.mxu0 %v868
  %1979 = vmatpush.msra.mxu0 %v864
  %1980 = vmatmul.f32.gmra.mxu0 %v27
  %v1981 = vpop.f32.mrf.mxu0
  %v1982 = vadd.f32 %v1962, %v1981
  %1983 = vdwg.mxu0
  %1984 = vmatpush.msra.mxu0 %v988
  %1985 = vmatpush.msra.mxu0 %v984
  %1986 = vmatpush.msra.mxu0 %v980
  %1987 = vmatpush.msra.mxu0 %v976
  %1988 = vmatpush.msra.mxu0 %v972
  %1989 = vmatpush.msra.mxu0 %v968
  %1990 = vmatpush.msra.mxu0 %v964
  %1991 = vmatpush.msra.mxu0 %v960
  %1992 = vmatpush.msra.mxu0 %v956
  %1993 = vmatpush.msra.mxu0 %v952
  %1994 = vmatpush.msra.mxu0 %v948
  %1995 = vmatpush.msra.mxu0 %v944
  %1996 = vmatpush.msra.mxu0 %v940
  %1997 = vmatpush.msra.mxu0 %v936
  %1998 = vmatpush.msra.mxu0 %v932
  %1999 = vmatpush.msra.mxu0 %v928
  %2000 = vmatmul.f32.gmra.mxu0 %v28
  %v2001 = vpop.f32.mrf.mxu0
  %v2002 = vadd.f32 %v1982, %v2001
  %2003 = vdwg.mxu0
  %2004 = vmatpush.msra.mxu0 %v1052
  %2005 = vmatpush.msra.mxu0 %v1048
  %2006 = vmatpush.msra.mxu0 %v1044
  %2007 = vmatpush.msra.mxu0 %v1040
  %2008 = vmatpush.msra.mxu0 %v1036
  %2009 = vmatpush.msra.mxu0 %v1032
  %2010 = vmatpush.msra.mxu0 %v1028
  %2011 = vmatpush.msra.mxu0 %v1024
  %2012 = vmatpush.msra.mxu0 %v1020
  %2013 = vmatpush.msra.mxu0 %v1016
  %2014 = vmatpush.msra.mxu0 %v1012
  %2015 = vmatpush.msra.mxu0 %v1008
  %2016 = vmatpush.msra.mxu0 %v1004
  %2017 = vmatpush.msra.mxu0 %v1000
  %2018 = vmatpush.msra.mxu0 %v996
  %2019 = vmatpush.msra.mxu0 %v992
  %2020 = vmatmul.f32.gmra.mxu0 %v29
  %v2021 = vpop.f32.mrf.mxu0
  %v2022 = vadd.f32 %v2002, %v2021
  %2023 = vdwg.mxu0
  %2024 = vmatpush.msra.mxu0 %v93
  %2025 = vmatpush.msra.mxu0 %v89
  %2026 = vmatpush.msra.mxu0 %v85
  %2027 = vmatpush.msra.mxu0 %v81
  %2028 = vmatpush.msra.mxu0 %v77
  %2029 = vmatpush.msra.mxu0 %v73
  %2030 = vmatpush.msra.mxu0 %v69
  %2031 = vmatpush.msra.mxu0 %v65
  %2032 = vmatpush.msra.mxu0 %v61
  %2033 = vmatpush.msra.mxu0 %v57
  %2034 = vmatpush.msra.mxu0 %v53
  %2035 = vmatpush.msra.mxu0 %v49
  %2036 = vmatpush.msra.mxu0 %v45
  %2037 = vmatpush.msra.mxu0 %v41
  %2038 = vmatpush.msra.mxu0 %v37
  %2039 = vmatpush.msra.mxu0 %v33
  %2040 = vmatmul.f32.gmra.mxu0 %v14
  %v2041 = vpop.f32.mrf.mxu0
  %v2042 = vadd.f32 %v1059, %v2041
  %2043 = vdwg.mxu0
  %2044 = vmatpush.msra.mxu0 %v157
  %2045 = vmatpush.msra.mxu0 %v153
  %2046 = vmatpush.msra.mxu0 %v149
  %2047 = vmatpush.msra.mxu0 %v145
  %2048 = vmatpush.msra.mxu0 %v141
  %2049 = vmatpush.msra.mxu0 %v137
  %2050 = vmatpush.msra.mxu0 %v133
  %2051 = vmatpush.msra.mxu0 %v129
  %2052 = vmatpush.msra.mxu0 %v125
  %2053 = vmatpush.msra.mxu0 %v121
  %2054 = vmatpush.msra.mxu0 %v117
  %2055 = vmatpush.msra.mxu0 %v113
  %2056 = vmatpush.msra.mxu0 %v109
  %2057 = vmatpush.msra.mxu0 %v105
  %2058 = vmatpush.msra.mxu0 %v101
  %2059 = vmatpush.msra.mxu0 %v97
  %2060 = vmatmul.f32.gmra.mxu0 %v15
  %v2061 = vpop.f32.mrf.mxu0
  %v2062 = vadd.f32 %v2042, %v2061
  %2063 = vdwg.mxu0
  %2064 = vmatpush.msra.mxu0 %v221
  %2065 = vmatpush.msra.mxu0 %v217
  %2066 = vmatpush.msra.mxu0 %v213
  %2067 = vmatpush.msra.mxu0 %v209
  %2068 = vmatpush.msra.mxu0 %v205
  %2069 = vmatpush.msra.mxu0 %v201
  %2070 = vmatpush.msra.mxu0 %v197
  %2071 = vmatpush.msra.mxu0 %v193
  %2072 = vmatpush.msra.mxu0 %v189
  %2073 = vmatpush.msra.mxu0 %v185
  %2074 = vmatpush.msra.mxu0 %v181
  %2075 = vmatpush.msra.mxu0 %v177
  %2076 = vmatpush.msra.mxu0 %v173
  %2077 = vmatpush.msra.mxu0 %v169
  %2078 = vmatpush.msra.mxu0 %v165
  %2079 = vmatpush.msra.mxu0 %v161
  %2080 = vmatmul.f32.gmra.mxu0 %v16
  %v2081 = vpop.f32.mrf.mxu0
  %v2082 = vadd.f32 %v2062, %v2081
  %2083 = vdwg.mxu0
  %2084 = vmatpush.msra.mxu0 %v285
  %2085 = vmatpush.msra.mxu0 %v281
  %2086 = vmatpush.msra.mxu0 %v277
  %2087 = vmatpush.msra.mxu0 %v273
  %2088 = vmatpush.msra.mxu0 %v269
  %2089 = vmatpush.msra.mxu0 %v265
  %2090 = vmatpush.msra.mxu0 %v261
  %2091 = vmatpush.msra.mxu0 %v257
  %2092 = vmatpush.msra.mxu0 %v253
  %2093 = vmatpush.msra.mxu0 %v249
  %2094 = vmatpush.msra.mxu0 %v245
  %2095 = vmatpush.msra.mxu0 %v241
  %2096 = vmatpush.msra.mxu0 %v237
  %2097 = vmatpush.msra.mxu0 %v233
  %2098 = vmatpush.msra.mxu0 %v229
  %2099 = vmatpush.msra.mxu0 %v225
  %2100 = vmatmul.f32.gmra.mxu0 %v17
  %v2101 = vpop.f32.mrf.mxu0
  %v2102 = vadd.f32 %v2082, %v2101
  %2103 = vdwg.mxu0
  %2104 = vmatpush.msra.mxu0 %v349
  %2105 = vmatpush.msra.mxu0 %v345
  %2106 = vmatpush.msra.mxu0 %v341
  %2107 = vmatpush.msra.mxu0 %v337
  %2108 = vmatpush.msra.mxu0 %v333
  %2109 = vmatpush.msra.mxu0 %v329
  %2110 = vmatpush.msra.mxu0 %v325
  %2111 = vmatpush.msra.mxu0 %v321
  %2112 = vmatpush.msra.mxu0 %v317
  %2113 = vmatpush.msra.mxu0 %v313
  %2114 = vmatpush.msra.mxu0 %v309
  %2115 = vmatpush.msra.mxu0 %v305
  %2116 = vmatpush.msra.mxu0 %v301
  %2117 = vmatpush.msra.mxu0 %v297
  %2118 = vmatpush.msra.mxu0 %v293
  %2119 = vmatpush.msra.mxu0 %v289
  %2120 = vmatmul.f32.gmra.mxu0 %v18
  %v2121 = vpop.f32.mrf.mxu0
  %v2122 = vadd.f32 %v2102, %v2121
  %2123 = vdwg.mxu0
  %2124 = vmatpush.msra.mxu0 %v413
  %2125 = vmatpush.msra.mxu0 %v409
  %2126 = vmatpush.msra.mxu0 %v405
  %2127 = vmatpush.msra.mxu0 %v401
  %2128 = vmatpush.msra.mxu0 %v397
  %2129 = vmatpush.msra.mxu0 %v393
  %2130 = vmatpush.msra.mxu0 %v389
  %2131 = vmatpush.msra.mxu0 %v385
  %2132 = vmatpush.msra.mxu0 %v381
  %2133 = vmatpush.msra.mxu0 %v377
  %2134 = vmatpush.msra.mxu0 %v373
  %2135 = vmatpush.msra.mxu0 %v369
  %2136 = vmatpush.msra.mxu0 %v365
  %2137 = vmatpush.msra.mxu0 %v361
  %2138 = vmatpush.msra.mxu0 %v357
  %2139 = vmatpush.msra.mxu0 %v353
  %2140 = vmatmul.f32.gmra.mxu0 %v19
  %v2141 = vpop.f32.mrf.mxu0
  %v2142 = vadd.f32 %v2122, %v2141
  %2143 = vdwg.mxu0
  %2144 = vmatpush.msra.mxu0 %v477
  %2145 = vmatpush.msra.mxu0 %v473
  %2146 = vmatpush.msra.mxu0 %v469
  %2147 = vmatpush.msra.mxu0 %v465
  %2148 = vmatpush.msra.mxu0 %v461
  %2149 = vmatpush.msra.mxu0 %v457
  %2150 = vmatpush.msra.mxu0 %v453
  %2151 = vmatpush.msra.mxu0 %v449
  %2152 = vmatpush.msra.mxu0 %v445
  %2153 = vmatpush.msra.mxu0 %v441
  %2154 = vmatpush.msra.mxu0 %v437
  %2155 = vmatpush.msra.mxu0 %v433
  %2156 = vmatpush.msra.mxu0 %v429
  %2157 = vmatpush.msra.mxu0 %v425
  %2158 = vmatpush.msra.mxu0 %v421
  %2159 = vmatpush.msra.mxu0 %v417
  %2160 = vmatmul.f32.gmra.mxu0 %v20
  %v2161 = vpop.f32.mrf.mxu0
  %v2162 = vadd.f32 %v2142, %v2161
  %2163 = vdwg.mxu0
  %2164 = vmatpush.msra.mxu0 %v541
  %2165 = vmatpush.msra.mxu0 %v537
  %2166 = vmatpush.msra.mxu0 %v533
  %2167 = vmatpush.msra.mxu0 %v529
  %2168 = vmatpush.msra.mxu0 %v525
  %2169 = vmatpush.msra.mxu0 %v521
  %2170 = vmatpush.msra.mxu0 %v517
  %2171 = vmatpush.msra.mxu0 %v513
  %2172 = vmatpush.msra.mxu0 %v509
  %2173 = vmatpush.msra.mxu0 %v505
  %2174 = vmatpush.msra.mxu0 %v501
  %2175 = vmatpush.msra.mxu0 %v497
  %2176 = vmatpush.msra.mxu0 %v493
  %2177 = vmatpush.msra.mxu0 %v489
  %2178 = vmatpush.msra.mxu0 %v485
  %2179 = vmatpush.msra.mxu0 %v481
  %2180 = vmatmul.f32.gmra.mxu0 %v21
  %v2181 = vpop.f32.mrf.mxu0
  %v2182 = vadd.f32 %v2162, %v2181
  %2183 = vdwg.mxu0
  %2184 = vmatpush.msra.mxu0 %v605
  %2185 = vmatpush.msra.mxu0 %v601
  %2186 = vmatpush.msra.mxu0 %v597
  %2187 = vmatpush.msra.mxu0 %v593
  %2188 = vmatpush.msra.mxu0 %v589
  %2189 = vmatpush.msra.mxu0 %v585
  %2190 = vmatpush.msra.mxu0 %v581
  %2191 = vmatpush.msra.mxu0 %v577
  %2192 = vmatpush.msra.mxu0 %v573
  %2193 = vmatpush.msra.mxu0 %v569
  %2194 = vmatpush.msra.mxu0 %v565
  %2195 = vmatpush.msra.mxu0 %v561
  %2196 = vmatpush.msra.mxu0 %v557
  %2197 = vmatpush.msra.mxu0 %v553
  %2198 = vmatpush.msra.mxu0 %v549
  %2199 = vmatpush.msra.mxu0 %v545
  %2200 = vmatmul.f32.gmra.mxu0 %v22
  %v2201 = vpop.f32.mrf.mxu0
  %v2202 = vadd.f32 %v2182, %v2201
  %2203 = vdwg.mxu0
  %2204 = vmatpush.msra.mxu0 %v669
  %2205 = vmatpush.msra.mxu0 %v665
  %2206 = vmatpush.msra.mxu0 %v661
  %2207 = vmatpush.msra.mxu0 %v657
  %2208 = vmatpush.msra.mxu0 %v653
  %2209 = vmatpush.msra.mxu0 %v649
  %2210 = vmatpush.msra.mxu0 %v645
  %2211 = vmatpush.msra.mxu0 %v641
  %2212 = vmatpush.msra.mxu0 %v637
  %2213 = vmatpush.msra.mxu0 %v633
  %2214 = vmatpush.msra.mxu0 %v629
  %2215 = vmatpush.msra.mxu0 %v625
  %2216 = vmatpush.msra.mxu0 %v621
  %2217 = vmatpush.msra.mxu0 %v617
  %2218 = vmatpush.msra.mxu0 %v613
  %2219 = vmatpush.msra.mxu0 %v609
  %2220 = vmatmul.f32.gmra.mxu0 %v23
  %v2221 = vpop.f32.mrf.mxu0
  %v2222 = vadd.f32 %v2202, %v2221
  %2223 = vdwg.mxu0
  %2224 = vmatpush.msra.mxu0 %v733
  %2225 = vmatpush.msra.mxu0 %v729
  %2226 = vmatpush.msra.mxu0 %v725
  %2227 = vmatpush.msra.mxu0 %v721
  %2228 = vmatpush.msra.mxu0 %v717
  %2229 = vmatpush.msra.mxu0 %v713
  %2230 = vmatpush.msra.mxu0 %v709
  %2231 = vmatpush.msra.mxu0 %v705
  %2232 = vmatpush.msra.mxu0 %v701
  %2233 = vmatpush.msra.mxu0 %v697
  %2234 = vmatpush.msra.mxu0 %v693
  %2235 = vmatpush.msra.mxu0 %v689
  %2236 = vmatpush.msra.mxu0 %v685
  %2237 = vmatpush.msra.mxu0 %v681
  %2238 = vmatpush.msra.mxu0 %v677
  %2239 = vmatpush.msra.mxu0 %v673
  %2240 = vmatmul.f32.gmra.mxu0 %v24
  %v2241 = vpop.f32.mrf.mxu0
  %v2242 = vadd.f32 %v2222, %v2241
  %2243 = vdwg.mxu0
  %2244 = vmatpush.msra.mxu0 %v797
  %2245 = vmatpush.msra.mxu0 %v793
  %2246 = vmatpush.msra.mxu0 %v789
  %2247 = vmatpush.msra.mxu0 %v785
  %2248 = vmatpush.msra.mxu0 %v781
  %2249 = vmatpush.msra.mxu0 %v777
  %2250 = vmatpush.msra.mxu0 %v773
  %2251 = vmatpush.msra.mxu0 %v769
  %2252 = vmatpush.msra.mxu0 %v765
  %2253 = vmatpush.msra.mxu0 %v761
  %2254 = vmatpush.msra.mxu0 %v757
  %2255 = vmatpush.msra.mxu0 %v753
  %2256 = vmatpush.msra.mxu0 %v749
  %2257 = vmatpush.msra.mxu0 %v745
  %2258 = vmatpush.msra.mxu0 %v741
  %2259 = vmatpush.msra.mxu0 %v737
  %2260 = vmatmul.f32.gmra.mxu0 %v25
  %v2261 = vpop.f32.mrf.mxu0
  %v2262 = vadd.f32 %v2242, %v2261
  %2263 = vdwg.mxu0
  %2264 = vmatpush.msra.mxu0 %v861
  %2265 = vmatpush.msra.mxu0 %v857
  %2266 = vmatpush.msra.mxu0 %v853
  %2267 = vmatpush.msra.mxu0 %v849
  %2268 = vmatpush.msra.mxu0 %v845
  %2269 = vmatpush.msra.mxu0 %v841
  %2270 = vmatpush.msra.mxu0 %v837
  %2271 = vmatpush.msra.mxu0 %v833
  %2272 = vmatpush.msra.mxu0 %v829
  %2273 = vmatpush.msra.mxu0 %v825
  %2274 = vmatpush.msra.mxu0 %v821
  %2275 = vmatpush.msra.mxu0 %v817
  %2276 = vmatpush.msra.mxu0 %v813
  %2277 = vmatpush.msra.mxu0 %v809
  %2278 = vmatpush.msra.mxu0 %v805
  %2279 = vmatpush.msra.mxu0 %v801
  %2280 = vmatmul.f32.gmra.mxu0 %v26
  %v2281 = vpop.f32.mrf.mxu0
  %v2282 = vadd.f32 %v2262, %v2281
  %2283 = vdwg.mxu0
  %2284 = vmatpush.msra.mxu0 %v925
  %2285 = vmatpush.msra.mxu0 %v921
  %2286 = vmatpush.msra.mxu0 %v917
  %2287 = vmatpush.msra.mxu0 %v913
  %2288 = vmatpush.msra.mxu0 %v909
  %2289 = vmatpush.msra.mxu0 %v905
  %2290 = vmatpush.msra.mxu0 %v901
  %2291 = vmatpush.msra.mxu0 %v897
  %2292 = vmatpush.msra.mxu0 %v893
  %2293 = vmatpush.msra.mxu0 %v889
  %2294 = vmatpush.msra.mxu0 %v885
  %2295 = vmatpush.msra.mxu0 %v881
  %2296 = vmatpush.msra.mxu0 %v877
  %2297 = vmatpush.msra.mxu0 %v873
  %2298 = vmatpush.msra.mxu0 %v869
  %2299 = vmatpush.msra.mxu0 %v865
  %2300 = vmatmul.f32.gmra.mxu0 %v27
  %v2301 = vpop.f32.mrf.mxu0
  %v2302 = vadd.f32 %v2282, %v2301
  %2303 = vdwg.mxu0
  %2304 = vmatpush.msra.mxu0 %v989
  %2305 = vmatpush.msra.mxu0 %v985
  %2306 = vmatpush.msra.mxu0 %v981
  %2307 = vmatpush.msra.mxu0 %v977
  %2308 = vmatpush.msra.mxu0 %v973
  %2309 = vmatpush.msra.mxu0 %v969
  %2310 = vmatpush.msra.mxu0 %v965
  %2311 = vmatpush.msra.mxu0 %v961
  %2312 = vmatpush.msra.mxu0 %v957
  %2313 = vmatpush.msra.mxu0 %v953
  %2314 = vmatpush.msra.mxu0 %v949
  %2315 = vmatpush.msra.mxu0 %v945
  %2316 = vmatpush.msra.mxu0 %v941
  %2317 = vmatpush.msra.mxu0 %v937
  %2318 = vmatpush.msra.mxu0 %v933
  %2319 = vmatpush.msra.mxu0 %v929
  %2320 = vmatmul.f32.gmra.mxu0 %v28
  %v2321 = vpop.f32.mrf.mxu0
  %v2322 = vadd.f32 %v2302, %v2321
  %2323 = vdwg.mxu0
  %2324 = vmatpush.msra.mxu0 %v1053
  %2325 = vmatpush.msra.mxu0 %v1049
  %2326 = vmatpush.msra.mxu0 %v1045
  %2327 = vmatpush.msra.mxu0 %v1041
  %2328 = vmatpush.msra.mxu0 %v1037
  %2329 = vmatpush.msra.mxu0 %v1033
  %2330 = vmatpush.msra.mxu0 %v1029
  %2331 = vmatpush.msra.mxu0 %v1025
  %2332 = vmatpush.msra.mxu0 %v1021
  %2333 = vmatpush.msra.mxu0 %v1017
  %2334 = vmatpush.msra.mxu0 %v1013
  %2335 = vmatpush.msra.mxu0 %v1009
  %2336 = vmatpush.msra.mxu0 %v1005
  %2337 = vmatpush.msra.mxu0 %v1001
  %2338 = vmatpush.msra.mxu0 %v997
  %2339 = vmatpush.msra.mxu0 %v993
  %2340 = vmatmul.f32.gmra.mxu0 %v29
  %v2341 = vpop.f32.mrf.mxu0
  %v2342 = vadd.f32 %v2322, %v2341
  %2343 = vdwg.mxu0
  %v2344 = vmax.f32 %v1382, 0.0
  %v2345 = vmax.f32 %v1702, 0.0
  %v2346 = vmax.f32 %v2022, 0.0
  %v2347 = vmax.f32 %v2342, 0.0
  %2348 = vst [vmem:[%s3] sm:$0xff] %v2344
  %2349 = vst [vmem:[%s3 + $0x8] sm:$0xff] %v2345
  %2350 = vst [vmem:[%s3 + $0x10] sm:$0xff] %v2346
  %2351 = vst [vmem:[%s3 + $0x18] sm:$0xff] %v2347
  // Predicated region
  $region14: #{lenet5_forward.10} parent=0 // pred_check
    _
  $region15: #{lenet5_forward.10} parent=0 // pred_check_branch
    %2353 = sbr.rel (0) target = $region17
  $region16: #{lenet5_forward.10} parent=0 // pred_region
    _
  $region17: #{lenet5_forward.10} parent=0 // pred_fallthru
    _
  // Predicated region
  $region18: #{lenet5_forward.10} parent=0 // pred_check
    _
  $region19: #{lenet5_forward.10} parent=0 // pred_check_branch
    %2355 = sbr.rel (0) target = $region21
  $region20: #{lenet5_forward.10} parent=0 // pred_region
    _
  $region21: #{lenet5_forward.10} parent=0 // pred_fallthru
    _

</llo_original>
